<compile_context>
chip_gen: v7x
topology: tpu7x:2x2x1
jax: 0.10.0
libtpu: 0.0.40
codegen_flags: <defaults>
</compile_context>

<pallas_src>
import functools

import jax
import jax.numpy as jnp
from jax.experimental import pallas as pl
from jax.experimental.pallas import tpu as pltpu


# --------------------------- in-kernel building blocks ---------------------------

def _time_block(u, n_pad, w_ref, b_ref):
    """Gated temporal conv (kernel=3 over time), 3 gates fused along lanes.

    u     : [T_in * n_pad, Cin] f32 value, rows time-major (t * n_pad + node)
    w_ref : [3 (tap), Cin, 3 * Cout]   (bf16)
    b_ref : [1, 3 * Cout]              (f32)
    returns relu(c1 + sigmoid(c2) + c3) : [(T_in - 2) * n_pad, Cout] f32
    """
    rows_out = u.shape[0] - 2 * n_pad
    cout = w_ref.shape[2] // 3
    ub = u.astype(w_ref.dtype)
    # in-kernel im2col: the 3 temporal taps are contiguous row slabs; one
    # accumulating dot per tap, all 3 gates produced in the 48 output lanes.
    y = (jnp.dot(ub[0:rows_out, :], w_ref[0],
                 preferred_element_type=jnp.float32)
         + jnp.dot(ub[n_pad:n_pad + rows_out, :], w_ref[1],
                   preferred_element_type=jnp.float32)
         + jnp.dot(ub[2 * n_pad:2 * n_pad + rows_out, :], w_ref[2],
                   preferred_element_type=jnp.float32)
         + b_ref[...])
    c1 = y[:, :cout]
    c2 = y[:, cout:2 * cout]
    c3 = y[:, 2 * cout:]
    return jnp.maximum(c1 + jax.nn.sigmoid(c2) + c3, 0.0)


def _graph_conv(u, theta_ref, a_ref, n_pad):
    """relu(A_hat @ X_t @ Theta): one Theta dot + tiny per-time-slab A dots."""
    t_len = u.shape[0] // n_pad
    y = jnp.dot(u.astype(theta_ref.dtype), theta_ref[...],
                preferred_element_type=jnp.float32)          # [rows, sp]
    yb = y.astype(a_ref.dtype)
    a = a_ref[...]
    slabs = [jnp.dot(a, yb[t * n_pad:(t + 1) * n_pad, :],
                     preferred_element_type=jnp.float32)
             for t in range(t_len)]                           # static unroll
    return jnp.maximum(jnp.concatenate(slabs, axis=0), 0.0)


def _batch_norm_nodes(u, n_pad):
    """Training-mode BatchNorm2d(num_nodes): per-node mean/var over (time, chan).

    Matrix-free: reshape rows -> (time, node, chan) and reduce (no matmuls).
    """
    rows, c = u.shape
    t_len = rows // n_pad
    u3 = u.reshape(t_len, n_pad, c)
    inv_cnt = 1.0 / float(t_len * c)
    s1 = jnp.sum(jnp.sum(u3, axis=2, keepdims=True), axis=0, keepdims=True)
    s2 = jnp.sum(jnp.sum(u3 * u3, axis=2, keepdims=True), axis=0, keepdims=True)
    mean = s1 * inv_cnt                                   # [1, n_pad, 1]
    var = jnp.maximum(s2 * inv_cnt - mean * mean, 0.0)    # clamp cancellation
    un = (u3 - mean) * jax.lax.rsqrt(var + 1e-5)
    return un.reshape(rows, c)


# --------------------------------- fused kernel ---------------------------------

def _stgcn_gru_kernel(n_pad,
                      x_ref, a_ref,
                      w11_ref, b11_ref, th1_ref, w12_ref, b12_ref,
                      w21_ref, b21_ref, th2_ref, w22_ref, b22_ref,
                      wlt_ref, blt_ref,
                      wx_ref, bx_ref, wh_ref, bh_ref,
                      out_ref, hlast_ref):
    # ---- ST-GCN block 1: TimeBlock -> graph conv -> TimeBlock -> BatchNorm ----
    t1 = _time_block(x_ref[...], n_pad, w11_ref, b11_ref)
    g1 = _graph_conv(t1, th1_ref, a_ref, n_pad)
    h1 = _batch_norm_nodes(_time_block(g1, n_pad, w12_ref, b12_ref), n_pad)

    # ---- ST-GCN block 2 ----
    t3 = _time_block(h1, n_pad, w21_ref, b21_ref)
    g2 = _graph_conv(t3, th2_ref, a_ref, n_pad)
    h2 = _batch_norm_nodes(_time_block(g2, n_pad, w22_ref, b22_ref), n_pad)

    # ---- final temporal block ----
    tf = _time_block(h2, n_pad, wlt_ref, blt_ref)            # [t5 * n_pad, C]

    # ---- GRU decoder over time (row = t * n_pad + node), 3 gates fused ----
    hidden = wh_ref.shape[0]
    n_steps = tf.shape[0] // n_pad
    gx = (jnp.dot(tf.astype(wx_ref.dtype), wx_ref[...],
                  preferred_element_type=jnp.float32) + bx_ref[...])
    wh = wh_ref[...]
    bh = bh_ref[...]
    h = jnp.zeros((n_pad, hidden), jnp.float32)
    outs = []
    for t in range(n_steps):                  # static unroll: n_steps is small
        gxt = gx[t * n_pad:(t + 1) * n_pad, :]
        gh = jnp.dot(h.astype(wh.dtype), wh,
                     preferred_element_type=jnp.float32) + bh
        r = jax.nn.sigmoid(gxt[:, :hidden] + gh[:, :hidden])
        z = jax.nn.sigmoid(gxt[:, hidden:2 * hidden] + gh[:, hidden:2 * hidden])
        cand = jnp.tanh(gxt[:, 2 * hidden:] + r * gh[:, 2 * hidden:])
        h = (1.0 - z) * cand + z * h
        outs.append(h)
    out_ref[...] = jnp.concatenate(outs, axis=0)     # single store, no per-step vst
    hlast_ref[...] = h


# ----------------------------------- wrapper -----------------------------------

def transf_stgcn3_forward(params, x, a_hat, num_nodes):
    b, n, t, f = x.shape
    assert b == 1 and n == num_nodes and t > 10
    hidden = params['gru_wh'].shape[1]
    n_pad = ((n + 7) // 8) * 8                # pad nodes -> aligned row slabs
    t5 = t - 10

    # time-major 2-D layout: row = time * n_pad + node (padded nodes are zero)
    x_p = jnp.pad(x, ((0, 0), (0, n_pad - n), (0, 0), (0, 0)))
    x2d = jnp.transpose(x_p[0], (1, 0, 2)).reshape(t * n_pad, f)

    a_pad = (jnp.zeros((n_pad, n_pad), jnp.float32)
             .at[:n, :n].set(a_hat).astype(jnp.bfloat16))

    def fuse_tb(w, bias):
        # [gate, tap, Cin, Cout] -> [tap, Cin, gate*Cout]; [gate,1,Cout] -> [1, gate*Cout]
        g, k, cin, cout = w.shape
        wf = jnp.transpose(w, (1, 2, 0, 3)).reshape(k, cin, g * cout)
        bf = jnp.transpose(bias, (1, 0, 2)).reshape(1, g * cout)
        return wf.astype(jnp.bfloat16), bf

    def fuse_gru(w, bias):
        # [3, Cin, H] -> [Cin, 3H]; [3, 1, H] -> [1, 3H]
        g, cin, hid = w.shape
        wf = jnp.transpose(w, (1, 0, 2)).reshape(cin, g * hid)
        bf = jnp.transpose(bias, (1, 0, 2)).reshape(1, g * hid)
        return wf.astype(jnp.bfloat16), bf

    w11, b11 = fuse_tb(params['b1t1_w'], params['b1t1_b'])
    w12, b12 = fuse_tb(params['b1t2_w'], params['b1t2_b'])
    w21, b21 = fuse_tb(params['b2t1_w'], params['b2t1_b'])
    w22, b22 = fuse_tb(params['b2t2_w'], params['b2t2_b'])
    wlt, blt = fuse_tb(params['lt_w'], params['lt_b'])
    wx, bx = fuse_gru(params['gru_wx'], params['gru_bx'])
    wh, bh = fuse_gru(params['gru_wh'], params['gru_bh'])
    th1 = params['b1_theta'].astype(jnp.bfloat16)
    th2 = params['b2_theta'].astype(jnp.bfloat16)

    inputs = (x2d, a_pad,
              w11, b11, th1, w12, b12,
              w21, b21, th2, w22, b22,
              wlt, blt, wx, bx, wh, bh)

    vmem = pl.BlockSpec(memory_space=pltpu.MemorySpace.VMEM)
    out2d, h_last = pl.pallas_call(
        functools.partial(_stgcn_gru_kernel, n_pad),
        out_shape=(jax.ShapeDtypeStruct((t5 * n_pad, hidden), jnp.float32),
                   jax.ShapeDtypeStruct((n_pad, hidden), jnp.float32)),
        in_specs=[vmem] * len(inputs),
        out_specs=(vmem, vmem),
    )(*inputs)

    output = out2d.reshape(t5, n_pad, hidden)[:, :n, :]    # [T', B*N, H] (B == 1)
    h = h_last[:n][None]                                   # [1, B*N, H]
    return output, h


# ------------------------------------ params ------------------------------------

def init_params(key, num_features, out_channels=16, spatial_channels=8,
                gru_hidden=16):
    keys = iter(jax.random.split(key, 16))

    def time_block(cin, cout):
        # [gate, tap, Cin, Cout] temporal conv weights + [gate, 1, Cout] biases
        w = jax.random.normal(next(keys), (3, 3, cin, cout), jnp.float32)
        w = w / jnp.sqrt(3.0 * cin)
        b = jax.random.normal(next(keys), (3, 1, cout), jnp.float32) * 0.01
        return w, b

    def dense(shape, fan_in):
        return jax.random.normal(next(keys), shape, jnp.float32) / jnp.sqrt(
            1.0 * fan_in)

    p = {}
    p['b1t1_w'], p['b1t1_b'] = time_block(num_features, out_channels)
    p['b1_theta'] = dense((out_channels, spatial_channels), out_channels)
    p['b1t2_w'], p['b1t2_b'] = time_block(spatial_channels, out_channels)
    p['b2t1_w'], p['b2t1_b'] = time_block(out_channels, out_channels)
    p['b2_theta'] = dense((out_channels, spatial_channels), out_channels)
    p['b2t2_w'], p['b2t2_b'] = time_block(spatial_channels, out_channels)
    p['lt_w'], p['lt_b'] = time_block(out_channels, out_channels)
    p['gru_wx'] = dense((3, out_channels, gru_hidden), out_channels)
    p['gru_bx'] = jnp.zeros((3, 1, gru_hidden), jnp.float32)
    p['gru_wh'] = dense((3, gru_hidden, gru_hidden), gru_hidden)
    p['gru_bh'] = jnp.zeros((3, 1, gru_hidden), jnp.float32)
    return p


# ------------------------------------- main --------------------------------------

if __name__ == "__main__":
    key = jax.random.PRNGKey(0)
    k_param, k_x, k_a = jax.random.split(key, 3)

    # small shapes consistent with the module: X [1, num_nodes, T, num_features]
    B, N, T, F = 1, 10, 16, 32
    params = init_params(k_param, num_features=F)
    x = jax.random.normal(k_x, (B, N, T, F), jnp.float32)
    a = jnp.abs(jax.random.normal(k_a, (N, N), jnp.float32)) + jnp.eye(N)
    a_hat = a / jnp.sum(a, axis=1, keepdims=True)          # normalized adjacency

    fwd = jax.jit(transf_stgcn3_forward, static_argnums=3)
    output, h = fwd(params, x, a_hat, N)
    jax.block_until_ready((output, h))
    assert output.shape == (T - 10, B * N, 16) and h.shape == (1, B * N, 16)
    print("KERNEL_OK")
</pallas_src>

<mosaic_0001>
module attributes {stable_mosaic.version = 11 : i64} {
  func.func @_stgcn_gru_kernel(%arg0: memref<256x32xf32, #tpu.memory_space<vmem>>, %arg1: memref<16x16xbf16, #tpu.memory_space<vmem>>, %arg2: memref<3x32x48xbf16, #tpu.memory_space<vmem>>, %arg3: memref<1x48xf32, #tpu.memory_space<vmem>>, %arg4: memref<16x8xbf16, #tpu.memory_space<vmem>>, %arg5: memref<3x8x48xbf16, #tpu.memory_space<vmem>>, %arg6: memref<1x48xf32, #tpu.memory_space<vmem>>, %arg7: memref<3x16x48xbf16, #tpu.memory_space<vmem>>, %arg8: memref<1x48xf32, #tpu.memory_space<vmem>>, %arg9: memref<16x8xbf16, #tpu.memory_space<vmem>>, %arg10: memref<3x8x48xbf16, #tpu.memory_space<vmem>>, %arg11: memref<1x48xf32, #tpu.memory_space<vmem>>, %arg12: memref<3x16x48xbf16, #tpu.memory_space<vmem>>, %arg13: memref<1x48xf32, #tpu.memory_space<vmem>>, %arg14: memref<16x48xbf16, #tpu.memory_space<vmem>>, %arg15: memref<1x48xf32, #tpu.memory_space<vmem>>, %arg16: memref<16x48xbf16, #tpu.memory_space<vmem>>, %arg17: memref<1x48xf32, #tpu.memory_space<vmem>>, %arg18: memref<96x16xf32, #tpu.memory_space<vmem>>, %arg19: memref<16x16xf32, #tpu.memory_space<vmem>>) attributes {dimension_semantics = [], scalar_prefetch = 0 : i64, scratch_operands = 0 : i64, tpu.core_type = #tpu.core_type<tc>} {
    %c0 = arith.constant 0 : index
    %c0_0 = arith.constant 0 : index
    %0 = vector.load %arg0[%c0, %c0_0] : memref<256x32xf32, #tpu.memory_space<vmem>>, vector<256x32xf32>
    %1 = arith.truncf %0 : vector<256x32xf32> to vector<256x32xbf16>
    %2 = vector.extract_strided_slice %1 {offsets = [0, 0], sizes = [224, 32], strides = [1, 1]} : vector<256x32xbf16> to vector<224x32xbf16>
    %c0_1 = arith.constant 0 : index
    %c0_2 = arith.constant 0 : index
    %c0_3 = arith.constant 0 : index
    %3 = vector.load %arg2[%c0_1, %c0_2, %c0_3] : memref<3x32x48xbf16, #tpu.memory_space<vmem>>, vector<1x32x48xbf16>
    %4 = vector.shape_cast %3 : vector<1x32x48xbf16> to vector<32x48xbf16>
    %cst = arith.constant dense<0.000000e+00> : vector<224x48xf32>
    %5 = tpu.matmul %2, %4, %cst {dimension_numbers = #tpu.dot_dimension_numbers<[1], [0], [0], [1], [0, 0, 1, 1], [], []>} : vector<224x32xbf16>, vector<32x48xbf16>, vector<224x48xf32> -> vector<224x48xf32>
    %6 = vector.extract_strided_slice %1 {offsets = [16, 0], sizes = [224, 32], strides = [1, 1]} : vector<256x32xbf16> to vector<224x32xbf16>
    %c1 = arith.constant 1 : index
    %c0_4 = arith.constant 0 : index
    %c0_5 = arith.constant 0 : index
    %7 = vector.load %arg2[%c1, %c0_4, %c0_5] : memref<3x32x48xbf16, #tpu.memory_space<vmem>>, vector<1x32x48xbf16>
    %8 = vector.shape_cast %7 : vector<1x32x48xbf16> to vector<32x48xbf16>
    %cst_6 = arith.constant dense<0.000000e+00> : vector<224x48xf32>
    %9 = tpu.matmul %6, %8, %cst_6 {dimension_numbers = #tpu.dot_dimension_numbers<[1], [0], [0], [1], [0, 0, 1, 1], [], []>} : vector<224x32xbf16>, vector<32x48xbf16>, vector<224x48xf32> -> vector<224x48xf32>
    %10 = arith.addf %5, %9 : vector<224x48xf32>
    %11 = vector.extract_strided_slice %1 {offsets = [32, 0], sizes = [224, 32], strides = [1, 1]} : vector<256x32xbf16> to vector<224x32xbf16>
    %c2 = arith.constant 2 : index
    %c0_7 = arith.constant 0 : index
    %c0_8 = arith.constant 0 : index
    %12 = vector.load %arg2[%c2, %c0_7, %c0_8] : memref<3x32x48xbf16, #tpu.memory_space<vmem>>, vector<1x32x48xbf16>
    %13 = vector.shape_cast %12 : vector<1x32x48xbf16> to vector<32x48xbf16>
    %cst_9 = arith.constant dense<0.000000e+00> : vector<224x48xf32>
    %14 = tpu.matmul %11, %13, %cst_9 {dimension_numbers = #tpu.dot_dimension_numbers<[1], [0], [0], [1], [0, 0, 1, 1], [], []>} : vector<224x32xbf16>, vector<32x48xbf16>, vector<224x48xf32> -> vector<224x48xf32>
    %15 = arith.addf %10, %14 : vector<224x48xf32>
    %c0_10 = arith.constant 0 : index
    %c0_11 = arith.constant 0 : index
    %16 = vector.load %arg3[%c0_10, %c0_11] : memref<1x48xf32, #tpu.memory_space<vmem>>, vector<1x48xf32>
    %17 = vector.broadcast %16 : vector<1x48xf32> to vector<224x48xf32>
    %18 = arith.addf %15, %17 : vector<224x48xf32>
    %19 = vector.extract_strided_slice %18 {offsets = [0, 0], sizes = [224, 16], strides = [1, 1]} : vector<224x48xf32> to vector<224x16xf32>
    %20 = vector.extract_strided_slice %18 {offsets = [0, 16], sizes = [224, 16], strides = [1, 1]} : vector<224x48xf32> to vector<224x16xf32>
    %21 = vector.extract_strided_slice %18 {offsets = [0, 32], sizes = [224, 16], strides = [1, 1]} : vector<224x48xf32> to vector<224x16xf32>
    %22 = arith.negf %20 : vector<224x16xf32>
    %23 = math.exp %22 : vector<224x16xf32>
    %cst_12 = arith.constant 1.000000e+00 : f32
    %24 = vector.broadcast %cst_12 : f32 to vector<224x16xf32>
    %25 = arith.addf %24, %23 : vector<224x16xf32>
    %26 = arith.divf %24, %25 : vector<224x16xf32>
    %27 = arith.addf %19, %26 : vector<224x16xf32>
    %28 = arith.addf %27, %21 : vector<224x16xf32>
    %cst_13 = arith.constant 0.000000e+00 : f32
    %29 = vector.broadcast %cst_13 : f32 to vector<224x16xf32>
    %30 = arith.maximumf %28, %29 : vector<224x16xf32>
    %31 = arith.truncf %30 : vector<224x16xf32> to vector<224x16xbf16>
    %c0_14 = arith.constant 0 : index
    %c0_15 = arith.constant 0 : index
    %32 = vector.load %arg4[%c0_14, %c0_15] : memref<16x8xbf16, #tpu.memory_space<vmem>>, vector<16x8xbf16>
    %cst_16 = arith.constant dense<0.000000e+00> : vector<224x8xf32>
    %33 = tpu.matmul %31, %32, %cst_16 {dimension_numbers = #tpu.dot_dimension_numbers<[1], [0], [0], [1], [0, 0, 1, 1], [], []>} : vector<224x16xbf16>, vector<16x8xbf16>, vector<224x8xf32> -> vector<224x8xf32>
    %34 = arith.truncf %33 : vector<224x8xf32> to vector<224x8xbf16>
    %c0_17 = arith.constant 0 : index
    %c0_18 = arith.constant 0 : index
    %35 = vector.load %arg1[%c0_17, %c0_18] : memref<16x16xbf16, #tpu.memory_space<vmem>>, vector<16x16xbf16>
    %36 = vector.extract_strided_slice %34 {offsets = [0, 0], sizes = [16, 8], strides = [1, 1]} : vector<224x8xbf16> to vector<16x8xbf16>
    %cst_19 = arith.constant dense<0.000000e+00> : vector<16x8xf32>
    %37 = tpu.matmul %35, %36, %cst_19 {dimension_numbers = #tpu.dot_dimension_numbers<[1], [0], [0], [1], [0, 0, 1, 1], [], []>} : vector<16x16xbf16>, vector<16x8xbf16>, vector<16x8xf32> -> vector<16x8xf32>
    %38 = vector.extract_strided_slice %34 {offsets = [16, 0], sizes = [16, 8], strides = [1, 1]} : vector<224x8xbf16> to vector<16x8xbf16>
    %cst_20 = arith.constant dense<0.000000e+00> : vector<16x8xf32>
    %39 = tpu.matmul %35, %38, %cst_20 {dimension_numbers = #tpu.dot_dimension_numbers<[1], [0], [0], [1], [0, 0, 1, 1], [], []>} : vector<16x16xbf16>, vector<16x8xbf16>, vector<16x8xf32> -> vector<16x8xf32>
    %40 = vector.extract_strided_slice %34 {offsets = [32, 0], sizes = [16, 8], strides = [1, 1]} : vector<224x8xbf16> to vector<16x8xbf16>
    %cst_21 = arith.constant dense<0.000000e+00> : vector<16x8xf32>
    %41 = tpu.matmul %35, %40, %cst_21 {dimension_numbers = #tpu.dot_dimension_numbers<[1], [0], [0], [1], [0, 0, 1, 1], [], []>} : vector<16x16xbf16>, vector<16x8xbf16>, vector<16x8xf32> -> vector<16x8xf32>
    %42 = vector.extract_strided_slice %34 {offsets = [48, 0], sizes = [16, 8], strides = [1, 1]} : vector<224x8xbf16> to vector<16x8xbf16>
    %cst_22 = arith.constant dense<0.000000e+00> : vector<16x8xf32>
    %43 = tpu.matmul %35, %42, %cst_22 {dimension_numbers = #tpu.dot_dimension_numbers<[1], [0], [0], [1], [0, 0, 1, 1], [], []>} : vector<16x16xbf16>, vector<16x8xbf16>, vector<16x8xf32> -> vector<16x8xf32>
    %44 = vector.extract_strided_slice %34 {offsets = [64, 0], sizes = [16, 8], strides = [1, 1]} : vector<224x8xbf16> to vector<16x8xbf16>
    %cst_23 = arith.constant dense<0.000000e+00> : vector<16x8xf32>
    %45 = tpu.matmul %35, %44, %cst_23 {dimension_numbers = #tpu.dot_dimension_numbers<[1], [0], [0], [1], [0, 0, 1, 1], [], []>} : vector<16x16xbf16>, vector<16x8xbf16>, vector<16x8xf32> -> vector<16x8xf32>
    %46 = vector.extract_strided_slice %34 {offsets = [80, 0], sizes = [16, 8], strides = [1, 1]} : vector<224x8xbf16> to vector<16x8xbf16>
    %cst_24 = arith.constant dense<0.000000e+00> : vector<16x8xf32>
    %47 = tpu.matmul %35, %46, %cst_24 {dimension_numbers = #tpu.dot_dimension_numbers<[1], [0], [0], [1], [0, 0, 1, 1], [], []>} : vector<16x16xbf16>, vector<16x8xbf16>, vector<16x8xf32> -> vector<16x8xf32>
    %48 = vector.extract_strided_slice %34 {offsets = [96, 0], sizes = [16, 8], strides = [1, 1]} : vector<224x8xbf16> to vector<16x8xbf16>
    %cst_25 = arith.constant dense<0.000000e+00> : vector<16x8xf32>
    %49 = tpu.matmul %35, %48, %cst_25 {dimension_numbers = #tpu.dot_dimension_numbers<[1], [0], [0], [1], [0, 0, 1, 1], [], []>} : vector<16x16xbf16>, vector<16x8xbf16>, vector<16x8xf32> -> vector<16x8xf32>
    %50 = vector.extract_strided_slice %34 {offsets = [112, 0], sizes = [16, 8], strides = [1, 1]} : vector<224x8xbf16> to vector<16x8xbf16>
    %cst_26 = arith.constant dense<0.000000e+00> : vector<16x8xf32>
    %51 = tpu.matmul %35, %50, %cst_26 {dimension_numbers = #tpu.dot_dimension_numbers<[1], [0], [0], [1], [0, 0, 1, 1], [], []>} : vector<16x16xbf16>, vector<16x8xbf16>, vector<16x8xf32> -> vector<16x8xf32>
    %52 = vector.extract_strided_slice %34 {offsets = [128, 0], sizes = [16, 8], strides = [1, 1]} : vector<224x8xbf16> to vector<16x8xbf16>
    %cst_27 = arith.constant dense<0.000000e+00> : vector<16x8xf32>
    %53 = tpu.matmul %35, %52, %cst_27 {dimension_numbers = #tpu.dot_dimension_numbers<[1], [0], [0], [1], [0, 0, 1, 1], [], []>} : vector<16x16xbf16>, vector<16x8xbf16>, vector<16x8xf32> -> vector<16x8xf32>
    %54 = vector.extract_strided_slice %34 {offsets = [144, 0], sizes = [16, 8], strides = [1, 1]} : vector<224x8xbf16> to vector<16x8xbf16>
    %cst_28 = arith.constant dense<0.000000e+00> : vector<16x8xf32>
    %55 = tpu.matmul %35, %54, %cst_28 {dimension_numbers = #tpu.dot_dimension_numbers<[1], [0], [0], [1], [0, 0, 1, 1], [], []>} : vector<16x16xbf16>, vector<16x8xbf16>, vector<16x8xf32> -> vector<16x8xf32>
    %56 = vector.extract_strided_slice %34 {offsets = [160, 0], sizes = [16, 8], strides = [1, 1]} : vector<224x8xbf16> to vector<16x8xbf16>
    %cst_29 = arith.constant dense<0.000000e+00> : vector<16x8xf32>
    %57 = tpu.matmul %35, %56, %cst_29 {dimension_numbers = #tpu.dot_dimension_numbers<[1], [0], [0], [1], [0, 0, 1, 1], [], []>} : vector<16x16xbf16>, vector<16x8xbf16>, vector<16x8xf32> -> vector<16x8xf32>
    %58 = vector.extract_strided_slice %34 {offsets = [176, 0], sizes = [16, 8], strides = [1, 1]} : vector<224x8xbf16> to vector<16x8xbf16>
    %cst_30 = arith.constant dense<0.000000e+00> : vector<16x8xf32>
    %59 = tpu.matmul %35, %58, %cst_30 {dimension_numbers = #tpu.dot_dimension_numbers<[1], [0], [0], [1], [0, 0, 1, 1], [], []>} : vector<16x16xbf16>, vector<16x8xbf16>, vector<16x8xf32> -> vector<16x8xf32>
    %60 = vector.extract_strided_slice %34 {offsets = [192, 0], sizes = [16, 8], strides = [1, 1]} : vector<224x8xbf16> to vector<16x8xbf16>
    %cst_31 = arith.constant dense<0.000000e+00> : vector<16x8xf32>
    %61 = tpu.matmul %35, %60, %cst_31 {dimension_numbers = #tpu.dot_dimension_numbers<[1], [0], [0], [1], [0, 0, 1, 1], [], []>} : vector<16x16xbf16>, vector<16x8xbf16>, vector<16x8xf32> -> vector<16x8xf32>
    %62 = vector.extract_strided_slice %34 {offsets = [208, 0], sizes = [16, 8], strides = [1, 1]} : vector<224x8xbf16> to vector<16x8xbf16>
    %cst_32 = arith.constant dense<0.000000e+00> : vector<16x8xf32>
    %63 = tpu.matmul %35, %62, %cst_32 {dimension_numbers = #tpu.dot_dimension_numbers<[1], [0], [0], [1], [0, 0, 1, 1], [], []>} : vector<16x16xbf16>, vector<16x8xbf16>, vector<16x8xf32> -> vector<16x8xf32>
    %64 = tpu.concatenate %37, %39, %41, %43, %45, %47, %49, %51, %53, %55, %57, %59, %61, %63 in 0 : vector<16x8xf32>, vector<16x8xf32>, vector<16x8xf32>, vector<16x8xf32>, vector<16x8xf32>, vector<16x8xf32>, vector<16x8xf32>, vector<16x8xf32>, vector<16x8xf32>, vector<16x8xf32>, vector<16x8xf32>, vector<16x8xf32>, vector<16x8xf32>, vector<16x8xf32> -> vector<224x8xf32>
    %cst_33 = arith.constant 0.000000e+00 : f32
    %65 = vector.broadcast %cst_33 : f32 to vector<224x8xf32>
    %66 = arith.maximumf %64, %65 : vector<224x8xf32>
    %67 = arith.truncf %66 : vector<224x8xf32> to vector<224x8xbf16>
    %68 = vector.extract_strided_slice %67 {offsets = [0, 0], sizes = [192, 8], strides = [1, 1]} : vector<224x8xbf16> to vector<192x8xbf16>
    %c0_34 = arith.constant 0 : index
    %c0_35 = arith.constant 0 : index
    %c0_36 = arith.constant 0 : index
    %69 = vector.load %arg5[%c0_34, %c0_35, %c0_36] : memref<3x8x48xbf16, #tpu.memory_space<vmem>>, vector<1x8x48xbf16>
    %70 = vector.shape_cast %69 : vector<1x8x48xbf16> to vector<8x48xbf16>
    %cst_37 = arith.constant dense<0.000000e+00> : vector<192x48xf32>
    %71 = tpu.matmul %68, %70, %cst_37 {dimension_numbers = #tpu.dot_dimension_numbers<[1], [0], [0], [1], [0, 0, 1, 1], [], []>} : vector<192x8xbf16>, vector<8x48xbf16>, vector<192x48xf32> -> vector<192x48xf32>
    %72 = vector.extract_strided_slice %67 {offsets = [16, 0], sizes = [192, 8], strides = [1, 1]} : vector<224x8xbf16> to vector<192x8xbf16>
    %c1_38 = arith.constant 1 : index
    %c0_39 = arith.constant 0 : index
    %c0_40 = arith.constant 0 : index
    %73 = vector.load %arg5[%c1_38, %c0_39, %c0_40] : memref<3x8x48xbf16, #tpu.memory_space<vmem>>, vector<1x8x48xbf16>
    %74 = vector.shape_cast %73 : vector<1x8x48xbf16> to vector<8x48xbf16>
    %cst_41 = arith.constant dense<0.000000e+00> : vector<192x48xf32>
    %75 = tpu.matmul %72, %74, %cst_41 {dimension_numbers = #tpu.dot_dimension_numbers<[1], [0], [0], [1], [0, 0, 1, 1], [], []>} : vector<192x8xbf16>, vector<8x48xbf16>, vector<192x48xf32> -> vector<192x48xf32>
    %76 = arith.addf %71, %75 : vector<192x48xf32>
    %77 = vector.extract_strided_slice %67 {offsets = [32, 0], sizes = [192, 8], strides = [1, 1]} : vector<224x8xbf16> to vector<192x8xbf16>
    %c2_42 = arith.constant 2 : index
    %c0_43 = arith.constant 0 : index
    %c0_44 = arith.constant 0 : index
    %78 = vector.load %arg5[%c2_42, %c0_43, %c0_44] : memref<3x8x48xbf16, #tpu.memory_space<vmem>>, vector<1x8x48xbf16>
    %79 = vector.shape_cast %78 : vector<1x8x48xbf16> to vector<8x48xbf16>
    %cst_45 = arith.constant dense<0.000000e+00> : vector<192x48xf32>
    %80 = tpu.matmul %77, %79, %cst_45 {dimension_numbers = #tpu.dot_dimension_numbers<[1], [0], [0], [1], [0, 0, 1, 1], [], []>} : vector<192x8xbf16>, vector<8x48xbf16>, vector<192x48xf32> -> vector<192x48xf32>
    %81 = arith.addf %76, %80 : vector<192x48xf32>
    %c0_46 = arith.constant 0 : index
    %c0_47 = arith.constant 0 : index
    %82 = vector.load %arg6[%c0_46, %c0_47] : memref<1x48xf32, #tpu.memory_space<vmem>>, vector<1x48xf32>
    %83 = vector.broadcast %82 : vector<1x48xf32> to vector<192x48xf32>
    %84 = arith.addf %81, %83 : vector<192x48xf32>
    %85 = vector.extract_strided_slice %84 {offsets = [0, 0], sizes = [192, 16], strides = [1, 1]} : vector<192x48xf32> to vector<192x16xf32>
    %86 = vector.extract_strided_slice %84 {offsets = [0, 16], sizes = [192, 16], strides = [1, 1]} : vector<192x48xf32> to vector<192x16xf32>
    %87 = vector.extract_strided_slice %84 {offsets = [0, 32], sizes = [192, 16], strides = [1, 1]} : vector<192x48xf32> to vector<192x16xf32>
    %88 = arith.negf %86 : vector<192x16xf32>
    %89 = math.exp %88 : vector<192x16xf32>
    %cst_48 = arith.constant 1.000000e+00 : f32
    %90 = vector.broadcast %cst_48 : f32 to vector<192x16xf32>
    %91 = arith.addf %90, %89 : vector<192x16xf32>
    %92 = arith.divf %90, %91 : vector<192x16xf32>
    %93 = arith.addf %85, %92 : vector<192x16xf32>
    %94 = arith.addf %93, %87 : vector<192x16xf32>
    %cst_49 = arith.constant 0.000000e+00 : f32
    %95 = vector.broadcast %cst_49 : f32 to vector<192x16xf32>
    %96 = arith.maximumf %94, %95 : vector<192x16xf32>
    %97 = vector.shape_cast %96 : vector<192x16xf32> to vector<12x16x16xf32>
    %cst_50 = arith.constant dense<0.000000e+00> : vector<12x16xf32>
    %98 = vector.multi_reduction <add>, %97, %cst_50 [2] : vector<12x16x16xf32> to vector<12x16xf32>
    %99 = vector.shape_cast %98 : vector<12x16xf32> to vector<12x16x1xf32>
    %cst_51 = arith.constant dense<0.000000e+00> : vector<16x1xf32>
    %100 = vector.multi_reduction <add>, %99, %cst_51 [0] : vector<12x16x1xf32> to vector<16x1xf32>
    %101 = vector.shape_cast %100 : vector<16x1xf32> to vector<1x16x1xf32>
    %102 = arith.mulf %97, %97 : vector<12x16x16xf32>
    %cst_52 = arith.constant dense<0.000000e+00> : vector<12x16xf32>
    %103 = vector.multi_reduction <add>, %102, %cst_52 [2] : vector<12x16x16xf32> to vector<12x16xf32>
    %104 = vector.shape_cast %103 : vector<12x16xf32> to vector<12x16x1xf32>
    %cst_53 = arith.constant dense<0.000000e+00> : vector<16x1xf32>
    %105 = vector.multi_reduction <add>, %104, %cst_53 [0] : vector<12x16x1xf32> to vector<16x1xf32>
    %106 = vector.shape_cast %105 : vector<16x1xf32> to vector<1x16x1xf32>
    %cst_54 = arith.constant 0.00520833349 : f32
    %107 = vector.broadcast %cst_54 : f32 to vector<1x16x1xf32>
    %108 = arith.mulf %101, %107 : vector<1x16x1xf32>
    %cst_55 = arith.constant 0.00520833349 : f32
    %109 = vector.broadcast %cst_55 : f32 to vector<1x16x1xf32>
    %110 = arith.mulf %106, %109 : vector<1x16x1xf32>
    %111 = arith.mulf %108, %108 : vector<1x16x1xf32>
    %112 = arith.subf %110, %111 : vector<1x16x1xf32>
    %cst_56 = arith.constant 0.000000e+00 : f32
    %113 = vector.broadcast %cst_56 : f32 to vector<1x16x1xf32>
    %114 = arith.maximumf %112, %113 : vector<1x16x1xf32>
    %115 = vector.broadcast %108 : vector<1x16x1xf32> to vector<12x16x16xf32>
    %116 = arith.subf %97, %115 : vector<12x16x16xf32>
    %cst_57 = arith.constant 9.99999974E-6 : f32
    %117 = vector.broadcast %cst_57 : f32 to vector<1x16x1xf32>
    %118 = arith.addf %114, %117 : vector<1x16x1xf32>
    %119 = math.rsqrt %118 : vector<1x16x1xf32>
    %120 = vector.broadcast %119 : vector<1x16x1xf32> to vector<12x16x16xf32>
    %121 = arith.mulf %116, %120 : vector<12x16x16xf32>
    %122 = vector.shape_cast %121 : vector<12x16x16xf32> to vector<192x16xf32>
    %123 = arith.truncf %122 : vector<192x16xf32> to vector<192x16xbf16>
    %124 = vector.extract_strided_slice %123 {offsets = [0, 0], sizes = [160, 16], strides = [1, 1]} : vector<192x16xbf16> to vector<160x16xbf16>
    %c0_58 = arith.constant 0 : index
    %c0_59 = arith.constant 0 : index
    %c0_60 = arith.constant 0 : index
    %125 = vector.load %arg7[%c0_58, %c0_59, %c0_60] : memref<3x16x48xbf16, #tpu.memory_space<vmem>>, vector<1x16x48xbf16>
    %126 = vector.shape_cast %125 : vector<1x16x48xbf16> to vector<16x48xbf16>
    %cst_61 = arith.constant dense<0.000000e+00> : vector<160x48xf32>
    %127 = tpu.matmul %124, %126, %cst_61 {dimension_numbers = #tpu.dot_dimension_numbers<[1], [0], [0], [1], [0, 0, 1, 1], [], []>} : vector<160x16xbf16>, vector<16x48xbf16>, vector<160x48xf32> -> vector<160x48xf32>
    %128 = vector.extract_strided_slice %123 {offsets = [16, 0], sizes = [160, 16], strides = [1, 1]} : vector<192x16xbf16> to vector<160x16xbf16>
    %c1_62 = arith.constant 1 : index
    %c0_63 = arith.constant 0 : index
    %c0_64 = arith.constant 0 : index
    %129 = vector.load %arg7[%c1_62, %c0_63, %c0_64] : memref<3x16x48xbf16, #tpu.memory_space<vmem>>, vector<1x16x48xbf16>
    %130 = vector.shape_cast %129 : vector<1x16x48xbf16> to vector<16x48xbf16>
    %cst_65 = arith.constant dense<0.000000e+00> : vector<160x48xf32>
    %131 = tpu.matmul %128, %130, %cst_65 {dimension_numbers = #tpu.dot_dimension_numbers<[1], [0], [0], [1], [0, 0, 1, 1], [], []>} : vector<160x16xbf16>, vector<16x48xbf16>, vector<160x48xf32> -> vector<160x48xf32>
    %132 = arith.addf %127, %131 : vector<160x48xf32>
    %133 = vector.extract_strided_slice %123 {offsets = [32, 0], sizes = [160, 16], strides = [1, 1]} : vector<192x16xbf16> to vector<160x16xbf16>
    %c2_66 = arith.constant 2 : index
    %c0_67 = arith.constant 0 : index
    %c0_68 = arith.constant 0 : index
    %134 = vector.load %arg7[%c2_66, %c0_67, %c0_68] : memref<3x16x48xbf16, #tpu.memory_space<vmem>>, vector<1x16x48xbf16>
    %135 = vector.shape_cast %134 : vector<1x16x48xbf16> to vector<16x48xbf16>
    %cst_69 = arith.constant dense<0.000000e+00> : vector<160x48xf32>
    %136 = tpu.matmul %133, %135, %cst_69 {dimension_numbers = #tpu.dot_dimension_numbers<[1], [0], [0], [1], [0, 0, 1, 1], [], []>} : vector<160x16xbf16>, vector<16x48xbf16>, vector<160x48xf32> -> vector<160x48xf32>
    %137 = arith.addf %132, %136 : vector<160x48xf32>
    %c0_70 = arith.constant 0 : index
    %c0_71 = arith.constant 0 : index
    %138 = vector.load %arg8[%c0_70, %c0_71] : memref<1x48xf32, #tpu.memory_space<vmem>>, vector<1x48xf32>
    %139 = vector.broadcast %138 : vector<1x48xf32> to vector<160x48xf32>
    %140 = arith.addf %137, %139 : vector<160x48xf32>
    %141 = vector.extract_strided_slice %140 {offsets = [0, 0], sizes = [160, 16], strides = [1, 1]} : vector<160x48xf32> to vector<160x16xf32>
    %142 = vector.extract_strided_slice %140 {offsets = [0, 16], sizes = [160, 16], strides = [1, 1]} : vector<160x48xf32> to vector<160x16xf32>
    %143 = vector.extract_strided_slice %140 {offsets = [0, 32], sizes = [160, 16], strides = [1, 1]} : vector<160x48xf32> to vector<160x16xf32>
    %144 = arith.negf %142 : vector<160x16xf32>
    %145 = math.exp %144 : vector<160x16xf32>
    %cst_72 = arith.constant 1.000000e+00 : f32
    %146 = vector.broadcast %cst_72 : f32 to vector<160x16xf32>
    %147 = arith.addf %146, %145 : vector<160x16xf32>
    %148 = arith.divf %146, %147 : vector<160x16xf32>
    %149 = arith.addf %141, %148 : vector<160x16xf32>
    %150 = arith.addf %149, %143 : vector<160x16xf32>
    %cst_73 = arith.constant 0.000000e+00 : f32
    %151 = vector.broadcast %cst_73 : f32 to vector<160x16xf32>
    %152 = arith.maximumf %150, %151 : vector<160x16xf32>
    %153 = arith.truncf %152 : vector<160x16xf32> to vector<160x16xbf16>
    %c0_74 = arith.constant 0 : index
    %c0_75 = arith.constant 0 : index
    %154 = vector.load %arg9[%c0_74, %c0_75] : memref<16x8xbf16, #tpu.memory_space<vmem>>, vector<16x8xbf16>
    %cst_76 = arith.constant dense<0.000000e+00> : vector<160x8xf32>
    %155 = tpu.matmul %153, %154, %cst_76 {dimension_numbers = #tpu.dot_dimension_numbers<[1], [0], [0], [1], [0, 0, 1, 1], [], []>} : vector<160x16xbf16>, vector<16x8xbf16>, vector<160x8xf32> -> vector<160x8xf32>
    %156 = arith.truncf %155 : vector<160x8xf32> to vector<160x8xbf16>
    %c0_77 = arith.constant 0 : index
    %c0_78 = arith.constant 0 : index
    %157 = vector.load %arg1[%c0_77, %c0_78] : memref<16x16xbf16, #tpu.memory_space<vmem>>, vector<16x16xbf16>
    %158 = vector.extract_strided_slice %156 {offsets = [0, 0], sizes = [16, 8], strides = [1, 1]} : vector<160x8xbf16> to vector<16x8xbf16>
    %cst_79 = arith.constant dense<0.000000e+00> : vector<16x8xf32>
    %159 = tpu.matmul %157, %158, %cst_79 {dimension_numbers = #tpu.dot_dimension_numbers<[1], [0], [0], [1], [0, 0, 1, 1], [], []>} : vector<16x16xbf16>, vector<16x8xbf16>, vector<16x8xf32> -> vector<16x8xf32>
    %160 = vector.extract_strided_slice %156 {offsets = [16, 0], sizes = [16, 8], strides = [1, 1]} : vector<160x8xbf16> to vector<16x8xbf16>
    %cst_80 = arith.constant dense<0.000000e+00> : vector<16x8xf32>
    %161 = tpu.matmul %157, %160, %cst_80 {dimension_numbers = #tpu.dot_dimension_numbers<[1], [0], [0], [1], [0, 0, 1, 1], [], []>} : vector<16x16xbf16>, vector<16x8xbf16>, vector<16x8xf32> -> vector<16x8xf32>
    %162 = vector.extract_strided_slice %156 {offsets = [32, 0], sizes = [16, 8], strides = [1, 1]} : vector<160x8xbf16> to vector<16x8xbf16>
    %cst_81 = arith.constant dense<0.000000e+00> : vector<16x8xf32>
    %163 = tpu.matmul %157, %162, %cst_81 {dimension_numbers = #tpu.dot_dimension_numbers<[1], [0], [0], [1], [0, 0, 1, 1], [], []>} : vector<16x16xbf16>, vector<16x8xbf16>, vector<16x8xf32> -> vector<16x8xf32>
    %164 = vector.extract_strided_slice %156 {offsets = [48, 0], sizes = [16, 8], strides = [1, 1]} : vector<160x8xbf16> to vector<16x8xbf16>
    %cst_82 = arith.constant dense<0.000000e+00> : vector<16x8xf32>
    %165 = tpu.matmul %157, %164, %cst_82 {dimension_numbers = #tpu.dot_dimension_numbers<[1], [0], [0], [1], [0, 0, 1, 1], [], []>} : vector<16x16xbf16>, vector<16x8xbf16>, vector<16x8xf32> -> vector<16x8xf32>
    %166 = vector.extract_strided_slice %156 {offsets = [64, 0], sizes = [16, 8], strides = [1, 1]} : vector<160x8xbf16> to vector<16x8xbf16>
    %cst_83 = arith.constant dense<0.000000e+00> : vector<16x8xf32>
    %167 = tpu.matmul %157, %166, %cst_83 {dimension_numbers = #tpu.dot_dimension_numbers<[1], [0], [0], [1], [0, 0, 1, 1], [], []>} : vector<16x16xbf16>, vector<16x8xbf16>, vector<16x8xf32> -> vector<16x8xf32>
    %168 = vector.extract_strided_slice %156 {offsets = [80, 0], sizes = [16, 8], strides = [1, 1]} : vector<160x8xbf16> to vector<16x8xbf16>
    %cst_84 = arith.constant dense<0.000000e+00> : vector<16x8xf32>
    %169 = tpu.matmul %157, %168, %cst_84 {dimension_numbers = #tpu.dot_dimension_numbers<[1], [0], [0], [1], [0, 0, 1, 1], [], []>} : vector<16x16xbf16>, vector<16x8xbf16>, vector<16x8xf32> -> vector<16x8xf32>
    %170 = vector.extract_strided_slice %156 {offsets = [96, 0], sizes = [16, 8], strides = [1, 1]} : vector<160x8xbf16> to vector<16x8xbf16>
    %cst_85 = arith.constant dense<0.000000e+00> : vector<16x8xf32>
    %171 = tpu.matmul %157, %170, %cst_85 {dimension_numbers = #tpu.dot_dimension_numbers<[1], [0], [0], [1], [0, 0, 1, 1], [], []>} : vector<16x16xbf16>, vector<16x8xbf16>, vector<16x8xf32> -> vector<16x8xf32>
    %172 = vector.extract_strided_slice %156 {offsets = [112, 0], sizes = [16, 8], strides = [1, 1]} : vector<160x8xbf16> to vector<16x8xbf16>
    %cst_86 = arith.constant dense<0.000000e+00> : vector<16x8xf32>
    %173 = tpu.matmul %157, %172, %cst_86 {dimension_numbers = #tpu.dot_dimension_numbers<[1], [0], [0], [1], [0, 0, 1, 1], [], []>} : vector<16x16xbf16>, vector<16x8xbf16>, vector<16x8xf32> -> vector<16x8xf32>
    %174 = vector.extract_strided_slice %156 {offsets = [128, 0], sizes = [16, 8], strides = [1, 1]} : vector<160x8xbf16> to vector<16x8xbf16>
    %cst_87 = arith.constant dense<0.000000e+00> : vector<16x8xf32>
    %175 = tpu.matmul %157, %174, %cst_87 {dimension_numbers = #tpu.dot_dimension_numbers<[1], [0], [0], [1], [0, 0, 1, 1], [], []>} : vector<16x16xbf16>, vector<16x8xbf16>, vector<16x8xf32> -> vector<16x8xf32>
    %176 = vector.extract_strided_slice %156 {offsets = [144, 0], sizes = [16, 8], strides = [1, 1]} : vector<160x8xbf16> to vector<16x8xbf16>
    %cst_88 = arith.constant dense<0.000000e+00> : vector<16x8xf32>
    %177 = tpu.matmul %157, %176, %cst_88 {dimension_numbers = #tpu.dot_dimension_numbers<[1], [0], [0], [1], [0, 0, 1, 1], [], []>} : vector<16x16xbf16>, vector<16x8xbf16>, vector<16x8xf32> -> vector<16x8xf32>
    %178 = tpu.concatenate %159, %161, %163, %165, %167, %169, %171, %173, %175, %177 in 0 : vector<16x8xf32>, vector<16x8xf32>, vector<16x8xf32>, vector<16x8xf32>, vector<16x8xf32>, vector<16x8xf32>, vector<16x8xf32>, vector<16x8xf32>, vector<16x8xf32>, vector<16x8xf32> -> vector<160x8xf32>
    %cst_89 = arith.constant 0.000000e+00 : f32
    %179 = vector.broadcast %cst_89 : f32 to vector<160x8xf32>
    %180 = arith.maximumf %178, %179 : vector<160x8xf32>
    %181 = arith.truncf %180 : vector<160x8xf32> to vector<160x8xbf16>
    %182 = vector.extract_strided_slice %181 {offsets = [0, 0], sizes = [128, 8], strides = [1, 1]} : vector<160x8xbf16> to vector<128x8xbf16>
    %c0_90 = arith.constant 0 : index
    %c0_91 = arith.constant 0 : index
    %c0_92 = arith.constant 0 : index
    %183 = vector.load %arg10[%c0_90, %c0_91, %c0_92] : memref<3x8x48xbf16, #tpu.memory_space<vmem>>, vector<1x8x48xbf16>
    %184 = vector.shape_cast %183 : vector<1x8x48xbf16> to vector<8x48xbf16>
    %cst_93 = arith.constant dense<0.000000e+00> : vector<128x48xf32>
    %185 = tpu.matmul %182, %184, %cst_93 {dimension_numbers = #tpu.dot_dimension_numbers<[1], [0], [0], [1], [0, 0, 1, 1], [], []>} : vector<128x8xbf16>, vector<8x48xbf16>, vector<128x48xf32> -> vector<128x48xf32>
    %186 = vector.extract_strided_slice %181 {offsets = [16, 0], sizes = [128, 8], strides = [1, 1]} : vector<160x8xbf16> to vector<128x8xbf16>
    %c1_94 = arith.constant 1 : index
    %c0_95 = arith.constant 0 : index
    %c0_96 = arith.constant 0 : index
    %187 = vector.load %arg10[%c1_94, %c0_95, %c0_96] : memref<3x8x48xbf16, #tpu.memory_space<vmem>>, vector<1x8x48xbf16>
    %188 = vector.shape_cast %187 : vector<1x8x48xbf16> to vector<8x48xbf16>
    %cst_97 = arith.constant dense<0.000000e+00> : vector<128x48xf32>
    %189 = tpu.matmul %186, %188, %cst_97 {dimension_numbers = #tpu.dot_dimension_numbers<[1], [0], [0], [1], [0, 0, 1, 1], [], []>} : vector<128x8xbf16>, vector<8x48xbf16>, vector<128x48xf32> -> vector<128x48xf32>
    %190 = arith.addf %185, %189 : vector<128x48xf32>
    %191 = vector.extract_strided_slice %181 {offsets = [32, 0], sizes = [128, 8], strides = [1, 1]} : vector<160x8xbf16> to vector<128x8xbf16>
    %c2_98 = arith.constant 2 : index
    %c0_99 = arith.constant 0 : index
    %c0_100 = arith.constant 0 : index
    %192 = vector.load %arg10[%c2_98, %c0_99, %c0_100] : memref<3x8x48xbf16, #tpu.memory_space<vmem>>, vector<1x8x48xbf16>
    %193 = vector.shape_cast %192 : vector<1x8x48xbf16> to vector<8x48xbf16>
    %cst_101 = arith.constant dense<0.000000e+00> : vector<128x48xf32>
    %194 = tpu.matmul %191, %193, %cst_101 {dimension_numbers = #tpu.dot_dimension_numbers<[1], [0], [0], [1], [0, 0, 1, 1], [], []>} : vector<128x8xbf16>, vector<8x48xbf16>, vector<128x48xf32> -> vector<128x48xf32>
    %195 = arith.addf %190, %194 : vector<128x48xf32>
    %c0_102 = arith.constant 0 : index
    %c0_103 = arith.constant 0 : index
    %196 = vector.load %arg11[%c0_102, %c0_103] : memref<1x48xf32, #tpu.memory_space<vmem>>, vector<1x48xf32>
    %197 = vector.broadcast %196 : vector<1x48xf32> to vector<128x48xf32>
    %198 = arith.addf %195, %197 : vector<128x48xf32>
    %199 = vector.extract_strided_slice %198 {offsets = [0, 0], sizes = [128, 16], strides = [1, 1]} : vector<128x48xf32> to vector<128x16xf32>
    %200 = vector.extract_strided_slice %198 {offsets = [0, 16], sizes = [128, 16], strides = [1, 1]} : vector<128x48xf32> to vector<128x16xf32>
    %201 = vector.extract_strided_slice %198 {offsets = [0, 32], sizes = [128, 16], strides = [1, 1]} : vector<128x48xf32> to vector<128x16xf32>
    %202 = arith.negf %200 : vector<128x16xf32>
    %203 = math.exp %202 : vector<128x16xf32>
    %cst_104 = arith.constant 1.000000e+00 : f32
    %204 = vector.broadcast %cst_104 : f32 to vector<128x16xf32>
    %205 = arith.addf %204, %203 : vector<128x16xf32>
    %206 = arith.divf %204, %205 : vector<128x16xf32>
    %207 = arith.addf %199, %206 : vector<128x16xf32>
    %208 = arith.addf %207, %201 : vector<128x16xf32>
    %cst_105 = arith.constant 0.000000e+00 : f32
    %209 = vector.broadcast %cst_105 : f32 to vector<128x16xf32>
    %210 = arith.maximumf %208, %209 : vector<128x16xf32>
    %211 = vector.shape_cast %210 : vector<128x16xf32> to vector<8x16x16xf32>
    %cst_106 = arith.constant dense<0.000000e+00> : vector<8x16xf32>
    %212 = vector.multi_reduction <add>, %211, %cst_106 [2] : vector<8x16x16xf32> to vector<8x16xf32>
    %213 = vector.shape_cast %212 : vector<8x16xf32> to vector<8x16x1xf32>
    %cst_107 = arith.constant dense<0.000000e+00> : vector<16x1xf32>
    %214 = vector.multi_reduction <add>, %213, %cst_107 [0] : vector<8x16x1xf32> to vector<16x1xf32>
    %215 = vector.shape_cast %214 : vector<16x1xf32> to vector<1x16x1xf32>
    %216 = arith.mulf %211, %211 : vector<8x16x16xf32>
    %cst_108 = arith.constant dense<0.000000e+00> : vector<8x16xf32>
    %217 = vector.multi_reduction <add>, %216, %cst_108 [2] : vector<8x16x16xf32> to vector<8x16xf32>
    %218 = vector.shape_cast %217 : vector<8x16xf32> to vector<8x16x1xf32>
    %cst_109 = arith.constant dense<0.000000e+00> : vector<16x1xf32>
    %219 = vector.multi_reduction <add>, %218, %cst_109 [0] : vector<8x16x1xf32> to vector<16x1xf32>
    %220 = vector.shape_cast %219 : vector<16x1xf32> to vector<1x16x1xf32>
    %cst_110 = arith.constant 7.812500e-03 : f32
    %221 = vector.broadcast %cst_110 : f32 to vector<1x16x1xf32>
    %222 = arith.mulf %215, %221 : vector<1x16x1xf32>
    %cst_111 = arith.constant 7.812500e-03 : f32
    %223 = vector.broadcast %cst_111 : f32 to vector<1x16x1xf32>
    %224 = arith.mulf %220, %223 : vector<1x16x1xf32>
    %225 = arith.mulf %222, %222 : vector<1x16x1xf32>
    %226 = arith.subf %224, %225 : vector<1x16x1xf32>
    %cst_112 = arith.constant 0.000000e+00 : f32
    %227 = vector.broadcast %cst_112 : f32 to vector<1x16x1xf32>
    %228 = arith.maximumf %226, %227 : vector<1x16x1xf32>
    %229 = vector.broadcast %222 : vector<1x16x1xf32> to vector<8x16x16xf32>
    %230 = arith.subf %211, %229 : vector<8x16x16xf32>
    %cst_113 = arith.constant 9.99999974E-6 : f32
    %231 = vector.broadcast %cst_113 : f32 to vector<1x16x1xf32>
    %232 = arith.addf %228, %231 : vector<1x16x1xf32>
    %233 = math.rsqrt %232 : vector<1x16x1xf32>
    %234 = vector.broadcast %233 : vector<1x16x1xf32> to vector<8x16x16xf32>
    %235 = arith.mulf %230, %234 : vector<8x16x16xf32>
    %236 = vector.shape_cast %235 : vector<8x16x16xf32> to vector<128x16xf32>
    %237 = arith.truncf %236 : vector<128x16xf32> to vector<128x16xbf16>
    %238 = vector.extract_strided_slice %237 {offsets = [0, 0], sizes = [96, 16], strides = [1, 1]} : vector<128x16xbf16> to vector<96x16xbf16>
    %c0_114 = arith.constant 0 : index
    %c0_115 = arith.constant 0 : index
    %c0_116 = arith.constant 0 : index
    %239 = vector.load %arg12[%c0_114, %c0_115, %c0_116] : memref<3x16x48xbf16, #tpu.memory_space<vmem>>, vector<1x16x48xbf16>
    %240 = vector.shape_cast %239 : vector<1x16x48xbf16> to vector<16x48xbf16>
    %cst_117 = arith.constant dense<0.000000e+00> : vector<96x48xf32>
    %241 = tpu.matmul %238, %240, %cst_117 {dimension_numbers = #tpu.dot_dimension_numbers<[1], [0], [0], [1], [0, 0, 1, 1], [], []>} : vector<96x16xbf16>, vector<16x48xbf16>, vector<96x48xf32> -> vector<96x48xf32>
    %242 = vector.extract_strided_slice %237 {offsets = [16, 0], sizes = [96, 16], strides = [1, 1]} : vector<128x16xbf16> to vector<96x16xbf16>
    %c1_118 = arith.constant 1 : index
    %c0_119 = arith.constant 0 : index
    %c0_120 = arith.constant 0 : index
    %243 = vector.load %arg12[%c1_118, %c0_119, %c0_120] : memref<3x16x48xbf16, #tpu.memory_space<vmem>>, vector<1x16x48xbf16>
    %244 = vector.shape_cast %243 : vector<1x16x48xbf16> to vector<16x48xbf16>
    %cst_121 = arith.constant dense<0.000000e+00> : vector<96x48xf32>
    %245 = tpu.matmul %242, %244, %cst_121 {dimension_numbers = #tpu.dot_dimension_numbers<[1], [0], [0], [1], [0, 0, 1, 1], [], []>} : vector<96x16xbf16>, vector<16x48xbf16>, vector<96x48xf32> -> vector<96x48xf32>
    %246 = arith.addf %241, %245 : vector<96x48xf32>
    %247 = vector.extract_strided_slice %237 {offsets = [32, 0], sizes = [96, 16], strides = [1, 1]} : vector<128x16xbf16> to vector<96x16xbf16>
    %c2_122 = arith.constant 2 : index
    %c0_123 = arith.constant 0 : index
    %c0_124 = arith.constant 0 : index
    %248 = vector.load %arg12[%c2_122, %c0_123, %c0_124] : memref<3x16x48xbf16, #tpu.memory_space<vmem>>, vector<1x16x48xbf16>
    %249 = vector.shape_cast %248 : vector<1x16x48xbf16> to vector<16x48xbf16>
    %cst_125 = arith.constant dense<0.000000e+00> : vector<96x48xf32>
    %250 = tpu.matmul %247, %249, %cst_125 {dimension_numbers = #tpu.dot_dimension_numbers<[1], [0], [0], [1], [0, 0, 1, 1], [], []>} : vector<96x16xbf16>, vector<16x48xbf16>, vector<96x48xf32> -> vector<96x48xf32>
    %251 = arith.addf %246, %250 : vector<96x48xf32>
    %c0_126 = arith.constant 0 : index
    %c0_127 = arith.constant 0 : index
    %252 = vector.load %arg13[%c0_126, %c0_127] : memref<1x48xf32, #tpu.memory_space<vmem>>, vector<1x48xf32>
    %253 = vector.broadcast %252 : vector<1x48xf32> to vector<96x48xf32>
    %254 = arith.addf %251, %253 : vector<96x48xf32>
    %255 = vector.extract_strided_slice %254 {offsets = [0, 0], sizes = [96, 16], strides = [1, 1]} : vector<96x48xf32> to vector<96x16xf32>
    %256 = vector.extract_strided_slice %254 {offsets = [0, 16], sizes = [96, 16], strides = [1, 1]} : vector<96x48xf32> to vector<96x16xf32>
    %257 = vector.extract_strided_slice %254 {offsets = [0, 32], sizes = [96, 16], strides = [1, 1]} : vector<96x48xf32> to vector<96x16xf32>
    %258 = arith.negf %256 : vector<96x16xf32>
    %259 = math.exp %258 : vector<96x16xf32>
    %cst_128 = arith.constant 1.000000e+00 : f32
    %260 = vector.broadcast %cst_128 : f32 to vector<96x16xf32>
    %261 = arith.addf %260, %259 : vector<96x16xf32>
    %262 = arith.divf %260, %261 : vector<96x16xf32>
    %263 = arith.addf %255, %262 : vector<96x16xf32>
    %264 = arith.addf %263, %257 : vector<96x16xf32>
    %cst_129 = arith.constant 0.000000e+00 : f32
    %265 = vector.broadcast %cst_129 : f32 to vector<96x16xf32>
    %266 = arith.maximumf %264, %265 : vector<96x16xf32>
    %267 = arith.truncf %266 : vector<96x16xf32> to vector<96x16xbf16>
    %c0_130 = arith.constant 0 : index
    %c0_131 = arith.constant 0 : index
    %268 = vector.load %arg14[%c0_130, %c0_131] : memref<16x48xbf16, #tpu.memory_space<vmem>>, vector<16x48xbf16>
    %cst_132 = arith.constant dense<0.000000e+00> : vector<96x48xf32>
    %269 = tpu.matmul %267, %268, %cst_132 {dimension_numbers = #tpu.dot_dimension_numbers<[1], [0], [0], [1], [0, 0, 1, 1], [], []>} : vector<96x16xbf16>, vector<16x48xbf16>, vector<96x48xf32> -> vector<96x48xf32>
    %c0_133 = arith.constant 0 : index
    %c0_134 = arith.constant 0 : index
    %270 = vector.load %arg15[%c0_133, %c0_134] : memref<1x48xf32, #tpu.memory_space<vmem>>, vector<1x48xf32>
    %271 = vector.broadcast %270 : vector<1x48xf32> to vector<96x48xf32>
    %272 = arith.addf %269, %271 : vector<96x48xf32>
    %c0_135 = arith.constant 0 : index
    %c0_136 = arith.constant 0 : index
    %273 = vector.load %arg16[%c0_135, %c0_136] : memref<16x48xbf16, #tpu.memory_space<vmem>>, vector<16x48xbf16>
    %c0_137 = arith.constant 0 : index
    %c0_138 = arith.constant 0 : index
    %274 = vector.load %arg17[%c0_137, %c0_138] : memref<1x48xf32, #tpu.memory_space<vmem>>, vector<1x48xf32>
    %cst_139 = arith.constant 0.000000e+00 : f32
    %275 = vector.broadcast %cst_139 : f32 to vector<16x16xf32>
    %276 = vector.extract_strided_slice %272 {offsets = [0, 0], sizes = [16, 48], strides = [1, 1]} : vector<96x48xf32> to vector<16x48xf32>
    %277 = arith.truncf %275 : vector<16x16xf32> to vector<16x16xbf16>
    %cst_140 = arith.constant dense<0.000000e+00> : vector<16x48xf32>
    %278 = tpu.matmul %277, %273, %cst_140 {dimension_numbers = #tpu.dot_dimension_numbers<[1], [0], [0], [1], [0, 0, 1, 1], [], []>} : vector<16x16xbf16>, vector<16x48xbf16>, vector<16x48xf32> -> vector<16x48xf32>
    %279 = vector.broadcast %274 : vector<1x48xf32> to vector<16x48xf32>
    %280 = arith.addf %278, %279 : vector<16x48xf32>
    %281 = vector.extract_strided_slice %276 {offsets = [0, 0], sizes = [16, 16], strides = [1, 1]} : vector<16x48xf32> to vector<16x16xf32>
    %282 = vector.extract_strided_slice %280 {offsets = [0, 0], sizes = [16, 16], strides = [1, 1]} : vector<16x48xf32> to vector<16x16xf32>
    %283 = arith.addf %281, %282 : vector<16x16xf32>
    %284 = arith.negf %283 : vector<16x16xf32>
    %285 = math.exp %284 : vector<16x16xf32>
    %cst_141 = arith.constant 1.000000e+00 : f32
    %286 = vector.broadcast %cst_141 : f32 to vector<16x16xf32>
    %287 = arith.addf %286, %285 : vector<16x16xf32>
    %288 = arith.divf %286, %287 : vector<16x16xf32>
    %289 = vector.extract_strided_slice %276 {offsets = [0, 16], sizes = [16, 16], strides = [1, 1]} : vector<16x48xf32> to vector<16x16xf32>
    %290 = vector.extract_strided_slice %280 {offsets = [0, 16], sizes = [16, 16], strides = [1, 1]} : vector<16x48xf32> to vector<16x16xf32>
    %291 = arith.addf %289, %290 : vector<16x16xf32>
    %292 = arith.negf %291 : vector<16x16xf32>
    %293 = math.exp %292 : vector<16x16xf32>
    %cst_142 = arith.constant 1.000000e+00 : f32
    %294 = vector.broadcast %cst_142 : f32 to vector<16x16xf32>
    %295 = arith.addf %294, %293 : vector<16x16xf32>
    %296 = arith.divf %294, %295 : vector<16x16xf32>
    %297 = vector.extract_strided_slice %276 {offsets = [0, 32], sizes = [16, 16], strides = [1, 1]} : vector<16x48xf32> to vector<16x16xf32>
    %298 = vector.extract_strided_slice %280 {offsets = [0, 32], sizes = [16, 16], strides = [1, 1]} : vector<16x48xf32> to vector<16x16xf32>
    %299 = arith.mulf %288, %298 : vector<16x16xf32>
    %300 = arith.addf %297, %299 : vector<16x16xf32>
    %301 = math.tanh %300 : vector<16x16xf32>
    %cst_143 = arith.constant 1.000000e+00 : f32
    %302 = vector.broadcast %cst_143 : f32 to vector<16x16xf32>
    %303 = arith.subf %302, %296 : vector<16x16xf32>
    %304 = arith.mulf %303, %301 : vector<16x16xf32>
    %305 = arith.mulf %296, %275 : vector<16x16xf32>
    %306 = arith.addf %304, %305 : vector<16x16xf32>
    %307 = vector.extract_strided_slice %272 {offsets = [16, 0], sizes = [16, 48], strides = [1, 1]} : vector<96x48xf32> to vector<16x48xf32>
    %308 = arith.truncf %306 : vector<16x16xf32> to vector<16x16xbf16>
    %cst_144 = arith.constant dense<0.000000e+00> : vector<16x48xf32>
    %309 = tpu.matmul %308, %273, %cst_144 {dimension_numbers = #tpu.dot_dimension_numbers<[1], [0], [0], [1], [0, 0, 1, 1], [], []>} : vector<16x16xbf16>, vector<16x48xbf16>, vector<16x48xf32> -> vector<16x48xf32>
    %310 = vector.broadcast %274 : vector<1x48xf32> to vector<16x48xf32>
    %311 = arith.addf %309, %310 : vector<16x48xf32>
    %312 = vector.extract_strided_slice %307 {offsets = [0, 0], sizes = [16, 16], strides = [1, 1]} : vector<16x48xf32> to vector<16x16xf32>
    %313 = vector.extract_strided_slice %311 {offsets = [0, 0], sizes = [16, 16], strides = [1, 1]} : vector<16x48xf32> to vector<16x16xf32>
    %314 = arith.addf %312, %313 : vector<16x16xf32>
    %315 = arith.negf %314 : vector<16x16xf32>
    %316 = math.exp %315 : vector<16x16xf32>
    %cst_145 = arith.constant 1.000000e+00 : f32
    %317 = vector.broadcast %cst_145 : f32 to vector<16x16xf32>
    %318 = arith.addf %317, %316 : vector<16x16xf32>
    %319 = arith.divf %317, %318 : vector<16x16xf32>
    %320 = vector.extract_strided_slice %307 {offsets = [0, 16], sizes = [16, 16], strides = [1, 1]} : vector<16x48xf32> to vector<16x16xf32>
    %321 = vector.extract_strided_slice %311 {offsets = [0, 16], sizes = [16, 16], strides = [1, 1]} : vector<16x48xf32> to vector<16x16xf32>
    %322 = arith.addf %320, %321 : vector<16x16xf32>
    %323 = arith.negf %322 : vector<16x16xf32>
    %324 = math.exp %323 : vector<16x16xf32>
    %cst_146 = arith.constant 1.000000e+00 : f32
    %325 = vector.broadcast %cst_146 : f32 to vector<16x16xf32>
    %326 = arith.addf %325, %324 : vector<16x16xf32>
    %327 = arith.divf %325, %326 : vector<16x16xf32>
    %328 = vector.extract_strided_slice %307 {offsets = [0, 32], sizes = [16, 16], strides = [1, 1]} : vector<16x48xf32> to vector<16x16xf32>
    %329 = vector.extract_strided_slice %311 {offsets = [0, 32], sizes = [16, 16], strides = [1, 1]} : vector<16x48xf32> to vector<16x16xf32>
    %330 = arith.mulf %319, %329 : vector<16x16xf32>
    %331 = arith.addf %328, %330 : vector<16x16xf32>
    %332 = math.tanh %331 : vector<16x16xf32>
    %cst_147 = arith.constant 1.000000e+00 : f32
    %333 = vector.broadcast %cst_147 : f32 to vector<16x16xf32>
    %334 = arith.subf %333, %327 : vector<16x16xf32>
    %335 = arith.mulf %334, %332 : vector<16x16xf32>
    %336 = arith.mulf %327, %306 : vector<16x16xf32>
    %337 = arith.addf %335, %336 : vector<16x16xf32>
    %338 = vector.extract_strided_slice %272 {offsets = [32, 0], sizes = [16, 48], strides = [1, 1]} : vector<96x48xf32> to vector<16x48xf32>
    %339 = arith.truncf %337 : vector<16x16xf32> to vector<16x16xbf16>
    %cst_148 = arith.constant dense<0.000000e+00> : vector<16x48xf32>
    %340 = tpu.matmul %339, %273, %cst_148 {dimension_numbers = #tpu.dot_dimension_numbers<[1], [0], [0], [1], [0, 0, 1, 1], [], []>} : vector<16x16xbf16>, vector<16x48xbf16>, vector<16x48xf32> -> vector<16x48xf32>
    %341 = vector.broadcast %274 : vector<1x48xf32> to vector<16x48xf32>
    %342 = arith.addf %340, %341 : vector<16x48xf32>
    %343 = vector.extract_strided_slice %338 {offsets = [0, 0], sizes = [16, 16], strides = [1, 1]} : vector<16x48xf32> to vector<16x16xf32>
    %344 = vector.extract_strided_slice %342 {offsets = [0, 0], sizes = [16, 16], strides = [1, 1]} : vector<16x48xf32> to vector<16x16xf32>
    %345 = arith.addf %343, %344 : vector<16x16xf32>
    %346 = arith.negf %345 : vector<16x16xf32>
    %347 = math.exp %346 : vector<16x16xf32>
    %cst_149 = arith.constant 1.000000e+00 : f32
    %348 = vector.broadcast %cst_149 : f32 to vector<16x16xf32>
    %349 = arith.addf %348, %347 : vector<16x16xf32>
    %350 = arith.divf %348, %349 : vector<16x16xf32>
    %351 = vector.extract_strided_slice %338 {offsets = [0, 16], sizes = [16, 16], strides = [1, 1]} : vector<16x48xf32> to vector<16x16xf32>
    %352 = vector.extract_strided_slice %342 {offsets = [0, 16], sizes = [16, 16], strides = [1, 1]} : vector<16x48xf32> to vector<16x16xf32>
    %353 = arith.addf %351, %352 : vector<16x16xf32>
    %354 = arith.negf %353 : vector<16x16xf32>
    %355 = math.exp %354 : vector<16x16xf32>
    %cst_150 = arith.constant 1.000000e+00 : f32
    %356 = vector.broadcast %cst_150 : f32 to vector<16x16xf32>
    %357 = arith.addf %356, %355 : vector<16x16xf32>
    %358 = arith.divf %356, %357 : vector<16x16xf32>
    %359 = vector.extract_strided_slice %338 {offsets = [0, 32], sizes = [16, 16], strides = [1, 1]} : vector<16x48xf32> to vector<16x16xf32>
    %360 = vector.extract_strided_slice %342 {offsets = [0, 32], sizes = [16, 16], strides = [1, 1]} : vector<16x48xf32> to vector<16x16xf32>
    %361 = arith.mulf %350, %360 : vector<16x16xf32>
    %362 = arith.addf %359, %361 : vector<16x16xf32>
    %363 = math.tanh %362 : vector<16x16xf32>
    %cst_151 = arith.constant 1.000000e+00 : f32
    %364 = vector.broadcast %cst_151 : f32 to vector<16x16xf32>
    %365 = arith.subf %364, %358 : vector<16x16xf32>
    %366 = arith.mulf %365, %363 : vector<16x16xf32>
    %367 = arith.mulf %358, %337 : vector<16x16xf32>
    %368 = arith.addf %366, %367 : vector<16x16xf32>
    %369 = vector.extract_strided_slice %272 {offsets = [48, 0], sizes = [16, 48], strides = [1, 1]} : vector<96x48xf32> to vector<16x48xf32>
    %370 = arith.truncf %368 : vector<16x16xf32> to vector<16x16xbf16>
    %cst_152 = arith.constant dense<0.000000e+00> : vector<16x48xf32>
    %371 = tpu.matmul %370, %273, %cst_152 {dimension_numbers = #tpu.dot_dimension_numbers<[1], [0], [0], [1], [0, 0, 1, 1], [], []>} : vector<16x16xbf16>, vector<16x48xbf16>, vector<16x48xf32> -> vector<16x48xf32>
    %372 = vector.broadcast %274 : vector<1x48xf32> to vector<16x48xf32>
    %373 = arith.addf %371, %372 : vector<16x48xf32>
    %374 = vector.extract_strided_slice %369 {offsets = [0, 0], sizes = [16, 16], strides = [1, 1]} : vector<16x48xf32> to vector<16x16xf32>
    %375 = vector.extract_strided_slice %373 {offsets = [0, 0], sizes = [16, 16], strides = [1, 1]} : vector<16x48xf32> to vector<16x16xf32>
    %376 = arith.addf %374, %375 : vector<16x16xf32>
    %377 = arith.negf %376 : vector<16x16xf32>
    %378 = math.exp %377 : vector<16x16xf32>
    %cst_153 = arith.constant 1.000000e+00 : f32
    %379 = vector.broadcast %cst_153 : f32 to vector<16x16xf32>
    %380 = arith.addf %379, %378 : vector<16x16xf32>
    %381 = arith.divf %379, %380 : vector<16x16xf32>
    %382 = vector.extract_strided_slice %369 {offsets = [0, 16], sizes = [16, 16], strides = [1, 1]} : vector<16x48xf32> to vector<16x16xf32>
    %383 = vector.extract_strided_slice %373 {offsets = [0, 16], sizes = [16, 16], strides = [1, 1]} : vector<16x48xf32> to vector<16x16xf32>
    %384 = arith.addf %382, %383 : vector<16x16xf32>
    %385 = arith.negf %384 : vector<16x16xf32>
    %386 = math.exp %385 : vector<16x16xf32>
    %cst_154 = arith.constant 1.000000e+00 : f32
    %387 = vector.broadcast %cst_154 : f32 to vector<16x16xf32>
    %388 = arith.addf %387, %386 : vector<16x16xf32>
    %389 = arith.divf %387, %388 : vector<16x16xf32>
    %390 = vector.extract_strided_slice %369 {offsets = [0, 32], sizes = [16, 16], strides = [1, 1]} : vector<16x48xf32> to vector<16x16xf32>
    %391 = vector.extract_strided_slice %373 {offsets = [0, 32], sizes = [16, 16], strides = [1, 1]} : vector<16x48xf32> to vector<16x16xf32>
    %392 = arith.mulf %381, %391 : vector<16x16xf32>
    %393 = arith.addf %390, %392 : vector<16x16xf32>
    %394 = math.tanh %393 : vector<16x16xf32>
    %cst_155 = arith.constant 1.000000e+00 : f32
    %395 = vector.broadcast %cst_155 : f32 to vector<16x16xf32>
    %396 = arith.subf %395, %389 : vector<16x16xf32>
    %397 = arith.mulf %396, %394 : vector<16x16xf32>
    %398 = arith.mulf %389, %368 : vector<16x16xf32>
    %399 = arith.addf %397, %398 : vector<16x16xf32>
    %400 = vector.extract_strided_slice %272 {offsets = [64, 0], sizes = [16, 48], strides = [1, 1]} : vector<96x48xf32> to vector<16x48xf32>
    %401 = arith.truncf %399 : vector<16x16xf32> to vector<16x16xbf16>
    %cst_156 = arith.constant dense<0.000000e+00> : vector<16x48xf32>
    %402 = tpu.matmul %401, %273, %cst_156 {dimension_numbers = #tpu.dot_dimension_numbers<[1], [0], [0], [1], [0, 0, 1, 1], [], []>} : vector<16x16xbf16>, vector<16x48xbf16>, vector<16x48xf32> -> vector<16x48xf32>
    %403 = vector.broadcast %274 : vector<1x48xf32> to vector<16x48xf32>
    %404 = arith.addf %402, %403 : vector<16x48xf32>
    %405 = vector.extract_strided_slice %400 {offsets = [0, 0], sizes = [16, 16], strides = [1, 1]} : vector<16x48xf32> to vector<16x16xf32>
    %406 = vector.extract_strided_slice %404 {offsets = [0, 0], sizes = [16, 16], strides = [1, 1]} : vector<16x48xf32> to vector<16x16xf32>
    %407 = arith.addf %405, %406 : vector<16x16xf32>
    %408 = arith.negf %407 : vector<16x16xf32>
    %409 = math.exp %408 : vector<16x16xf32>
    %cst_157 = arith.constant 1.000000e+00 : f32
    %410 = vector.broadcast %cst_157 : f32 to vector<16x16xf32>
    %411 = arith.addf %410, %409 : vector<16x16xf32>
    %412 = arith.divf %410, %411 : vector<16x16xf32>
    %413 = vector.extract_strided_slice %400 {offsets = [0, 16], sizes = [16, 16], strides = [1, 1]} : vector<16x48xf32> to vector<16x16xf32>
    %414 = vector.extract_strided_slice %404 {offsets = [0, 16], sizes = [16, 16], strides = [1, 1]} : vector<16x48xf32> to vector<16x16xf32>
    %415 = arith.addf %413, %414 : vector<16x16xf32>
    %416 = arith.negf %415 : vector<16x16xf32>
    %417 = math.exp %416 : vector<16x16xf32>
    %cst_158 = arith.constant 1.000000e+00 : f32
    %418 = vector.broadcast %cst_158 : f32 to vector<16x16xf32>
    %419 = arith.addf %418, %417 : vector<16x16xf32>
    %420 = arith.divf %418, %419 : vector<16x16xf32>
    %421 = vector.extract_strided_slice %400 {offsets = [0, 32], sizes = [16, 16], strides = [1, 1]} : vector<16x48xf32> to vector<16x16xf32>
    %422 = vector.extract_strided_slice %404 {offsets = [0, 32], sizes = [16, 16], strides = [1, 1]} : vector<16x48xf32> to vector<16x16xf32>
    %423 = arith.mulf %412, %422 : vector<16x16xf32>
    %424 = arith.addf %421, %423 : vector<16x16xf32>
    %425 = math.tanh %424 : vector<16x16xf32>
    %cst_159 = arith.constant 1.000000e+00 : f32
    %426 = vector.broadcast %cst_159 : f32 to vector<16x16xf32>
    %427 = arith.subf %426, %420 : vector<16x16xf32>
    %428 = arith.mulf %427, %425 : vector<16x16xf32>
    %429 = arith.mulf %420, %399 : vector<16x16xf32>
    %430 = arith.addf %428, %429 : vector<16x16xf32>
    %431 = vector.extract_strided_slice %272 {offsets = [80, 0], sizes = [16, 48], strides = [1, 1]} : vector<96x48xf32> to vector<16x48xf32>
    %432 = arith.truncf %430 : vector<16x16xf32> to vector<16x16xbf16>
    %cst_160 = arith.constant dense<0.000000e+00> : vector<16x48xf32>
    %433 = tpu.matmul %432, %273, %cst_160 {dimension_numbers = #tpu.dot_dimension_numbers<[1], [0], [0], [1], [0, 0, 1, 1], [], []>} : vector<16x16xbf16>, vector<16x48xbf16>, vector<16x48xf32> -> vector<16x48xf32>
    %434 = vector.broadcast %274 : vector<1x48xf32> to vector<16x48xf32>
    %435 = arith.addf %433, %434 : vector<16x48xf32>
    %436 = vector.extract_strided_slice %431 {offsets = [0, 0], sizes = [16, 16], strides = [1, 1]} : vector<16x48xf32> to vector<16x16xf32>
    %437 = vector.extract_strided_slice %435 {offsets = [0, 0], sizes = [16, 16], strides = [1, 1]} : vector<16x48xf32> to vector<16x16xf32>
    %438 = arith.addf %436, %437 : vector<16x16xf32>
    %439 = arith.negf %438 : vector<16x16xf32>
    %440 = math.exp %439 : vector<16x16xf32>
    %cst_161 = arith.constant 1.000000e+00 : f32
    %441 = vector.broadcast %cst_161 : f32 to vector<16x16xf32>
    %442 = arith.addf %441, %440 : vector<16x16xf32>
    %443 = arith.divf %441, %442 : vector<16x16xf32>
    %444 = vector.extract_strided_slice %431 {offsets = [0, 16], sizes = [16, 16], strides = [1, 1]} : vector<16x48xf32> to vector<16x16xf32>
    %445 = vector.extract_strided_slice %435 {offsets = [0, 16], sizes = [16, 16], strides = [1, 1]} : vector<16x48xf32> to vector<16x16xf32>
    %446 = arith.addf %444, %445 : vector<16x16xf32>
    %447 = arith.negf %446 : vector<16x16xf32>
    %448 = math.exp %447 : vector<16x16xf32>
    %cst_162 = arith.constant 1.000000e+00 : f32
    %449 = vector.broadcast %cst_162 : f32 to vector<16x16xf32>
    %450 = arith.addf %449, %448 : vector<16x16xf32>
    %451 = arith.divf %449, %450 : vector<16x16xf32>
    %452 = vector.extract_strided_slice %431 {offsets = [0, 32], sizes = [16, 16], strides = [1, 1]} : vector<16x48xf32> to vector<16x16xf32>
    %453 = vector.extract_strided_slice %435 {offsets = [0, 32], sizes = [16, 16], strides = [1, 1]} : vector<16x48xf32> to vector<16x16xf32>
    %454 = arith.mulf %443, %453 : vector<16x16xf32>
    %455 = arith.addf %452, %454 : vector<16x16xf32>
    %456 = math.tanh %455 : vector<16x16xf32>
    %cst_163 = arith.constant 1.000000e+00 : f32
    %457 = vector.broadcast %cst_163 : f32 to vector<16x16xf32>
    %458 = arith.subf %457, %451 : vector<16x16xf32>
    %459 = arith.mulf %458, %456 : vector<16x16xf32>
    %460 = arith.mulf %451, %430 : vector<16x16xf32>
    %461 = arith.addf %459, %460 : vector<16x16xf32>
    %462 = tpu.concatenate %306, %337, %368, %399, %430, %461 in 0 : vector<16x16xf32>, vector<16x16xf32>, vector<16x16xf32>, vector<16x16xf32>, vector<16x16xf32>, vector<16x16xf32> -> vector<96x16xf32>
    %c0_164 = arith.constant 0 : index
    %c0_165 = arith.constant 0 : index
    %463 = vector.load %arg18[%c0_164, %c0_165] : memref<96x16xf32, #tpu.memory_space<vmem>>, vector<96x16xf32>
    tpu.vector_store %arg18[%c0_164, %c0_165], %462 {strides = array<i32>} : memref<96x16xf32, #tpu.memory_space<vmem>>, vector<96x16xf32>,
    %c0_166 = arith.constant 0 : index
    %c0_167 = arith.constant 0 : index
    %464 = vector.load %arg19[%c0_166, %c0_167] : memref<16x16xf32, #tpu.memory_space<vmem>>, vector<16x16xf32>
    tpu.vector_store %arg19[%c0_166, %c0_167], %461 {strides = array<i32>} : memref<16x16xf32, #tpu.memory_space<vmem>>, vector<16x16xf32>,
    return
  }
}

</mosaic_0001>

<llo_original>
// kernel: transf_stgcn3_forward.1
$region0: #{transf_stgcn3_forward.1}
  #allocation0 [shape = 'u32[]', space=smem, size = 0x4, offset = 0x4, fixed_abs, tag = 'smem constant byte address 0x4 - core index']
  #allocation1 [shape = 'u32[144,128]{1,0:T(1,128)}', space=vmem, size = 0x12000, scoped, tag = 'internal scratch']
  %s0 = inlined_call_operand.vmem [shape: f32[256,32], index: 0, kind: input, shape index: {}]
  %s1 = inlined_call_operand.vmem [shape: bf16[16,16], index: 1, kind: input, shape index: {}]
  %s2 = inlined_call_operand.vmem [shape: bf16[3,32,48], index: 2, kind: input, shape index: {}]
  %s3 = inlined_call_operand.vmem [shape: f32[1,48], index: 3, kind: input, shape index: {}]
  %s4 = inlined_call_operand.vmem [shape: bf16[16,8], index: 4, kind: input, shape index: {}]
  %s5 = inlined_call_operand.vmem [shape: bf16[3,8,48], index: 5, kind: input, shape index: {}]
  %s6 = inlined_call_operand.vmem [shape: f32[1,48], index: 6, kind: input, shape index: {}]
  %s7 = inlined_call_operand.vmem [shape: bf16[3,16,48], index: 7, kind: input, shape index: {}]
  %s8 = inlined_call_operand.vmem [shape: f32[1,48], index: 8, kind: input, shape index: {}]
  %s9 = inlined_call_operand.vmem [shape: bf16[16,8], index: 9, kind: input, shape index: {}]
  %s10 = inlined_call_operand.vmem [shape: bf16[3,8,48], index: 10, kind: input, shape index: {}]
  %s11 = inlined_call_operand.vmem [shape: f32[1,48], index: 11, kind: input, shape index: {}]
  %s12 = inlined_call_operand.vmem [shape: bf16[3,16,48], index: 12, kind: input, shape index: {}]
  %s13 = inlined_call_operand.vmem [shape: f32[1,48], index: 13, kind: input, shape index: {}]
  %s14 = inlined_call_operand.vmem [shape: bf16[16,48], index: 14, kind: input, shape index: {}]
  %s15 = inlined_call_operand.vmem [shape: f32[1,48], index: 15, kind: input, shape index: {}]
  %s16 = inlined_call_operand.vmem [shape: bf16[16,48], index: 16, kind: input, shape index: {}]
  %s17 = inlined_call_operand.vmem [shape: f32[1,48], index: 17, kind: input, shape index: {}]
  %s18 = inlined_call_operand.vmem [shape: f32[96,16], index: 18, kind: output, shape index: {0}]
  %s19 = inlined_call_operand.vmem [shape: f32[16,16], index: 19, kind: output, shape index: {1}]
  %20 = xla_tuple %s18, %s19
  %s21 = sld [smem:[#allocation0]]
  $region90: #{transf_stgcn3_forward.1} parent=0
    _
  %s23 = ssub.s32 1, %s21
  %s24 = scalar_select 0, %s23, %s21
  // Predicated region
  $region2: #{transf_stgcn3_forward.1} parent=0 // pred_check
    _
  $region3: #{transf_stgcn3_forward.1} parent=0 // pred_check_branch
    %26 = sbr.rel (0) target = $region5
  $region4: #{transf_stgcn3_forward.1} parent=0 // pred_region
    _
  $region5: #{transf_stgcn3_forward.1} parent=0 // pred_fallthru
    _
  // Predicated region
  $region6: #{transf_stgcn3_forward.1} parent=0 // pred_check
    _
  $region7: #{transf_stgcn3_forward.1} parent=0 // pred_check_branch
    %28 = sbr.rel (0) target = $region9
  $region8: #{transf_stgcn3_forward.1} parent=0 // pred_region
    _
  $region9: #{transf_stgcn3_forward.1} parent=0 // pred_fallthru
    _
  // Predicated region
  $region10: #{transf_stgcn3_forward.1} parent=0 // pred_check
    _
  $region11: #{transf_stgcn3_forward.1} parent=0 // pred_check_branch
    %30 = sbr.rel (0) target = $region13
  $region12: #{transf_stgcn3_forward.1} parent=0 // pred_region
    _
  $region13: #{transf_stgcn3_forward.1} parent=0 // pred_fallthru
    _
  // Predicated region
  $region14: #{transf_stgcn3_forward.1} parent=0 // pred_check
    _
  $region15: #{transf_stgcn3_forward.1} parent=0 // pred_check_branch
    %32 = sbr.rel (0) target = $region17
  $region16: #{transf_stgcn3_forward.1} parent=0 // pred_region
    _
  $region17: #{transf_stgcn3_forward.1} parent=0 // pred_fallthru
    _
  // Predicated region
  $region18: #{transf_stgcn3_forward.1} parent=0 // pred_check
    _
  $region19: #{transf_stgcn3_forward.1} parent=0 // pred_check_branch
    %34 = sbr.rel (0) target = $region21
  $region20: #{transf_stgcn3_forward.1} parent=0 // pred_region
    _
  $region21: #{transf_stgcn3_forward.1} parent=0 // pred_fallthru
    _
  // Predicated region
  $region22: #{transf_stgcn3_forward.1} parent=0 // pred_check
    _
  $region23: #{transf_stgcn3_forward.1} parent=0 // pred_check_branch
    %36 = sbr.rel (0) target = $region25
  $region24: #{transf_stgcn3_forward.1} parent=0 // pred_region
    _
  $region25: #{transf_stgcn3_forward.1} parent=0 // pred_fallthru
    _
  // Predicated region
  $region26: #{transf_stgcn3_forward.1} parent=0 // pred_check
    _
  $region27: #{transf_stgcn3_forward.1} parent=0 // pred_check_branch
    %38 = sbr.rel (0) target = $region29
  $region28: #{transf_stgcn3_forward.1} parent=0 // pred_region
    _
  $region29: #{transf_stgcn3_forward.1} parent=0 // pred_fallthru
    _
  // Predicated region
  $region30: #{transf_stgcn3_forward.1} parent=0 // pred_check
    _
  $region31: #{transf_stgcn3_forward.1} parent=0 // pred_check_branch
    %40 = sbr.rel (0) target = $region33
  $region32: #{transf_stgcn3_forward.1} parent=0 // pred_region
    _
  $region33: #{transf_stgcn3_forward.1} parent=0 // pred_fallthru
    _
  // Predicated region
  $region34: #{transf_stgcn3_forward.1} parent=0 // pred_check
    _
  $region35: #{transf_stgcn3_forward.1} parent=0 // pred_check_branch
    %42 = sbr.rel (0) target = $region37
  $region36: #{transf_stgcn3_forward.1} parent=0 // pred_region
    _
  $region37: #{transf_stgcn3_forward.1} parent=0 // pred_fallthru
    _
  // Predicated region
  $region38: #{transf_stgcn3_forward.1} parent=0 // pred_check
    _
  $region39: #{transf_stgcn3_forward.1} parent=0 // pred_check_branch
    %44 = sbr.rel (0) target = $region41
  $region40: #{transf_stgcn3_forward.1} parent=0 // pred_region
    _
  $region41: #{transf_stgcn3_forward.1} parent=0 // pred_fallthru
    _
  // Predicated region
  $region42: #{transf_stgcn3_forward.1} parent=0 // pred_check
    _
  $region43: #{transf_stgcn3_forward.1} parent=0 // pred_check_branch
    %46 = sbr.rel (0) target = $region45
  $region44: #{transf_stgcn3_forward.1} parent=0 // pred_region
    _
  $region45: #{transf_stgcn3_forward.1} parent=0 // pred_fallthru
    _
  // Predicated region
  $region46: #{transf_stgcn3_forward.1} parent=0 // pred_check
    _
  $region47: #{transf_stgcn3_forward.1} parent=0 // pred_check_branch
    %48 = sbr.rel (0) target = $region49
  $region48: #{transf_stgcn3_forward.1} parent=0 // pred_region
    _
  $region49: #{transf_stgcn3_forward.1} parent=0 // pred_fallthru
    _
  // Predicated region
  $region50: #{transf_stgcn3_forward.1} parent=0 // pred_check
    _
  $region51: #{transf_stgcn3_forward.1} parent=0 // pred_check_branch
    %50 = sbr.rel (0) target = $region53
  $region52: #{transf_stgcn3_forward.1} parent=0 // pred_region
    _
  $region53: #{transf_stgcn3_forward.1} parent=0 // pred_fallthru
    _
  // Predicated region
  $region54: #{transf_stgcn3_forward.1} parent=0 // pred_check
    _
  $region55: #{transf_stgcn3_forward.1} parent=0 // pred_check_branch
    %52 = sbr.rel (0) target = $region57
  $region56: #{transf_stgcn3_forward.1} parent=0 // pred_region
    _
  $region57: #{transf_stgcn3_forward.1} parent=0 // pred_fallthru
    _
  // Predicated region
  $region58: #{transf_stgcn3_forward.1} parent=0 // pred_check
    _
  $region59: #{transf_stgcn3_forward.1} parent=0 // pred_check_branch
    %54 = sbr.rel (0) target = $region61
  $region60: #{transf_stgcn3_forward.1} parent=0 // pred_region
    _
  $region61: #{transf_stgcn3_forward.1} parent=0 // pred_fallthru
    _
  // Predicated region
  $region62: #{transf_stgcn3_forward.1} parent=0 // pred_check
    _
  $region63: #{transf_stgcn3_forward.1} parent=0 // pred_check_branch
    %56 = sbr.rel (0) target = $region65
  $region64: #{transf_stgcn3_forward.1} parent=0 // pred_region
    _
  $region65: #{transf_stgcn3_forward.1} parent=0 // pred_fallthru
    _
  // Predicated region
  $region66: #{transf_stgcn3_forward.1} parent=0 // pred_check
    _
  $region67: #{transf_stgcn3_forward.1} parent=0 // pred_check_branch
    %58 = sbr.rel (0) target = $region69
  $region68: #{transf_stgcn3_forward.1} parent=0 // pred_region
    _
  $region69: #{transf_stgcn3_forward.1} parent=0 // pred_fallthru
    _
  // Predicated region
  $region70: #{transf_stgcn3_forward.1} parent=0 // pred_check
    _
  $region71: #{transf_stgcn3_forward.1} parent=0 // pred_check_branch
    %60 = sbr.rel (0) target = $region73
  $region72: #{transf_stgcn3_forward.1} parent=0 // pred_region
    _
  $region73: #{transf_stgcn3_forward.1} parent=0 // pred_fallthru
    _
  %v62 = vld [vmem:[%s0] sm:$0xff]
  %v63 = vld [vmem:[%s0 + $0x8] sm:$0xff]
  %v64 = vld [vmem:[%s0 + $0x10] sm:$0xff]
  %v65 = vld [vmem:[%s0 + $0x18] sm:$0xff]
  %v66 = vld [vmem:[%s0 + $0x20] sm:$0xff]
  %v67 = vld [vmem:[%s0 + $0x28] sm:$0xff]
  %v68 = vld [vmem:[%s0 + $0x30] sm:$0xff]
  %v69 = vld [vmem:[%s0 + $0x38] sm:$0xff]
  %v70 = vld [vmem:[%s0 + $0x40] sm:$0xff]
  %v71 = vld [vmem:[%s0 + $0x48] sm:$0xff]
  %v72 = vld [vmem:[%s0 + $0x50] sm:$0xff]
  %v73 = vld [vmem:[%s0 + $0x58] sm:$0xff]
  %v74 = vld [vmem:[%s0 + $0x60] sm:$0xff]
  %v75 = vld [vmem:[%s0 + $0x68] sm:$0xff]
  %v76 = vld [vmem:[%s0 + $0x70] sm:$0xff]
  %v77 = vld [vmem:[%s0 + $0x78] sm:$0xff]
  %v78 = vld [vmem:[%s0 + $0x80] sm:$0xff]
  %v79 = vld [vmem:[%s0 + $0x88] sm:$0xff]
  %v80 = vld [vmem:[%s0 + $0x90] sm:$0xff]
  %v81 = vld [vmem:[%s0 + $0x98] sm:$0xff]
  %v82 = vld [vmem:[%s0 + $0xa0] sm:$0xff]
  %v83 = vld [vmem:[%s0 + $0xa8] sm:$0xff]
  %v84 = vld [vmem:[%s0 + $0xb0] sm:$0xff]
  %v85 = vld [vmem:[%s0 + $0xb8] sm:$0xff]
  %v86 = vld [vmem:[%s0 + $0xc0] sm:$0xff]
  %v87 = vld [vmem:[%s0 + $0xc8] sm:$0xff]
  %v88 = vld [vmem:[%s0 + $0xd0] sm:$0xff]
  %v89 = vld [vmem:[%s0 + $0xd8] sm:$0xff]
  %v90 = vld [vmem:[%s0 + $0xe0] sm:$0xff]
  %v91 = vld [vmem:[%s0 + $0xe8] sm:$0xff]
  %v92 = vld [vmem:[%s0 + $0xf0] sm:$0xff]
  %v93 = vld [vmem:[%s0 + $0xf8] sm:$0xff]
  %v94 = vpack.c.bf16 %v63, %v62
  %v95 = vpack.c.bf16 %v65, %v64
  %v96 = vpack.c.bf16 %v67, %v66
  %v97 = vpack.c.bf16 %v69, %v68
  %v98 = vpack.c.bf16 %v71, %v70
  %v99 = vpack.c.bf16 %v73, %v72
  %v100 = vpack.c.bf16 %v75, %v74
  %v101 = vpack.c.bf16 %v77, %v76
  %v102 = vpack.c.bf16 %v79, %v78
  %v103 = vpack.c.bf16 %v81, %v80
  %v104 = vpack.c.bf16 %v83, %v82
  %v105 = vpack.c.bf16 %v85, %v84
  %v106 = vpack.c.bf16 %v87, %v86
  %v107 = vpack.c.bf16 %v89, %v88
  %v108 = vpack.c.bf16 %v91, %v90
  %v109 = vpack.c.bf16 %v93, %v92
  %v110 = vld [vmem:[%s2] sm:$0xf]
  %v111 = vld [vmem:[%s2 + $0x4] sm:$0xf]
  %v112 = vld [vmem:[%s2 + $0x8] sm:$0xf]
  %v113 = vld [vmem:[%s2 + $0xc] sm:$0xf]
  %s114 = scalar_lea.vmem %s2, 16
  %v115 = vld [vmem:[%s114] sm:$0xf]
  %v116 = vld [vmem:[%s114 + $0x4] sm:$0xf]
  %v117 = vld [vmem:[%s114 + $0x8] sm:$0xf]
  %v118 = vld [vmem:[%s114 + $0xc] sm:$0xf]
  %v123 = vunpack.c.l.b16 %v115
  %v124 = vunpack.c.l.b16 %v116
  %v125 = vunpack.c.l.b16 %v117
  %v126 = vunpack.c.l.b16 %v118
  %v127 = vpack.c.b16 %v124, %v123
  %v128 = vpack.c.b16 %v126, %v125
  %vm131 = vcmask 261120
  %v133 = vsel %vm131, %v95, 0
  %v136 = vsel %vm131, %v96, 0
  %v139 = vsel %vm131, %v97, 0
  %v142 = vsel %vm131, %v98, 0
  %v145 = vsel %vm131, %v99, 0
  %v148 = vsel %vm131, %v100, 0
  %v151 = vsel %vm131, %v101, 0
  %v154 = vsel %vm131, %v102, 0
  %v157 = vsel %vm131, %v103, 0
  %v160 = vsel %vm131, %v104, 0
  %v163 = vsel %vm131, %v105, 0
  %v166 = vsel %vm131, %v106, 0
  %v169 = vsel %vm131, %v107, 0
  %v172 = vsel %vm131, %v108, 0
  %174 = vmatprep.subr.bf16.mxu0 0
  %175 = vmatpush1.bf16.msra.mxu0 %v127
  %176 = vmatprep.subr.bf16.mxu0 0
  %177 = vmatpush1.bf16.msra.mxu0 %v128
  %178 = vmatprep.subr.bf16.mxu0 0
  %179 = vmatpush1.bf16.msra.mxu0 0
  %180 = vmatprep.subr.bf16.mxu0 0
  %181 = vmatpush1.bf16.msra.mxu0 0
  %182 = vmatprep.subr.bf16.mxu0 0
  %183 = vmatpush1.bf16.msra.mxu0 0
  %184 = vmatprep.subr.bf16.mxu0 0
  %185 = vmatpush1.bf16.msra.mxu0 0
  %186 = vmatprep.subr.bf16.mxu0 0
  %187 = vmatpush1.bf16.msra.mxu0 0
  %188 = vmatprep.subr.bf16.mxu0 0
  %189 = vmatpush1.bf16.msra.mxu0 0
  %190 = vmatprep.subr.bf16.mxu0 0
  %191 = vmatpush1.bf16.msra.mxu0 0
  %192 = vmatprep.subr.bf16.mxu0 0
  %193 = vmatpush1.bf16.msra.mxu0 0
  %194 = vmatprep.subr.bf16.mxu0 0
  %195 = vmatpush1.bf16.msra.mxu0 0
  %196 = vmatprep.subr.bf16.mxu0 0
  %197 = vmatpush1.bf16.msra.mxu0 0
  %198 = vmatprep.subr.bf16.mxu0 0
  %199 = vmatpush1.bf16.msra.mxu0 0
  %200 = vmatprep.subr.bf16.mxu0 0
  %201 = vmatpush1.bf16.msra.mxu0 0
  %202 = vmatprep.subr.bf16.mxu0 0
  %203 = vmatpush1.bf16.msra.mxu0 0
  %204 = vmatprep.subr.bf16.mxu0 0
  %205 = vmatpush1.bf16.msra.mxu0 0
  %206 = vmatprep.mubr.bf16.mxu0 0
  %207 = vmatmul.mubr.bf16.gmra.mrb[0].mxu0 %v133
  %v208 = vpop.f32.mrb[0].mxu0
  %v209 = vadd.f32 0.0, %v208
  %v210 = vpop.f32.mrb[0].mxu0
  %v211 = vpop.f32.mrb[0].mxu0
  %v212 = vadd.f32 0.0, %v211
  %v213 = vpop.f32.mrb[0].mxu0
  %214 = vmatprep.mubr.bf16.mxu0 0
  %215 = vmatmul.mubr.bf16.gmra.mrb[0].mxu0 %v136
  %v216 = vpop.f32.mrb[0].mxu0
  %v217 = vadd.f32 0.0, %v216
  %v218 = vpop.f32.mrb[0].mxu0
  %v219 = vpop.f32.mrb[0].mxu0
  %v220 = vadd.f32 0.0, %v219
  %v221 = vpop.f32.mrb[0].mxu0
  %222 = vmatprep.mubr.bf16.mxu0 0
  %223 = vmatmul.mubr.bf16.gmra.mrb[0].mxu0 %v139
  %v224 = vpop.f32.mrb[0].mxu0
  %v225 = vadd.f32 0.0, %v224
  %v226 = vpop.f32.mrb[0].mxu0
  %v227 = vpop.f32.mrb[0].mxu0
  %v228 = vadd.f32 0.0, %v227
  %v229 = vpop.f32.mrb[0].mxu0
  %230 = vmatprep.mubr.bf16.mxu0 0
  %231 = vmatmul.mubr.bf16.gmra.mrb[0].mxu0 %v142
  %v232 = vpop.f32.mrb[0].mxu0
  %v233 = vadd.f32 0.0, %v232
  %v234 = vpop.f32.mrb[0].mxu0
  %v235 = vpop.f32.mrb[0].mxu0
  %v236 = vadd.f32 0.0, %v235
  %v237 = vpop.f32.mrb[0].mxu0
  %238 = vmatprep.mubr.bf16.mxu0 0
  %239 = vmatmul.mubr.bf16.gmra.mrb[0].mxu0 %v145
  %v240 = vpop.f32.mrb[0].mxu0
  %v241 = vadd.f32 0.0, %v240
  %v242 = vpop.f32.mrb[0].mxu0
  %v243 = vpop.f32.mrb[0].mxu0
  %v244 = vadd.f32 0.0, %v243
  %v245 = vpop.f32.mrb[0].mxu0
  %246 = vmatprep.mubr.bf16.mxu0 0
  %247 = vmatmul.mubr.bf16.gmra.mrb[0].mxu0 %v148
  %v248 = vpop.f32.mrb[0].mxu0
  %v249 = vadd.f32 0.0, %v248
  %v250 = vpop.f32.mrb[0].mxu0
  %v251 = vpop.f32.mrb[0].mxu0
  %v252 = vadd.f32 0.0, %v251
  %v253 = vpop.f32.mrb[0].mxu0
  %254 = vmatprep.mubr.bf16.mxu0 0
  %255 = vmatmul.mubr.bf16.gmra.mrb[0].mxu0 %v151
  %v256 = vpop.f32.mrb[0].mxu0
  %v257 = vadd.f32 0.0, %v256
  %v258 = vpop.f32.mrb[0].mxu0
  %v259 = vpop.f32.mrb[0].mxu0
  %v260 = vadd.f32 0.0, %v259
  %v261 = vpop.f32.mrb[0].mxu0
  %262 = vmatprep.mubr.bf16.mxu0 0
  %263 = vmatmul.mubr.bf16.gmra.mrb[0].mxu0 %v154
  %v264 = vpop.f32.mrb[0].mxu0
  %v265 = vadd.f32 0.0, %v264
  %v266 = vpop.f32.mrb[0].mxu0
  %v267 = vpop.f32.mrb[0].mxu0
  %v268 = vadd.f32 0.0, %v267
  %v269 = vpop.f32.mrb[0].mxu0
  %270 = vmatprep.mubr.bf16.mxu0 0
  %271 = vmatmul.mubr.bf16.gmra.mrb[0].mxu0 %v157
  %v272 = vpop.f32.mrb[0].mxu0
  %v273 = vadd.f32 0.0, %v272
  %v274 = vpop.f32.mrb[0].mxu0
  %v275 = vpop.f32.mrb[0].mxu0
  %v276 = vadd.f32 0.0, %v275
  %v277 = vpop.f32.mrb[0].mxu0
  %278 = vmatprep.mubr.bf16.mxu0 0
  %279 = vmatmul.mubr.bf16.gmra.mrb[0].mxu0 %v160
  %v280 = vpop.f32.mrb[0].mxu0
  %v281 = vadd.f32 0.0, %v280
  %v282 = vpop.f32.mrb[0].mxu0
  %v283 = vpop.f32.mrb[0].mxu0
  %v284 = vadd.f32 0.0, %v283
  %v285 = vpop.f32.mrb[0].mxu0
  %286 = vmatprep.mubr.bf16.mxu0 0
  %287 = vmatmul.mubr.bf16.gmra.mrb[0].mxu0 %v163
  %v288 = vpop.f32.mrb[0].mxu0
  %v289 = vadd.f32 0.0, %v288
  %v290 = vpop.f32.mrb[0].mxu0
  %v291 = vpop.f32.mrb[0].mxu0
  %v292 = vadd.f32 0.0, %v291
  %v293 = vpop.f32.mrb[0].mxu0
  %294 = vmatprep.mubr.bf16.mxu0 0
  %295 = vmatmul.mubr.bf16.gmra.mrb[0].mxu0 %v166
  %v296 = vpop.f32.mrb[0].mxu0
  %v297 = vadd.f32 0.0, %v296
  %v298 = vpop.f32.mrb[0].mxu0
  %v299 = vpop.f32.mrb[0].mxu0
  %v300 = vadd.f32 0.0, %v299
  %v301 = vpop.f32.mrb[0].mxu0
  %302 = vmatprep.mubr.bf16.mxu0 0
  %303 = vmatmul.mubr.bf16.gmra.mrb[0].mxu0 %v169
  %v304 = vpop.f32.mrb[0].mxu0
  %v305 = vadd.f32 0.0, %v304
  %v306 = vpop.f32.mrb[0].mxu0
  %v307 = vpop.f32.mrb[0].mxu0
  %v308 = vadd.f32 0.0, %v307
  %v309 = vpop.f32.mrb[0].mxu0
  %310 = vmatprep.mubr.bf16.mxu0 0
  %311 = vmatmul.mubr.bf16.gmra.mrb[0].mxu0 %v172
  %v312 = vpop.f32.mrb[0].mxu0
  %v313 = vadd.f32 0.0, %v312
  %v314 = vpop.f32.mrb[0].mxu0
  %v315 = vpop.f32.mrb[0].mxu0
  %v316 = vadd.f32 0.0, %v315
  %v317 = vpop.f32.mrb[0].mxu0
  %318 = vdwg.mxu0
  %v323 = vunpack.c.l.b16 %v110
  %v324 = vunpack.c.l.b16 %v111
  %v325 = vunpack.c.l.b16 %v112
  %v326 = vunpack.c.l.b16 %v113
  %v327 = vpack.c.b16 %v324, %v323
  %v328 = vpack.c.b16 %v326, %v325
  %v332 = vsel %vm131, %v94, 0
  %334 = vmatprep.subr.bf16.mxu0 0
  %335 = vmatpush1.bf16.msra.mxu0 %v327
  %336 = vmatprep.subr.bf16.mxu0 0
  %337 = vmatpush1.bf16.msra.mxu0 %v328
  %338 = vmatprep.subr.bf16.mxu0 0
  %339 = vmatpush1.bf16.msra.mxu0 0
  %340 = vmatprep.subr.bf16.mxu0 0
  %341 = vmatpush1.bf16.msra.mxu0 0
  %342 = vmatprep.subr.bf16.mxu0 0
  %343 = vmatpush1.bf16.msra.mxu0 0
  %344 = vmatprep.subr.bf16.mxu0 0
  %345 = vmatpush1.bf16.msra.mxu0 0
  %346 = vmatprep.subr.bf16.mxu0 0
  %347 = vmatpush1.bf16.msra.mxu0 0
  %348 = vmatprep.subr.bf16.mxu0 0
  %349 = vmatpush1.bf16.msra.mxu0 0
  %350 = vmatprep.subr.bf16.mxu0 0
  %351 = vmatpush1.bf16.msra.mxu0 0
  %352 = vmatprep.subr.bf16.mxu0 0
  %353 = vmatpush1.bf16.msra.mxu0 0
  %354 = vmatprep.subr.bf16.mxu0 0
  %355 = vmatpush1.bf16.msra.mxu0 0
  %356 = vmatprep.subr.bf16.mxu0 0
  %357 = vmatpush1.bf16.msra.mxu0 0
  %358 = vmatprep.subr.bf16.mxu0 0
  %359 = vmatpush1.bf16.msra.mxu0 0
  %360 = vmatprep.subr.bf16.mxu0 0
  %361 = vmatpush1.bf16.msra.mxu0 0
  %362 = vmatprep.subr.bf16.mxu0 0
  %363 = vmatpush1.bf16.msra.mxu0 0
  %364 = vmatprep.subr.bf16.mxu0 0
  %365 = vmatpush1.bf16.msra.mxu0 0
  %366 = vmatprep.mubr.bf16.mxu0 0
  %367 = vmatmul.mubr.bf16.gmra.mrb[0].mxu0 %v332
  %v368 = vpop.f32.mrb[0].mxu0
  %v369 = vadd.f32 %v209, %v368
  %v370 = vpop.f32.mrb[0].mxu0
  %v371 = vpop.f32.mrb[0].mxu0
  %v372 = vadd.f32 %v212, %v371
  %v373 = vpop.f32.mrb[0].mxu0
  %374 = vmatprep.mubr.bf16.mxu0 0
  %375 = vmatmul.mubr.bf16.gmra.mrb[0].mxu0 %v133
  %v376 = vpop.f32.mrb[0].mxu0
  %v377 = vadd.f32 %v217, %v376
  %v378 = vpop.f32.mrb[0].mxu0
  %v379 = vpop.f32.mrb[0].mxu0
  %v380 = vadd.f32 %v220, %v379
  %v381 = vpop.f32.mrb[0].mxu0
  %382 = vmatprep.mubr.bf16.mxu0 0
  %383 = vmatmul.mubr.bf16.gmra.mrb[0].mxu0 %v136
  %v384 = vpop.f32.mrb[0].mxu0
  %v385 = vadd.f32 %v225, %v384
  %v386 = vpop.f32.mrb[0].mxu0
  %v387 = vpop.f32.mrb[0].mxu0
  %v388 = vadd.f32 %v228, %v387
  %v389 = vpop.f32.mrb[0].mxu0
  %390 = vmatprep.mubr.bf16.mxu0 0
  %391 = vmatmul.mubr.bf16.gmra.mrb[0].mxu0 %v139
  %v392 = vpop.f32.mrb[0].mxu0
  %v393 = vadd.f32 %v233, %v392
  %v394 = vpop.f32.mrb[0].mxu0
  %v395 = vpop.f32.mrb[0].mxu0
  %v396 = vadd.f32 %v236, %v395
  %v397 = vpop.f32.mrb[0].mxu0
  %398 = vmatprep.mubr.bf16.mxu0 0
  %399 = vmatmul.mubr.bf16.gmra.mrb[0].mxu0 %v142
  %v400 = vpop.f32.mrb[0].mxu0
  %v401 = vadd.f32 %v241, %v400
  %v402 = vpop.f32.mrb[0].mxu0
  %v403 = vpop.f32.mrb[0].mxu0
  %v404 = vadd.f32 %v244, %v403
  %v405 = vpop.f32.mrb[0].mxu0
  %406 = vmatprep.mubr.bf16.mxu0 0
  %407 = vmatmul.mubr.bf16.gmra.mrb[0].mxu0 %v145
  %v408 = vpop.f32.mrb[0].mxu0
  %v409 = vadd.f32 %v249, %v408
  %v410 = vpop.f32.mrb[0].mxu0
  %v411 = vpop.f32.mrb[0].mxu0
  %v412 = vadd.f32 %v252, %v411
  %v413 = vpop.f32.mrb[0].mxu0
  %414 = vmatprep.mubr.bf16.mxu0 0
  %415 = vmatmul.mubr.bf16.gmra.mrb[0].mxu0 %v148
  %v416 = vpop.f32.mrb[0].mxu0
  %v417 = vadd.f32 %v257, %v416
  %v418 = vpop.f32.mrb[0].mxu0
  %v419 = vpop.f32.mrb[0].mxu0
  %v420 = vadd.f32 %v260, %v419
  %v421 = vpop.f32.mrb[0].mxu0
  %422 = vmatprep.mubr.bf16.mxu0 0
  %423 = vmatmul.mubr.bf16.gmra.mrb[0].mxu0 %v151
  %v424 = vpop.f32.mrb[0].mxu0
  %v425 = vadd.f32 %v265, %v424
  %v426 = vpop.f32.mrb[0].mxu0
  %v427 = vpop.f32.mrb[0].mxu0
  %v428 = vadd.f32 %v268, %v427
  %v429 = vpop.f32.mrb[0].mxu0
  %430 = vmatprep.mubr.bf16.mxu0 0
  %431 = vmatmul.mubr.bf16.gmra.mrb[0].mxu0 %v154
  %v432 = vpop.f32.mrb[0].mxu0
  %v433 = vadd.f32 %v273, %v432
  %v434 = vpop.f32.mrb[0].mxu0
  %v435 = vpop.f32.mrb[0].mxu0
  %v436 = vadd.f32 %v276, %v435
  %v437 = vpop.f32.mrb[0].mxu0
  %438 = vmatprep.mubr.bf16.mxu0 0
  %439 = vmatmul.mubr.bf16.gmra.mrb[0].mxu0 %v157
  %v440 = vpop.f32.mrb[0].mxu0
  %v441 = vadd.f32 %v281, %v440
  %v442 = vpop.f32.mrb[0].mxu0
  %v443 = vpop.f32.mrb[0].mxu0
  %v444 = vadd.f32 %v284, %v443
  %v445 = vpop.f32.mrb[0].mxu0
  %446 = vmatprep.mubr.bf16.mxu0 0
  %447 = vmatmul.mubr.bf16.gmra.mrb[0].mxu0 %v160
  %v448 = vpop.f32.mrb[0].mxu0
  %v449 = vadd.f32 %v289, %v448
  %v450 = vpop.f32.mrb[0].mxu0
  %v451 = vpop.f32.mrb[0].mxu0
  %v452 = vadd.f32 %v292, %v451
  %v453 = vpop.f32.mrb[0].mxu0
  %454 = vmatprep.mubr.bf16.mxu0 0
  %455 = vmatmul.mubr.bf16.gmra.mrb[0].mxu0 %v163
  %v456 = vpop.f32.mrb[0].mxu0
  %v457 = vadd.f32 %v297, %v456
  %v458 = vpop.f32.mrb[0].mxu0
  %v459 = vpop.f32.mrb[0].mxu0
  %v460 = vadd.f32 %v300, %v459
  %v461 = vpop.f32.mrb[0].mxu0
  %462 = vmatprep.mubr.bf16.mxu0 0
  %463 = vmatmul.mubr.bf16.gmra.mrb[0].mxu0 %v166
  %v464 = vpop.f32.mrb[0].mxu0
  %v465 = vadd.f32 %v305, %v464
  %v466 = vpop.f32.mrb[0].mxu0
  %v467 = vpop.f32.mrb[0].mxu0
  %v468 = vadd.f32 %v308, %v467
  %v469 = vpop.f32.mrb[0].mxu0
  %470 = vmatprep.mubr.bf16.mxu0 0
  %471 = vmatmul.mubr.bf16.gmra.mrb[0].mxu0 %v169
  %v472 = vpop.f32.mrb[0].mxu0
  %v473 = vadd.f32 %v313, %v472
  %v474 = vpop.f32.mrb[0].mxu0
  %v475 = vpop.f32.mrb[0].mxu0
  %v476 = vadd.f32 %v316, %v475
  %v477 = vpop.f32.mrb[0].mxu0
  %478 = vdwg.mxu0
  %s479 = scalar_lea.vmem %s2, 32
  %v480 = vld [vmem:[%s479] sm:$0xf]
  %v481 = vld [vmem:[%s479 + $0x4] sm:$0xf]
  %v482 = vld [vmem:[%s479 + $0x8] sm:$0xf]
  %v483 = vld [vmem:[%s479 + $0xc] sm:$0xf]
  %v488 = vunpack.c.l.b16 %v480
  %v489 = vunpack.c.l.b16 %v481
  %v490 = vunpack.c.l.b16 %v482
  %v491 = vunpack.c.l.b16 %v483
  %v492 = vpack.c.b16 %v489, %v488
  %v493 = vpack.c.b16 %v491, %v490
  %v497 = vsel %vm131, %v109, 0
  %499 = vmatprep.subr.bf16.mxu0 0
  %500 = vmatpush1.bf16.msra.mxu0 %v492
  %501 = vmatprep.subr.bf16.mxu0 0
  %502 = vmatpush1.bf16.msra.mxu0 %v493
  %503 = vmatprep.subr.bf16.mxu0 0
  %504 = vmatpush1.bf16.msra.mxu0 0
  %505 = vmatprep.subr.bf16.mxu0 0
  %506 = vmatpush1.bf16.msra.mxu0 0
  %507 = vmatprep.subr.bf16.mxu0 0
  %508 = vmatpush1.bf16.msra.mxu0 0
  %509 = vmatprep.subr.bf16.mxu0 0
  %510 = vmatpush1.bf16.msra.mxu0 0
  %511 = vmatprep.subr.bf16.mxu0 0
  %512 = vmatpush1.bf16.msra.mxu0 0
  %513 = vmatprep.subr.bf16.mxu0 0
  %514 = vmatpush1.bf16.msra.mxu0 0
  %515 = vmatprep.subr.bf16.mxu0 0
  %516 = vmatpush1.bf16.msra.mxu0 0
  %517 = vmatprep.subr.bf16.mxu0 0
  %518 = vmatpush1.bf16.msra.mxu0 0
  %519 = vmatprep.subr.bf16.mxu0 0
  %520 = vmatpush1.bf16.msra.mxu0 0
  %521 = vmatprep.subr.bf16.mxu0 0
  %522 = vmatpush1.bf16.msra.mxu0 0
  %523 = vmatprep.subr.bf16.mxu0 0
  %524 = vmatpush1.bf16.msra.mxu0 0
  %525 = vmatprep.subr.bf16.mxu0 0
  %526 = vmatpush1.bf16.msra.mxu0 0
  %527 = vmatprep.subr.bf16.mxu0 0
  %528 = vmatpush1.bf16.msra.mxu0 0
  %529 = vmatprep.subr.bf16.mxu0 0
  %530 = vmatpush1.bf16.msra.mxu0 0
  %531 = vmatprep.mubr.bf16.mxu0 0
  %532 = vmatmul.mubr.bf16.gmra.mrb[0].mxu0 %v136
  %v533 = vpop.f32.mrb[0].mxu0
  %v534 = vadd.f32 0.0, %v533
  %v535 = vpop.f32.mrb[0].mxu0
  %v536 = vpop.f32.mrb[0].mxu0
  %v537 = vadd.f32 0.0, %v536
  %v538 = vpop.f32.mrb[0].mxu0
  %539 = vmatprep.mubr.bf16.mxu0 0
  %540 = vmatmul.mubr.bf16.gmra.mrb[0].mxu0 %v139
  %v541 = vpop.f32.mrb[0].mxu0
  %v542 = vadd.f32 0.0, %v541
  %v543 = vpop.f32.mrb[0].mxu0
  %v544 = vpop.f32.mrb[0].mxu0
  %v545 = vadd.f32 0.0, %v544
  %v546 = vpop.f32.mrb[0].mxu0
  %547 = vmatprep.mubr.bf16.mxu0 0
  %548 = vmatmul.mubr.bf16.gmra.mrb[0].mxu0 %v142
  %v549 = vpop.f32.mrb[0].mxu0
  %v550 = vadd.f32 0.0, %v549
  %v551 = vpop.f32.mrb[0].mxu0
  %v552 = vpop.f32.mrb[0].mxu0
  %v553 = vadd.f32 0.0, %v552
  %v554 = vpop.f32.mrb[0].mxu0
  %555 = vmatprep.mubr.bf16.mxu0 0
  %556 = vmatmul.mubr.bf16.gmra.mrb[0].mxu0 %v145
  %v557 = vpop.f32.mrb[0].mxu0
  %v558 = vadd.f32 0.0, %v557
  %v559 = vpop.f32.mrb[0].mxu0
  %v560 = vpop.f32.mrb[0].mxu0
  %v561 = vadd.f32 0.0, %v560
  %v562 = vpop.f32.mrb[0].mxu0
  %563 = vmatprep.mubr.bf16.mxu0 0
  %564 = vmatmul.mubr.bf16.gmra.mrb[0].mxu0 %v148
  %v565 = vpop.f32.mrb[0].mxu0
  %v566 = vadd.f32 0.0, %v565
  %v567 = vpop.f32.mrb[0].mxu0
  %v568 = vpop.f32.mrb[0].mxu0
  %v569 = vadd.f32 0.0, %v568
  %v570 = vpop.f32.mrb[0].mxu0
  %571 = vmatprep.mubr.bf16.mxu0 0
  %572 = vmatmul.mubr.bf16.gmra.mrb[0].mxu0 %v151
  %v573 = vpop.f32.mrb[0].mxu0
  %v574 = vadd.f32 0.0, %v573
  %v575 = vpop.f32.mrb[0].mxu0
  %v576 = vpop.f32.mrb[0].mxu0
  %v577 = vadd.f32 0.0, %v576
  %v578 = vpop.f32.mrb[0].mxu0
  %579 = vmatprep.mubr.bf16.mxu0 0
  %580 = vmatmul.mubr.bf16.gmra.mrb[0].mxu0 %v154
  %v581 = vpop.f32.mrb[0].mxu0
  %v582 = vadd.f32 0.0, %v581
  %v583 = vpop.f32.mrb[0].mxu0
  %v584 = vpop.f32.mrb[0].mxu0
  %v585 = vadd.f32 0.0, %v584
  %v586 = vpop.f32.mrb[0].mxu0
  %587 = vmatprep.mubr.bf16.mxu0 0
  %588 = vmatmul.mubr.bf16.gmra.mrb[0].mxu0 %v157
  %v589 = vpop.f32.mrb[0].mxu0
  %v590 = vadd.f32 0.0, %v589
  %v591 = vpop.f32.mrb[0].mxu0
  %v592 = vpop.f32.mrb[0].mxu0
  %v593 = vadd.f32 0.0, %v592
  %v594 = vpop.f32.mrb[0].mxu0
  %595 = vmatprep.mubr.bf16.mxu0 0
  %596 = vmatmul.mubr.bf16.gmra.mrb[0].mxu0 %v160
  %v597 = vpop.f32.mrb[0].mxu0
  %v598 = vadd.f32 0.0, %v597
  %v599 = vpop.f32.mrb[0].mxu0
  %v600 = vpop.f32.mrb[0].mxu0
  %v601 = vadd.f32 0.0, %v600
  %v602 = vpop.f32.mrb[0].mxu0
  %603 = vmatprep.mubr.bf16.mxu0 0
  %604 = vmatmul.mubr.bf16.gmra.mrb[0].mxu0 %v163
  %v605 = vpop.f32.mrb[0].mxu0
  %v606 = vadd.f32 0.0, %v605
  %v607 = vpop.f32.mrb[0].mxu0
  %v608 = vpop.f32.mrb[0].mxu0
  %v609 = vadd.f32 0.0, %v608
  %v610 = vpop.f32.mrb[0].mxu0
  %611 = vmatprep.mubr.bf16.mxu0 0
  %612 = vmatmul.mubr.bf16.gmra.mrb[0].mxu0 %v166
  %v613 = vpop.f32.mrb[0].mxu0
  %v614 = vadd.f32 0.0, %v613
  %v615 = vpop.f32.mrb[0].mxu0
  %v616 = vpop.f32.mrb[0].mxu0
  %v617 = vadd.f32 0.0, %v616
  %v618 = vpop.f32.mrb[0].mxu0
  %619 = vmatprep.mubr.bf16.mxu0 0
  %620 = vmatmul.mubr.bf16.gmra.mrb[0].mxu0 %v169
  %v621 = vpop.f32.mrb[0].mxu0
  %v622 = vadd.f32 0.0, %v621
  %v623 = vpop.f32.mrb[0].mxu0
  %v624 = vpop.f32.mrb[0].mxu0
  %v625 = vadd.f32 0.0, %v624
  %v626 = vpop.f32.mrb[0].mxu0
  %627 = vmatprep.mubr.bf16.mxu0 0
  %628 = vmatmul.mubr.bf16.gmra.mrb[0].mxu0 %v172
  %v629 = vpop.f32.mrb[0].mxu0
  %v630 = vadd.f32 0.0, %v629
  %v631 = vpop.f32.mrb[0].mxu0
  %v632 = vpop.f32.mrb[0].mxu0
  %v633 = vadd.f32 0.0, %v632
  %v634 = vpop.f32.mrb[0].mxu0
  %635 = vmatprep.mubr.bf16.mxu0 0
  %636 = vmatmul.mubr.bf16.gmra.mrb[0].mxu0 %v497
  %v637 = vpop.f32.mrb[0].mxu0
  %v638 = vadd.f32 0.0, %v637
  %v639 = vpop.f32.mrb[0].mxu0
  %v640 = vpop.f32.mrb[0].mxu0
  %v641 = vadd.f32 0.0, %v640
  %v642 = vpop.f32.mrb[0].mxu0
  %643 = vdwg.mxu0
  %v644 = vadd.f32 %v369, %v534
  %v645 = vadd.f32 %v372, %v537
  %v646 = vadd.f32 %v377, %v542
  %v647 = vadd.f32 %v380, %v545
  %v648 = vadd.f32 %v385, %v550
  %v649 = vadd.f32 %v388, %v553
  %v650 = vadd.f32 %v393, %v558
  %v651 = vadd.f32 %v396, %v561
  %v652 = vadd.f32 %v401, %v566
  %v653 = vadd.f32 %v404, %v569
  %v654 = vadd.f32 %v409, %v574
  %v655 = vadd.f32 %v412, %v577
  %v656 = vadd.f32 %v417, %v582
  %v657 = vadd.f32 %v420, %v585
  %v658 = vadd.f32 %v425, %v590
  %v659 = vadd.f32 %v428, %v593
  %v660 = vadd.f32 %v433, %v598
  %v661 = vadd.f32 %v436, %v601
  %v662 = vadd.f32 %v441, %v606
  %v663 = vadd.f32 %v444, %v609
  %v664 = vadd.f32 %v449, %v614
  %v665 = vadd.f32 %v452, %v617
  %v666 = vadd.f32 %v457, %v622
  %v667 = vadd.f32 %v460, %v625
  %v668 = vadd.f32 %v465, %v630
  %v669 = vadd.f32 %v468, %v633
  %v670 = vadd.f32 %v473, %v638
  %v671 = vadd.f32 %v476, %v641
  %v672 = vld [vmem:[%s3] sm:$0x1]
  %v674 = vlaneseq
  %v675 = vshrl.u32 %v674, 7
  %v676 = vsub.s32 0, %v675
  %v677 = vrot.slane %v672, %v676
  %v679 = vadd.f32 %v644, %v677
  %v680 = vadd.f32 %v645, %v677
  %v681 = vadd.f32 %v646, %v677
  %v682 = vadd.f32 %v647, %v677
  %v683 = vadd.f32 %v648, %v677
  %v684 = vadd.f32 %v649, %v677
  %v685 = vadd.f32 %v650, %v677
  %v686 = vadd.f32 %v651, %v677
  %v687 = vadd.f32 %v652, %v677
  %v688 = vadd.f32 %v653, %v677
  %v689 = vadd.f32 %v654, %v677
  %v690 = vadd.f32 %v655, %v677
  %v691 = vadd.f32 %v656, %v677
  %v692 = vadd.f32 %v657, %v677
  %v693 = vadd.f32 %v658, %v677
  %v694 = vadd.f32 %v659, %v677
  %v695 = vadd.f32 %v660, %v677
  %v696 = vadd.f32 %v661, %v677
  %v697 = vadd.f32 %v662, %v677
  %v698 = vadd.f32 %v663, %v677
  %v699 = vadd.f32 %v664, %v677
  %v700 = vadd.f32 %v665, %v677
  %v701 = vadd.f32 %v666, %v677
  %v702 = vadd.f32 %v667, %v677
  %v703 = vadd.f32 %v668, %v677
  %v704 = vadd.f32 %v669, %v677
  %v705 = vadd.f32 %v670, %v677
  %v706 = vadd.f32 %v671, %v677
  %v707 = vxor.u32 %v679, 2147483648
  %v708 = vxor.u32 %v680, 2147483648
  %v709 = vxor.u32 %v681, 2147483648
  %v710 = vxor.u32 %v682, 2147483648
  %v711 = vxor.u32 %v683, 2147483648
  %v712 = vxor.u32 %v684, 2147483648
  %v713 = vxor.u32 %v685, 2147483648
  %v714 = vxor.u32 %v686, 2147483648
  %v715 = vxor.u32 %v687, 2147483648
  %v716 = vxor.u32 %v688, 2147483648
  %v717 = vxor.u32 %v689, 2147483648
  %v718 = vxor.u32 %v690, 2147483648
  %v719 = vxor.u32 %v691, 2147483648
  %v720 = vxor.u32 %v692, 2147483648
  %v721 = vxor.u32 %v693, 2147483648
  %v722 = vxor.u32 %v694, 2147483648
  %v723 = vxor.u32 %v695, 2147483648
  %v724 = vxor.u32 %v696, 2147483648
  %v725 = vxor.u32 %v697, 2147483648
  %v726 = vxor.u32 %v698, 2147483648
  %v727 = vxor.u32 %v699, 2147483648
  %v728 = vxor.u32 %v700, 2147483648
  %v729 = vxor.u32 %v701, 2147483648
  %v730 = vxor.u32 %v702, 2147483648
  %v731 = vxor.u32 %v703, 2147483648
  %v732 = vxor.u32 %v704, 2147483648
  %v733 = vxor.u32 %v705, 2147483648
  %v734 = vxor.u32 %v706, 2147483648
  %v735 = vmul.f32 %v707, 1.442695
  %v736 = vpow.pop %v735
  %v737 = vmul.f32 %v708, 1.442695
  %v738 = vpow.pop %v737
  %v739 = vmul.f32 %v709, 1.442695
  %v740 = vpow.pop %v739
  %v741 = vmul.f32 %v710, 1.442695
  %v742 = vpow.pop %v741
  %v743 = vmul.f32 %v711, 1.442695
  %v744 = vpow.pop %v743
  %v745 = vmul.f32 %v712, 1.442695
  %v746 = vpow.pop %v745
  %v747 = vmul.f32 %v713, 1.442695
  %v748 = vpow.pop %v747
  %v749 = vmul.f32 %v714, 1.442695
  %v750 = vpow.pop %v749
  %v751 = vmul.f32 %v715, 1.442695
  %v752 = vpow.pop %v751
  %v753 = vmul.f32 %v716, 1.442695
  %v754 = vpow.pop %v753
  %v755 = vmul.f32 %v717, 1.442695
  %v756 = vpow.pop %v755
  %v757 = vmul.f32 %v718, 1.442695
  %v758 = vpow.pop %v757
  %v759 = vmul.f32 %v719, 1.442695
  %v760 = vpow.pop %v759
  %v761 = vmul.f32 %v720, 1.442695
  %v762 = vpow.pop %v761
  %v763 = vmul.f32 %v721, 1.442695
  %v764 = vpow.pop %v763
  %v765 = vmul.f32 %v722, 1.442695
  %v766 = vpow.pop %v765
  %v767 = vmul.f32 %v723, 1.442695
  %v768 = vpow.pop %v767
  %v769 = vmul.f32 %v724, 1.442695
  %v770 = vpow.pop %v769
  %v771 = vmul.f32 %v725, 1.442695
  %v772 = vpow.pop %v771
  %v773 = vmul.f32 %v726, 1.442695
  %v774 = vpow.pop %v773
  %v775 = vmul.f32 %v727, 1.442695
  %v776 = vpow.pop %v775
  %v777 = vmul.f32 %v728, 1.442695
  %v778 = vpow.pop %v777
  %v779 = vmul.f32 %v729, 1.442695
  %v780 = vpow.pop %v779
  %v781 = vmul.f32 %v730, 1.442695
  %v782 = vpow.pop %v781
  %v783 = vmul.f32 %v731, 1.442695
  %v784 = vpow.pop %v783
  %v785 = vmul.f32 %v732, 1.442695
  %v786 = vpow.pop %v785
  %v787 = vmul.f32 %v733, 1.442695
  %v788 = vpow.pop %v787
  %v789 = vmul.f32 %v734, 1.442695
  %v790 = vpow.pop %v789
  %v791 = vadd.f32 %v736, 1.0
  %v792 = vadd.f32 %v738, 1.0
  %v793 = vadd.f32 %v740, 1.0
  %v794 = vadd.f32 %v742, 1.0
  %v795 = vadd.f32 %v744, 1.0
  %v796 = vadd.f32 %v746, 1.0
  %v797 = vadd.f32 %v748, 1.0
  %v798 = vadd.f32 %v750, 1.0
  %v799 = vadd.f32 %v752, 1.0
  %v800 = vadd.f32 %v754, 1.0
  %v801 = vadd.f32 %v756, 1.0
  %v802 = vadd.f32 %v758, 1.0
  %v803 = vadd.f32 %v760, 1.0
  %v804 = vadd.f32 %v762, 1.0
  %v805 = vadd.f32 %v764, 1.0
  %v806 = vadd.f32 %v766, 1.0
  %v807 = vadd.f32 %v768, 1.0
  %v808 = vadd.f32 %v770, 1.0
  %v809 = vadd.f32 %v772, 1.0
  %v810 = vadd.f32 %v774, 1.0
  %v811 = vadd.f32 %v776, 1.0
  %v812 = vadd.f32 %v778, 1.0
  %v813 = vadd.f32 %v780, 1.0
  %v814 = vadd.f32 %v782, 1.0
  %v815 = vadd.f32 %v784, 1.0
  %v816 = vadd.f32 %v786, 1.0
  %v817 = vadd.f32 %v788, 1.0
  %v818 = vadd.f32 %v790, 1.0
  %v819 = vrcp.pop %v791
  %v820 = vmul.f32 1.0, %v819
  %v821 = vrcp.pop %v792
  %v822 = vmul.f32 1.0, %v821
  %v823 = vrcp.pop %v793
  %v824 = vmul.f32 1.0, %v823
  %v825 = vrcp.pop %v794
  %v826 = vmul.f32 1.0, %v825
  %v827 = vrcp.pop %v795
  %v828 = vmul.f32 1.0, %v827
  %v829 = vrcp.pop %v796
  %v830 = vmul.f32 1.0, %v829
  %v831 = vrcp.pop %v797
  %v832 = vmul.f32 1.0, %v831
  %v833 = vrcp.pop %v798
  %v834 = vmul.f32 1.0, %v833
  %v835 = vrcp.pop %v799
  %v836 = vmul.f32 1.0, %v835
  %v837 = vrcp.pop %v800
  %v838 = vmul.f32 1.0, %v837
  %v839 = vrcp.pop %v801
  %v840 = vmul.f32 1.0, %v839
  %v841 = vrcp.pop %v802
  %v842 = vmul.f32 1.0, %v841
  %v843 = vrcp.pop %v803
  %v844 = vmul.f32 1.0, %v843
  %v845 = vrcp.pop %v804
  %v846 = vmul.f32 1.0, %v845
  %v847 = vrcp.pop %v805
  %v848 = vmul.f32 1.0, %v847
  %v849 = vrcp.pop %v806
  %v850 = vmul.f32 1.0, %v849
  %v851 = vrcp.pop %v807
  %v852 = vmul.f32 1.0, %v851
  %v853 = vrcp.pop %v808
  %v854 = vmul.f32 1.0, %v853
  %v855 = vrcp.pop %v809
  %v856 = vmul.f32 1.0, %v855
  %v857 = vrcp.pop %v810
  %v858 = vmul.f32 1.0, %v857
  %v859 = vrcp.pop %v811
  %v860 = vmul.f32 1.0, %v859
  %v861 = vrcp.pop %v812
  %v862 = vmul.f32 1.0, %v861
  %v863 = vrcp.pop %v813
  %v864 = vmul.f32 1.0, %v863
  %v865 = vrcp.pop %v814
  %v866 = vmul.f32 1.0, %v865
  %v867 = vrcp.pop %v815
  %v868 = vmul.f32 1.0, %v867
  %v869 = vrcp.pop %v816
  %v870 = vmul.f32 1.0, %v869
  %v871 = vrcp.pop %v817
  %v872 = vmul.f32 1.0, %v871
  %v873 = vrcp.pop %v818
  %v874 = vmul.f32 1.0, %v873
  %903 = vrot.lane.b32.xlu0 %v820, 112
  %v904 = vpop.permute.xlu0 %903
  %905 = vrot.lane.b32.xlu0 %v822, 112
  %v906 = vpop.permute.xlu0 %905
  %907 = vrot.lane.b32.xlu0 %v824, 112
  %v908 = vpop.permute.xlu0 %907
  %909 = vrot.lane.b32.xlu0 %v826, 112
  %v910 = vpop.permute.xlu0 %909
  %911 = vrot.lane.b32.xlu0 %v828, 112
  %v912 = vpop.permute.xlu0 %911
  %913 = vrot.lane.b32.xlu0 %v830, 112
  %v914 = vpop.permute.xlu0 %913
  %915 = vrot.lane.b32.xlu0 %v832, 112
  %v916 = vpop.permute.xlu0 %915
  %917 = vrot.lane.b32.xlu0 %v834, 112
  %v918 = vpop.permute.xlu0 %917
  %919 = vrot.lane.b32.xlu0 %v836, 112
  %v920 = vpop.permute.xlu0 %919
  %921 = vrot.lane.b32.xlu0 %v838, 112
  %v922 = vpop.permute.xlu0 %921
  %923 = vrot.lane.b32.xlu0 %v840, 112
  %v924 = vpop.permute.xlu0 %923
  %925 = vrot.lane.b32.xlu0 %v842, 112
  %v926 = vpop.permute.xlu0 %925
  %927 = vrot.lane.b32.xlu0 %v844, 112
  %v928 = vpop.permute.xlu0 %927
  %929 = vrot.lane.b32.xlu0 %v846, 112
  %v930 = vpop.permute.xlu0 %929
  %931 = vrot.lane.b32.xlu0 %v848, 112
  %v932 = vpop.permute.xlu0 %931
  %933 = vrot.lane.b32.xlu0 %v850, 112
  %v934 = vpop.permute.xlu0 %933
  %935 = vrot.lane.b32.xlu0 %v852, 112
  %v936 = vpop.permute.xlu0 %935
  %937 = vrot.lane.b32.xlu0 %v854, 112
  %v938 = vpop.permute.xlu0 %937
  %939 = vrot.lane.b32.xlu0 %v856, 112
  %v940 = vpop.permute.xlu0 %939
  %941 = vrot.lane.b32.xlu0 %v858, 112
  %v942 = vpop.permute.xlu0 %941
  %943 = vrot.lane.b32.xlu0 %v860, 112
  %v944 = vpop.permute.xlu0 %943
  %945 = vrot.lane.b32.xlu0 %v862, 112
  %v946 = vpop.permute.xlu0 %945
  %947 = vrot.lane.b32.xlu0 %v864, 112
  %v948 = vpop.permute.xlu0 %947
  %949 = vrot.lane.b32.xlu0 %v866, 112
  %v950 = vpop.permute.xlu0 %949
  %951 = vrot.lane.b32.xlu0 %v868, 112
  %v952 = vpop.permute.xlu0 %951
  %953 = vrot.lane.b32.xlu0 %v870, 112
  %v954 = vpop.permute.xlu0 %953
  %955 = vrot.lane.b32.xlu0 %v872, 112
  %v956 = vpop.permute.xlu0 %955
  %957 = vrot.lane.b32.xlu0 %v874, 112
  %v958 = vpop.permute.xlu0 %957
  %v987 = vadd.f32 %v679, %v904
  %v988 = vadd.f32 %v680, %v906
  %v989 = vadd.f32 %v681, %v908
  %v990 = vadd.f32 %v682, %v910
  %v991 = vadd.f32 %v683, %v912
  %v992 = vadd.f32 %v684, %v914
  %v993 = vadd.f32 %v685, %v916
  %v994 = vadd.f32 %v686, %v918
  %v995 = vadd.f32 %v687, %v920
  %v996 = vadd.f32 %v688, %v922
  %v997 = vadd.f32 %v689, %v924
  %v998 = vadd.f32 %v690, %v926
  %v999 = vadd.f32 %v691, %v928
  %v1000 = vadd.f32 %v692, %v930
  %v1001 = vadd.f32 %v693, %v932
  %v1002 = vadd.f32 %v694, %v934
  %v1003 = vadd.f32 %v695, %v936
  %v1004 = vadd.f32 %v696, %v938
  %v1005 = vadd.f32 %v697, %v940
  %v1006 = vadd.f32 %v698, %v942
  %v1007 = vadd.f32 %v699, %v944
  %v1008 = vadd.f32 %v700, %v946
  %v1009 = vadd.f32 %v701, %v948
  %v1010 = vadd.f32 %v702, %v950
  %v1011 = vadd.f32 %v703, %v952
  %v1012 = vadd.f32 %v704, %v954
  %v1013 = vadd.f32 %v705, %v956
  %v1014 = vadd.f32 %v706, %v958
  %1043 = vrot.lane.b32.xlu0 %v679, 96
  %v1044 = vpop.permute.xlu0 %1043
  %1045 = vrot.lane.b32.xlu0 %v680, 96
  %v1046 = vpop.permute.xlu0 %1045
  %1047 = vrot.lane.b32.xlu0 %v681, 96
  %v1048 = vpop.permute.xlu0 %1047
  %1049 = vrot.lane.b32.xlu0 %v682, 96
  %v1050 = vpop.permute.xlu0 %1049
  %1051 = vrot.lane.b32.xlu0 %v683, 96
  %v1052 = vpop.permute.xlu0 %1051
  %1053 = vrot.lane.b32.xlu0 %v684, 96
  %v1054 = vpop.permute.xlu0 %1053
  %1055 = vrot.lane.b32.xlu0 %v685, 96
  %v1056 = vpop.permute.xlu0 %1055
  %1057 = vrot.lane.b32.xlu0 %v686, 96
  %v1058 = vpop.permute.xlu0 %1057
  %1059 = vrot.lane.b32.xlu0 %v687, 96
  %v1060 = vpop.permute.xlu0 %1059
  %1061 = vrot.lane.b32.xlu0 %v688, 96
  %v1062 = vpop.permute.xlu0 %1061
  %1063 = vrot.lane.b32.xlu0 %v689, 96
  %v1064 = vpop.permute.xlu0 %1063
  %1065 = vrot.lane.b32.xlu0 %v690, 96
  %v1066 = vpop.permute.xlu0 %1065
  %1067 = vrot.lane.b32.xlu0 %v691, 96
  %v1068 = vpop.permute.xlu0 %1067
  %1069 = vrot.lane.b32.xlu0 %v692, 96
  %v1070 = vpop.permute.xlu0 %1069
  %1071 = vrot.lane.b32.xlu0 %v693, 96
  %v1072 = vpop.permute.xlu0 %1071
  %1073 = vrot.lane.b32.xlu0 %v694, 96
  %v1074 = vpop.permute.xlu0 %1073
  %1075 = vrot.lane.b32.xlu0 %v695, 96
  %v1076 = vpop.permute.xlu0 %1075
  %1077 = vrot.lane.b32.xlu0 %v696, 96
  %v1078 = vpop.permute.xlu0 %1077
  %1079 = vrot.lane.b32.xlu0 %v697, 96
  %v1080 = vpop.permute.xlu0 %1079
  %1081 = vrot.lane.b32.xlu0 %v698, 96
  %v1082 = vpop.permute.xlu0 %1081
  %1083 = vrot.lane.b32.xlu0 %v699, 96
  %v1084 = vpop.permute.xlu0 %1083
  %1085 = vrot.lane.b32.xlu0 %v700, 96
  %v1086 = vpop.permute.xlu0 %1085
  %1087 = vrot.lane.b32.xlu0 %v701, 96
  %v1088 = vpop.permute.xlu0 %1087
  %1089 = vrot.lane.b32.xlu0 %v702, 96
  %v1090 = vpop.permute.xlu0 %1089
  %1091 = vrot.lane.b32.xlu0 %v703, 96
  %v1092 = vpop.permute.xlu0 %1091
  %1093 = vrot.lane.b32.xlu0 %v704, 96
  %v1094 = vpop.permute.xlu0 %1093
  %1095 = vrot.lane.b32.xlu0 %v705, 96
  %v1096 = vpop.permute.xlu0 %1095
  %1097 = vrot.lane.b32.xlu0 %v706, 96
  %v1098 = vpop.permute.xlu0 %1097
  %v1127 = vadd.f32 %v987, %v1044
  %v1128 = vadd.f32 %v988, %v1046
  %v1129 = vadd.f32 %v989, %v1048
  %v1130 = vadd.f32 %v990, %v1050
  %v1131 = vadd.f32 %v991, %v1052
  %v1132 = vadd.f32 %v992, %v1054
  %v1133 = vadd.f32 %v993, %v1056
  %v1134 = vadd.f32 %v994, %v1058
  %v1135 = vadd.f32 %v995, %v1060
  %v1136 = vadd.f32 %v996, %v1062
  %v1137 = vadd.f32 %v997, %v1064
  %v1138 = vadd.f32 %v998, %v1066
  %v1139 = vadd.f32 %v999, %v1068
  %v1140 = vadd.f32 %v1000, %v1070
  %v1141 = vadd.f32 %v1001, %v1072
  %v1142 = vadd.f32 %v1002, %v1074
  %v1143 = vadd.f32 %v1003, %v1076
  %v1144 = vadd.f32 %v1004, %v1078
  %v1145 = vadd.f32 %v1005, %v1080
  %v1146 = vadd.f32 %v1006, %v1082
  %v1147 = vadd.f32 %v1007, %v1084
  %v1148 = vadd.f32 %v1008, %v1086
  %v1149 = vadd.f32 %v1009, %v1088
  %v1150 = vadd.f32 %v1010, %v1090
  %v1151 = vadd.f32 %v1011, %v1092
  %v1152 = vadd.f32 %v1012, %v1094
  %v1153 = vadd.f32 %v1013, %v1096
  %v1154 = vadd.f32 %v1014, %v1098
  %v1155 = vmax.f32 %v1127, 0.0
  %v1156 = vmax.f32 %v1128, 0.0
  %v1157 = vmax.f32 %v1129, 0.0
  %v1158 = vmax.f32 %v1130, 0.0
  %v1159 = vmax.f32 %v1131, 0.0
  %v1160 = vmax.f32 %v1132, 0.0
  %v1161 = vmax.f32 %v1133, 0.0
  %v1162 = vmax.f32 %v1134, 0.0
  %v1163 = vmax.f32 %v1135, 0.0
  %v1164 = vmax.f32 %v1136, 0.0
  %v1165 = vmax.f32 %v1137, 0.0
  %v1166 = vmax.f32 %v1138, 0.0
  %v1167 = vmax.f32 %v1139, 0.0
  %v1168 = vmax.f32 %v1140, 0.0
  %v1169 = vmax.f32 %v1141, 0.0
  %v1170 = vmax.f32 %v1142, 0.0
  %v1171 = vmax.f32 %v1143, 0.0
  %v1172 = vmax.f32 %v1144, 0.0
  %v1173 = vmax.f32 %v1145, 0.0
  %v1174 = vmax.f32 %v1146, 0.0
  %v1175 = vmax.f32 %v1147, 0.0
  %v1176 = vmax.f32 %v1148, 0.0
  %v1177 = vmax.f32 %v1149, 0.0
  %v1178 = vmax.f32 %v1150, 0.0
  %v1179 = vmax.f32 %v1151, 0.0
  %v1180 = vmax.f32 %v1152, 0.0
  %v1181 = vmax.f32 %v1153, 0.0
  %v1182 = vmax.f32 %v1154, 0.0
  %v1183 = vpack.c.bf16 %v1156, %v1155
  %v1184 = vpack.c.bf16 %v1158, %v1157
  %v1185 = vpack.c.bf16 %v1160, %v1159
  %v1186 = vpack.c.bf16 %v1162, %v1161
  %v1187 = vpack.c.bf16 %v1164, %v1163
  %v1188 = vpack.c.bf16 %v1166, %v1165
  %v1189 = vpack.c.bf16 %v1168, %v1167
  %v1190 = vpack.c.bf16 %v1170, %v1169
  %v1191 = vpack.c.bf16 %v1172, %v1171
  %v1192 = vpack.c.bf16 %v1174, %v1173
  %v1193 = vpack.c.bf16 %v1176, %v1175
  %v1194 = vpack.c.bf16 %v1178, %v1177
  %v1195 = vpack.c.bf16 %v1180, %v1179
  %v1196 = vpack.c.bf16 %v1182, %v1181
  %v1197 = vld [vmem:[%s4] sm:$0xf]
  %v1198 = vld [vmem:[%s4 + $0x4] sm:$0xf]
  %v1201 = vunpack.c.l.b16 %v1197
  %v1202 = vunpack.c.l.b16 %v1198
  %v1203 = vpack.c.b16 %v1202, %v1201
  %vm1205 = vcmask 130048
  %v1207 = vsel %vm1205, %v1183, 0
  %v1210 = vsel %vm1205, %v1184, 0
  %v1213 = vsel %vm1205, %v1185, 0
  %v1216 = vsel %vm1205, %v1186, 0
  %v1219 = vsel %vm1205, %v1187, 0
  %v1222 = vsel %vm1205, %v1188, 0
  %v1225 = vsel %vm1205, %v1189, 0
  %v1228 = vsel %vm1205, %v1190, 0
  %v1231 = vsel %vm1205, %v1191, 0
  %v1234 = vsel %vm1205, %v1192, 0
  %v1237 = vsel %vm1205, %v1193, 0
  %v1240 = vsel %vm1205, %v1194, 0
  %v1243 = vsel %vm1205, %v1195, 0
  %v1246 = vsel %vm1205, %v1196, 0
  %1248 = vmatprep.subr.bf16.mxu0 0
  %1249 = vmatpush1.bf16.msra.mxu0 %v1203
  %1250 = vmatprep.subr.bf16.mxu0 0
  %1251 = vmatpush1.bf16.msra.mxu0 0
  %1252 = vmatprep.subr.bf16.mxu0 0
  %1253 = vmatpush1.bf16.msra.mxu0 0
  %1254 = vmatprep.subr.bf16.mxu0 0
  %1255 = vmatpush1.bf16.msra.mxu0 0
  %1256 = vmatprep.subr.bf16.mxu0 0
  %1257 = vmatpush1.bf16.msra.mxu0 0
  %1258 = vmatprep.subr.bf16.mxu0 0
  %1259 = vmatpush1.bf16.msra.mxu0 0
  %1260 = vmatprep.subr.bf16.mxu0 0
  %1261 = vmatpush1.bf16.msra.mxu0 0
  %1262 = vmatprep.subr.bf16.mxu0 0
  %1263 = vmatpush1.bf16.msra.mxu0 0
  %1264 = vmatprep.subr.bf16.mxu0 0
  %1265 = vmatpush1.bf16.msra.mxu0 0
  %1266 = vmatprep.subr.bf16.mxu0 0
  %1267 = vmatpush1.bf16.msra.mxu0 0
  %1268 = vmatprep.subr.bf16.mxu0 0
  %1269 = vmatpush1.bf16.msra.mxu0 0
  %1270 = vmatprep.subr.bf16.mxu0 0
  %1271 = vmatpush1.bf16.msra.mxu0 0
  %1272 = vmatprep.subr.bf16.mxu0 0
  %1273 = vmatpush1.bf16.msra.mxu0 0
  %1274 = vmatprep.subr.bf16.mxu0 0
  %1275 = vmatpush1.bf16.msra.mxu0 0
  %1276 = vmatprep.subr.bf16.mxu0 0
  %1277 = vmatpush1.bf16.msra.mxu0 0
  %1278 = vmatprep.subr.bf16.mxu0 0
  %1279 = vmatpush1.bf16.msra.mxu0 0
  %1280 = vmatprep.mubr.bf16.mxu0 0
  %1281 = vmatmul.mubr.bf16.gmra.mrb[0].mxu0 %v1207
  %v1282 = vpop.f32.mrb[0].mxu0
  %v1283 = vadd.f32 0.0, %v1282
  %v1284 = vpop.f32.mrb[0].mxu0
  %v1285 = vpop.f32.mrb[0].mxu0
  %v1286 = vadd.f32 0.0, %v1285
  %v1287 = vpop.f32.mrb[0].mxu0
  %1288 = vmatprep.mubr.bf16.mxu0 0
  %1289 = vmatmul.mubr.bf16.gmra.mrb[0].mxu0 %v1210
  %v1290 = vpop.f32.mrb[0].mxu0
  %v1291 = vadd.f32 0.0, %v1290
  %v1292 = vpop.f32.mrb[0].mxu0
  %v1293 = vpop.f32.mrb[0].mxu0
  %v1294 = vadd.f32 0.0, %v1293
  %v1295 = vpop.f32.mrb[0].mxu0
  %1296 = vmatprep.mubr.bf16.mxu0 0
  %1297 = vmatmul.mubr.bf16.gmra.mrb[0].mxu0 %v1213
  %v1298 = vpop.f32.mrb[0].mxu0
  %v1299 = vadd.f32 0.0, %v1298
  %v1300 = vpop.f32.mrb[0].mxu0
  %v1301 = vpop.f32.mrb[0].mxu0
  %v1302 = vadd.f32 0.0, %v1301
  %v1303 = vpop.f32.mrb[0].mxu0
  %1304 = vmatprep.mubr.bf16.mxu0 0
  %1305 = vmatmul.mubr.bf16.gmra.mrb[0].mxu0 %v1216
  %v1306 = vpop.f32.mrb[0].mxu0
  %v1307 = vadd.f32 0.0, %v1306
  %v1308 = vpop.f32.mrb[0].mxu0
  %v1309 = vpop.f32.mrb[0].mxu0
  %v1310 = vadd.f32 0.0, %v1309
  %v1311 = vpop.f32.mrb[0].mxu0
  %1312 = vmatprep.mubr.bf16.mxu0 0
  %1313 = vmatmul.mubr.bf16.gmra.mrb[0].mxu0 %v1219
  %v1314 = vpop.f32.mrb[0].mxu0
  %v1315 = vadd.f32 0.0, %v1314
  %v1316 = vpop.f32.mrb[0].mxu0
  %v1317 = vpop.f32.mrb[0].mxu0
  %v1318 = vadd.f32 0.0, %v1317
  %v1319 = vpop.f32.mrb[0].mxu0
  %1320 = vmatprep.mubr.bf16.mxu0 0
  %1321 = vmatmul.mubr.bf16.gmra.mrb[0].mxu0 %v1222
  %v1322 = vpop.f32.mrb[0].mxu0
  %v1323 = vadd.f32 0.0, %v1322
  %v1324 = vpop.f32.mrb[0].mxu0
  %v1325 = vpop.f32.mrb[0].mxu0
  %v1326 = vadd.f32 0.0, %v1325
  %v1327 = vpop.f32.mrb[0].mxu0
  %1328 = vmatprep.mubr.bf16.mxu0 0
  %1329 = vmatmul.mubr.bf16.gmra.mrb[0].mxu0 %v1225
  %v1330 = vpop.f32.mrb[0].mxu0
  %v1331 = vadd.f32 0.0, %v1330
  %v1332 = vpop.f32.mrb[0].mxu0
  %v1333 = vpop.f32.mrb[0].mxu0
  %v1334 = vadd.f32 0.0, %v1333
  %v1335 = vpop.f32.mrb[0].mxu0
  %1336 = vmatprep.mubr.bf16.mxu0 0
  %1337 = vmatmul.mubr.bf16.gmra.mrb[0].mxu0 %v1228
  %v1338 = vpop.f32.mrb[0].mxu0
  %v1339 = vadd.f32 0.0, %v1338
  %v1340 = vpop.f32.mrb[0].mxu0
  %v1341 = vpop.f32.mrb[0].mxu0
  %v1342 = vadd.f32 0.0, %v1341
  %v1343 = vpop.f32.mrb[0].mxu0
  %1344 = vmatprep.mubr.bf16.mxu0 0
  %1345 = vmatmul.mubr.bf16.gmra.mrb[0].mxu0 %v1231
  %v1346 = vpop.f32.mrb[0].mxu0
  %v1347 = vadd.f32 0.0, %v1346
  %v1348 = vpop.f32.mrb[0].mxu0
  %v1349 = vpop.f32.mrb[0].mxu0
  %v1350 = vadd.f32 0.0, %v1349
  %v1351 = vpop.f32.mrb[0].mxu0
  %1352 = vmatprep.mubr.bf16.mxu0 0
  %1353 = vmatmul.mubr.bf16.gmra.mrb[0].mxu0 %v1234
  %v1354 = vpop.f32.mrb[0].mxu0
  %v1355 = vadd.f32 0.0, %v1354
  %v1356 = vpop.f32.mrb[0].mxu0
  %v1357 = vpop.f32.mrb[0].mxu0
  %v1358 = vadd.f32 0.0, %v1357
  %v1359 = vpop.f32.mrb[0].mxu0
  %1360 = vmatprep.mubr.bf16.mxu0 0
  %1361 = vmatmul.mubr.bf16.gmra.mrb[0].mxu0 %v1237
  %v1362 = vpop.f32.mrb[0].mxu0
  %v1363 = vadd.f32 0.0, %v1362
  %v1364 = vpop.f32.mrb[0].mxu0
  %v1365 = vpop.f32.mrb[0].mxu0
  %v1366 = vadd.f32 0.0, %v1365
  %v1367 = vpop.f32.mrb[0].mxu0
  %1368 = vmatprep.mubr.bf16.mxu0 0
  %1369 = vmatmul.mubr.bf16.gmra.mrb[0].mxu0 %v1240
  %v1370 = vpop.f32.mrb[0].mxu0
  %v1371 = vadd.f32 0.0, %v1370
  %v1372 = vpop.f32.mrb[0].mxu0
  %v1373 = vpop.f32.mrb[0].mxu0
  %v1374 = vadd.f32 0.0, %v1373
  %v1375 = vpop.f32.mrb[0].mxu0
  %1376 = vmatprep.mubr.bf16.mxu0 0
  %1377 = vmatmul.mubr.bf16.gmra.mrb[0].mxu0 %v1243
  %v1378 = vpop.f32.mrb[0].mxu0
  %v1379 = vadd.f32 0.0, %v1378
  %v1380 = vpop.f32.mrb[0].mxu0
  %v1381 = vpop.f32.mrb[0].mxu0
  %v1382 = vadd.f32 0.0, %v1381
  %v1383 = vpop.f32.mrb[0].mxu0
  %1384 = vmatprep.mubr.bf16.mxu0 0
  %1385 = vmatmul.mubr.bf16.gmra.mrb[0].mxu0 %v1246
  %v1386 = vpop.f32.mrb[0].mxu0
  %v1387 = vadd.f32 0.0, %v1386
  %v1388 = vpop.f32.mrb[0].mxu0
  %v1389 = vpop.f32.mrb[0].mxu0
  %v1390 = vadd.f32 0.0, %v1389
  %v1391 = vpop.f32.mrb[0].mxu0
  %1392 = vdwg.mxu0
  %v1393 = vpack.c.bf16 %v1286, %v1283
  %v1394 = vpack.c.bf16 %v1294, %v1291
  %v1395 = vpack.c.bf16 %v1302, %v1299
  %v1396 = vpack.c.bf16 %v1310, %v1307
  %v1397 = vpack.c.bf16 %v1318, %v1315
  %v1398 = vpack.c.bf16 %v1326, %v1323
  %v1399 = vpack.c.bf16 %v1334, %v1331
  %v1400 = vpack.c.bf16 %v1342, %v1339
  %v1401 = vpack.c.bf16 %v1350, %v1347
  %v1402 = vpack.c.bf16 %v1358, %v1355
  %v1403 = vpack.c.bf16 %v1366, %v1363
  %v1404 = vpack.c.bf16 %v1374, %v1371
  %v1405 = vpack.c.bf16 %v1382, %v1379
  %v1406 = vpack.c.bf16 %v1390, %v1387
  %v1407 = vld [vmem:[%s1] sm:$0xf]
  %v1408 = vld [vmem:[%s1 + $0x4] sm:$0xf]
  %v1411 = vunpack.c.l.b16 %v1407
  %v1412 = vunpack.c.l.b16 %v1408
  %v1413 = vpack.c.b16 %v1412, %v1411
  %v1415 = vsel %vm1205, %v1413, 0
  %1417 = vmatprep.subr.bf16.mxu0 0
  %1418 = vmatpush1.bf16.msra.mxu0 %v1393
  %1419 = vmatprep.subr.bf16.mxu0 0
  %1420 = vmatpush1.bf16.msra.mxu0 0
  %1421 = vmatprep.subr.bf16.mxu0 0
  %1422 = vmatpush1.bf16.msra.mxu0 0
  %1423 = vmatprep.subr.bf16.mxu0 0
  %1424 = vmatpush1.bf16.msra.mxu0 0
  %1425 = vmatprep.subr.bf16.mxu0 0
  %1426 = vmatpush1.bf16.msra.mxu0 0
  %1427 = vmatprep.subr.bf16.mxu0 0
  %1428 = vmatpush1.bf16.msra.mxu0 0
  %1429 = vmatprep.subr.bf16.mxu0 0
  %1430 = vmatpush1.bf16.msra.mxu0 0
  %1431 = vmatprep.subr.bf16.mxu0 0
  %1432 = vmatpush1.bf16.msra.mxu0 0
  %1433 = vmatprep.subr.bf16.mxu0 0
  %1434 = vmatpush1.bf16.msra.mxu0 0
  %1435 = vmatprep.subr.bf16.mxu0 0
  %1436 = vmatpush1.bf16.msra.mxu0 0
  %1437 = vmatprep.subr.bf16.mxu0 0
  %1438 = vmatpush1.bf16.msra.mxu0 0
  %1439 = vmatprep.subr.bf16.mxu0 0
  %1440 = vmatpush1.bf16.msra.mxu0 0
  %1441 = vmatprep.subr.bf16.mxu0 0
  %1442 = vmatpush1.bf16.msra.mxu0 0
  %1443 = vmatprep.subr.bf16.mxu0 0
  %1444 = vmatpush1.bf16.msra.mxu0 0
  %1445 = vmatprep.subr.bf16.mxu0 0
  %1446 = vmatpush1.bf16.msra.mxu0 0
  %1447 = vmatprep.subr.bf16.mxu0 0
  %1448 = vmatpush1.bf16.msra.mxu0 0
  %1449 = vmatprep.mubr.bf16.mxu0 0
  %1450 = vmatmul.mubr.bf16.gmra.mrb[0].mxu0 %v1415
  %v1451 = vpop.f32.mrb[0].mxu0
  %v1452 = vadd.f32 0.0, %v1451
  %v1453 = vpop.f32.mrb[0].mxu0
  %v1454 = vpop.f32.mrb[0].mxu0
  %v1455 = vadd.f32 0.0, %v1454
  %v1456 = vpop.f32.mrb[0].mxu0
  %1457 = vdwg.mxu0
  %1458 = vmatprep.subr.bf16.mxu0 0
  %1459 = vmatpush1.bf16.msra.mxu0 %v1394
  %1460 = vmatprep.subr.bf16.mxu0 0
  %1461 = vmatpush1.bf16.msra.mxu0 0
  %1462 = vmatprep.subr.bf16.mxu0 0
  %1463 = vmatpush1.bf16.msra.mxu0 0
  %1464 = vmatprep.subr.bf16.mxu0 0
  %1465 = vmatpush1.bf16.msra.mxu0 0
  %1466 = vmatprep.subr.bf16.mxu0 0
  %1467 = vmatpush1.bf16.msra.mxu0 0
  %1468 = vmatprep.subr.bf16.mxu0 0
  %1469 = vmatpush1.bf16.msra.mxu0 0
  %1470 = vmatprep.subr.bf16.mxu0 0
  %1471 = vmatpush1.bf16.msra.mxu0 0
  %1472 = vmatprep.subr.bf16.mxu0 0
  %1473 = vmatpush1.bf16.msra.mxu0 0
  %1474 = vmatprep.subr.bf16.mxu0 0
  %1475 = vmatpush1.bf16.msra.mxu0 0
  %1476 = vmatprep.subr.bf16.mxu0 0
  %1477 = vmatpush1.bf16.msra.mxu0 0
  %1478 = vmatprep.subr.bf16.mxu0 0
  %1479 = vmatpush1.bf16.msra.mxu0 0
  %1480 = vmatprep.subr.bf16.mxu0 0
  %1481 = vmatpush1.bf16.msra.mxu0 0
  %1482 = vmatprep.subr.bf16.mxu0 0
  %1483 = vmatpush1.bf16.msra.mxu0 0
  %1484 = vmatprep.subr.bf16.mxu0 0
  %1485 = vmatpush1.bf16.msra.mxu0 0
  %1486 = vmatprep.subr.bf16.mxu0 0
  %1487 = vmatpush1.bf16.msra.mxu0 0
  %1488 = vmatprep.subr.bf16.mxu0 0
  %1489 = vmatpush1.bf16.msra.mxu0 0
  %1490 = vmatprep.mubr.bf16.mxu0 0
  %1491 = vmatmul.mubr.bf16.gmra.mrb[0].mxu0 %v1415
  %v1492 = vpop.f32.mrb[0].mxu0
  %v1493 = vadd.f32 0.0, %v1492
  %v1494 = vpop.f32.mrb[0].mxu0
  %v1495 = vpop.f32.mrb[0].mxu0
  %v1496 = vadd.f32 0.0, %v1495
  %v1497 = vpop.f32.mrb[0].mxu0
  %1498 = vdwg.mxu0
  %1499 = vmatprep.subr.bf16.mxu0 0
  %1500 = vmatpush1.bf16.msra.mxu0 %v1395
  %1501 = vmatprep.subr.bf16.mxu0 0
  %1502 = vmatpush1.bf16.msra.mxu0 0
  %1503 = vmatprep.subr.bf16.mxu0 0
  %1504 = vmatpush1.bf16.msra.mxu0 0
  %1505 = vmatprep.subr.bf16.mxu0 0
  %1506 = vmatpush1.bf16.msra.mxu0 0
  %1507 = vmatprep.subr.bf16.mxu0 0
  %1508 = vmatpush1.bf16.msra.mxu0 0
  %1509 = vmatprep.subr.bf16.mxu0 0
  %1510 = vmatpush1.bf16.msra.mxu0 0
  %1511 = vmatprep.subr.bf16.mxu0 0
  %1512 = vmatpush1.bf16.msra.mxu0 0
  %1513 = vmatprep.subr.bf16.mxu0 0
  %1514 = vmatpush1.bf16.msra.mxu0 0
  %1515 = vmatprep.subr.bf16.mxu0 0
  %1516 = vmatpush1.bf16.msra.mxu0 0
  %1517 = vmatprep.subr.bf16.mxu0 0
  %1518 = vmatpush1.bf16.msra.mxu0 0
  %1519 = vmatprep.subr.bf16.mxu0 0
  %1520 = vmatpush1.bf16.msra.mxu0 0
  %1521 = vmatprep.subr.bf16.mxu0 0
  %1522 = vmatpush1.bf16.msra.mxu0 0
  %1523 = vmatprep.subr.bf16.mxu0 0
  %1524 = vmatpush1.bf16.msra.mxu0 0
  %1525 = vmatprep.subr.bf16.mxu0 0
  %1526 = vmatpush1.bf16.msra.mxu0 0
  %1527 = vmatprep.subr.bf16.mxu0 0
  %1528 = vmatpush1.bf16.msra.mxu0 0
  %1529 = vmatprep.subr.bf16.mxu0 0
  %1530 = vmatpush1.bf16.msra.mxu0 0
  %1531 = vmatprep.mubr.bf16.mxu0 0
  %1532 = vmatmul.mubr.bf16.gmra.mrb[0].mxu0 %v1415
  %v1533 = vpop.f32.mrb[0].mxu0
  %v1534 = vadd.f32 0.0, %v1533
  %v1535 = vpop.f32.mrb[0].mxu0
  %v1536 = vpop.f32.mrb[0].mxu0
  %v1537 = vadd.f32 0.0, %v1536
  %v1538 = vpop.f32.mrb[0].mxu0
  %1539 = vdwg.mxu0
  %1540 = vmatprep.subr.bf16.mxu0 0
  %1541 = vmatpush1.bf16.msra.mxu0 %v1396
  %1542 = vmatprep.subr.bf16.mxu0 0
  %1543 = vmatpush1.bf16.msra.mxu0 0
  %1544 = vmatprep.subr.bf16.mxu0 0
  %1545 = vmatpush1.bf16.msra.mxu0 0
  %1546 = vmatprep.subr.bf16.mxu0 0
  %1547 = vmatpush1.bf16.msra.mxu0 0
  %1548 = vmatprep.subr.bf16.mxu0 0
  %1549 = vmatpush1.bf16.msra.mxu0 0
  %1550 = vmatprep.subr.bf16.mxu0 0
  %1551 = vmatpush1.bf16.msra.mxu0 0
  %1552 = vmatprep.subr.bf16.mxu0 0
  %1553 = vmatpush1.bf16.msra.mxu0 0
  %1554 = vmatprep.subr.bf16.mxu0 0
  %1555 = vmatpush1.bf16.msra.mxu0 0
  %1556 = vmatprep.subr.bf16.mxu0 0
  %1557 = vmatpush1.bf16.msra.mxu0 0
  %1558 = vmatprep.subr.bf16.mxu0 0
  %1559 = vmatpush1.bf16.msra.mxu0 0
  %1560 = vmatprep.subr.bf16.mxu0 0
  %1561 = vmatpush1.bf16.msra.mxu0 0
  %1562 = vmatprep.subr.bf16.mxu0 0
  %1563 = vmatpush1.bf16.msra.mxu0 0
  %1564 = vmatprep.subr.bf16.mxu0 0
  %1565 = vmatpush1.bf16.msra.mxu0 0
  %1566 = vmatprep.subr.bf16.mxu0 0
  %1567 = vmatpush1.bf16.msra.mxu0 0
  %1568 = vmatprep.subr.bf16.mxu0 0
  %1569 = vmatpush1.bf16.msra.mxu0 0
  %1570 = vmatprep.subr.bf16.mxu0 0
  %1571 = vmatpush1.bf16.msra.mxu0 0
  %1572 = vmatprep.mubr.bf16.mxu0 0
  %1573 = vmatmul.mubr.bf16.gmra.mrb[0].mxu0 %v1415
  %v1574 = vpop.f32.mrb[0].mxu0
  %v1575 = vadd.f32 0.0, %v1574
  %v1576 = vpop.f32.mrb[0].mxu0
  %v1577 = vpop.f32.mrb[0].mxu0
  %v1578 = vadd.f32 0.0, %v1577
  %v1579 = vpop.f32.mrb[0].mxu0
  %1580 = vdwg.mxu0
  %1581 = vmatprep.subr.bf16.mxu0 0
  %1582 = vmatpush1.bf16.msra.mxu0 %v1397
  %1583 = vmatprep.subr.bf16.mxu0 0
  %1584 = vmatpush1.bf16.msra.mxu0 0
  %1585 = vmatprep.subr.bf16.mxu0 0
  %1586 = vmatpush1.bf16.msra.mxu0 0
  %1587 = vmatprep.subr.bf16.mxu0 0
  %1588 = vmatpush1.bf16.msra.mxu0 0
  %1589 = vmatprep.subr.bf16.mxu0 0
  %1590 = vmatpush1.bf16.msra.mxu0 0
  %1591 = vmatprep.subr.bf16.mxu0 0
  %1592 = vmatpush1.bf16.msra.mxu0 0
  %1593 = vmatprep.subr.bf16.mxu0 0
  %1594 = vmatpush1.bf16.msra.mxu0 0
  %1595 = vmatprep.subr.bf16.mxu0 0
  %1596 = vmatpush1.bf16.msra.mxu0 0
  %1597 = vmatprep.subr.bf16.mxu0 0
  %1598 = vmatpush1.bf16.msra.mxu0 0
  %1599 = vmatprep.subr.bf16.mxu0 0
  %1600 = vmatpush1.bf16.msra.mxu0 0
  %1601 = vmatprep.subr.bf16.mxu0 0
  %1602 = vmatpush1.bf16.msra.mxu0 0
  %1603 = vmatprep.subr.bf16.mxu0 0
  %1604 = vmatpush1.bf16.msra.mxu0 0
  %1605 = vmatprep.subr.bf16.mxu0 0
  %1606 = vmatpush1.bf16.msra.mxu0 0
  %1607 = vmatprep.subr.bf16.mxu0 0
  %1608 = vmatpush1.bf16.msra.mxu0 0
  %1609 = vmatprep.subr.bf16.mxu0 0
  %1610 = vmatpush1.bf16.msra.mxu0 0
  %1611 = vmatprep.subr.bf16.mxu0 0
  %1612 = vmatpush1.bf16.msra.mxu0 0
  %1613 = vmatprep.mubr.bf16.mxu0 0
  %1614 = vmatmul.mubr.bf16.gmra.mrb[0].mxu0 %v1415
  %v1615 = vpop.f32.mrb[0].mxu0
  %v1616 = vadd.f32 0.0, %v1615
  %v1617 = vpop.f32.mrb[0].mxu0
  %v1618 = vpop.f32.mrb[0].mxu0
  %v1619 = vadd.f32 0.0, %v1618
  %v1620 = vpop.f32.mrb[0].mxu0
  %1621 = vdwg.mxu0
  %1622 = vmatprep.subr.bf16.mxu0 0
  %1623 = vmatpush1.bf16.msra.mxu0 %v1398
  %1624 = vmatprep.subr.bf16.mxu0 0
  %1625 = vmatpush1.bf16.msra.mxu0 0
  %1626 = vmatprep.subr.bf16.mxu0 0
  %1627 = vmatpush1.bf16.msra.mxu0 0
  %1628 = vmatprep.subr.bf16.mxu0 0
  %1629 = vmatpush1.bf16.msra.mxu0 0
  %1630 = vmatprep.subr.bf16.mxu0 0
  %1631 = vmatpush1.bf16.msra.mxu0 0
  %1632 = vmatprep.subr.bf16.mxu0 0
  %1633 = vmatpush1.bf16.msra.mxu0 0
  %1634 = vmatprep.subr.bf16.mxu0 0
  %1635 = vmatpush1.bf16.msra.mxu0 0
  %1636 = vmatprep.subr.bf16.mxu0 0
  %1637 = vmatpush1.bf16.msra.mxu0 0
  %1638 = vmatprep.subr.bf16.mxu0 0
  %1639 = vmatpush1.bf16.msra.mxu0 0
  %1640 = vmatprep.subr.bf16.mxu0 0
  %1641 = vmatpush1.bf16.msra.mxu0 0
  %1642 = vmatprep.subr.bf16.mxu0 0
  %1643 = vmatpush1.bf16.msra.mxu0 0
  %1644 = vmatprep.subr.bf16.mxu0 0
  %1645 = vmatpush1.bf16.msra.mxu0 0
  %1646 = vmatprep.subr.bf16.mxu0 0
  %1647 = vmatpush1.bf16.msra.mxu0 0
  %1648 = vmatprep.subr.bf16.mxu0 0
  %1649 = vmatpush1.bf16.msra.mxu0 0
  %1650 = vmatprep.subr.bf16.mxu0 0
  %1651 = vmatpush1.bf16.msra.mxu0 0
  %1652 = vmatprep.subr.bf16.mxu0 0
  %1653 = vmatpush1.bf16.msra.mxu0 0
  %1654 = vmatprep.mubr.bf16.mxu0 0
  %1655 = vmatmul.mubr.bf16.gmra.mrb[0].mxu0 %v1415
  %v1656 = vpop.f32.mrb[0].mxu0
  %v1657 = vadd.f32 0.0, %v1656
  %v1658 = vpop.f32.mrb[0].mxu0
  %v1659 = vpop.f32.mrb[0].mxu0
  %v1660 = vadd.f32 0.0, %v1659
  %v1661 = vpop.f32.mrb[0].mxu0
  %1662 = vdwg.mxu0
  %1663 = vmatprep.subr.bf16.mxu0 0
  %1664 = vmatpush1.bf16.msra.mxu0 %v1399
  %1665 = vmatprep.subr.bf16.mxu0 0
  %1666 = vmatpush1.bf16.msra.mxu0 0
  %1667 = vmatprep.subr.bf16.mxu0 0
  %1668 = vmatpush1.bf16.msra.mxu0 0
  %1669 = vmatprep.subr.bf16.mxu0 0
  %1670 = vmatpush1.bf16.msra.mxu0 0
  %1671 = vmatprep.subr.bf16.mxu0 0
  %1672 = vmatpush1.bf16.msra.mxu0 0
  %1673 = vmatprep.subr.bf16.mxu0 0
  %1674 = vmatpush1.bf16.msra.mxu0 0
  %1675 = vmatprep.subr.bf16.mxu0 0
  %1676 = vmatpush1.bf16.msra.mxu0 0
  %1677 = vmatprep.subr.bf16.mxu0 0
  %1678 = vmatpush1.bf16.msra.mxu0 0
  %1679 = vmatprep.subr.bf16.mxu0 0
  %1680 = vmatpush1.bf16.msra.mxu0 0
  %1681 = vmatprep.subr.bf16.mxu0 0
  %1682 = vmatpush1.bf16.msra.mxu0 0
  %1683 = vmatprep.subr.bf16.mxu0 0
  %1684 = vmatpush1.bf16.msra.mxu0 0
  %1685 = vmatprep.subr.bf16.mxu0 0
  %1686 = vmatpush1.bf16.msra.mxu0 0
  %1687 = vmatprep.subr.bf16.mxu0 0
  %1688 = vmatpush1.bf16.msra.mxu0 0
  %1689 = vmatprep.subr.bf16.mxu0 0
  %1690 = vmatpush1.bf16.msra.mxu0 0
  %1691 = vmatprep.subr.bf16.mxu0 0
  %1692 = vmatpush1.bf16.msra.mxu0 0
  %1693 = vmatprep.subr.bf16.mxu0 0
  %1694 = vmatpush1.bf16.msra.mxu0 0
  %1695 = vmatprep.mubr.bf16.mxu0 0
  %1696 = vmatmul.mubr.bf16.gmra.mrb[0].mxu0 %v1415
  %v1697 = vpop.f32.mrb[0].mxu0
  %v1698 = vadd.f32 0.0, %v1697
  %v1699 = vpop.f32.mrb[0].mxu0
  %v1700 = vpop.f32.mrb[0].mxu0
  %v1701 = vadd.f32 0.0, %v1700
  %v1702 = vpop.f32.mrb[0].mxu0
  %1703 = vdwg.mxu0
  %1704 = vmatprep.subr.bf16.mxu0 0
  %1705 = vmatpush1.bf16.msra.mxu0 %v1400
  %1706 = vmatprep.subr.bf16.mxu0 0
  %1707 = vmatpush1.bf16.msra.mxu0 0
  %1708 = vmatprep.subr.bf16.mxu0 0
  %1709 = vmatpush1.bf16.msra.mxu0 0
  %1710 = vmatprep.subr.bf16.mxu0 0
  %1711 = vmatpush1.bf16.msra.mxu0 0
  %1712 = vmatprep.subr.bf16.mxu0 0
  %1713 = vmatpush1.bf16.msra.mxu0 0
  %1714 = vmatprep.subr.bf16.mxu0 0
  %1715 = vmatpush1.bf16.msra.mxu0 0
  %1716 = vmatprep.subr.bf16.mxu0 0
  %1717 = vmatpush1.bf16.msra.mxu0 0
  %1718 = vmatprep.subr.bf16.mxu0 0
  %1719 = vmatpush1.bf16.msra.mxu0 0
  %1720 = vmatprep.subr.bf16.mxu0 0
  %1721 = vmatpush1.bf16.msra.mxu0 0
  %1722 = vmatprep.subr.bf16.mxu0 0
  %1723 = vmatpush1.bf16.msra.mxu0 0
  %1724 = vmatprep.subr.bf16.mxu0 0
  %1725 = vmatpush1.bf16.msra.mxu0 0
  %1726 = vmatprep.subr.bf16.mxu0 0
  %1727 = vmatpush1.bf16.msra.mxu0 0
  %1728 = vmatprep.subr.bf16.mxu0 0
  %1729 = vmatpush1.bf16.msra.mxu0 0
  %1730 = vmatprep.subr.bf16.mxu0 0
  %1731 = vmatpush1.bf16.msra.mxu0 0
  %1732 = vmatprep.subr.bf16.mxu0 0
  %1733 = vmatpush1.bf16.msra.mxu0 0
  %1734 = vmatprep.subr.bf16.mxu0 0
  %1735 = vmatpush1.bf16.msra.mxu0 0
  %1736 = vmatprep.mubr.bf16.mxu0 0
  %1737 = vmatmul.mubr.bf16.gmra.mrb[0].mxu0 %v1415
  %v1738 = vpop.f32.mrb[0].mxu0
  %v1739 = vadd.f32 0.0, %v1738
  %v1740 = vpop.f32.mrb[0].mxu0
  %v1741 = vpop.f32.mrb[0].mxu0
  %v1742 = vadd.f32 0.0, %v1741
  %v1743 = vpop.f32.mrb[0].mxu0
  %1744 = vdwg.mxu0
  %1745 = vmatprep.subr.bf16.mxu0 0
  %1746 = vmatpush1.bf16.msra.mxu0 %v1401
  %1747 = vmatprep.subr.bf16.mxu0 0
  %1748 = vmatpush1.bf16.msra.mxu0 0
  %1749 = vmatprep.subr.bf16.mxu0 0
  %1750 = vmatpush1.bf16.msra.mxu0 0
  %1751 = vmatprep.subr.bf16.mxu0 0
  %1752 = vmatpush1.bf16.msra.mxu0 0
  %1753 = vmatprep.subr.bf16.mxu0 0
  %1754 = vmatpush1.bf16.msra.mxu0 0
  %1755 = vmatprep.subr.bf16.mxu0 0
  %1756 = vmatpush1.bf16.msra.mxu0 0
  %1757 = vmatprep.subr.bf16.mxu0 0
  %1758 = vmatpush1.bf16.msra.mxu0 0
  %1759 = vmatprep.subr.bf16.mxu0 0
  %1760 = vmatpush1.bf16.msra.mxu0 0
  %1761 = vmatprep.subr.bf16.mxu0 0
  %1762 = vmatpush1.bf16.msra.mxu0 0
  %1763 = vmatprep.subr.bf16.mxu0 0
  %1764 = vmatpush1.bf16.msra.mxu0 0
  %1765 = vmatprep.subr.bf16.mxu0 0
  %1766 = vmatpush1.bf16.msra.mxu0 0
  %1767 = vmatprep.subr.bf16.mxu0 0
  %1768 = vmatpush1.bf16.msra.mxu0 0
  %1769 = vmatprep.subr.bf16.mxu0 0
  %1770 = vmatpush1.bf16.msra.mxu0 0
  %1771 = vmatprep.subr.bf16.mxu0 0
  %1772 = vmatpush1.bf16.msra.mxu0 0
  %1773 = vmatprep.subr.bf16.mxu0 0
  %1774 = vmatpush1.bf16.msra.mxu0 0
  %1775 = vmatprep.subr.bf16.mxu0 0
  %1776 = vmatpush1.bf16.msra.mxu0 0
  %1777 = vmatprep.mubr.bf16.mxu0 0
  %1778 = vmatmul.mubr.bf16.gmra.mrb[0].mxu0 %v1415
  %v1779 = vpop.f32.mrb[0].mxu0
  %v1780 = vadd.f32 0.0, %v1779
  %v1781 = vpop.f32.mrb[0].mxu0
  %v1782 = vpop.f32.mrb[0].mxu0
  %v1783 = vadd.f32 0.0, %v1782
  %v1784 = vpop.f32.mrb[0].mxu0
  %1785 = vdwg.mxu0
  %1786 = vmatprep.subr.bf16.mxu0 0
  %1787 = vmatpush1.bf16.msra.mxu0 %v1402
  %1788 = vmatprep.subr.bf16.mxu0 0
  %1789 = vmatpush1.bf16.msra.mxu0 0
  %1790 = vmatprep.subr.bf16.mxu0 0
  %1791 = vmatpush1.bf16.msra.mxu0 0
  %1792 = vmatprep.subr.bf16.mxu0 0
  %1793 = vmatpush1.bf16.msra.mxu0 0
  %1794 = vmatprep.subr.bf16.mxu0 0
  %1795 = vmatpush1.bf16.msra.mxu0 0
  %1796 = vmatprep.subr.bf16.mxu0 0
  %1797 = vmatpush1.bf16.msra.mxu0 0
  %1798 = vmatprep.subr.bf16.mxu0 0
  %1799 = vmatpush1.bf16.msra.mxu0 0
  %1800 = vmatprep.subr.bf16.mxu0 0
  %1801 = vmatpush1.bf16.msra.mxu0 0
  %1802 = vmatprep.subr.bf16.mxu0 0
  %1803 = vmatpush1.bf16.msra.mxu0 0
  %1804 = vmatprep.subr.bf16.mxu0 0
  %1805 = vmatpush1.bf16.msra.mxu0 0
  %1806 = vmatprep.subr.bf16.mxu0 0
  %1807 = vmatpush1.bf16.msra.mxu0 0
  %1808 = vmatprep.subr.bf16.mxu0 0
  %1809 = vmatpush1.bf16.msra.mxu0 0
  %1810 = vmatprep.subr.bf16.mxu0 0
  %1811 = vmatpush1.bf16.msra.mxu0 0
  %1812 = vmatprep.subr.bf16.mxu0 0
  %1813 = vmatpush1.bf16.msra.mxu0 0
  %1814 = vmatprep.subr.bf16.mxu0 0
  %1815 = vmatpush1.bf16.msra.mxu0 0
  %1816 = vmatprep.subr.bf16.mxu0 0
  %1817 = vmatpush1.bf16.msra.mxu0 0
  %1818 = vmatprep.mubr.bf16.mxu0 0
  %1819 = vmatmul.mubr.bf16.gmra.mrb[0].mxu0 %v1415
  %v1820 = vpop.f32.mrb[0].mxu0
  %v1821 = vadd.f32 0.0, %v1820
  %v1822 = vpop.f32.mrb[0].mxu0
  %v1823 = vpop.f32.mrb[0].mxu0
  %v1824 = vadd.f32 0.0, %v1823
  %v1825 = vpop.f32.mrb[0].mxu0
  %1826 = vdwg.mxu0
  %1827 = vmatprep.subr.bf16.mxu0 0
  %1828 = vmatpush1.bf16.msra.mxu0 %v1403
  %1829 = vmatprep.subr.bf16.mxu0 0
  %1830 = vmatpush1.bf16.msra.mxu0 0
  %1831 = vmatprep.subr.bf16.mxu0 0
  %1832 = vmatpush1.bf16.msra.mxu0 0
  %1833 = vmatprep.subr.bf16.mxu0 0
  %1834 = vmatpush1.bf16.msra.mxu0 0
  %1835 = vmatprep.subr.bf16.mxu0 0
  %1836 = vmatpush1.bf16.msra.mxu0 0
  %1837 = vmatprep.subr.bf16.mxu0 0
  %1838 = vmatpush1.bf16.msra.mxu0 0
  %1839 = vmatprep.subr.bf16.mxu0 0
  %1840 = vmatpush1.bf16.msra.mxu0 0
  %1841 = vmatprep.subr.bf16.mxu0 0
  %1842 = vmatpush1.bf16.msra.mxu0 0
  %1843 = vmatprep.subr.bf16.mxu0 0
  %1844 = vmatpush1.bf16.msra.mxu0 0
  %1845 = vmatprep.subr.bf16.mxu0 0
  %1846 = vmatpush1.bf16.msra.mxu0 0
  %1847 = vmatprep.subr.bf16.mxu0 0
  %1848 = vmatpush1.bf16.msra.mxu0 0
  %1849 = vmatprep.subr.bf16.mxu0 0
  %1850 = vmatpush1.bf16.msra.mxu0 0
  %1851 = vmatprep.subr.bf16.mxu0 0
  %1852 = vmatpush1.bf16.msra.mxu0 0
  %1853 = vmatprep.subr.bf16.mxu0 0
  %1854 = vmatpush1.bf16.msra.mxu0 0
  %1855 = vmatprep.subr.bf16.mxu0 0
  %1856 = vmatpush1.bf16.msra.mxu0 0
  %1857 = vmatprep.subr.bf16.mxu0 0
  %1858 = vmatpush1.bf16.msra.mxu0 0
  %1859 = vmatprep.mubr.bf16.mxu0 0
  %1860 = vmatmul.mubr.bf16.gmra.mrb[0].mxu0 %v1415
  %v1861 = vpop.f32.mrb[0].mxu0
  %v1862 = vadd.f32 0.0, %v1861
  %v1863 = vpop.f32.mrb[0].mxu0
  %v1864 = vpop.f32.mrb[0].mxu0
  %v1865 = vadd.f32 0.0, %v1864
  %v1866 = vpop.f32.mrb[0].mxu0
  %1867 = vdwg.mxu0
  %1868 = vmatprep.subr.bf16.mxu0 0
  %1869 = vmatpush1.bf16.msra.mxu0 %v1404
  %1870 = vmatprep.subr.bf16.mxu0 0
  %1871 = vmatpush1.bf16.msra.mxu0 0
  %1872 = vmatprep.subr.bf16.mxu0 0
  %1873 = vmatpush1.bf16.msra.mxu0 0
  %1874 = vmatprep.subr.bf16.mxu0 0
  %1875 = vmatpush1.bf16.msra.mxu0 0
  %1876 = vmatprep.subr.bf16.mxu0 0
  %1877 = vmatpush1.bf16.msra.mxu0 0
  %1878 = vmatprep.subr.bf16.mxu0 0
  %1879 = vmatpush1.bf16.msra.mxu0 0
  %1880 = vmatprep.subr.bf16.mxu0 0
  %1881 = vmatpush1.bf16.msra.mxu0 0
  %1882 = vmatprep.subr.bf16.mxu0 0
  %1883 = vmatpush1.bf16.msra.mxu0 0
  %1884 = vmatprep.subr.bf16.mxu0 0
  %1885 = vmatpush1.bf16.msra.mxu0 0
  %1886 = vmatprep.subr.bf16.mxu0 0
  %1887 = vmatpush1.bf16.msra.mxu0 0
  %1888 = vmatprep.subr.bf16.mxu0 0
  %1889 = vmatpush1.bf16.msra.mxu0 0
  %1890 = vmatprep.subr.bf16.mxu0 0
  %1891 = vmatpush1.bf16.msra.mxu0 0
  %1892 = vmatprep.subr.bf16.mxu0 0
  %1893 = vmatpush1.bf16.msra.mxu0 0
  %1894 = vmatprep.subr.bf16.mxu0 0
  %1895 = vmatpush1.bf16.msra.mxu0 0
  %1896 = vmatprep.subr.bf16.mxu0 0
  %1897 = vmatpush1.bf16.msra.mxu0 0
  %1898 = vmatprep.subr.bf16.mxu0 0
  %1899 = vmatpush1.bf16.msra.mxu0 0
  %1900 = vmatprep.mubr.bf16.mxu0 0
  %1901 = vmatmul.mubr.bf16.gmra.mrb[0].mxu0 %v1415
  %v1902 = vpop.f32.mrb[0].mxu0
  %v1903 = vadd.f32 0.0, %v1902
  %v1904 = vpop.f32.mrb[0].mxu0
  %v1905 = vpop.f32.mrb[0].mxu0
  %v1906 = vadd.f32 0.0, %v1905
  %v1907 = vpop.f32.mrb[0].mxu0
  %1908 = vdwg.mxu0
  %1909 = vmatprep.subr.bf16.mxu0 0
  %1910 = vmatpush1.bf16.msra.mxu0 %v1405
  %1911 = vmatprep.subr.bf16.mxu0 0
  %1912 = vmatpush1.bf16.msra.mxu0 0
  %1913 = vmatprep.subr.bf16.mxu0 0
  %1914 = vmatpush1.bf16.msra.mxu0 0
  %1915 = vmatprep.subr.bf16.mxu0 0
  %1916 = vmatpush1.bf16.msra.mxu0 0
  %1917 = vmatprep.subr.bf16.mxu0 0
  %1918 = vmatpush1.bf16.msra.mxu0 0
  %1919 = vmatprep.subr.bf16.mxu0 0
  %1920 = vmatpush1.bf16.msra.mxu0 0
  %1921 = vmatprep.subr.bf16.mxu0 0
  %1922 = vmatpush1.bf16.msra.mxu0 0
  %1923 = vmatprep.subr.bf16.mxu0 0
  %1924 = vmatpush1.bf16.msra.mxu0 0
  %1925 = vmatprep.subr.bf16.mxu0 0
  %1926 = vmatpush1.bf16.msra.mxu0 0
  %1927 = vmatprep.subr.bf16.mxu0 0
  %1928 = vmatpush1.bf16.msra.mxu0 0
  %1929 = vmatprep.subr.bf16.mxu0 0
  %1930 = vmatpush1.bf16.msra.mxu0 0
  %1931 = vmatprep.subr.bf16.mxu0 0
  %1932 = vmatpush1.bf16.msra.mxu0 0
  %1933 = vmatprep.subr.bf16.mxu0 0
  %1934 = vmatpush1.bf16.msra.mxu0 0
  %1935 = vmatprep.subr.bf16.mxu0 0
  %1936 = vmatpush1.bf16.msra.mxu0 0
  %1937 = vmatprep.subr.bf16.mxu0 0
  %1938 = vmatpush1.bf16.msra.mxu0 0
  %1939 = vmatprep.subr.bf16.mxu0 0
  %1940 = vmatpush1.bf16.msra.mxu0 0
  %1941 = vmatprep.mubr.bf16.mxu0 0
  %1942 = vmatmul.mubr.bf16.gmra.mrb[0].mxu0 %v1415
  %v1943 = vpop.f32.mrb[0].mxu0
  %v1944 = vadd.f32 0.0, %v1943
  %v1945 = vpop.f32.mrb[0].mxu0
  %v1946 = vpop.f32.mrb[0].mxu0
  %v1947 = vadd.f32 0.0, %v1946
  %v1948 = vpop.f32.mrb[0].mxu0
  %1949 = vdwg.mxu0
  %1950 = vmatprep.subr.bf16.mxu0 0
  %1951 = vmatpush1.bf16.msra.mxu0 %v1406
  %1952 = vmatprep.subr.bf16.mxu0 0
  %1953 = vmatpush1.bf16.msra.mxu0 0
  %1954 = vmatprep.subr.bf16.mxu0 0
  %1955 = vmatpush1.bf16.msra.mxu0 0
  %1956 = vmatprep.subr.bf16.mxu0 0
  %1957 = vmatpush1.bf16.msra.mxu0 0
  %1958 = vmatprep.subr.bf16.mxu0 0
  %1959 = vmatpush1.bf16.msra.mxu0 0
  %1960 = vmatprep.subr.bf16.mxu0 0
  %1961 = vmatpush1.bf16.msra.mxu0 0
  %1962 = vmatprep.subr.bf16.mxu0 0
  %1963 = vmatpush1.bf16.msra.mxu0 0
  %1964 = vmatprep.subr.bf16.mxu0 0
  %1965 = vmatpush1.bf16.msra.mxu0 0
  %1966 = vmatprep.subr.bf16.mxu0 0
  %1967 = vmatpush1.bf16.msra.mxu0 0
  %1968 = vmatprep.subr.bf16.mxu0 0
  %1969 = vmatpush1.bf16.msra.mxu0 0
  %1970 = vmatprep.subr.bf16.mxu0 0
  %1971 = vmatpush1.bf16.msra.mxu0 0
  %1972 = vmatprep.subr.bf16.mxu0 0
  %1973 = vmatpush1.bf16.msra.mxu0 0
  %1974 = vmatprep.subr.bf16.mxu0 0
  %1975 = vmatpush1.bf16.msra.mxu0 0
  %1976 = vmatprep.subr.bf16.mxu0 0
  %1977 = vmatpush1.bf16.msra.mxu0 0
  %1978 = vmatprep.subr.bf16.mxu0 0
  %1979 = vmatpush1.bf16.msra.mxu0 0
  %1980 = vmatprep.subr.bf16.mxu0 0
  %1981 = vmatpush1.bf16.msra.mxu0 0
  %1982 = vmatprep.mubr.bf16.mxu0 0
  %1983 = vmatmul.mubr.bf16.gmra.mrb[0].mxu0 %v1415
  %v1984 = vpop.f32.mrb[0].mxu0
  %v1985 = vadd.f32 0.0, %v1984
  %v1986 = vpop.f32.mrb[0].mxu0
  %v1987 = vpop.f32.mrb[0].mxu0
  %v1988 = vadd.f32 0.0, %v1987
  %v1989 = vpop.f32.mrb[0].mxu0
  %1990 = vdwg.mxu0
  %v1991 = vmax.f32 %v1452, 0.0
  %v1992 = vmax.f32 %v1455, 0.0
  %v1993 = vmax.f32 %v1493, 0.0
  %v1994 = vmax.f32 %v1496, 0.0
  %v1995 = vmax.f32 %v1534, 0.0
  %v1996 = vmax.f32 %v1537, 0.0
  %v1997 = vmax.f32 %v1575, 0.0
  %v1998 = vmax.f32 %v1578, 0.0
  %v1999 = vmax.f32 %v1616, 0.0
  %v2000 = vmax.f32 %v1619, 0.0
  %v2001 = vmax.f32 %v1657, 0.0
  %v2002 = vmax.f32 %v1660, 0.0
  %v2003 = vmax.f32 %v1698, 0.0
  %v2004 = vmax.f32 %v1701, 0.0
  %v2005 = vmax.f32 %v1739, 0.0
  %v2006 = vmax.f32 %v1742, 0.0
  %v2007 = vmax.f32 %v1780, 0.0
  %v2008 = vmax.f32 %v1783, 0.0
  %v2009 = vmax.f32 %v1821, 0.0
  %v2010 = vmax.f32 %v1824, 0.0
  %v2011 = vmax.f32 %v1862, 0.0
  %v2012 = vmax.f32 %v1865, 0.0
  %v2013 = vmax.f32 %v1903, 0.0
  %v2014 = vmax.f32 %v1906, 0.0
  %v2015 = vmax.f32 %v1944, 0.0
  %v2016 = vmax.f32 %v1947, 0.0
  %v2017 = vmax.f32 %v1985, 0.0
  %v2018 = vmax.f32 %v1988, 0.0
  %v2019 = vpack.c.bf16 %v1992, %v1991
  %v2020 = vpack.c.bf16 %v1994, %v1993
  %v2021 = vpack.c.bf16 %v1996, %v1995
  %v2022 = vpack.c.bf16 %v1998, %v1997
  %v2023 = vpack.c.bf16 %v2000, %v1999
  %v2024 = vpack.c.bf16 %v2002, %v2001
  %v2025 = vpack.c.bf16 %v2004, %v2003
  %v2026 = vpack.c.bf16 %v2006, %v2005
  %v2027 = vpack.c.bf16 %v2008, %v2007
  %v2028 = vpack.c.bf16 %v2010, %v2009
  %v2029 = vpack.c.bf16 %v2012, %v2011
  %v2030 = vpack.c.bf16 %v2014, %v2013
  %v2031 = vpack.c.bf16 %v2016, %v2015
  %v2032 = vpack.c.bf16 %v2018, %v2017
  %v2033 = vld [vmem:[%s5] sm:$0xf]
  %s2034 = scalar_lea.vmem %s5, 4
  %v2035 = vld [vmem:[%s2034] sm:$0xf]
  %vm2036 = vcmask 64512
  %v2038 = vsel %vm2036, %v2020, 0
  %v2041 = vsel %vm2036, %v2021, 0
  %v2044 = vsel %vm2036, %v2022, 0
  %v2047 = vsel %vm2036, %v2023, 0
  %v2050 = vsel %vm2036, %v2024, 0
  %v2053 = vsel %vm2036, %v2025, 0
  %v2056 = vsel %vm2036, %v2026, 0
  %v2059 = vsel %vm2036, %v2027, 0
  %v2062 = vsel %vm2036, %v2028, 0
  %v2065 = vsel %vm2036, %v2029, 0
  %v2068 = vsel %vm2036, %v2030, 0
  %v2071 = vsel %vm2036, %v2031, 0
  %vm2073 = vcmask 1043456
  %v2075 = vsel %vm2073, %v2035, 0
  %2077 = vmatprep.subr.bf16.mxu0 0
  %2078 = vmatpush1.bf16.msra.mxu0 %v2075
  %2079 = vmatprep.subr.bf16.mxu0 0
  %2080 = vmatpush1.bf16.msra.mxu0 0
  %2081 = vmatprep.subr.bf16.mxu0 0
  %2082 = vmatpush1.bf16.msra.mxu0 0
  %2083 = vmatprep.subr.bf16.mxu0 0
  %2084 = vmatpush1.bf16.msra.mxu0 0
  %2085 = vmatprep.subr.bf16.mxu0 0
  %2086 = vmatpush1.bf16.msra.mxu0 0
  %2087 = vmatprep.subr.bf16.mxu0 0
  %2088 = vmatpush1.bf16.msra.mxu0 0
  %2089 = vmatprep.subr.bf16.mxu0 0
  %2090 = vmatpush1.bf16.msra.mxu0 0
  %2091 = vmatprep.subr.bf16.mxu0 0
  %2092 = vmatpush1.bf16.msra.mxu0 0
  %2093 = vmatprep.subr.bf16.mxu0 0
  %2094 = vmatpush1.bf16.msra.mxu0 0
  %2095 = vmatprep.subr.bf16.mxu0 0
  %2096 = vmatpush1.bf16.msra.mxu0 0
  %2097 = vmatprep.subr.bf16.mxu0 0
  %2098 = vmatpush1.bf16.msra.mxu0 0
  %2099 = vmatprep.subr.bf16.mxu0 0
  %2100 = vmatpush1.bf16.msra.mxu0 0
  %2101 = vmatprep.subr.bf16.mxu0 0
  %2102 = vmatpush1.bf16.msra.mxu0 0
  %2103 = vmatprep.subr.bf16.mxu0 0
  %2104 = vmatpush1.bf16.msra.mxu0 0
  %2105 = vmatprep.subr.bf16.mxu0 0
  %2106 = vmatpush1.bf16.msra.mxu0 0
  %2107 = vmatprep.subr.bf16.mxu0 0
  %2108 = vmatpush1.bf16.msra.mxu0 0
  %2109 = vmatprep.mubr.bf16.mxu0 0
  %2110 = vmatmul.mubr.bf16.gmra.mrb[0].mxu0 %v2038
  %v2111 = vpop.f32.mrb[0].mxu0
  %v2112 = vadd.f32 0.0, %v2111
  %v2113 = vpop.f32.mrb[0].mxu0
  %v2114 = vpop.f32.mrb[0].mxu0
  %v2115 = vadd.f32 0.0, %v2114
  %v2116 = vpop.f32.mrb[0].mxu0
  %2117 = vmatprep.mubr.bf16.mxu0 0
  %2118 = vmatmul.mubr.bf16.gmra.mrb[0].mxu0 %v2041
  %v2119 = vpop.f32.mrb[0].mxu0
  %v2120 = vadd.f32 0.0, %v2119
  %v2121 = vpop.f32.mrb[0].mxu0
  %v2122 = vpop.f32.mrb[0].mxu0
  %v2123 = vadd.f32 0.0, %v2122
  %v2124 = vpop.f32.mrb[0].mxu0
  %2125 = vmatprep.mubr.bf16.mxu0 0
  %2126 = vmatmul.mubr.bf16.gmra.mrb[0].mxu0 %v2044
  %v2127 = vpop.f32.mrb[0].mxu0
  %v2128 = vadd.f32 0.0, %v2127
  %v2129 = vpop.f32.mrb[0].mxu0
  %v2130 = vpop.f32.mrb[0].mxu0
  %v2131 = vadd.f32 0.0, %v2130
  %v2132 = vpop.f32.mrb[0].mxu0
  %2133 = vmatprep.mubr.bf16.mxu0 0
  %2134 = vmatmul.mubr.bf16.gmra.mrb[0].mxu0 %v2047
  %v2135 = vpop.f32.mrb[0].mxu0
  %v2136 = vadd.f32 0.0, %v2135
  %v2137 = vpop.f32.mrb[0].mxu0
  %v2138 = vpop.f32.mrb[0].mxu0
  %v2139 = vadd.f32 0.0, %v2138
  %v2140 = vpop.f32.mrb[0].mxu0
  %2141 = vmatprep.mubr.bf16.mxu0 0
  %2142 = vmatmul.mubr.bf16.gmra.mrb[0].mxu0 %v2050
  %v2143 = vpop.f32.mrb[0].mxu0
  %v2144 = vadd.f32 0.0, %v2143
  %v2145 = vpop.f32.mrb[0].mxu0
  %v2146 = vpop.f32.mrb[0].mxu0
  %v2147 = vadd.f32 0.0, %v2146
  %v2148 = vpop.f32.mrb[0].mxu0
  %2149 = vmatprep.mubr.bf16.mxu0 0
  %2150 = vmatmul.mubr.bf16.gmra.mrb[0].mxu0 %v2053
  %v2151 = vpop.f32.mrb[0].mxu0
  %v2152 = vadd.f32 0.0, %v2151
  %v2153 = vpop.f32.mrb[0].mxu0
  %v2154 = vpop.f32.mrb[0].mxu0
  %v2155 = vadd.f32 0.0, %v2154
  %v2156 = vpop.f32.mrb[0].mxu0
  %2157 = vmatprep.mubr.bf16.mxu0 0
  %2158 = vmatmul.mubr.bf16.gmra.mrb[0].mxu0 %v2056
  %v2159 = vpop.f32.mrb[0].mxu0
  %v2160 = vadd.f32 0.0, %v2159
  %v2161 = vpop.f32.mrb[0].mxu0
  %v2162 = vpop.f32.mrb[0].mxu0
  %v2163 = vadd.f32 0.0, %v2162
  %v2164 = vpop.f32.mrb[0].mxu0
  %2165 = vmatprep.mubr.bf16.mxu0 0
  %2166 = vmatmul.mubr.bf16.gmra.mrb[0].mxu0 %v2059
  %v2167 = vpop.f32.mrb[0].mxu0
  %v2168 = vadd.f32 0.0, %v2167
  %v2169 = vpop.f32.mrb[0].mxu0
  %v2170 = vpop.f32.mrb[0].mxu0
  %v2171 = vadd.f32 0.0, %v2170
  %v2172 = vpop.f32.mrb[0].mxu0
  %2173 = vmatprep.mubr.bf16.mxu0 0
  %2174 = vmatmul.mubr.bf16.gmra.mrb[0].mxu0 %v2062
  %v2175 = vpop.f32.mrb[0].mxu0
  %v2176 = vadd.f32 0.0, %v2175
  %v2177 = vpop.f32.mrb[0].mxu0
  %v2178 = vpop.f32.mrb[0].mxu0
  %v2179 = vadd.f32 0.0, %v2178
  %v2180 = vpop.f32.mrb[0].mxu0
  %2181 = vmatprep.mubr.bf16.mxu0 0
  %2182 = vmatmul.mubr.bf16.gmra.mrb[0].mxu0 %v2065
  %v2183 = vpop.f32.mrb[0].mxu0
  %v2184 = vadd.f32 0.0, %v2183
  %v2185 = vpop.f32.mrb[0].mxu0
  %v2186 = vpop.f32.mrb[0].mxu0
  %v2187 = vadd.f32 0.0, %v2186
  %v2188 = vpop.f32.mrb[0].mxu0
  %2189 = vmatprep.mubr.bf16.mxu0 0
  %2190 = vmatmul.mubr.bf16.gmra.mrb[0].mxu0 %v2068
  %v2191 = vpop.f32.mrb[0].mxu0
  %v2192 = vadd.f32 0.0, %v2191
  %v2193 = vpop.f32.mrb[0].mxu0
  %v2194 = vpop.f32.mrb[0].mxu0
  %v2195 = vadd.f32 0.0, %v2194
  %v2196 = vpop.f32.mrb[0].mxu0
  %2197 = vmatprep.mubr.bf16.mxu0 0
  %2198 = vmatmul.mubr.bf16.gmra.mrb[0].mxu0 %v2071
  %v2199 = vpop.f32.mrb[0].mxu0
  %v2200 = vadd.f32 0.0, %v2199
  %v2201 = vpop.f32.mrb[0].mxu0
  %v2202 = vpop.f32.mrb[0].mxu0
  %v2203 = vadd.f32 0.0, %v2202
  %v2204 = vpop.f32.mrb[0].mxu0
  %2205 = vdwg.mxu0
  %v2207 = vsel %vm2036, %v2019, 0
  %v2210 = vsel %vm2073, %v2033, 0
  %2212 = vmatprep.subr.bf16.mxu0 0
  %2213 = vmatpush1.bf16.msra.mxu0 %v2210
  %2214 = vmatprep.subr.bf16.mxu0 0
  %2215 = vmatpush1.bf16.msra.mxu0 0
  %2216 = vmatprep.subr.bf16.mxu0 0
  %2217 = vmatpush1.bf16.msra.mxu0 0
  %2218 = vmatprep.subr.bf16.mxu0 0
  %2219 = vmatpush1.bf16.msra.mxu0 0
  %2220 = vmatprep.subr.bf16.mxu0 0
  %2221 = vmatpush1.bf16.msra.mxu0 0
  %2222 = vmatprep.subr.bf16.mxu0 0
  %2223 = vmatpush1.bf16.msra.mxu0 0
  %2224 = vmatprep.subr.bf16.mxu0 0
  %2225 = vmatpush1.bf16.msra.mxu0 0
  %2226 = vmatprep.subr.bf16.mxu0 0
  %2227 = vmatpush1.bf16.msra.mxu0 0
  %2228 = vmatprep.subr.bf16.mxu0 0
  %2229 = vmatpush1.bf16.msra.mxu0 0
  %2230 = vmatprep.subr.bf16.mxu0 0
  %2231 = vmatpush1.bf16.msra.mxu0 0
  %2232 = vmatprep.subr.bf16.mxu0 0
  %2233 = vmatpush1.bf16.msra.mxu0 0
  %2234 = vmatprep.subr.bf16.mxu0 0
  %2235 = vmatpush1.bf16.msra.mxu0 0
  %2236 = vmatprep.subr.bf16.mxu0 0
  %2237 = vmatpush1.bf16.msra.mxu0 0
  %2238 = vmatprep.subr.bf16.mxu0 0
  %2239 = vmatpush1.bf16.msra.mxu0 0
  %2240 = vmatprep.subr.bf16.mxu0 0
  %2241 = vmatpush1.bf16.msra.mxu0 0
  %2242 = vmatprep.subr.bf16.mxu0 0
  %2243 = vmatpush1.bf16.msra.mxu0 0
  %2244 = vmatprep.mubr.bf16.mxu0 0
  %2245 = vmatmul.mubr.bf16.gmra.mrb[0].mxu0 %v2207
  %v2246 = vpop.f32.mrb[0].mxu0
  %v2247 = vadd.f32 %v2112, %v2246
  %v2248 = vpop.f32.mrb[0].mxu0
  %v2249 = vpop.f32.mrb[0].mxu0
  %v2250 = vadd.f32 %v2115, %v2249
  %v2251 = vpop.f32.mrb[0].mxu0
  %2252 = vmatprep.mubr.bf16.mxu0 0
  %2253 = vmatmul.mubr.bf16.gmra.mrb[0].mxu0 %v2038
  %v2254 = vpop.f32.mrb[0].mxu0
  %v2255 = vadd.f32 %v2120, %v2254
  %v2256 = vpop.f32.mrb[0].mxu0
  %v2257 = vpop.f32.mrb[0].mxu0
  %v2258 = vadd.f32 %v2123, %v2257
  %v2259 = vpop.f32.mrb[0].mxu0
  %2260 = vmatprep.mubr.bf16.mxu0 0
  %2261 = vmatmul.mubr.bf16.gmra.mrb[0].mxu0 %v2041
  %v2262 = vpop.f32.mrb[0].mxu0
  %v2263 = vadd.f32 %v2128, %v2262
  %v2264 = vpop.f32.mrb[0].mxu0
  %v2265 = vpop.f32.mrb[0].mxu0
  %v2266 = vadd.f32 %v2131, %v2265
  %v2267 = vpop.f32.mrb[0].mxu0
  %2268 = vmatprep.mubr.bf16.mxu0 0
  %2269 = vmatmul.mubr.bf16.gmra.mrb[0].mxu0 %v2044
  %v2270 = vpop.f32.mrb[0].mxu0
  %v2271 = vadd.f32 %v2136, %v2270
  %v2272 = vpop.f32.mrb[0].mxu0
  %v2273 = vpop.f32.mrb[0].mxu0
  %v2274 = vadd.f32 %v2139, %v2273
  %v2275 = vpop.f32.mrb[0].mxu0
  %2276 = vmatprep.mubr.bf16.mxu0 0
  %2277 = vmatmul.mubr.bf16.gmra.mrb[0].mxu0 %v2047
  %v2278 = vpop.f32.mrb[0].mxu0
  %v2279 = vadd.f32 %v2144, %v2278
  %v2280 = vpop.f32.mrb[0].mxu0
  %v2281 = vpop.f32.mrb[0].mxu0
  %v2282 = vadd.f32 %v2147, %v2281
  %v2283 = vpop.f32.mrb[0].mxu0
  %2284 = vmatprep.mubr.bf16.mxu0 0
  %2285 = vmatmul.mubr.bf16.gmra.mrb[0].mxu0 %v2050
  %v2286 = vpop.f32.mrb[0].mxu0
  %v2287 = vadd.f32 %v2152, %v2286
  %v2288 = vpop.f32.mrb[0].mxu0
  %v2289 = vpop.f32.mrb[0].mxu0
  %v2290 = vadd.f32 %v2155, %v2289
  %v2291 = vpop.f32.mrb[0].mxu0
  %2292 = vmatprep.mubr.bf16.mxu0 0
  %2293 = vmatmul.mubr.bf16.gmra.mrb[0].mxu0 %v2053
  %v2294 = vpop.f32.mrb[0].mxu0
  %v2295 = vadd.f32 %v2160, %v2294
  %v2296 = vpop.f32.mrb[0].mxu0
  %v2297 = vpop.f32.mrb[0].mxu0
  %v2298 = vadd.f32 %v2163, %v2297
  %v2299 = vpop.f32.mrb[0].mxu0
  %2300 = vmatprep.mubr.bf16.mxu0 0
  %2301 = vmatmul.mubr.bf16.gmra.mrb[0].mxu0 %v2056
  %v2302 = vpop.f32.mrb[0].mxu0
  %v2303 = vadd.f32 %v2168, %v2302
  %v2304 = vpop.f32.mrb[0].mxu0
  %v2305 = vpop.f32.mrb[0].mxu0
  %v2306 = vadd.f32 %v2171, %v2305
  %v2307 = vpop.f32.mrb[0].mxu0
  %2308 = vmatprep.mubr.bf16.mxu0 0
  %2309 = vmatmul.mubr.bf16.gmra.mrb[0].mxu0 %v2059
  %v2310 = vpop.f32.mrb[0].mxu0
  %v2311 = vadd.f32 %v2176, %v2310
  %v2312 = vpop.f32.mrb[0].mxu0
  %v2313 = vpop.f32.mrb[0].mxu0
  %v2314 = vadd.f32 %v2179, %v2313
  %v2315 = vpop.f32.mrb[0].mxu0
  %2316 = vmatprep.mubr.bf16.mxu0 0
  %2317 = vmatmul.mubr.bf16.gmra.mrb[0].mxu0 %v2062
  %v2318 = vpop.f32.mrb[0].mxu0
  %v2319 = vadd.f32 %v2184, %v2318
  %v2320 = vpop.f32.mrb[0].mxu0
  %v2321 = vpop.f32.mrb[0].mxu0
  %v2322 = vadd.f32 %v2187, %v2321
  %v2323 = vpop.f32.mrb[0].mxu0
  %2324 = vmatprep.mubr.bf16.mxu0 0
  %2325 = vmatmul.mubr.bf16.gmra.mrb[0].mxu0 %v2065
  %v2326 = vpop.f32.mrb[0].mxu0
  %v2327 = vadd.f32 %v2192, %v2326
  %v2328 = vpop.f32.mrb[0].mxu0
  %v2329 = vpop.f32.mrb[0].mxu0
  %v2330 = vadd.f32 %v2195, %v2329
  %v2331 = vpop.f32.mrb[0].mxu0
  %2332 = vmatprep.mubr.bf16.mxu0 0
  %2333 = vmatmul.mubr.bf16.gmra.mrb[0].mxu0 %v2068
  %v2334 = vpop.f32.mrb[0].mxu0
  %v2335 = vadd.f32 %v2200, %v2334
  %v2336 = vpop.f32.mrb[0].mxu0
  %v2337 = vpop.f32.mrb[0].mxu0
  %v2338 = vadd.f32 %v2203, %v2337
  %v2339 = vpop.f32.mrb[0].mxu0
  %2340 = vdwg.mxu0
  %s2341 = scalar_lea.vmem %s5, 8
  %v2342 = vld [vmem:[%s2341] sm:$0xf]
  %v2344 = vsel %vm2036, %v2032, 0
  %v2347 = vsel %vm2073, %v2342, 0
  %2349 = vmatprep.subr.bf16.mxu0 0
  %2350 = vmatpush1.bf16.msra.mxu0 %v2347
  %2351 = vmatprep.subr.bf16.mxu0 0
  %2352 = vmatpush1.bf16.msra.mxu0 0
  %2353 = vmatprep.subr.bf16.mxu0 0
  %2354 = vmatpush1.bf16.msra.mxu0 0
  %2355 = vmatprep.subr.bf16.mxu0 0
  %2356 = vmatpush1.bf16.msra.mxu0 0
  %2357 = vmatprep.subr.bf16.mxu0 0
  %2358 = vmatpush1.bf16.msra.mxu0 0
  %2359 = vmatprep.subr.bf16.mxu0 0
  %2360 = vmatpush1.bf16.msra.mxu0 0
  %2361 = vmatprep.subr.bf16.mxu0 0
  %2362 = vmatpush1.bf16.msra.mxu0 0
  %2363 = vmatprep.subr.bf16.mxu0 0
  %2364 = vmatpush1.bf16.msra.mxu0 0
  %2365 = vmatprep.subr.bf16.mxu0 0
  %2366 = vmatpush1.bf16.msra.mxu0 0
  %2367 = vmatprep.subr.bf16.mxu0 0
  %2368 = vmatpush1.bf16.msra.mxu0 0
  %2369 = vmatprep.subr.bf16.mxu0 0
  %2370 = vmatpush1.bf16.msra.mxu0 0
  %2371 = vmatprep.subr.bf16.mxu0 0
  %2372 = vmatpush1.bf16.msra.mxu0 0
  %2373 = vmatprep.subr.bf16.mxu0 0
  %2374 = vmatpush1.bf16.msra.mxu0 0
  %2375 = vmatprep.subr.bf16.mxu0 0
  %2376 = vmatpush1.bf16.msra.mxu0 0
  %2377 = vmatprep.subr.bf16.mxu0 0
  %2378 = vmatpush1.bf16.msra.mxu0 0
  %2379 = vmatprep.subr.bf16.mxu0 0
  %2380 = vmatpush1.bf16.msra.mxu0 0
  %2381 = vmatprep.mubr.bf16.mxu0 0
  %2382 = vmatmul.mubr.bf16.gmra.mrb[0].mxu0 %v2041
  %v2383 = vpop.f32.mrb[0].mxu0
  %v2384 = vadd.f32 0.0, %v2383
  %v2385 = vpop.f32.mrb[0].mxu0
  %v2386 = vpop.f32.mrb[0].mxu0
  %v2387 = vadd.f32 0.0, %v2386
  %v2388 = vpop.f32.mrb[0].mxu0
  %2389 = vmatprep.mubr.bf16.mxu0 0
  %2390 = vmatmul.mubr.bf16.gmra.mrb[0].mxu0 %v2044
  %v2391 = vpop.f32.mrb[0].mxu0
  %v2392 = vadd.f32 0.0, %v2391
  %v2393 = vpop.f32.mrb[0].mxu0
  %v2394 = vpop.f32.mrb[0].mxu0
  %v2395 = vadd.f32 0.0, %v2394
  %v2396 = vpop.f32.mrb[0].mxu0
  %2397 = vmatprep.mubr.bf16.mxu0 0
  %2398 = vmatmul.mubr.bf16.gmra.mrb[0].mxu0 %v2047
  %v2399 = vpop.f32.mrb[0].mxu0
  %v2400 = vadd.f32 0.0, %v2399
  %v2401 = vpop.f32.mrb[0].mxu0
  %v2402 = vpop.f32.mrb[0].mxu0
  %v2403 = vadd.f32 0.0, %v2402
  %v2404 = vpop.f32.mrb[0].mxu0
  %2405 = vmatprep.mubr.bf16.mxu0 0
  %2406 = vmatmul.mubr.bf16.gmra.mrb[0].mxu0 %v2050
  %v2407 = vpop.f32.mrb[0].mxu0
  %v2408 = vadd.f32 0.0, %v2407
  %v2409 = vpop.f32.mrb[0].mxu0
  %v2410 = vpop.f32.mrb[0].mxu0
  %v2411 = vadd.f32 0.0, %v2410
  %v2412 = vpop.f32.mrb[0].mxu0
  %2413 = vmatprep.mubr.bf16.mxu0 0
  %2414 = vmatmul.mubr.bf16.gmra.mrb[0].mxu0 %v2053
  %v2415 = vpop.f32.mrb[0].mxu0
  %v2416 = vadd.f32 0.0, %v2415
  %v2417 = vpop.f32.mrb[0].mxu0
  %v2418 = vpop.f32.mrb[0].mxu0
  %v2419 = vadd.f32 0.0, %v2418
  %v2420 = vpop.f32.mrb[0].mxu0
  %2421 = vmatprep.mubr.bf16.mxu0 0
  %2422 = vmatmul.mubr.bf16.gmra.mrb[0].mxu0 %v2056
  %v2423 = vpop.f32.mrb[0].mxu0
  %v2424 = vadd.f32 0.0, %v2423
  %v2425 = vpop.f32.mrb[0].mxu0
  %v2426 = vpop.f32.mrb[0].mxu0
  %v2427 = vadd.f32 0.0, %v2426
  %v2428 = vpop.f32.mrb[0].mxu0
  %2429 = vmatprep.mubr.bf16.mxu0 0
  %2430 = vmatmul.mubr.bf16.gmra.mrb[0].mxu0 %v2059
  %v2431 = vpop.f32.mrb[0].mxu0
  %v2432 = vadd.f32 0.0, %v2431
  %v2433 = vpop.f32.mrb[0].mxu0
  %v2434 = vpop.f32.mrb[0].mxu0
  %v2435 = vadd.f32 0.0, %v2434
  %v2436 = vpop.f32.mrb[0].mxu0
  %2437 = vmatprep.mubr.bf16.mxu0 0
  %2438 = vmatmul.mubr.bf16.gmra.mrb[0].mxu0 %v2062
  %v2439 = vpop.f32.mrb[0].mxu0
  %v2440 = vadd.f32 0.0, %v2439
  %v2441 = vpop.f32.mrb[0].mxu0
  %v2442 = vpop.f32.mrb[0].mxu0
  %v2443 = vadd.f32 0.0, %v2442
  %v2444 = vpop.f32.mrb[0].mxu0
  %2445 = vmatprep.mubr.bf16.mxu0 0
  %2446 = vmatmul.mubr.bf16.gmra.mrb[0].mxu0 %v2065
  %v2447 = vpop.f32.mrb[0].mxu0
  %v2448 = vadd.f32 0.0, %v2447
  %v2449 = vpop.f32.mrb[0].mxu0
  %v2450 = vpop.f32.mrb[0].mxu0
  %v2451 = vadd.f32 0.0, %v2450
  %v2452 = vpop.f32.mrb[0].mxu0
  %2453 = vmatprep.mubr.bf16.mxu0 0
  %2454 = vmatmul.mubr.bf16.gmra.mrb[0].mxu0 %v2068
  %v2455 = vpop.f32.mrb[0].mxu0
  %v2456 = vadd.f32 0.0, %v2455
  %v2457 = vpop.f32.mrb[0].mxu0
  %v2458 = vpop.f32.mrb[0].mxu0
  %v2459 = vadd.f32 0.0, %v2458
  %v2460 = vpop.f32.mrb[0].mxu0
  %2461 = vmatprep.mubr.bf16.mxu0 0
  %2462 = vmatmul.mubr.bf16.gmra.mrb[0].mxu0 %v2071
  %v2463 = vpop.f32.mrb[0].mxu0
  %v2464 = vadd.f32 0.0, %v2463
  %v2465 = vpop.f32.mrb[0].mxu0
  %v2466 = vpop.f32.mrb[0].mxu0
  %v2467 = vadd.f32 0.0, %v2466
  %v2468 = vpop.f32.mrb[0].mxu0
  %2469 = vmatprep.mubr.bf16.mxu0 0
  %2470 = vmatmul.mubr.bf16.gmra.mrb[0].mxu0 %v2344
  %v2471 = vpop.f32.mrb[0].mxu0
  %v2472 = vadd.f32 0.0, %v2471
  %v2473 = vpop.f32.mrb[0].mxu0
  %v2474 = vpop.f32.mrb[0].mxu0
  %v2475 = vadd.f32 0.0, %v2474
  %v2476 = vpop.f32.mrb[0].mxu0
  %2477 = vdwg.mxu0
  %v2478 = vadd.f32 %v2247, %v2384
  %v2479 = vadd.f32 %v2250, %v2387
  %v2480 = vadd.f32 %v2255, %v2392
  %v2481 = vadd.f32 %v2258, %v2395
  %v2482 = vadd.f32 %v2263, %v2400
  %v2483 = vadd.f32 %v2266, %v2403
  %v2484 = vadd.f32 %v2271, %v2408
  %v2485 = vadd.f32 %v2274, %v2411
  %v2486 = vadd.f32 %v2279, %v2416
  %v2487 = vadd.f32 %v2282, %v2419
  %v2488 = vadd.f32 %v2287, %v2424
  %v2489 = vadd.f32 %v2290, %v2427
  %v2490 = vadd.f32 %v2295, %v2432
  %v2491 = vadd.f32 %v2298, %v2435
  %v2492 = vadd.f32 %v2303, %v2440
  %v2493 = vadd.f32 %v2306, %v2443
  %v2494 = vadd.f32 %v2311, %v2448
  %v2495 = vadd.f32 %v2314, %v2451
  %v2496 = vadd.f32 %v2319, %v2456
  %v2497 = vadd.f32 %v2322, %v2459
  %v2498 = vadd.f32 %v2327, %v2464
  %v2499 = vadd.f32 %v2330, %v2467
  %v2500 = vadd.f32 %v2335, %v2472
  %v2501 = vadd.f32 %v2338, %v2475
  %v2502 = vld [vmem:[%s6] sm:$0x1]
  %v2504 = vlaneseq
  %v2505 = vshrl.u32 %v2504, 7
  %v2506 = vsub.s32 0, %v2505
  %v2507 = vrot.slane %v2502, %v2506
  %v2509 = vadd.f32 %v2478, %v2507
  %v2510 = vadd.f32 %v2479, %v2507
  %v2511 = vadd.f32 %v2480, %v2507
  %v2512 = vadd.f32 %v2481, %v2507
  %v2513 = vadd.f32 %v2482, %v2507
  %v2514 = vadd.f32 %v2483, %v2507
  %v2515 = vadd.f32 %v2484, %v2507
  %v2516 = vadd.f32 %v2485, %v2507
  %v2517 = vadd.f32 %v2486, %v2507
  %v2518 = vadd.f32 %v2487, %v2507
  %v2519 = vadd.f32 %v2488, %v2507
  %v2520 = vadd.f32 %v2489, %v2507
  %v2521 = vadd.f32 %v2490, %v2507
  %v2522 = vadd.f32 %v2491, %v2507
  %v2523 = vadd.f32 %v2492, %v2507
  %v2524 = vadd.f32 %v2493, %v2507
  %v2525 = vadd.f32 %v2494, %v2507
  %v2526 = vadd.f32 %v2495, %v2507
  %v2527 = vadd.f32 %v2496, %v2507
  %v2528 = vadd.f32 %v2497, %v2507
  %v2529 = vadd.f32 %v2498, %v2507
  %v2530 = vadd.f32 %v2499, %v2507
  %v2531 = vadd.f32 %v2500, %v2507
  %v2532 = vadd.f32 %v2501, %v2507
  %v2533 = vxor.u32 %v2509, 2147483648
  %v2534 = vxor.u32 %v2510, 2147483648
  %v2535 = vxor.u32 %v2511, 2147483648
  %v2536 = vxor.u32 %v2512, 2147483648
  %v2537 = vxor.u32 %v2513, 2147483648
  %v2538 = vxor.u32 %v2514, 2147483648
  %v2539 = vxor.u32 %v2515, 2147483648
  %v2540 = vxor.u32 %v2516, 2147483648
  %v2541 = vxor.u32 %v2517, 2147483648
  %v2542 = vxor.u32 %v2518, 2147483648
  %v2543 = vxor.u32 %v2519, 2147483648
  %v2544 = vxor.u32 %v2520, 2147483648
  %v2545 = vxor.u32 %v2521, 2147483648
  %v2546 = vxor.u32 %v2522, 2147483648
  %v2547 = vxor.u32 %v2523, 2147483648
  %v2548 = vxor.u32 %v2524, 2147483648
  %v2549 = vxor.u32 %v2525, 2147483648
  %v2550 = vxor.u32 %v2526, 2147483648
  %v2551 = vxor.u32 %v2527, 2147483648
  %v2552 = vxor.u32 %v2528, 2147483648
  %v2553 = vxor.u32 %v2529, 2147483648
  %v2554 = vxor.u32 %v2530, 2147483648
  %v2555 = vxor.u32 %v2531, 2147483648
  %v2556 = vxor.u32 %v2532, 2147483648
  %v2557 = vmul.f32 %v2533, 1.442695
  %v2558 = vpow.pop %v2557
  %v2559 = vmul.f32 %v2534, 1.442695
  %v2560 = vpow.pop %v2559
  %v2561 = vmul.f32 %v2535, 1.442695
  %v2562 = vpow.pop %v2561
  %v2563 = vmul.f32 %v2536, 1.442695
  %v2564 = vpow.pop %v2563
  %v2565 = vmul.f32 %v2537, 1.442695
  %v2566 = vpow.pop %v2565
  %v2567 = vmul.f32 %v2538, 1.442695
  %v2568 = vpow.pop %v2567
  %v2569 = vmul.f32 %v2539, 1.442695
  %v2570 = vpow.pop %v2569
  %v2571 = vmul.f32 %v2540, 1.442695
  %v2572 = vpow.pop %v2571
  %v2573 = vmul.f32 %v2541, 1.442695
  %v2574 = vpow.pop %v2573
  %v2575 = vmul.f32 %v2542, 1.442695
  %v2576 = vpow.pop %v2575
  %v2577 = vmul.f32 %v2543, 1.442695
  %v2578 = vpow.pop %v2577
  %v2579 = vmul.f32 %v2544, 1.442695
  %v2580 = vpow.pop %v2579
  %v2581 = vmul.f32 %v2545, 1.442695
  %v2582 = vpow.pop %v2581
  %v2583 = vmul.f32 %v2546, 1.442695
  %v2584 = vpow.pop %v2583
  %v2585 = vmul.f32 %v2547, 1.442695
  %v2586 = vpow.pop %v2585
  %v2587 = vmul.f32 %v2548, 1.442695
  %v2588 = vpow.pop %v2587
  %v2589 = vmul.f32 %v2549, 1.442695
  %v2590 = vpow.pop %v2589
  %v2591 = vmul.f32 %v2550, 1.442695
  %v2592 = vpow.pop %v2591
  %v2593 = vmul.f32 %v2551, 1.442695
  %v2594 = vpow.pop %v2593
  %v2595 = vmul.f32 %v2552, 1.442695
  %v2596 = vpow.pop %v2595
  %v2597 = vmul.f32 %v2553, 1.442695
  %v2598 = vpow.pop %v2597
  %v2599 = vmul.f32 %v2554, 1.442695
  %v2600 = vpow.pop %v2599
  %v2601 = vmul.f32 %v2555, 1.442695
  %v2602 = vpow.pop %v2601
  %v2603 = vmul.f32 %v2556, 1.442695
  %v2604 = vpow.pop %v2603
  %v2605 = vadd.f32 %v2558, 1.0
  %v2606 = vadd.f32 %v2560, 1.0
  %v2607 = vadd.f32 %v2562, 1.0
  %v2608 = vadd.f32 %v2564, 1.0
  %v2609 = vadd.f32 %v2566, 1.0
  %v2610 = vadd.f32 %v2568, 1.0
  %v2611 = vadd.f32 %v2570, 1.0
  %v2612 = vadd.f32 %v2572, 1.0
  %v2613 = vadd.f32 %v2574, 1.0
  %v2614 = vadd.f32 %v2576, 1.0
  %v2615 = vadd.f32 %v2578, 1.0
  %v2616 = vadd.f32 %v2580, 1.0
  %v2617 = vadd.f32 %v2582, 1.0
  %v2618 = vadd.f32 %v2584, 1.0
  %v2619 = vadd.f32 %v2586, 1.0
  %v2620 = vadd.f32 %v2588, 1.0
  %v2621 = vadd.f32 %v2590, 1.0
  %v2622 = vadd.f32 %v2592, 1.0
  %v2623 = vadd.f32 %v2594, 1.0
  %v2624 = vadd.f32 %v2596, 1.0
  %v2625 = vadd.f32 %v2598, 1.0
  %v2626 = vadd.f32 %v2600, 1.0
  %v2627 = vadd.f32 %v2602, 1.0
  %v2628 = vadd.f32 %v2604, 1.0
  %v2629 = vrcp.pop %v2605
  %v2630 = vmul.f32 1.0, %v2629
  %v2631 = vrcp.pop %v2606
  %v2632 = vmul.f32 1.0, %v2631
  %v2633 = vrcp.pop %v2607
  %v2634 = vmul.f32 1.0, %v2633
  %v2635 = vrcp.pop %v2608
  %v2636 = vmul.f32 1.0, %v2635
  %v2637 = vrcp.pop %v2609
  %v2638 = vmul.f32 1.0, %v2637
  %v2639 = vrcp.pop %v2610
  %v2640 = vmul.f32 1.0, %v2639
  %v2641 = vrcp.pop %v2611
  %v2642 = vmul.f32 1.0, %v2641
  %v2643 = vrcp.pop %v2612
  %v2644 = vmul.f32 1.0, %v2643
  %v2645 = vrcp.pop %v2613
  %v2646 = vmul.f32 1.0, %v2645
  %v2647 = vrcp.pop %v2614
  %v2648 = vmul.f32 1.0, %v2647
  %v2649 = vrcp.pop %v2615
  %v2650 = vmul.f32 1.0, %v2649
  %v2651 = vrcp.pop %v2616
  %v2652 = vmul.f32 1.0, %v2651
  %v2653 = vrcp.pop %v2617
  %v2654 = vmul.f32 1.0, %v2653
  %v2655 = vrcp.pop %v2618
  %v2656 = vmul.f32 1.0, %v2655
  %v2657 = vrcp.pop %v2619
  %v2658 = vmul.f32 1.0, %v2657
  %v2659 = vrcp.pop %v2620
  %v2660 = vmul.f32 1.0, %v2659
  %v2661 = vrcp.pop %v2621
  %v2662 = vmul.f32 1.0, %v2661
  %v2663 = vrcp.pop %v2622
  %v2664 = vmul.f32 1.0, %v2663
  %v2665 = vrcp.pop %v2623
  %v2666 = vmul.f32 1.0, %v2665
  %v2667 = vrcp.pop %v2624
  %v2668 = vmul.f32 1.0, %v2667
  %v2669 = vrcp.pop %v2625
  %v2670 = vmul.f32 1.0, %v2669
  %v2671 = vrcp.pop %v2626
  %v2672 = vmul.f32 1.0, %v2671
  %v2673 = vrcp.pop %v2627
  %v2674 = vmul.f32 1.0, %v2673
  %v2675 = vrcp.pop %v2628
  %v2676 = vmul.f32 1.0, %v2675
  %2701 = vrot.lane.b32.xlu0 %v2630, 112
  %v2702 = vpop.permute.xlu0 %2701
  %2703 = vrot.lane.b32.xlu0 %v2632, 112
  %v2704 = vpop.permute.xlu0 %2703
  %2705 = vrot.lane.b32.xlu0 %v2634, 112
  %v2706 = vpop.permute.xlu0 %2705
  %2707 = vrot.lane.b32.xlu0 %v2636, 112
  %v2708 = vpop.permute.xlu0 %2707
  %2709 = vrot.lane.b32.xlu0 %v2638, 112
  %v2710 = vpop.permute.xlu0 %2709
  %2711 = vrot.lane.b32.xlu0 %v2640, 112
  %v2712 = vpop.permute.xlu0 %2711
  %2713 = vrot.lane.b32.xlu0 %v2642, 112
  %v2714 = vpop.permute.xlu0 %2713
  %2715 = vrot.lane.b32.xlu0 %v2644, 112
  %v2716 = vpop.permute.xlu0 %2715
  %2717 = vrot.lane.b32.xlu0 %v2646, 112
  %v2718 = vpop.permute.xlu0 %2717
  %2719 = vrot.lane.b32.xlu0 %v2648, 112
  %v2720 = vpop.permute.xlu0 %2719
  %2721 = vrot.lane.b32.xlu0 %v2650, 112
  %v2722 = vpop.permute.xlu0 %2721
  %2723 = vrot.lane.b32.xlu0 %v2652, 112
  %v2724 = vpop.permute.xlu0 %2723
  %2725 = vrot.lane.b32.xlu0 %v2654, 112
  %v2726 = vpop.permute.xlu0 %2725
  %2727 = vrot.lane.b32.xlu0 %v2656, 112
  %v2728 = vpop.permute.xlu0 %2727
  %2729 = vrot.lane.b32.xlu0 %v2658, 112
  %v2730 = vpop.permute.xlu0 %2729
  %2731 = vrot.lane.b32.xlu0 %v2660, 112
  %v2732 = vpop.permute.xlu0 %2731
  %2733 = vrot.lane.b32.xlu0 %v2662, 112
  %v2734 = vpop.permute.xlu0 %2733
  %2735 = vrot.lane.b32.xlu0 %v2664, 112
  %v2736 = vpop.permute.xlu0 %2735
  %2737 = vrot.lane.b32.xlu0 %v2666, 112
  %v2738 = vpop.permute.xlu0 %2737
  %2739 = vrot.lane.b32.xlu0 %v2668, 112
  %v2740 = vpop.permute.xlu0 %2739
  %2741 = vrot.lane.b32.xlu0 %v2670, 112
  %v2742 = vpop.permute.xlu0 %2741
  %2743 = vrot.lane.b32.xlu0 %v2672, 112
  %v2744 = vpop.permute.xlu0 %2743
  %2745 = vrot.lane.b32.xlu0 %v2674, 112
  %v2746 = vpop.permute.xlu0 %2745
  %2747 = vrot.lane.b32.xlu0 %v2676, 112
  %v2748 = vpop.permute.xlu0 %2747
  %v2773 = vadd.f32 %v2509, %v2702
  %v2774 = vadd.f32 %v2510, %v2704
  %v2775 = vadd.f32 %v2511, %v2706
  %v2776 = vadd.f32 %v2512, %v2708
  %v2777 = vadd.f32 %v2513, %v2710
  %v2778 = vadd.f32 %v2514, %v2712
  %v2779 = vadd.f32 %v2515, %v2714
  %v2780 = vadd.f32 %v2516, %v2716
  %v2781 = vadd.f32 %v2517, %v2718
  %v2782 = vadd.f32 %v2518, %v2720
  %v2783 = vadd.f32 %v2519, %v2722
  %v2784 = vadd.f32 %v2520, %v2724
  %v2785 = vadd.f32 %v2521, %v2726
  %v2786 = vadd.f32 %v2522, %v2728
  %v2787 = vadd.f32 %v2523, %v2730
  %v2788 = vadd.f32 %v2524, %v2732
  %v2789 = vadd.f32 %v2525, %v2734
  %v2790 = vadd.f32 %v2526, %v2736
  %v2791 = vadd.f32 %v2527, %v2738
  %v2792 = vadd.f32 %v2528, %v2740
  %v2793 = vadd.f32 %v2529, %v2742
  %v2794 = vadd.f32 %v2530, %v2744
  %v2795 = vadd.f32 %v2531, %v2746
  %v2796 = vadd.f32 %v2532, %v2748
  %2821 = vrot.lane.b32.xlu0 %v2509, 96
  %v2822 = vpop.permute.xlu0 %2821
  %2823 = vrot.lane.b32.xlu0 %v2510, 96
  %v2824 = vpop.permute.xlu0 %2823
  %2825 = vrot.lane.b32.xlu0 %v2511, 96
  %v2826 = vpop.permute.xlu0 %2825
  %2827 = vrot.lane.b32.xlu0 %v2512, 96
  %v2828 = vpop.permute.xlu0 %2827
  %2829 = vrot.lane.b32.xlu0 %v2513, 96
  %v2830 = vpop.permute.xlu0 %2829
  %2831 = vrot.lane.b32.xlu0 %v2514, 96
  %v2832 = vpop.permute.xlu0 %2831
  %2833 = vrot.lane.b32.xlu0 %v2515, 96
  %v2834 = vpop.permute.xlu0 %2833
  %2835 = vrot.lane.b32.xlu0 %v2516, 96
  %v2836 = vpop.permute.xlu0 %2835
  %2837 = vrot.lane.b32.xlu0 %v2517, 96
  %v2838 = vpop.permute.xlu0 %2837
  %2839 = vrot.lane.b32.xlu0 %v2518, 96
  %v2840 = vpop.permute.xlu0 %2839
  %2841 = vrot.lane.b32.xlu0 %v2519, 96
  %v2842 = vpop.permute.xlu0 %2841
  %2843 = vrot.lane.b32.xlu0 %v2520, 96
  %v2844 = vpop.permute.xlu0 %2843
  %2845 = vrot.lane.b32.xlu0 %v2521, 96
  %v2846 = vpop.permute.xlu0 %2845
  %2847 = vrot.lane.b32.xlu0 %v2522, 96
  %v2848 = vpop.permute.xlu0 %2847
  %2849 = vrot.lane.b32.xlu0 %v2523, 96
  %v2850 = vpop.permute.xlu0 %2849
  %2851 = vrot.lane.b32.xlu0 %v2524, 96
  %v2852 = vpop.permute.xlu0 %2851
  %2853 = vrot.lane.b32.xlu0 %v2525, 96
  %v2854 = vpop.permute.xlu0 %2853
  %2855 = vrot.lane.b32.xlu0 %v2526, 96
  %v2856 = vpop.permute.xlu0 %2855
  %2857 = vrot.lane.b32.xlu0 %v2527, 96
  %v2858 = vpop.permute.xlu0 %2857
  %2859 = vrot.lane.b32.xlu0 %v2528, 96
  %v2860 = vpop.permute.xlu0 %2859
  %2861 = vrot.lane.b32.xlu0 %v2529, 96
  %v2862 = vpop.permute.xlu0 %2861
  %2863 = vrot.lane.b32.xlu0 %v2530, 96
  %v2864 = vpop.permute.xlu0 %2863
  %2865 = vrot.lane.b32.xlu0 %v2531, 96
  %v2866 = vpop.permute.xlu0 %2865
  %2867 = vrot.lane.b32.xlu0 %v2532, 96
  %v2868 = vpop.permute.xlu0 %2867
  %v2893 = vadd.f32 %v2773, %v2822
  %v2894 = vadd.f32 %v2774, %v2824
  %v2895 = vadd.f32 %v2775, %v2826
  %v2896 = vadd.f32 %v2776, %v2828
  %v2897 = vadd.f32 %v2777, %v2830
  %v2898 = vadd.f32 %v2778, %v2832
  %v2899 = vadd.f32 %v2779, %v2834
  %v2900 = vadd.f32 %v2780, %v2836
  %v2901 = vadd.f32 %v2781, %v2838
  %v2902 = vadd.f32 %v2782, %v2840
  %v2903 = vadd.f32 %v2783, %v2842
  %v2904 = vadd.f32 %v2784, %v2844
  %v2905 = vadd.f32 %v2785, %v2846
  %v2906 = vadd.f32 %v2786, %v2848
  %v2907 = vadd.f32 %v2787, %v2850
  %v2908 = vadd.f32 %v2788, %v2852
  %v2909 = vadd.f32 %v2789, %v2854
  %v2910 = vadd.f32 %v2790, %v2856
  %v2911 = vadd.f32 %v2791, %v2858
  %v2912 = vadd.f32 %v2792, %v2860
  %v2913 = vadd.f32 %v2793, %v2862
  %v2914 = vadd.f32 %v2794, %v2864
  %v2915 = vadd.f32 %v2795, %v2866
  %v2916 = vadd.f32 %v2796, %v2868
  %v2917 = vmax.f32 %v2893, 0.0
  %v2918 = vmax.f32 %v2894, 0.0
  %v2919 = vmax.f32 %v2895, 0.0
  %v2920 = vmax.f32 %v2896, 0.0
  %v2921 = vmax.f32 %v2897, 0.0
  %v2922 = vmax.f32 %v2898, 0.0
  %v2923 = vmax.f32 %v2899, 0.0
  %v2924 = vmax.f32 %v2900, 0.0
  %v2925 = vmax.f32 %v2901, 0.0
  %v2926 = vmax.f32 %v2902, 0.0
  %v2927 = vmax.f32 %v2903, 0.0
  %v2928 = vmax.f32 %v2904, 0.0
  %v2929 = vmax.f32 %v2905, 0.0
  %v2930 = vmax.f32 %v2906, 0.0
  %v2931 = vmax.f32 %v2907, 0.0
  %v2932 = vmax.f32 %v2908, 0.0
  %v2933 = vmax.f32 %v2909, 0.0
  %v2934 = vmax.f32 %v2910, 0.0
  %v2935 = vmax.f32 %v2911, 0.0
  %v2936 = vmax.f32 %v2912, 0.0
  %v2937 = vmax.f32 %v2913, 0.0
  %v2938 = vmax.f32 %v2914, 0.0
  %v2939 = vmax.f32 %v2915, 0.0
  %v2940 = vmax.f32 %v2916, 0.0
  %v2941 = vsel %vm1205, %v2917, 0.0
  %2942 = vadd.xlane.f32.xlu0 %v2941
  %v2943 = vpop.xlane.xlu0 %2942
  %v2944 = vsel %vm1205, %v2918, 0.0
  %2945 = vadd.xlane.f32.xlu0 %v2944
  %v2946 = vpop.xlane.xlu0 %2945
  %v2947 = vsel %vm1205, %v2919, 0.0
  %2948 = vadd.xlane.f32.xlu0 %v2947
  %v2949 = vpop.xlane.xlu0 %2948
  %v2950 = vsel %vm1205, %v2920, 0.0
  %2951 = vadd.xlane.f32.xlu0 %v2950
  %v2952 = vpop.xlane.xlu0 %2951
  %v2953 = vsel %vm1205, %v2921, 0.0
  %2954 = vadd.xlane.f32.xlu0 %v2953
  %v2955 = vpop.xlane.xlu0 %2954
  %v2956 = vsel %vm1205, %v2922, 0.0
  %2957 = vadd.xlane.f32.xlu0 %v2956
  %v2958 = vpop.xlane.xlu0 %2957
  %v2959 = vsel %vm1205, %v2923, 0.0
  %2960 = vadd.xlane.f32.xlu0 %v2959
  %v2961 = vpop.xlane.xlu0 %2960
  %v2962 = vsel %vm1205, %v2924, 0.0
  %2963 = vadd.xlane.f32.xlu0 %v2962
  %v2964 = vpop.xlane.xlu0 %2963
  %v2965 = vsel %vm1205, %v2925, 0.0
  %2966 = vadd.xlane.f32.xlu0 %v2965
  %v2967 = vpop.xlane.xlu0 %2966
  %v2968 = vsel %vm1205, %v2926, 0.0
  %2969 = vadd.xlane.f32.xlu0 %v2968
  %v2970 = vpop.xlane.xlu0 %2969
  %v2971 = vsel %vm1205, %v2927, 0.0
  %2972 = vadd.xlane.f32.xlu0 %v2971
  %v2973 = vpop.xlane.xlu0 %2972
  %v2974 = vsel %vm1205, %v2928, 0.0
  %2975 = vadd.xlane.f32.xlu0 %v2974
  %v2976 = vpop.xlane.xlu0 %2975
  %v2977 = vsel %vm1205, %v2929, 0.0
  %2978 = vadd.xlane.f32.xlu0 %v2977
  %v2979 = vpop.xlane.xlu0 %2978
  %v2980 = vsel %vm1205, %v2930, 0.0
  %2981 = vadd.xlane.f32.xlu0 %v2980
  %v2982 = vpop.xlane.xlu0 %2981
  %v2983 = vsel %vm1205, %v2931, 0.0
  %2984 = vadd.xlane.f32.xlu0 %v2983
  %v2985 = vpop.xlane.xlu0 %2984
  %v2986 = vsel %vm1205, %v2932, 0.0
  %2987 = vadd.xlane.f32.xlu0 %v2986
  %v2988 = vpop.xlane.xlu0 %2987
  %v2989 = vsel %vm1205, %v2933, 0.0
  %2990 = vadd.xlane.f32.xlu0 %v2989
  %v2991 = vpop.xlane.xlu0 %2990
  %v2992 = vsel %vm1205, %v2934, 0.0
  %2993 = vadd.xlane.f32.xlu0 %v2992
  %v2994 = vpop.xlane.xlu0 %2993
  %v2995 = vsel %vm1205, %v2935, 0.0
  %2996 = vadd.xlane.f32.xlu0 %v2995
  %v2997 = vpop.xlane.xlu0 %2996
  %v2998 = vsel %vm1205, %v2936, 0.0
  %2999 = vadd.xlane.f32.xlu0 %v2998
  %v3000 = vpop.xlane.xlu0 %2999
  %v3001 = vsel %vm1205, %v2937, 0.0
  %3002 = vadd.xlane.f32.xlu0 %v3001
  %v3003 = vpop.xlane.xlu0 %3002
  %v3004 = vsel %vm1205, %v2938, 0.0
  %3005 = vadd.xlane.f32.xlu0 %v3004
  %v3006 = vpop.xlane.xlu0 %3005
  %v3007 = vsel %vm1205, %v2939, 0.0
  %3008 = vadd.xlane.f32.xlu0 %v3007
  %v3009 = vpop.xlane.xlu0 %3008
  %v3010 = vsel %vm1205, %v2940, 0.0
  %3011 = vadd.xlane.f32.xlu0 %v3010
  %v3012 = vpop.xlane.xlu0 %3011
  %v3013 = vadd.f32 %v2943, %v2949
  %v3014 = vadd.f32 %v3013, %v2955
  %v3015 = vadd.f32 %v3014, %v2961
  %v3016 = vadd.f32 %v3015, %v2967
  %v3017 = vadd.f32 %v3016, %v2973
  %v3018 = vadd.f32 %v3017, %v2979
  %v3019 = vadd.f32 %v3018, %v2985
  %v3020 = vadd.f32 %v3019, %v2991
  %v3021 = vadd.f32 %v3020, %v2997
  %v3022 = vadd.f32 %v3021, %v3003
  %v3023 = vadd.f32 %v3022, %v3009
  %v3024 = vadd.f32 %v2946, %v2952
  %v3025 = vadd.f32 %v3024, %v2958
  %v3026 = vadd.f32 %v3025, %v2964
  %v3027 = vadd.f32 %v3026, %v2970
  %v3028 = vadd.f32 %v3027, %v2976
  %v3029 = vadd.f32 %v3028, %v2982
  %v3030 = vadd.f32 %v3029, %v2988
  %v3031 = vadd.f32 %v3030, %v2994
  %v3032 = vadd.f32 %v3031, %v3000
  %v3033 = vadd.f32 %v3032, %v3006
  %v3034 = vadd.f32 %v3033, %v3012
  %v3035 = vmul.f32 %v2917, %v2917
  %v3036 = vmul.f32 %v2918, %v2918
  %v3037 = vmul.f32 %v2919, %v2919
  %v3038 = vmul.f32 %v2920, %v2920
  %v3039 = vmul.f32 %v2921, %v2921
  %v3040 = vmul.f32 %v2922, %v2922
  %v3041 = vmul.f32 %v2923, %v2923
  %v3042 = vmul.f32 %v2924, %v2924
  %v3043 = vmul.f32 %v2925, %v2925
  %v3044 = vmul.f32 %v2926, %v2926
  %v3045 = vmul.f32 %v2927, %v2927
  %v3046 = vmul.f32 %v2928, %v2928
  %v3047 = vmul.f32 %v2929, %v2929
  %v3048 = vmul.f32 %v2930, %v2930
  %v3049 = vmul.f32 %v2931, %v2931
  %v3050 = vmul.f32 %v2932, %v2932
  %v3051 = vmul.f32 %v2933, %v2933
  %v3052 = vmul.f32 %v2934, %v2934
  %v3053 = vmul.f32 %v2935, %v2935
  %v3054 = vmul.f32 %v2936, %v2936
  %v3055 = vmul.f32 %v2937, %v2937
  %v3056 = vmul.f32 %v2938, %v2938
  %v3057 = vmul.f32 %v2939, %v2939
  %v3058 = vmul.f32 %v2940, %v2940
  %v3059 = vsel %vm1205, %v3035, 0.0
  %3060 = vadd.xlane.f32.xlu0 %v3059
  %v3061 = vpop.xlane.xlu0 %3060
  %v3062 = vsel %vm1205, %v3036, 0.0
  %3063 = vadd.xlane.f32.xlu0 %v3062
  %v3064 = vpop.xlane.xlu0 %3063
  %v3065 = vsel %vm1205, %v3037, 0.0
  %3066 = vadd.xlane.f32.xlu0 %v3065
  %v3067 = vpop.xlane.xlu0 %3066
  %v3068 = vsel %vm1205, %v3038, 0.0
  %3069 = vadd.xlane.f32.xlu0 %v3068
  %v3070 = vpop.xlane.xlu0 %3069
  %v3071 = vsel %vm1205, %v3039, 0.0
  %3072 = vadd.xlane.f32.xlu0 %v3071
  %v3073 = vpop.xlane.xlu0 %3072
  %v3074 = vsel %vm1205, %v3040, 0.0
  %3075 = vadd.xlane.f32.xlu0 %v3074
  %v3076 = vpop.xlane.xlu0 %3075
  %v3077 = vsel %vm1205, %v3041, 0.0
  %3078 = vadd.xlane.f32.xlu0 %v3077
  %v3079 = vpop.xlane.xlu0 %3078
  %v3080 = vsel %vm1205, %v3042, 0.0
  %3081 = vadd.xlane.f32.xlu0 %v3080
  %v3082 = vpop.xlane.xlu0 %3081
  %v3083 = vsel %vm1205, %v3043, 0.0
  %3084 = vadd.xlane.f32.xlu0 %v3083
  %v3085 = vpop.xlane.xlu0 %3084
  %v3086 = vsel %vm1205, %v3044, 0.0
  %3087 = vadd.xlane.f32.xlu0 %v3086
  %v3088 = vpop.xlane.xlu0 %3087
  %v3089 = vsel %vm1205, %v3045, 0.0
  %3090 = vadd.xlane.f32.xlu0 %v3089
  %v3091 = vpop.xlane.xlu0 %3090
  %v3092 = vsel %vm1205, %v3046, 0.0
  %3093 = vadd.xlane.f32.xlu0 %v3092
  %v3094 = vpop.xlane.xlu0 %3093
  %v3095 = vsel %vm1205, %v3047, 0.0
  %3096 = vadd.xlane.f32.xlu0 %v3095
  %v3097 = vpop.xlane.xlu0 %3096
  %v3098 = vsel %vm1205, %v3048, 0.0
  %3099 = vadd.xlane.f32.xlu0 %v3098
  %v3100 = vpop.xlane.xlu0 %3099
  %v3101 = vsel %vm1205, %v3049, 0.0
  %3102 = vadd.xlane.f32.xlu0 %v3101
  %v3103 = vpop.xlane.xlu0 %3102
  %v3104 = vsel %vm1205, %v3050, 0.0
  %3105 = vadd.xlane.f32.xlu0 %v3104
  %v3106 = vpop.xlane.xlu0 %3105
  %v3107 = vsel %vm1205, %v3051, 0.0
  %3108 = vadd.xlane.f32.xlu0 %v3107
  %v3109 = vpop.xlane.xlu0 %3108
  %v3110 = vsel %vm1205, %v3052, 0.0
  %3111 = vadd.xlane.f32.xlu0 %v3110
  %v3112 = vpop.xlane.xlu0 %3111
  %v3113 = vsel %vm1205, %v3053, 0.0
  %3114 = vadd.xlane.f32.xlu0 %v3113
  %v3115 = vpop.xlane.xlu0 %3114
  %v3116 = vsel %vm1205, %v3054, 0.0
  %3117 = vadd.xlane.f32.xlu0 %v3116
  %v3118 = vpop.xlane.xlu0 %3117
  %v3119 = vsel %vm1205, %v3055, 0.0
  %3120 = vadd.xlane.f32.xlu0 %v3119
  %v3121 = vpop.xlane.xlu0 %3120
  %v3122 = vsel %vm1205, %v3056, 0.0
  %3123 = vadd.xlane.f32.xlu0 %v3122
  %v3124 = vpop.xlane.xlu0 %3123
  %v3125 = vsel %vm1205, %v3057, 0.0
  %3126 = vadd.xlane.f32.xlu0 %v3125
  %v3127 = vpop.xlane.xlu0 %3126
  %v3128 = vsel %vm1205, %v3058, 0.0
  %3129 = vadd.xlane.f32.xlu0 %v3128
  %v3130 = vpop.xlane.xlu0 %3129
  %v3131 = vadd.f32 %v3061, %v3067
  %v3132 = vadd.f32 %v3131, %v3073
  %v3133 = vadd.f32 %v3132, %v3079
  %v3134 = vadd.f32 %v3133, %v3085
  %v3135 = vadd.f32 %v3134, %v3091
  %v3136 = vadd.f32 %v3135, %v3097
  %v3137 = vadd.f32 %v3136, %v3103
  %v3138 = vadd.f32 %v3137, %v3109
  %v3139 = vadd.f32 %v3138, %v3115
  %v3140 = vadd.f32 %v3139, %v3121
  %v3141 = vadd.f32 %v3140, %v3127
  %v3142 = vadd.f32 %v3064, %v3070
  %v3143 = vadd.f32 %v3142, %v3076
  %v3144 = vadd.f32 %v3143, %v3082
  %v3145 = vadd.f32 %v3144, %v3088
  %v3146 = vadd.f32 %v3145, %v3094
  %v3147 = vadd.f32 %v3146, %v3100
  %v3148 = vadd.f32 %v3147, %v3106
  %v3149 = vadd.f32 %v3148, %v3112
  %v3150 = vadd.f32 %v3149, %v3118
  %v3151 = vadd.f32 %v3150, %v3124
  %v3152 = vadd.f32 %v3151, %v3130
  %v3153 = vmul.f32 %v3023, 0.0052083335
  %v3154 = vmul.f32 %v3034, 0.0052083335
  %v3155 = vmul.f32 %v3141, 0.0052083335
  %v3156 = vmul.f32 %v3152, 0.0052083335
  %v3157 = vmul.f32 %v3153, %v3153
  %v3158 = vmul.f32 %v3154, %v3154
  %v3159 = vsub.f32 %v3155, %v3157
  %v3160 = vsub.f32 %v3156, %v3158
  %v3161 = vmax.f32 %v3159, 0.0
  %v3162 = vmax.f32 %v3160, 0.0
  %v3163 = vsub.f32 %v2917, %v3153
  %v3164 = vsub.f32 %v2918, %v3154
  %v3165 = vsub.f32 %v2919, %v3153
  %v3166 = vsub.f32 %v2920, %v3154
  %v3167 = vsub.f32 %v2921, %v3153
  %v3168 = vsub.f32 %v2922, %v3154
  %v3169 = vsub.f32 %v2923, %v3153
  %v3170 = vsub.f32 %v2924, %v3154
  %v3171 = vsub.f32 %v2925, %v3153
  %v3172 = vsub.f32 %v2926, %v3154
  %v3173 = vsub.f32 %v2927, %v3153
  %v3174 = vsub.f32 %v2928, %v3154
  %v3175 = vsub.f32 %v2929, %v3153
  %v3176 = vsub.f32 %v2930, %v3154
  %v3177 = vsub.f32 %v2931, %v3153
  %v3178 = vsub.f32 %v2932, %v3154
  %v3179 = vsub.f32 %v2933, %v3153
  %v3180 = vsub.f32 %v2934, %v3154
  %v3181 = vsub.f32 %v2935, %v3153
  %v3182 = vsub.f32 %v2936, %v3154
  %v3183 = vsub.f32 %v2937, %v3153
  %v3184 = vsub.f32 %v2938, %v3154
  %v3185 = vsub.f32 %v2939, %v3153
  %v3186 = vsub.f32 %v2940, %v3154
  %v3187 = vadd.f32 %v3161, 1e-05
  %v3188 = vadd.f32 %v3162, 1e-05
  %v3189 = vrsqrt.pop %v3187
  %v3190 = vrsqrt.pop %v3188
  %v3191 = vmul.f32 %v3163, %v3189
  %v3192 = vmul.f32 %v3164, %v3190
  %v3193 = vmul.f32 %v3165, %v3189
  %v3194 = vmul.f32 %v3166, %v3190
  %v3195 = vmul.f32 %v3167, %v3189
  %v3196 = vmul.f32 %v3168, %v3190
  %v3197 = vmul.f32 %v3169, %v3189
  %v3198 = vmul.f32 %v3170, %v3190
  %v3199 = vmul.f32 %v3171, %v3189
  %v3200 = vmul.f32 %v3172, %v3190
  %v3201 = vmul.f32 %v3173, %v3189
  %v3202 = vmul.f32 %v3174, %v3190
  %v3203 = vmul.f32 %v3175, %v3189
  %v3204 = vmul.f32 %v3176, %v3190
  %v3205 = vmul.f32 %v3177, %v3189
  %v3206 = vmul.f32 %v3178, %v3190
  %v3207 = vmul.f32 %v3179, %v3189
  %v3208 = vmul.f32 %v3180, %v3190
  %v3209 = vmul.f32 %v3181, %v3189
  %v3210 = vmul.f32 %v3182, %v3190
  %v3211 = vmul.f32 %v3183, %v3189
  %v3212 = vmul.f32 %v3184, %v3190
  %v3213 = vmul.f32 %v3185, %v3189
  %v3214 = vmul.f32 %v3186, %v3190
  %v3215 = vpack.c.bf16 %v3192, %v3191
  %v3216 = vpack.c.bf16 %v3194, %v3193
  %v3217 = vpack.c.bf16 %v3196, %v3195
  %v3218 = vpack.c.bf16 %v3198, %v3197
  %v3219 = vpack.c.bf16 %v3200, %v3199
  %v3220 = vpack.c.bf16 %v3202, %v3201
  %v3221 = vpack.c.bf16 %v3204, %v3203
  %v3222 = vpack.c.bf16 %v3206, %v3205
  %v3223 = vpack.c.bf16 %v3208, %v3207
  %v3224 = vpack.c.bf16 %v3210, %v3209
  %v3225 = vpack.c.bf16 %v3212, %v3211
  %v3226 = vpack.c.bf16 %v3214, %v3213
  %v3227 = vld [vmem:[%s7] sm:$0xf]
  %v3228 = vld [vmem:[%s7 + $0x4] sm:$0xf]
  %s3229 = scalar_lea.vmem %s7, 8
  %v3230 = vld [vmem:[%s3229] sm:$0xf]
  %v3231 = vld [vmem:[%s3229 + $0x4] sm:$0xf]
  %v3234 = vunpack.c.l.b16 %v3230
  %v3235 = vunpack.c.l.b16 %v3231
  %v3236 = vpack.c.b16 %v3235, %v3234
  %v3239 = vsel %vm1205, %v3216, 0
  %v3242 = vsel %vm1205, %v3217, 0
  %v3245 = vsel %vm1205, %v3218, 0
  %v3248 = vsel %vm1205, %v3219, 0
  %v3251 = vsel %vm1205, %v3220, 0
  %v3254 = vsel %vm1205, %v3221, 0
  %v3257 = vsel %vm1205, %v3222, 0
  %v3260 = vsel %vm1205, %v3223, 0
  %v3263 = vsel %vm1205, %v3224, 0
  %v3266 = vsel %vm1205, %v3225, 0
  %3268 = vmatprep.subr.bf16.mxu0 0
  %3269 = vmatpush1.bf16.msra.mxu0 %v3236
  %3270 = vmatprep.subr.bf16.mxu0 0
  %3271 = vmatpush1.bf16.msra.mxu0 0
  %3272 = vmatprep.subr.bf16.mxu0 0
  %3273 = vmatpush1.bf16.msra.mxu0 0
  %3274 = vmatprep.subr.bf16.mxu0 0
  %3275 = vmatpush1.bf16.msra.mxu0 0
  %3276 = vmatprep.subr.bf16.mxu0 0
  %3277 = vmatpush1.bf16.msra.mxu0 0
  %3278 = vmatprep.subr.bf16.mxu0 0
  %3279 = vmatpush1.bf16.msra.mxu0 0
  %3280 = vmatprep.subr.bf16.mxu0 0
  %3281 = vmatpush1.bf16.msra.mxu0 0
  %3282 = vmatprep.subr.bf16.mxu0 0
  %3283 = vmatpush1.bf16.msra.mxu0 0
  %3284 = vmatprep.subr.bf16.mxu0 0
  %3285 = vmatpush1.bf16.msra.mxu0 0
  %3286 = vmatprep.subr.bf16.mxu0 0
  %3287 = vmatpush1.bf16.msra.mxu0 0
  %3288 = vmatprep.subr.bf16.mxu0 0
  %3289 = vmatpush1.bf16.msra.mxu0 0
  %3290 = vmatprep.subr.bf16.mxu0 0
  %3291 = vmatpush1.bf16.msra.mxu0 0
  %3292 = vmatprep.subr.bf16.mxu0 0
  %3293 = vmatpush1.bf16.msra.mxu0 0
  %3294 = vmatprep.subr.bf16.mxu0 0
  %3295 = vmatpush1.bf16.msra.mxu0 0
  %3296 = vmatprep.subr.bf16.mxu0 0
  %3297 = vmatpush1.bf16.msra.mxu0 0
  %3298 = vmatprep.subr.bf16.mxu0 0
  %3299 = vmatpush1.bf16.msra.mxu0 0
  %3300 = vmatprep.mubr.bf16.mxu0 0
  %3301 = vmatmul.mubr.bf16.gmra.mrb[0].mxu0 %v3239
  %v3302 = vpop.f32.mrb[0].mxu0
  %v3303 = vadd.f32 0.0, %v3302
  %v3304 = vpop.f32.mrb[0].mxu0
  %v3305 = vpop.f32.mrb[0].mxu0
  %v3306 = vadd.f32 0.0, %v3305
  %v3307 = vpop.f32.mrb[0].mxu0
  %3308 = vmatprep.mubr.bf16.mxu0 0
  %3309 = vmatmul.mubr.bf16.gmra.mrb[0].mxu0 %v3242
  %v3310 = vpop.f32.mrb[0].mxu0
  %v3311 = vadd.f32 0.0, %v3310
  %v3312 = vpop.f32.mrb[0].mxu0
  %v3313 = vpop.f32.mrb[0].mxu0
  %v3314 = vadd.f32 0.0, %v3313
  %v3315 = vpop.f32.mrb[0].mxu0
  %3316 = vmatprep.mubr.bf16.mxu0 0
  %3317 = vmatmul.mubr.bf16.gmra.mrb[0].mxu0 %v3245
  %v3318 = vpop.f32.mrb[0].mxu0
  %v3319 = vadd.f32 0.0, %v3318
  %v3320 = vpop.f32.mrb[0].mxu0
  %v3321 = vpop.f32.mrb[0].mxu0
  %v3322 = vadd.f32 0.0, %v3321
  %v3323 = vpop.f32.mrb[0].mxu0
  %3324 = vmatprep.mubr.bf16.mxu0 0
  %3325 = vmatmul.mubr.bf16.gmra.mrb[0].mxu0 %v3248
  %v3326 = vpop.f32.mrb[0].mxu0
  %v3327 = vadd.f32 0.0, %v3326
  %v3328 = vpop.f32.mrb[0].mxu0
  %v3329 = vpop.f32.mrb[0].mxu0
  %v3330 = vadd.f32 0.0, %v3329
  %v3331 = vpop.f32.mrb[0].mxu0
  %3332 = vmatprep.mubr.bf16.mxu0 0
  %3333 = vmatmul.mubr.bf16.gmra.mrb[0].mxu0 %v3251
  %v3334 = vpop.f32.mrb[0].mxu0
  %v3335 = vadd.f32 0.0, %v3334
  %v3336 = vpop.f32.mrb[0].mxu0
  %v3337 = vpop.f32.mrb[0].mxu0
  %v3338 = vadd.f32 0.0, %v3337
  %v3339 = vpop.f32.mrb[0].mxu0
  %3340 = vmatprep.mubr.bf16.mxu0 0
  %3341 = vmatmul.mubr.bf16.gmra.mrb[0].mxu0 %v3254
  %v3342 = vpop.f32.mrb[0].mxu0
  %v3343 = vadd.f32 0.0, %v3342
  %v3344 = vpop.f32.mrb[0].mxu0
  %v3345 = vpop.f32.mrb[0].mxu0
  %v3346 = vadd.f32 0.0, %v3345
  %v3347 = vpop.f32.mrb[0].mxu0
  %3348 = vmatprep.mubr.bf16.mxu0 0
  %3349 = vmatmul.mubr.bf16.gmra.mrb[0].mxu0 %v3257
  %v3350 = vpop.f32.mrb[0].mxu0
  %v3351 = vadd.f32 0.0, %v3350
  %v3352 = vpop.f32.mrb[0].mxu0
  %v3353 = vpop.f32.mrb[0].mxu0
  %v3354 = vadd.f32 0.0, %v3353
  %v3355 = vpop.f32.mrb[0].mxu0
  %3356 = vmatprep.mubr.bf16.mxu0 0
  %3357 = vmatmul.mubr.bf16.gmra.mrb[0].mxu0 %v3260
  %v3358 = vpop.f32.mrb[0].mxu0
  %v3359 = vadd.f32 0.0, %v3358
  %v3360 = vpop.f32.mrb[0].mxu0
  %v3361 = vpop.f32.mrb[0].mxu0
  %v3362 = vadd.f32 0.0, %v3361
  %v3363 = vpop.f32.mrb[0].mxu0
  %3364 = vmatprep.mubr.bf16.mxu0 0
  %3365 = vmatmul.mubr.bf16.gmra.mrb[0].mxu0 %v3263
  %v3366 = vpop.f32.mrb[0].mxu0
  %v3367 = vadd.f32 0.0, %v3366
  %v3368 = vpop.f32.mrb[0].mxu0
  %v3369 = vpop.f32.mrb[0].mxu0
  %v3370 = vadd.f32 0.0, %v3369
  %v3371 = vpop.f32.mrb[0].mxu0
  %3372 = vmatprep.mubr.bf16.mxu0 0
  %3373 = vmatmul.mubr.bf16.gmra.mrb[0].mxu0 %v3266
  %v3374 = vpop.f32.mrb[0].mxu0
  %v3375 = vadd.f32 0.0, %v3374
  %v3376 = vpop.f32.mrb[0].mxu0
  %v3377 = vpop.f32.mrb[0].mxu0
  %v3378 = vadd.f32 0.0, %v3377
  %v3379 = vpop.f32.mrb[0].mxu0
  %3380 = vdwg.mxu0
  %v3383 = vunpack.c.l.b16 %v3227
  %v3384 = vunpack.c.l.b16 %v3228
  %v3385 = vpack.c.b16 %v3384, %v3383
  %v3388 = vsel %vm1205, %v3215, 0
  %3390 = vmatprep.subr.bf16.mxu0 0
  %3391 = vmatpush1.bf16.msra.mxu0 %v3385
  %3392 = vmatprep.subr.bf16.mxu0 0
  %3393 = vmatpush1.bf16.msra.mxu0 0
  %3394 = vmatprep.subr.bf16.mxu0 0
  %3395 = vmatpush1.bf16.msra.mxu0 0
  %3396 = vmatprep.subr.bf16.mxu0 0
  %3397 = vmatpush1.bf16.msra.mxu0 0
  %3398 = vmatprep.subr.bf16.mxu0 0
  %3399 = vmatpush1.bf16.msra.mxu0 0
  %3400 = vmatprep.subr.bf16.mxu0 0
  %3401 = vmatpush1.bf16.msra.mxu0 0
  %3402 = vmatprep.subr.bf16.mxu0 0
  %3403 = vmatpush1.bf16.msra.mxu0 0
  %3404 = vmatprep.subr.bf16.mxu0 0
  %3405 = vmatpush1.bf16.msra.mxu0 0
  %3406 = vmatprep.subr.bf16.mxu0 0
  %3407 = vmatpush1.bf16.msra.mxu0 0
  %3408 = vmatprep.subr.bf16.mxu0 0
  %3409 = vmatpush1.bf16.msra.mxu0 0
  %3410 = vmatprep.subr.bf16.mxu0 0
  %3411 = vmatpush1.bf16.msra.mxu0 0
  %3412 = vmatprep.subr.bf16.mxu0 0
  %3413 = vmatpush1.bf16.msra.mxu0 0
  %3414 = vmatprep.subr.bf16.mxu0 0
  %3415 = vmatpush1.bf16.msra.mxu0 0
  %3416 = vmatprep.subr.bf16.mxu0 0
  %3417 = vmatpush1.bf16.msra.mxu0 0
  %3418 = vmatprep.subr.bf16.mxu0 0
  %3419 = vmatpush1.bf16.msra.mxu0 0
  %3420 = vmatprep.subr.bf16.mxu0 0
  %3421 = vmatpush1.bf16.msra.mxu0 0
  %3422 = vmatprep.mubr.bf16.mxu0 0
  %3423 = vmatmul.mubr.bf16.gmra.mrb[0].mxu0 %v3388
  %v3424 = vpop.f32.mrb[0].mxu0
  %v3425 = vadd.f32 %v3303, %v3424
  %v3426 = vpop.f32.mrb[0].mxu0
  %v3427 = vpop.f32.mrb[0].mxu0
  %v3428 = vadd.f32 %v3306, %v3427
  %v3429 = vpop.f32.mrb[0].mxu0
  %3430 = vmatprep.mubr.bf16.mxu0 0
  %3431 = vmatmul.mubr.bf16.gmra.mrb[0].mxu0 %v3239
  %v3432 = vpop.f32.mrb[0].mxu0
  %v3433 = vadd.f32 %v3311, %v3432
  %v3434 = vpop.f32.mrb[0].mxu0
  %v3435 = vpop.f32.mrb[0].mxu0
  %v3436 = vadd.f32 %v3314, %v3435
  %v3437 = vpop.f32.mrb[0].mxu0
  %3438 = vmatprep.mubr.bf16.mxu0 0
  %3439 = vmatmul.mubr.bf16.gmra.mrb[0].mxu0 %v3242
  %v3440 = vpop.f32.mrb[0].mxu0
  %v3441 = vadd.f32 %v3319, %v3440
  %v3442 = vpop.f32.mrb[0].mxu0
  %v3443 = vpop.f32.mrb[0].mxu0
  %v3444 = vadd.f32 %v3322, %v3443
  %v3445 = vpop.f32.mrb[0].mxu0
  %3446 = vmatprep.mubr.bf16.mxu0 0
  %3447 = vmatmul.mubr.bf16.gmra.mrb[0].mxu0 %v3245
  %v3448 = vpop.f32.mrb[0].mxu0
  %v3449 = vadd.f32 %v3327, %v3448
  %v3450 = vpop.f32.mrb[0].mxu0
  %v3451 = vpop.f32.mrb[0].mxu0
  %v3452 = vadd.f32 %v3330, %v3451
  %v3453 = vpop.f32.mrb[0].mxu0
  %3454 = vmatprep.mubr.bf16.mxu0 0
  %3455 = vmatmul.mubr.bf16.gmra.mrb[0].mxu0 %v3248
  %v3456 = vpop.f32.mrb[0].mxu0
  %v3457 = vadd.f32 %v3335, %v3456
  %v3458 = vpop.f32.mrb[0].mxu0
  %v3459 = vpop.f32.mrb[0].mxu0
  %v3460 = vadd.f32 %v3338, %v3459
  %v3461 = vpop.f32.mrb[0].mxu0
  %3462 = vmatprep.mubr.bf16.mxu0 0
  %3463 = vmatmul.mubr.bf16.gmra.mrb[0].mxu0 %v3251
  %v3464 = vpop.f32.mrb[0].mxu0
  %v3465 = vadd.f32 %v3343, %v3464
  %v3466 = vpop.f32.mrb[0].mxu0
  %v3467 = vpop.f32.mrb[0].mxu0
  %v3468 = vadd.f32 %v3346, %v3467
  %v3469 = vpop.f32.mrb[0].mxu0
  %3470 = vmatprep.mubr.bf16.mxu0 0
  %3471 = vmatmul.mubr.bf16.gmra.mrb[0].mxu0 %v3254
  %v3472 = vpop.f32.mrb[0].mxu0
  %v3473 = vadd.f32 %v3351, %v3472
  %v3474 = vpop.f32.mrb[0].mxu0
  %v3475 = vpop.f32.mrb[0].mxu0
  %v3476 = vadd.f32 %v3354, %v3475
  %v3477 = vpop.f32.mrb[0].mxu0
  %3478 = vmatprep.mubr.bf16.mxu0 0
  %3479 = vmatmul.mubr.bf16.gmra.mrb[0].mxu0 %v3257
  %v3480 = vpop.f32.mrb[0].mxu0
  %v3481 = vadd.f32 %v3359, %v3480
  %v3482 = vpop.f32.mrb[0].mxu0
  %v3483 = vpop.f32.mrb[0].mxu0
  %v3484 = vadd.f32 %v3362, %v3483
  %v3485 = vpop.f32.mrb[0].mxu0
  %3486 = vmatprep.mubr.bf16.mxu0 0
  %3487 = vmatmul.mubr.bf16.gmra.mrb[0].mxu0 %v3260
  %v3488 = vpop.f32.mrb[0].mxu0
  %v3489 = vadd.f32 %v3367, %v3488
  %v3490 = vpop.f32.mrb[0].mxu0
  %v3491 = vpop.f32.mrb[0].mxu0
  %v3492 = vadd.f32 %v3370, %v3491
  %v3493 = vpop.f32.mrb[0].mxu0
  %3494 = vmatprep.mubr.bf16.mxu0 0
  %3495 = vmatmul.mubr.bf16.gmra.mrb[0].mxu0 %v3263
  %v3496 = vpop.f32.mrb[0].mxu0
  %v3497 = vadd.f32 %v3375, %v3496
  %v3498 = vpop.f32.mrb[0].mxu0
  %v3499 = vpop.f32.mrb[0].mxu0
  %v3500 = vadd.f32 %v3378, %v3499
  %v3501 = vpop.f32.mrb[0].mxu0
  %3502 = vdwg.mxu0
  %s3503 = scalar_lea.vmem %s7, 16
  %v3504 = vld [vmem:[%s3503] sm:$0xf]
  %v3505 = vld [vmem:[%s3503 + $0x4] sm:$0xf]
  %v3508 = vunpack.c.l.b16 %v3504
  %v3509 = vunpack.c.l.b16 %v3505
  %v3510 = vpack.c.b16 %v3509, %v3508
  %v3513 = vsel %vm1205, %v3226, 0
  %3515 = vmatprep.subr.bf16.mxu0 0
  %3516 = vmatpush1.bf16.msra.mxu0 %v3510
  %3517 = vmatprep.subr.bf16.mxu0 0
  %3518 = vmatpush1.bf16.msra.mxu0 0
  %3519 = vmatprep.subr.bf16.mxu0 0
  %3520 = vmatpush1.bf16.msra.mxu0 0
  %3521 = vmatprep.subr.bf16.mxu0 0
  %3522 = vmatpush1.bf16.msra.mxu0 0
  %3523 = vmatprep.subr.bf16.mxu0 0
  %3524 = vmatpush1.bf16.msra.mxu0 0
  %3525 = vmatprep.subr.bf16.mxu0 0
  %3526 = vmatpush1.bf16.msra.mxu0 0
  %3527 = vmatprep.subr.bf16.mxu0 0
  %3528 = vmatpush1.bf16.msra.mxu0 0
  %3529 = vmatprep.subr.bf16.mxu0 0
  %3530 = vmatpush1.bf16.msra.mxu0 0
  %3531 = vmatprep.subr.bf16.mxu0 0
  %3532 = vmatpush1.bf16.msra.mxu0 0
  %3533 = vmatprep.subr.bf16.mxu0 0
  %3534 = vmatpush1.bf16.msra.mxu0 0
  %3535 = vmatprep.subr.bf16.mxu0 0
  %3536 = vmatpush1.bf16.msra.mxu0 0
  %3537 = vmatprep.subr.bf16.mxu0 0
  %3538 = vmatpush1.bf16.msra.mxu0 0
  %3539 = vmatprep.subr.bf16.mxu0 0
  %3540 = vmatpush1.bf16.msra.mxu0 0
  %3541 = vmatprep.subr.bf16.mxu0 0
  %3542 = vmatpush1.bf16.msra.mxu0 0
  %3543 = vmatprep.subr.bf16.mxu0 0
  %3544 = vmatpush1.bf16.msra.mxu0 0
  %3545 = vmatprep.subr.bf16.mxu0 0
  %3546 = vmatpush1.bf16.msra.mxu0 0
  %3547 = vmatprep.mubr.bf16.mxu0 0
  %3548 = vmatmul.mubr.bf16.gmra.mrb[0].mxu0 %v3242
  %v3549 = vpop.f32.mrb[0].mxu0
  %v3550 = vadd.f32 0.0, %v3549
  %v3551 = vpop.f32.mrb[0].mxu0
  %v3552 = vpop.f32.mrb[0].mxu0
  %v3553 = vadd.f32 0.0, %v3552
  %v3554 = vpop.f32.mrb[0].mxu0
  %3555 = vmatprep.mubr.bf16.mxu0 0
  %3556 = vmatmul.mubr.bf16.gmra.mrb[0].mxu0 %v3245
  %v3557 = vpop.f32.mrb[0].mxu0
  %v3558 = vadd.f32 0.0, %v3557
  %v3559 = vpop.f32.mrb[0].mxu0
  %v3560 = vpop.f32.mrb[0].mxu0
  %v3561 = vadd.f32 0.0, %v3560
  %v3562 = vpop.f32.mrb[0].mxu0
  %3563 = vmatprep.mubr.bf16.mxu0 0
  %3564 = vmatmul.mubr.bf16.gmra.mrb[0].mxu0 %v3248
  %v3565 = vpop.f32.mrb[0].mxu0
  %v3566 = vadd.f32 0.0, %v3565
  %v3567 = vpop.f32.mrb[0].mxu0
  %v3568 = vpop.f32.mrb[0].mxu0
  %v3569 = vadd.f32 0.0, %v3568
  %v3570 = vpop.f32.mrb[0].mxu0
  %3571 = vmatprep.mubr.bf16.mxu0 0
  %3572 = vmatmul.mubr.bf16.gmra.mrb[0].mxu0 %v3251
  %v3573 = vpop.f32.mrb[0].mxu0
  %v3574 = vadd.f32 0.0, %v3573
  %v3575 = vpop.f32.mrb[0].mxu0
  %v3576 = vpop.f32.mrb[0].mxu0
  %v3577 = vadd.f32 0.0, %v3576
  %v3578 = vpop.f32.mrb[0].mxu0
  %3579 = vmatprep.mubr.bf16.mxu0 0
  %3580 = vmatmul.mubr.bf16.gmra.mrb[0].mxu0 %v3254
  %v3581 = vpop.f32.mrb[0].mxu0
  %v3582 = vadd.f32 0.0, %v3581
  %v3583 = vpop.f32.mrb[0].mxu0
  %v3584 = vpop.f32.mrb[0].mxu0
  %v3585 = vadd.f32 0.0, %v3584
  %v3586 = vpop.f32.mrb[0].mxu0
  %3587 = vmatprep.mubr.bf16.mxu0 0
  %3588 = vmatmul.mubr.bf16.gmra.mrb[0].mxu0 %v3257
  %v3589 = vpop.f32.mrb[0].mxu0
  %v3590 = vadd.f32 0.0, %v3589
  %v3591 = vpop.f32.mrb[0].mxu0
  %v3592 = vpop.f32.mrb[0].mxu0
  %v3593 = vadd.f32 0.0, %v3592
  %v3594 = vpop.f32.mrb[0].mxu0
  %3595 = vmatprep.mubr.bf16.mxu0 0
  %3596 = vmatmul.mubr.bf16.gmra.mrb[0].mxu0 %v3260
  %v3597 = vpop.f32.mrb[0].mxu0
  %v3598 = vadd.f32 0.0, %v3597
  %v3599 = vpop.f32.mrb[0].mxu0
  %v3600 = vpop.f32.mrb[0].mxu0
  %v3601 = vadd.f32 0.0, %v3600
  %v3602 = vpop.f32.mrb[0].mxu0
  %3603 = vmatprep.mubr.bf16.mxu0 0
  %3604 = vmatmul.mubr.bf16.gmra.mrb[0].mxu0 %v3263
  %v3605 = vpop.f32.mrb[0].mxu0
  %v3606 = vadd.f32 0.0, %v3605
  %v3607 = vpop.f32.mrb[0].mxu0
  %v3608 = vpop.f32.mrb[0].mxu0
  %v3609 = vadd.f32 0.0, %v3608
  %v3610 = vpop.f32.mrb[0].mxu0
  %3611 = vmatprep.mubr.bf16.mxu0 0
  %3612 = vmatmul.mubr.bf16.gmra.mrb[0].mxu0 %v3266
  %v3613 = vpop.f32.mrb[0].mxu0
  %v3614 = vadd.f32 0.0, %v3613
  %v3615 = vpop.f32.mrb[0].mxu0
  %v3616 = vpop.f32.mrb[0].mxu0
  %v3617 = vadd.f32 0.0, %v3616
  %v3618 = vpop.f32.mrb[0].mxu0
  %3619 = vmatprep.mubr.bf16.mxu0 0
  %3620 = vmatmul.mubr.bf16.gmra.mrb[0].mxu0 %v3513
  %v3621 = vpop.f32.mrb[0].mxu0
  %v3622 = vadd.f32 0.0, %v3621
  %v3623 = vpop.f32.mrb[0].mxu0
  %v3624 = vpop.f32.mrb[0].mxu0
  %v3625 = vadd.f32 0.0, %v3624
  %v3626 = vpop.f32.mrb[0].mxu0
  %3627 = vdwg.mxu0
  %v3628 = vadd.f32 %v3425, %v3550
  %v3629 = vadd.f32 %v3428, %v3553
  %v3630 = vadd.f32 %v3433, %v3558
  %v3631 = vadd.f32 %v3436, %v3561
  %v3632 = vadd.f32 %v3441, %v3566
  %v3633 = vadd.f32 %v3444, %v3569
  %v3634 = vadd.f32 %v3449, %v3574
  %v3635 = vadd.f32 %v3452, %v3577
  %v3636 = vadd.f32 %v3457, %v3582
  %v3637 = vadd.f32 %v3460, %v3585
  %v3638 = vadd.f32 %v3465, %v3590
  %v3639 = vadd.f32 %v3468, %v3593
  %v3640 = vadd.f32 %v3473, %v3598
  %v3641 = vadd.f32 %v3476, %v3601
  %v3642 = vadd.f32 %v3481, %v3606
  %v3643 = vadd.f32 %v3484, %v3609
  %v3644 = vadd.f32 %v3489, %v3614
  %v3645 = vadd.f32 %v3492, %v3617
  %v3646 = vadd.f32 %v3497, %v3622
  %v3647 = vadd.f32 %v3500, %v3625
  %v3648 = vld [vmem:[%s8] sm:$0x1]
  %v3650 = vlaneseq
  %v3651 = vshrl.u32 %v3650, 7
  %v3652 = vsub.s32 0, %v3651
  %v3653 = vrot.slane %v3648, %v3652
  %v3655 = vadd.f32 %v3628, %v3653
  %v3656 = vadd.f32 %v3629, %v3653
  %v3657 = vadd.f32 %v3630, %v3653
  %v3658 = vadd.f32 %v3631, %v3653
  %v3659 = vadd.f32 %v3632, %v3653
  %v3660 = vadd.f32 %v3633, %v3653
  %v3661 = vadd.f32 %v3634, %v3653
  %v3662 = vadd.f32 %v3635, %v3653
  %v3663 = vadd.f32 %v3636, %v3653
  %v3664 = vadd.f32 %v3637, %v3653
  %v3665 = vadd.f32 %v3638, %v3653
  %v3666 = vadd.f32 %v3639, %v3653
  %v3667 = vadd.f32 %v3640, %v3653
  %v3668 = vadd.f32 %v3641, %v3653
  %v3669 = vadd.f32 %v3642, %v3653
  %v3670 = vadd.f32 %v3643, %v3653
  %v3671 = vadd.f32 %v3644, %v3653
  %v3672 = vadd.f32 %v3645, %v3653
  %v3673 = vadd.f32 %v3646, %v3653
  %v3674 = vadd.f32 %v3647, %v3653
  %v3675 = vxor.u32 %v3655, 2147483648
  %v3676 = vxor.u32 %v3656, 2147483648
  %v3677 = vxor.u32 %v3657, 2147483648
  %v3678 = vxor.u32 %v3658, 2147483648
  %v3679 = vxor.u32 %v3659, 2147483648
  %v3680 = vxor.u32 %v3660, 2147483648
  %v3681 = vxor.u32 %v3661, 2147483648
  %v3682 = vxor.u32 %v3662, 2147483648
  %v3683 = vxor.u32 %v3663, 2147483648
  %v3684 = vxor.u32 %v3664, 2147483648
  %v3685 = vxor.u32 %v3665, 2147483648
  %v3686 = vxor.u32 %v3666, 2147483648
  %v3687 = vxor.u32 %v3667, 2147483648
  %v3688 = vxor.u32 %v3668, 2147483648
  %v3689 = vxor.u32 %v3669, 2147483648
  %v3690 = vxor.u32 %v3670, 2147483648
  %v3691 = vxor.u32 %v3671, 2147483648
  %v3692 = vxor.u32 %v3672, 2147483648
  %v3693 = vxor.u32 %v3673, 2147483648
  %v3694 = vxor.u32 %v3674, 2147483648
  %v3695 = vmul.f32 %v3675, 1.442695
  %v3696 = vpow.pop %v3695
  %v3697 = vmul.f32 %v3676, 1.442695
  %v3698 = vpow.pop %v3697
  %v3699 = vmul.f32 %v3677, 1.442695
  %v3700 = vpow.pop %v3699
  %v3701 = vmul.f32 %v3678, 1.442695
  %v3702 = vpow.pop %v3701
  %v3703 = vmul.f32 %v3679, 1.442695
  %v3704 = vpow.pop %v3703
  %v3705 = vmul.f32 %v3680, 1.442695
  %v3706 = vpow.pop %v3705
  %v3707 = vmul.f32 %v3681, 1.442695
  %v3708 = vpow.pop %v3707
  %v3709 = vmul.f32 %v3682, 1.442695
  %v3710 = vpow.pop %v3709
  %v3711 = vmul.f32 %v3683, 1.442695
  %v3712 = vpow.pop %v3711
  %v3713 = vmul.f32 %v3684, 1.442695
  %v3714 = vpow.pop %v3713
  %v3715 = vmul.f32 %v3685, 1.442695
  %v3716 = vpow.pop %v3715
  %v3717 = vmul.f32 %v3686, 1.442695
  %v3718 = vpow.pop %v3717
  %v3719 = vmul.f32 %v3687, 1.442695
  %v3720 = vpow.pop %v3719
  %v3721 = vmul.f32 %v3688, 1.442695
  %v3722 = vpow.pop %v3721
  %v3723 = vmul.f32 %v3689, 1.442695
  %v3724 = vpow.pop %v3723
  %v3725 = vmul.f32 %v3690, 1.442695
  %v3726 = vpow.pop %v3725
  %v3727 = vmul.f32 %v3691, 1.442695
  %v3728 = vpow.pop %v3727
  %v3729 = vmul.f32 %v3692, 1.442695
  %v3730 = vpow.pop %v3729
  %v3731 = vmul.f32 %v3693, 1.442695
  %v3732 = vpow.pop %v3731
  %v3733 = vmul.f32 %v3694, 1.442695
  %v3734 = vpow.pop %v3733
  %v3735 = vadd.f32 %v3696, 1.0
  %v3736 = vadd.f32 %v3698, 1.0
  %v3737 = vadd.f32 %v3700, 1.0
  %v3738 = vadd.f32 %v3702, 1.0
  %v3739 = vadd.f32 %v3704, 1.0
  %v3740 = vadd.f32 %v3706, 1.0
  %v3741 = vadd.f32 %v3708, 1.0
  %v3742 = vadd.f32 %v3710, 1.0
  %v3743 = vadd.f32 %v3712, 1.0
  %v3744 = vadd.f32 %v3714, 1.0
  %v3745 = vadd.f32 %v3716, 1.0
  %v3746 = vadd.f32 %v3718, 1.0
  %v3747 = vadd.f32 %v3720, 1.0
  %v3748 = vadd.f32 %v3722, 1.0
  %v3749 = vadd.f32 %v3724, 1.0
  %v3750 = vadd.f32 %v3726, 1.0
  %v3751 = vadd.f32 %v3728, 1.0
  %v3752 = vadd.f32 %v3730, 1.0
  %v3753 = vadd.f32 %v3732, 1.0
  %v3754 = vadd.f32 %v3734, 1.0
  %v3755 = vrcp.pop %v3735
  %v3756 = vmul.f32 1.0, %v3755
  %v3757 = vrcp.pop %v3736
  %v3758 = vmul.f32 1.0, %v3757
  %v3759 = vrcp.pop %v3737
  %v3760 = vmul.f32 1.0, %v3759
  %v3761 = vrcp.pop %v3738
  %v3762 = vmul.f32 1.0, %v3761
  %v3763 = vrcp.pop %v3739
  %v3764 = vmul.f32 1.0, %v3763
  %v3765 = vrcp.pop %v3740
  %v3766 = vmul.f32 1.0, %v3765
  %v3767 = vrcp.pop %v3741
  %v3768 = vmul.f32 1.0, %v3767
  %v3769 = vrcp.pop %v3742
  %v3770 = vmul.f32 1.0, %v3769
  %v3771 = vrcp.pop %v3743
  %v3772 = vmul.f32 1.0, %v3771
  %v3773 = vrcp.pop %v3744
  %v3774 = vmul.f32 1.0, %v3773
  %v3775 = vrcp.pop %v3745
  %v3776 = vmul.f32 1.0, %v3775
  %v3777 = vrcp.pop %v3746
  %v3778 = vmul.f32 1.0, %v3777
  %v3779 = vrcp.pop %v3747
  %v3780 = vmul.f32 1.0, %v3779
  %v3781 = vrcp.pop %v3748
  %v3782 = vmul.f32 1.0, %v3781
  %v3783 = vrcp.pop %v3749
  %v3784 = vmul.f32 1.0, %v3783
  %v3785 = vrcp.pop %v3750
  %v3786 = vmul.f32 1.0, %v3785
  %v3787 = vrcp.pop %v3751
  %v3788 = vmul.f32 1.0, %v3787
  %v3789 = vrcp.pop %v3752
  %v3790 = vmul.f32 1.0, %v3789
  %v3791 = vrcp.pop %v3753
  %v3792 = vmul.f32 1.0, %v3791
  %v3793 = vrcp.pop %v3754
  %v3794 = vmul.f32 1.0, %v3793
  %3815 = vrot.lane.b32.xlu0 %v3756, 112
  %v3816 = vpop.permute.xlu0 %3815
  %3817 = vrot.lane.b32.xlu0 %v3758, 112
  %v3818 = vpop.permute.xlu0 %3817
  %3819 = vrot.lane.b32.xlu0 %v3760, 112
  %v3820 = vpop.permute.xlu0 %3819
  %3821 = vrot.lane.b32.xlu0 %v3762, 112
  %v3822 = vpop.permute.xlu0 %3821
  %3823 = vrot.lane.b32.xlu0 %v3764, 112
  %v3824 = vpop.permute.xlu0 %3823
  %3825 = vrot.lane.b32.xlu0 %v3766, 112
  %v3826 = vpop.permute.xlu0 %3825
  %3827 = vrot.lane.b32.xlu0 %v3768, 112
  %v3828 = vpop.permute.xlu0 %3827
  %3829 = vrot.lane.b32.xlu0 %v3770, 112
  %v3830 = vpop.permute.xlu0 %3829
  %3831 = vrot.lane.b32.xlu0 %v3772, 112
  %v3832 = vpop.permute.xlu0 %3831
  %3833 = vrot.lane.b32.xlu0 %v3774, 112
  %v3834 = vpop.permute.xlu0 %3833
  %3835 = vrot.lane.b32.xlu0 %v3776, 112
  %v3836 = vpop.permute.xlu0 %3835
  %3837 = vrot.lane.b32.xlu0 %v3778, 112
  %v3838 = vpop.permute.xlu0 %3837
  %3839 = vrot.lane.b32.xlu0 %v3780, 112
  %v3840 = vpop.permute.xlu0 %3839
  %3841 = vrot.lane.b32.xlu0 %v3782, 112
  %v3842 = vpop.permute.xlu0 %3841
  %3843 = vrot.lane.b32.xlu0 %v3784, 112
  %v3844 = vpop.permute.xlu0 %3843
  %3845 = vrot.lane.b32.xlu0 %v3786, 112
  %v3846 = vpop.permute.xlu0 %3845
  %3847 = vrot.lane.b32.xlu0 %v3788, 112
  %v3848 = vpop.permute.xlu0 %3847
  %3849 = vrot.lane.b32.xlu0 %v3790, 112
  %v3850 = vpop.permute.xlu0 %3849
  %3851 = vrot.lane.b32.xlu0 %v3792, 112
  %v3852 = vpop.permute.xlu0 %3851
  %3853 = vrot.lane.b32.xlu0 %v3794, 112
  %v3854 = vpop.permute.xlu0 %3853
  %v3875 = vadd.f32 %v3655, %v3816
  %v3876 = vadd.f32 %v3656, %v3818
  %v3877 = vadd.f32 %v3657, %v3820
  %v3878 = vadd.f32 %v3658, %v3822
  %v3879 = vadd.f32 %v3659, %v3824
  %v3880 = vadd.f32 %v3660, %v3826
  %v3881 = vadd.f32 %v3661, %v3828
  %v3882 = vadd.f32 %v3662, %v3830
  %v3883 = vadd.f32 %v3663, %v3832
  %v3884 = vadd.f32 %v3664, %v3834
  %v3885 = vadd.f32 %v3665, %v3836
  %v3886 = vadd.f32 %v3666, %v3838
  %v3887 = vadd.f32 %v3667, %v3840
  %v3888 = vadd.f32 %v3668, %v3842
  %v3889 = vadd.f32 %v3669, %v3844
  %v3890 = vadd.f32 %v3670, %v3846
  %v3891 = vadd.f32 %v3671, %v3848
  %v3892 = vadd.f32 %v3672, %v3850
  %v3893 = vadd.f32 %v3673, %v3852
  %v3894 = vadd.f32 %v3674, %v3854
  %3915 = vrot.lane.b32.xlu0 %v3655, 96
  %v3916 = vpop.permute.xlu0 %3915
  %3917 = vrot.lane.b32.xlu0 %v3656, 96
  %v3918 = vpop.permute.xlu0 %3917
  %3919 = vrot.lane.b32.xlu0 %v3657, 96
  %v3920 = vpop.permute.xlu0 %3919
  %3921 = vrot.lane.b32.xlu0 %v3658, 96
  %v3922 = vpop.permute.xlu0 %3921
  %3923 = vrot.lane.b32.xlu0 %v3659, 96
  %v3924 = vpop.permute.xlu0 %3923
  %3925 = vrot.lane.b32.xlu0 %v3660, 96
  %v3926 = vpop.permute.xlu0 %3925
  %3927 = vrot.lane.b32.xlu0 %v3661, 96
  %v3928 = vpop.permute.xlu0 %3927
  %3929 = vrot.lane.b32.xlu0 %v3662, 96
  %v3930 = vpop.permute.xlu0 %3929
  %3931 = vrot.lane.b32.xlu0 %v3663, 96
  %v3932 = vpop.permute.xlu0 %3931
  %3933 = vrot.lane.b32.xlu0 %v3664, 96
  %v3934 = vpop.permute.xlu0 %3933
  %3935 = vrot.lane.b32.xlu0 %v3665, 96
  %v3936 = vpop.permute.xlu0 %3935
  %3937 = vrot.lane.b32.xlu0 %v3666, 96
  %v3938 = vpop.permute.xlu0 %3937
  %3939 = vrot.lane.b32.xlu0 %v3667, 96
  %v3940 = vpop.permute.xlu0 %3939
  %3941 = vrot.lane.b32.xlu0 %v3668, 96
  %v3942 = vpop.permute.xlu0 %3941
  %3943 = vrot.lane.b32.xlu0 %v3669, 96
  %v3944 = vpop.permute.xlu0 %3943
  %3945 = vrot.lane.b32.xlu0 %v3670, 96
  %v3946 = vpop.permute.xlu0 %3945
  %3947 = vrot.lane.b32.xlu0 %v3671, 96
  %v3948 = vpop.permute.xlu0 %3947
  %3949 = vrot.lane.b32.xlu0 %v3672, 96
  %v3950 = vpop.permute.xlu0 %3949
  %3951 = vrot.lane.b32.xlu0 %v3673, 96
  %v3952 = vpop.permute.xlu0 %3951
  %3953 = vrot.lane.b32.xlu0 %v3674, 96
  %v3954 = vpop.permute.xlu0 %3953
  %v3975 = vadd.f32 %v3875, %v3916
  %v3976 = vadd.f32 %v3876, %v3918
  %v3977 = vadd.f32 %v3877, %v3920
  %v3978 = vadd.f32 %v3878, %v3922
  %v3979 = vadd.f32 %v3879, %v3924
  %v3980 = vadd.f32 %v3880, %v3926
  %v3981 = vadd.f32 %v3881, %v3928
  %v3982 = vadd.f32 %v3882, %v3930
  %v3983 = vadd.f32 %v3883, %v3932
  %v3984 = vadd.f32 %v3884, %v3934
  %v3985 = vadd.f32 %v3885, %v3936
  %v3986 = vadd.f32 %v3886, %v3938
  %v3987 = vadd.f32 %v3887, %v3940
  %v3988 = vadd.f32 %v3888, %v3942
  %v3989 = vadd.f32 %v3889, %v3944
  %v3990 = vadd.f32 %v3890, %v3946
  %v3991 = vadd.f32 %v3891, %v3948
  %v3992 = vadd.f32 %v3892, %v3950
  %v3993 = vadd.f32 %v3893, %v3952
  %v3994 = vadd.f32 %v3894, %v3954
  %v3995 = vmax.f32 %v3975, 0.0
  %v3996 = vmax.f32 %v3976, 0.0
  %v3997 = vmax.f32 %v3977, 0.0
  %v3998 = vmax.f32 %v3978, 0.0
  %v3999 = vmax.f32 %v3979, 0.0
  %v4000 = vmax.f32 %v3980, 0.0
  %v4001 = vmax.f32 %v3981, 0.0
  %v4002 = vmax.f32 %v3982, 0.0
  %v4003 = vmax.f32 %v3983, 0.0
  %v4004 = vmax.f32 %v3984, 0.0
  %v4005 = vmax.f32 %v3985, 0.0
  %v4006 = vmax.f32 %v3986, 0.0
  %v4007 = vmax.f32 %v3987, 0.0
  %v4008 = vmax.f32 %v3988, 0.0
  %v4009 = vmax.f32 %v3989, 0.0
  %v4010 = vmax.f32 %v3990, 0.0
  %v4011 = vmax.f32 %v3991, 0.0
  %v4012 = vmax.f32 %v3992, 0.0
  %v4013 = vmax.f32 %v3993, 0.0
  %v4014 = vmax.f32 %v3994, 0.0
  %v4015 = vpack.c.bf16 %v3996, %v3995
  %v4016 = vpack.c.bf16 %v3998, %v3997
  %v4017 = vpack.c.bf16 %v4000, %v3999
  %v4018 = vpack.c.bf16 %v4002, %v4001
  %v4019 = vpack.c.bf16 %v4004, %v4003
  %v4020 = vpack.c.bf16 %v4006, %v4005
  %v4021 = vpack.c.bf16 %v4008, %v4007
  %v4022 = vpack.c.bf16 %v4010, %v4009
  %v4023 = vpack.c.bf16 %v4012, %v4011
  %v4024 = vpack.c.bf16 %v4014, %v4013
  %v4025 = vld [vmem:[%s9] sm:$0xf]
  %v4026 = vld [vmem:[%s9 + $0x4] sm:$0xf]
  %v4029 = vunpack.c.l.b16 %v4025
  %v4030 = vunpack.c.l.b16 %v4026
  %v4031 = vpack.c.b16 %v4030, %v4029
  %v4034 = vsel %vm1205, %v4015, 0
  %v4037 = vsel %vm1205, %v4016, 0
  %v4040 = vsel %vm1205, %v4017, 0
  %v4043 = vsel %vm1205, %v4018, 0
  %v4046 = vsel %vm1205, %v4019, 0
  %v4049 = vsel %vm1205, %v4020, 0
  %v4052 = vsel %vm1205, %v4021, 0
  %v4055 = vsel %vm1205, %v4022, 0
  %v4058 = vsel %vm1205, %v4023, 0
  %v4061 = vsel %vm1205, %v4024, 0
  %4063 = vmatprep.subr.bf16.mxu0 0
  %4064 = vmatpush1.bf16.msra.mxu0 %v4031
  %4065 = vmatprep.subr.bf16.mxu0 0
  %4066 = vmatpush1.bf16.msra.mxu0 0
  %4067 = vmatprep.subr.bf16.mxu0 0
  %4068 = vmatpush1.bf16.msra.mxu0 0
  %4069 = vmatprep.subr.bf16.mxu0 0
  %4070 = vmatpush1.bf16.msra.mxu0 0
  %4071 = vmatprep.subr.bf16.mxu0 0
  %4072 = vmatpush1.bf16.msra.mxu0 0
  %4073 = vmatprep.subr.bf16.mxu0 0
  %4074 = vmatpush1.bf16.msra.mxu0 0
  %4075 = vmatprep.subr.bf16.mxu0 0
  %4076 = vmatpush1.bf16.msra.mxu0 0
  %4077 = vmatprep.subr.bf16.mxu0 0
  %4078 = vmatpush1.bf16.msra.mxu0 0
  %4079 = vmatprep.subr.bf16.mxu0 0
  %4080 = vmatpush1.bf16.msra.mxu0 0
  %4081 = vmatprep.subr.bf16.mxu0 0
  %4082 = vmatpush1.bf16.msra.mxu0 0
  %4083 = vmatprep.subr.bf16.mxu0 0
  %4084 = vmatpush1.bf16.msra.mxu0 0
  %4085 = vmatprep.subr.bf16.mxu0 0
  %4086 = vmatpush1.bf16.msra.mxu0 0
  %4087 = vmatprep.subr.bf16.mxu0 0
  %4088 = vmatpush1.bf16.msra.mxu0 0
  %4089 = vmatprep.subr.bf16.mxu0 0
  %4090 = vmatpush1.bf16.msra.mxu0 0
  %4091 = vmatprep.subr.bf16.mxu0 0
  %4092 = vmatpush1.bf16.msra.mxu0 0
  %4093 = vmatprep.subr.bf16.mxu0 0
  %4094 = vmatpush1.bf16.msra.mxu0 0
  %4095 = vmatprep.mubr.bf16.mxu0 0
  %4096 = vmatmul.mubr.bf16.gmra.mrb[0].mxu0 %v4034
  %v4097 = vpop.f32.mrb[0].mxu0
  %v4098 = vadd.f32 0.0, %v4097
  %v4099 = vpop.f32.mrb[0].mxu0
  %v4100 = vpop.f32.mrb[0].mxu0
  %v4101 = vadd.f32 0.0, %v4100
  %v4102 = vpop.f32.mrb[0].mxu0
  %4103 = vmatprep.mubr.bf16.mxu0 0
  %4104 = vmatmul.mubr.bf16.gmra.mrb[0].mxu0 %v4037
  %v4105 = vpop.f32.mrb[0].mxu0
  %v4106 = vadd.f32 0.0, %v4105
  %v4107 = vpop.f32.mrb[0].mxu0
  %v4108 = vpop.f32.mrb[0].mxu0
  %v4109 = vadd.f32 0.0, %v4108
  %v4110 = vpop.f32.mrb[0].mxu0
  %4111 = vmatprep.mubr.bf16.mxu0 0
  %4112 = vmatmul.mubr.bf16.gmra.mrb[0].mxu0 %v4040
  %v4113 = vpop.f32.mrb[0].mxu0
  %v4114 = vadd.f32 0.0, %v4113
  %v4115 = vpop.f32.mrb[0].mxu0
  %v4116 = vpop.f32.mrb[0].mxu0
  %v4117 = vadd.f32 0.0, %v4116
  %v4118 = vpop.f32.mrb[0].mxu0
  %4119 = vmatprep.mubr.bf16.mxu0 0
  %4120 = vmatmul.mubr.bf16.gmra.mrb[0].mxu0 %v4043
  %v4121 = vpop.f32.mrb[0].mxu0
  %v4122 = vadd.f32 0.0, %v4121
  %v4123 = vpop.f32.mrb[0].mxu0
  %v4124 = vpop.f32.mrb[0].mxu0
  %v4125 = vadd.f32 0.0, %v4124
  %v4126 = vpop.f32.mrb[0].mxu0
  %4127 = vmatprep.mubr.bf16.mxu0 0
  %4128 = vmatmul.mubr.bf16.gmra.mrb[0].mxu0 %v4046
  %v4129 = vpop.f32.mrb[0].mxu0
  %v4130 = vadd.f32 0.0, %v4129
  %v4131 = vpop.f32.mrb[0].mxu0
  %v4132 = vpop.f32.mrb[0].mxu0
  %v4133 = vadd.f32 0.0, %v4132
  %v4134 = vpop.f32.mrb[0].mxu0
  %4135 = vmatprep.mubr.bf16.mxu0 0
  %4136 = vmatmul.mubr.bf16.gmra.mrb[0].mxu0 %v4049
  %v4137 = vpop.f32.mrb[0].mxu0
  %v4138 = vadd.f32 0.0, %v4137
  %v4139 = vpop.f32.mrb[0].mxu0
  %v4140 = vpop.f32.mrb[0].mxu0
  %v4141 = vadd.f32 0.0, %v4140
  %v4142 = vpop.f32.mrb[0].mxu0
  %4143 = vmatprep.mubr.bf16.mxu0 0
  %4144 = vmatmul.mubr.bf16.gmra.mrb[0].mxu0 %v4052
  %v4145 = vpop.f32.mrb[0].mxu0
  %v4146 = vadd.f32 0.0, %v4145
  %v4147 = vpop.f32.mrb[0].mxu0
  %v4148 = vpop.f32.mrb[0].mxu0
  %v4149 = vadd.f32 0.0, %v4148
  %v4150 = vpop.f32.mrb[0].mxu0
  %4151 = vmatprep.mubr.bf16.mxu0 0
  %4152 = vmatmul.mubr.bf16.gmra.mrb[0].mxu0 %v4055
  %v4153 = vpop.f32.mrb[0].mxu0
  %v4154 = vadd.f32 0.0, %v4153
  %v4155 = vpop.f32.mrb[0].mxu0
  %v4156 = vpop.f32.mrb[0].mxu0
  %v4157 = vadd.f32 0.0, %v4156
  %v4158 = vpop.f32.mrb[0].mxu0
  %4159 = vmatprep.mubr.bf16.mxu0 0
  %4160 = vmatmul.mubr.bf16.gmra.mrb[0].mxu0 %v4058
  %v4161 = vpop.f32.mrb[0].mxu0
  %v4162 = vadd.f32 0.0, %v4161
  %v4163 = vpop.f32.mrb[0].mxu0
  %v4164 = vpop.f32.mrb[0].mxu0
  %v4165 = vadd.f32 0.0, %v4164
  %v4166 = vpop.f32.mrb[0].mxu0
  %4167 = vmatprep.mubr.bf16.mxu0 0
  %4168 = vmatmul.mubr.bf16.gmra.mrb[0].mxu0 %v4061
  %v4169 = vpop.f32.mrb[0].mxu0
  %v4170 = vadd.f32 0.0, %v4169
  %v4171 = vpop.f32.mrb[0].mxu0
  %v4172 = vpop.f32.mrb[0].mxu0
  %v4173 = vadd.f32 0.0, %v4172
  %v4174 = vpop.f32.mrb[0].mxu0
  %4175 = vdwg.mxu0
  %v4176 = vpack.c.bf16 %v4101, %v4098
  %v4177 = vpack.c.bf16 %v4109, %v4106
  %v4178 = vpack.c.bf16 %v4117, %v4114
  %v4179 = vpack.c.bf16 %v4125, %v4122
  %v4180 = vpack.c.bf16 %v4133, %v4130
  %v4181 = vpack.c.bf16 %v4141, %v4138
  %v4182 = vpack.c.bf16 %v4149, %v4146
  %v4183 = vpack.c.bf16 %v4157, %v4154
  %v4184 = vpack.c.bf16 %v4165, %v4162
  %v4185 = vpack.c.bf16 %v4173, %v4170
  %4186 = vmatprep.subr.bf16.mxu0 0
  %4187 = vmatpush1.bf16.msra.mxu0 %v4176
  %4188 = vmatprep.subr.bf16.mxu0 0
  %4189 = vmatpush1.bf16.msra.mxu0 0
  %4190 = vmatprep.subr.bf16.mxu0 0
  %4191 = vmatpush1.bf16.msra.mxu0 0
  %4192 = vmatprep.subr.bf16.mxu0 0
  %4193 = vmatpush1.bf16.msra.mxu0 0
  %4194 = vmatprep.subr.bf16.mxu0 0
  %4195 = vmatpush1.bf16.msra.mxu0 0
  %4196 = vmatprep.subr.bf16.mxu0 0
  %4197 = vmatpush1.bf16.msra.mxu0 0
  %4198 = vmatprep.subr.bf16.mxu0 0
  %4199 = vmatpush1.bf16.msra.mxu0 0
  %4200 = vmatprep.subr.bf16.mxu0 0
  %4201 = vmatpush1.bf16.msra.mxu0 0
  %4202 = vmatprep.subr.bf16.mxu0 0
  %4203 = vmatpush1.bf16.msra.mxu0 0
  %4204 = vmatprep.subr.bf16.mxu0 0
  %4205 = vmatpush1.bf16.msra.mxu0 0
  %4206 = vmatprep.subr.bf16.mxu0 0
  %4207 = vmatpush1.bf16.msra.mxu0 0
  %4208 = vmatprep.subr.bf16.mxu0 0
  %4209 = vmatpush1.bf16.msra.mxu0 0
  %4210 = vmatprep.subr.bf16.mxu0 0
  %4211 = vmatpush1.bf16.msra.mxu0 0
  %4212 = vmatprep.subr.bf16.mxu0 0
  %4213 = vmatpush1.bf16.msra.mxu0 0
  %4214 = vmatprep.subr.bf16.mxu0 0
  %4215 = vmatpush1.bf16.msra.mxu0 0
  %4216 = vmatprep.subr.bf16.mxu0 0
  %4217 = vmatpush1.bf16.msra.mxu0 0
  %4218 = vmatprep.mubr.bf16.mxu0 0
  %4219 = vmatmul.mubr.bf16.gmra.mrb[0].mxu0 %v1415
  %v4220 = vpop.f32.mrb[0].mxu0
  %v4221 = vadd.f32 0.0, %v4220
  %v4222 = vpop.f32.mrb[0].mxu0
  %v4223 = vpop.f32.mrb[0].mxu0
  %v4224 = vadd.f32 0.0, %v4223
  %v4225 = vpop.f32.mrb[0].mxu0
  %4226 = vdwg.mxu0
  %4227 = vmatprep.subr.bf16.mxu0 0
  %4228 = vmatpush1.bf16.msra.mxu0 %v4177
  %4229 = vmatprep.subr.bf16.mxu0 0
  %4230 = vmatpush1.bf16.msra.mxu0 0
  %4231 = vmatprep.subr.bf16.mxu0 0
  %4232 = vmatpush1.bf16.msra.mxu0 0
  %4233 = vmatprep.subr.bf16.mxu0 0
  %4234 = vmatpush1.bf16.msra.mxu0 0
  %4235 = vmatprep.subr.bf16.mxu0 0
  %4236 = vmatpush1.bf16.msra.mxu0 0
  %4237 = vmatprep.subr.bf16.mxu0 0
  %4238 = vmatpush1.bf16.msra.mxu0 0
  %4239 = vmatprep.subr.bf16.mxu0 0
  %4240 = vmatpush1.bf16.msra.mxu0 0
  %4241 = vmatprep.subr.bf16.mxu0 0
  %4242 = vmatpush1.bf16.msra.mxu0 0
  %4243 = vmatprep.subr.bf16.mxu0 0
  %4244 = vmatpush1.bf16.msra.mxu0 0
  %4245 = vmatprep.subr.bf16.mxu0 0
  %4246 = vmatpush1.bf16.msra.mxu0 0
  %4247 = vmatprep.subr.bf16.mxu0 0
  %4248 = vmatpush1.bf16.msra.mxu0 0
  %4249 = vmatprep.subr.bf16.mxu0 0
  %4250 = vmatpush1.bf16.msra.mxu0 0
  %4251 = vmatprep.subr.bf16.mxu0 0
  %4252 = vmatpush1.bf16.msra.mxu0 0
  %4253 = vmatprep.subr.bf16.mxu0 0
  %4254 = vmatpush1.bf16.msra.mxu0 0
  %4255 = vmatprep.subr.bf16.mxu0 0
  %4256 = vmatpush1.bf16.msra.mxu0 0
  %4257 = vmatprep.subr.bf16.mxu0 0
  %4258 = vmatpush1.bf16.msra.mxu0 0
  %4259 = vmatprep.mubr.bf16.mxu0 0
  %4260 = vmatmul.mubr.bf16.gmra.mrb[0].mxu0 %v1415
  %v4261 = vpop.f32.mrb[0].mxu0
  %v4262 = vadd.f32 0.0, %v4261
  %v4263 = vpop.f32.mrb[0].mxu0
  %v4264 = vpop.f32.mrb[0].mxu0
  %v4265 = vadd.f32 0.0, %v4264
  %v4266 = vpop.f32.mrb[0].mxu0
  %4267 = vdwg.mxu0
  %4268 = vmatprep.subr.bf16.mxu0 0
  %4269 = vmatpush1.bf16.msra.mxu0 %v4178
  %4270 = vmatprep.subr.bf16.mxu0 0
  %4271 = vmatpush1.bf16.msra.mxu0 0
  %4272 = vmatprep.subr.bf16.mxu0 0
  %4273 = vmatpush1.bf16.msra.mxu0 0
  %4274 = vmatprep.subr.bf16.mxu0 0
  %4275 = vmatpush1.bf16.msra.mxu0 0
  %4276 = vmatprep.subr.bf16.mxu0 0
  %4277 = vmatpush1.bf16.msra.mxu0 0
  %4278 = vmatprep.subr.bf16.mxu0 0
  %4279 = vmatpush1.bf16.msra.mxu0 0
  %4280 = vmatprep.subr.bf16.mxu0 0
  %4281 = vmatpush1.bf16.msra.mxu0 0
  %4282 = vmatprep.subr.bf16.mxu0 0
  %4283 = vmatpush1.bf16.msra.mxu0 0
  %4284 = vmatprep.subr.bf16.mxu0 0
  %4285 = vmatpush1.bf16.msra.mxu0 0
  %4286 = vmatprep.subr.bf16.mxu0 0
  %4287 = vmatpush1.bf16.msra.mxu0 0
  %4288 = vmatprep.subr.bf16.mxu0 0
  %4289 = vmatpush1.bf16.msra.mxu0 0
  %4290 = vmatprep.subr.bf16.mxu0 0
  %4291 = vmatpush1.bf16.msra.mxu0 0
  %4292 = vmatprep.subr.bf16.mxu0 0
  %4293 = vmatpush1.bf16.msra.mxu0 0
  %4294 = vmatprep.subr.bf16.mxu0 0
  %4295 = vmatpush1.bf16.msra.mxu0 0
  %4296 = vmatprep.subr.bf16.mxu0 0
  %4297 = vmatpush1.bf16.msra.mxu0 0
  %4298 = vmatprep.subr.bf16.mxu0 0
  %4299 = vmatpush1.bf16.msra.mxu0 0
  %4300 = vmatprep.mubr.bf16.mxu0 0
  %4301 = vmatmul.mubr.bf16.gmra.mrb[0].mxu0 %v1415
  %v4302 = vpop.f32.mrb[0].mxu0
  %v4303 = vadd.f32 0.0, %v4302
  %v4304 = vpop.f32.mrb[0].mxu0
  %v4305 = vpop.f32.mrb[0].mxu0
  %v4306 = vadd.f32 0.0, %v4305
  %v4307 = vpop.f32.mrb[0].mxu0
  %4308 = vdwg.mxu0
  %4309 = vmatprep.subr.bf16.mxu0 0
  %4310 = vmatpush1.bf16.msra.mxu0 %v4179
  %4311 = vmatprep.subr.bf16.mxu0 0
  %4312 = vmatpush1.bf16.msra.mxu0 0
  %4313 = vmatprep.subr.bf16.mxu0 0
  %4314 = vmatpush1.bf16.msra.mxu0 0
  %4315 = vmatprep.subr.bf16.mxu0 0
  %4316 = vmatpush1.bf16.msra.mxu0 0
  %4317 = vmatprep.subr.bf16.mxu0 0
  %4318 = vmatpush1.bf16.msra.mxu0 0
  %4319 = vmatprep.subr.bf16.mxu0 0
  %4320 = vmatpush1.bf16.msra.mxu0 0
  %4321 = vmatprep.subr.bf16.mxu0 0
  %4322 = vmatpush1.bf16.msra.mxu0 0
  %4323 = vmatprep.subr.bf16.mxu0 0
  %4324 = vmatpush1.bf16.msra.mxu0 0
  %4325 = vmatprep.subr.bf16.mxu0 0
  %4326 = vmatpush1.bf16.msra.mxu0 0
  %4327 = vmatprep.subr.bf16.mxu0 0
  %4328 = vmatpush1.bf16.msra.mxu0 0
  %4329 = vmatprep.subr.bf16.mxu0 0
  %4330 = vmatpush1.bf16.msra.mxu0 0
  %4331 = vmatprep.subr.bf16.mxu0 0
  %4332 = vmatpush1.bf16.msra.mxu0 0
  %4333 = vmatprep.subr.bf16.mxu0 0
  %4334 = vmatpush1.bf16.msra.mxu0 0
  %4335 = vmatprep.subr.bf16.mxu0 0
  %4336 = vmatpush1.bf16.msra.mxu0 0
  %4337 = vmatprep.subr.bf16.mxu0 0
  %4338 = vmatpush1.bf16.msra.mxu0 0
  %4339 = vmatprep.subr.bf16.mxu0 0
  %4340 = vmatpush1.bf16.msra.mxu0 0
  %4341 = vmatprep.mubr.bf16.mxu0 0
  %4342 = vmatmul.mubr.bf16.gmra.mrb[0].mxu0 %v1415
  %v4343 = vpop.f32.mrb[0].mxu0
  %v4344 = vadd.f32 0.0, %v4343
  %v4345 = vpop.f32.mrb[0].mxu0
  %v4346 = vpop.f32.mrb[0].mxu0
  %v4347 = vadd.f32 0.0, %v4346
  %v4348 = vpop.f32.mrb[0].mxu0
  %4349 = vdwg.mxu0
  %4350 = vmatprep.subr.bf16.mxu0 0
  %4351 = vmatpush1.bf16.msra.mxu0 %v4180
  %4352 = vmatprep.subr.bf16.mxu0 0
  %4353 = vmatpush1.bf16.msra.mxu0 0
  %4354 = vmatprep.subr.bf16.mxu0 0
  %4355 = vmatpush1.bf16.msra.mxu0 0
  %4356 = vmatprep.subr.bf16.mxu0 0
  %4357 = vmatpush1.bf16.msra.mxu0 0
  %4358 = vmatprep.subr.bf16.mxu0 0
  %4359 = vmatpush1.bf16.msra.mxu0 0
  %4360 = vmatprep.subr.bf16.mxu0 0
  %4361 = vmatpush1.bf16.msra.mxu0 0
  %4362 = vmatprep.subr.bf16.mxu0 0
  %4363 = vmatpush1.bf16.msra.mxu0 0
  %4364 = vmatprep.subr.bf16.mxu0 0
  %4365 = vmatpush1.bf16.msra.mxu0 0
  %4366 = vmatprep.subr.bf16.mxu0 0
  %4367 = vmatpush1.bf16.msra.mxu0 0
  %4368 = vmatprep.subr.bf16.mxu0 0
  %4369 = vmatpush1.bf16.msra.mxu0 0
  %4370 = vmatprep.subr.bf16.mxu0 0
  %4371 = vmatpush1.bf16.msra.mxu0 0
  %4372 = vmatprep.subr.bf16.mxu0 0
  %4373 = vmatpush1.bf16.msra.mxu0 0
  %4374 = vmatprep.subr.bf16.mxu0 0
  %4375 = vmatpush1.bf16.msra.mxu0 0
  %4376 = vmatprep.subr.bf16.mxu0 0
  %4377 = vmatpush1.bf16.msra.mxu0 0
  %4378 = vmatprep.subr.bf16.mxu0 0
  %4379 = vmatpush1.bf16.msra.mxu0 0
  %4380 = vmatprep.subr.bf16.mxu0 0
  %4381 = vmatpush1.bf16.msra.mxu0 0
  %4382 = vmatprep.mubr.bf16.mxu0 0
  %4383 = vmatmul.mubr.bf16.gmra.mrb[0].mxu0 %v1415
  %v4384 = vpop.f32.mrb[0].mxu0
  %v4385 = vadd.f32 0.0, %v4384
  %v4386 = vpop.f32.mrb[0].mxu0
  %v4387 = vpop.f32.mrb[0].mxu0
  %v4388 = vadd.f32 0.0, %v4387
  %v4389 = vpop.f32.mrb[0].mxu0
  %4390 = vdwg.mxu0
  %4391 = vmatprep.subr.bf16.mxu0 0
  %4392 = vmatpush1.bf16.msra.mxu0 %v4181
  %4393 = vmatprep.subr.bf16.mxu0 0
  %4394 = vmatpush1.bf16.msra.mxu0 0
  %4395 = vmatprep.subr.bf16.mxu0 0
  %4396 = vmatpush1.bf16.msra.mxu0 0
  %4397 = vmatprep.subr.bf16.mxu0 0
  %4398 = vmatpush1.bf16.msra.mxu0 0
  %4399 = vmatprep.subr.bf16.mxu0 0
  %4400 = vmatpush1.bf16.msra.mxu0 0
  %4401 = vmatprep.subr.bf16.mxu0 0
  %4402 = vmatpush1.bf16.msra.mxu0 0
  %4403 = vmatprep.subr.bf16.mxu0 0
  %4404 = vmatpush1.bf16.msra.mxu0 0
  %4405 = vmatprep.subr.bf16.mxu0 0
  %4406 = vmatpush1.bf16.msra.mxu0 0
  %4407 = vmatprep.subr.bf16.mxu0 0
  %4408 = vmatpush1.bf16.msra.mxu0 0
  %4409 = vmatprep.subr.bf16.mxu0 0
  %4410 = vmatpush1.bf16.msra.mxu0 0
  %4411 = vmatprep.subr.bf16.mxu0 0
  %4412 = vmatpush1.bf16.msra.mxu0 0
  %4413 = vmatprep.subr.bf16.mxu0 0
  %4414 = vmatpush1.bf16.msra.mxu0 0
  %4415 = vmatprep.subr.bf16.mxu0 0
  %4416 = vmatpush1.bf16.msra.mxu0 0
  %4417 = vmatprep.subr.bf16.mxu0 0
  %4418 = vmatpush1.bf16.msra.mxu0 0
  %4419 = vmatprep.subr.bf16.mxu0 0
  %4420 = vmatpush1.bf16.msra.mxu0 0
  %4421 = vmatprep.subr.bf16.mxu0 0
  %4422 = vmatpush1.bf16.msra.mxu0 0
  %4423 = vmatprep.mubr.bf16.mxu0 0
  %4424 = vmatmul.mubr.bf16.gmra.mrb[0].mxu0 %v1415
  %v4425 = vpop.f32.mrb[0].mxu0
  %v4426 = vadd.f32 0.0, %v4425
  %v4427 = vpop.f32.mrb[0].mxu0
  %v4428 = vpop.f32.mrb[0].mxu0
  %v4429 = vadd.f32 0.0, %v4428
  %v4430 = vpop.f32.mrb[0].mxu0
  %4431 = vdwg.mxu0
  %4432 = vmatprep.subr.bf16.mxu0 0
  %4433 = vmatpush1.bf16.msra.mxu0 %v4182
  %4434 = vmatprep.subr.bf16.mxu0 0
  %4435 = vmatpush1.bf16.msra.mxu0 0
  %4436 = vmatprep.subr.bf16.mxu0 0
  %4437 = vmatpush1.bf16.msra.mxu0 0
  %4438 = vmatprep.subr.bf16.mxu0 0
  %4439 = vmatpush1.bf16.msra.mxu0 0
  %4440 = vmatprep.subr.bf16.mxu0 0
  %4441 = vmatpush1.bf16.msra.mxu0 0
  %4442 = vmatprep.subr.bf16.mxu0 0
  %4443 = vmatpush1.bf16.msra.mxu0 0
  %4444 = vmatprep.subr.bf16.mxu0 0
  %4445 = vmatpush1.bf16.msra.mxu0 0
  %4446 = vmatprep.subr.bf16.mxu0 0
  %4447 = vmatpush1.bf16.msra.mxu0 0
  %4448 = vmatprep.subr.bf16.mxu0 0
  %4449 = vmatpush1.bf16.msra.mxu0 0
  %4450 = vmatprep.subr.bf16.mxu0 0
  %4451 = vmatpush1.bf16.msra.mxu0 0
  %4452 = vmatprep.subr.bf16.mxu0 0
  %4453 = vmatpush1.bf16.msra.mxu0 0
  %4454 = vmatprep.subr.bf16.mxu0 0
  %4455 = vmatpush1.bf16.msra.mxu0 0
  %4456 = vmatprep.subr.bf16.mxu0 0
  %4457 = vmatpush1.bf16.msra.mxu0 0
  %4458 = vmatprep.subr.bf16.mxu0 0
  %4459 = vmatpush1.bf16.msra.mxu0 0
  %4460 = vmatprep.subr.bf16.mxu0 0
  %4461 = vmatpush1.bf16.msra.mxu0 0
  %4462 = vmatprep.subr.bf16.mxu0 0
  %4463 = vmatpush1.bf16.msra.mxu0 0
  %4464 = vmatprep.mubr.bf16.mxu0 0
  %4465 = vmatmul.mubr.bf16.gmra.mrb[0].mxu0 %v1415
  %v4466 = vpop.f32.mrb[0].mxu0
  %v4467 = vadd.f32 0.0, %v4466
  %v4468 = vpop.f32.mrb[0].mxu0
  %v4469 = vpop.f32.mrb[0].mxu0
  %v4470 = vadd.f32 0.0, %v4469
  %v4471 = vpop.f32.mrb[0].mxu0
  %4472 = vdwg.mxu0
  %4473 = vmatprep.subr.bf16.mxu0 0
  %4474 = vmatpush1.bf16.msra.mxu0 %v4183
  %4475 = vmatprep.subr.bf16.mxu0 0
  %4476 = vmatpush1.bf16.msra.mxu0 0
  %4477 = vmatprep.subr.bf16.mxu0 0
  %4478 = vmatpush1.bf16.msra.mxu0 0
  %4479 = vmatprep.subr.bf16.mxu0 0
  %4480 = vmatpush1.bf16.msra.mxu0 0
  %4481 = vmatprep.subr.bf16.mxu0 0
  %4482 = vmatpush1.bf16.msra.mxu0 0
  %4483 = vmatprep.subr.bf16.mxu0 0
  %4484 = vmatpush1.bf16.msra.mxu0 0
  %4485 = vmatprep.subr.bf16.mxu0 0
  %4486 = vmatpush1.bf16.msra.mxu0 0
  %4487 = vmatprep.subr.bf16.mxu0 0
  %4488 = vmatpush1.bf16.msra.mxu0 0
  %4489 = vmatprep.subr.bf16.mxu0 0
  %4490 = vmatpush1.bf16.msra.mxu0 0
  %4491 = vmatprep.subr.bf16.mxu0 0
  %4492 = vmatpush1.bf16.msra.mxu0 0
  %4493 = vmatprep.subr.bf16.mxu0 0
  %4494 = vmatpush1.bf16.msra.mxu0 0
  %4495 = vmatprep.subr.bf16.mxu0 0
  %4496 = vmatpush1.bf16.msra.mxu0 0
  %4497 = vmatprep.subr.bf16.mxu0 0
  %4498 = vmatpush1.bf16.msra.mxu0 0
  %4499 = vmatprep.subr.bf16.mxu0 0
  %4500 = vmatpush1.bf16.msra.mxu0 0
  %4501 = vmatprep.subr.bf16.mxu0 0
  %4502 = vmatpush1.bf16.msra.mxu0 0
  %4503 = vmatprep.subr.bf16.mxu0 0
  %4504 = vmatpush1.bf16.msra.mxu0 0
  %4505 = vmatprep.mubr.bf16.mxu0 0
  %4506 = vmatmul.mubr.bf16.gmra.mrb[0].mxu0 %v1415
  %v4507 = vpop.f32.mrb[0].mxu0
  %v4508 = vadd.f32 0.0, %v4507
  %v4509 = vpop.f32.mrb[0].mxu0
  %v4510 = vpop.f32.mrb[0].mxu0
  %v4511 = vadd.f32 0.0, %v4510
  %v4512 = vpop.f32.mrb[0].mxu0
  %4513 = vdwg.mxu0
  %4514 = vmatprep.subr.bf16.mxu0 0
  %4515 = vmatpush1.bf16.msra.mxu0 %v4184
  %4516 = vmatprep.subr.bf16.mxu0 0
  %4517 = vmatpush1.bf16.msra.mxu0 0
  %4518 = vmatprep.subr.bf16.mxu0 0
  %4519 = vmatpush1.bf16.msra.mxu0 0
  %4520 = vmatprep.subr.bf16.mxu0 0
  %4521 = vmatpush1.bf16.msra.mxu0 0
  %4522 = vmatprep.subr.bf16.mxu0 0
  %4523 = vmatpush1.bf16.msra.mxu0 0
  %4524 = vmatprep.subr.bf16.mxu0 0
  %4525 = vmatpush1.bf16.msra.mxu0 0
  %4526 = vmatprep.subr.bf16.mxu0 0
  %4527 = vmatpush1.bf16.msra.mxu0 0
  %4528 = vmatprep.subr.bf16.mxu0 0
  %4529 = vmatpush1.bf16.msra.mxu0 0
  %4530 = vmatprep.subr.bf16.mxu0 0
  %4531 = vmatpush1.bf16.msra.mxu0 0
  %4532 = vmatprep.subr.bf16.mxu0 0
  %4533 = vmatpush1.bf16.msra.mxu0 0
  %4534 = vmatprep.subr.bf16.mxu0 0
  %4535 = vmatpush1.bf16.msra.mxu0 0
  %4536 = vmatprep.subr.bf16.mxu0 0
  %4537 = vmatpush1.bf16.msra.mxu0 0
  %4538 = vmatprep.subr.bf16.mxu0 0
  %4539 = vmatpush1.bf16.msra.mxu0 0
  %4540 = vmatprep.subr.bf16.mxu0 0
  %4541 = vmatpush1.bf16.msra.mxu0 0
  %4542 = vmatprep.subr.bf16.mxu0 0
  %4543 = vmatpush1.bf16.msra.mxu0 0
  %4544 = vmatprep.subr.bf16.mxu0 0
  %4545 = vmatpush1.bf16.msra.mxu0 0
  %4546 = vmatprep.mubr.bf16.mxu0 0
  %4547 = vmatmul.mubr.bf16.gmra.mrb[0].mxu0 %v1415
  %v4548 = vpop.f32.mrb[0].mxu0
  %v4549 = vadd.f32 0.0, %v4548
  %v4550 = vpop.f32.mrb[0].mxu0
  %v4551 = vpop.f32.mrb[0].mxu0
  %v4552 = vadd.f32 0.0, %v4551
  %v4553 = vpop.f32.mrb[0].mxu0
  %4554 = vdwg.mxu0
  %4555 = vmatprep.subr.bf16.mxu0 0
  %4556 = vmatpush1.bf16.msra.mxu0 %v4185
  %4557 = vmatprep.subr.bf16.mxu0 0
  %4558 = vmatpush1.bf16.msra.mxu0 0
  %4559 = vmatprep.subr.bf16.mxu0 0
  %4560 = vmatpush1.bf16.msra.mxu0 0
  %4561 = vmatprep.subr.bf16.mxu0 0
  %4562 = vmatpush1.bf16.msra.mxu0 0
  %4563 = vmatprep.subr.bf16.mxu0 0
  %4564 = vmatpush1.bf16.msra.mxu0 0
  %4565 = vmatprep.subr.bf16.mxu0 0
  %4566 = vmatpush1.bf16.msra.mxu0 0
  %4567 = vmatprep.subr.bf16.mxu0 0
  %4568 = vmatpush1.bf16.msra.mxu0 0
  %4569 = vmatprep.subr.bf16.mxu0 0
  %4570 = vmatpush1.bf16.msra.mxu0 0
  %4571 = vmatprep.subr.bf16.mxu0 0
  %4572 = vmatpush1.bf16.msra.mxu0 0
  %4573 = vmatprep.subr.bf16.mxu0 0
  %4574 = vmatpush1.bf16.msra.mxu0 0
  %4575 = vmatprep.subr.bf16.mxu0 0
  %4576 = vmatpush1.bf16.msra.mxu0 0
  %4577 = vmatprep.subr.bf16.mxu0 0
  %4578 = vmatpush1.bf16.msra.mxu0 0
  %4579 = vmatprep.subr.bf16.mxu0 0
  %4580 = vmatpush1.bf16.msra.mxu0 0
  %4581 = vmatprep.subr.bf16.mxu0 0
  %4582 = vmatpush1.bf16.msra.mxu0 0
  %4583 = vmatprep.subr.bf16.mxu0 0
  %4584 = vmatpush1.bf16.msra.mxu0 0
  %4585 = vmatprep.subr.bf16.mxu0 0
  %4586 = vmatpush1.bf16.msra.mxu0 0
  %4587 = vmatprep.mubr.bf16.mxu0 0
  %4588 = vmatmul.mubr.bf16.gmra.mrb[0].mxu0 %v1415
  %v4589 = vpop.f32.mrb[0].mxu0
  %v4590 = vadd.f32 0.0, %v4589
  %v4591 = vpop.f32.mrb[0].mxu0
  %v4592 = vpop.f32.mrb[0].mxu0
  %v4593 = vadd.f32 0.0, %v4592
  %v4594 = vpop.f32.mrb[0].mxu0
  %4595 = vdwg.mxu0
  %v4596 = vmax.f32 %v4221, 0.0
  %v4597 = vmax.f32 %v4224, 0.0
  %v4598 = vmax.f32 %v4262, 0.0
  %v4599 = vmax.f32 %v4265, 0.0
  %v4600 = vmax.f32 %v4303, 0.0
  %v4601 = vmax.f32 %v4306, 0.0
  %v4602 = vmax.f32 %v4344, 0.0
  %v4603 = vmax.f32 %v4347, 0.0
  %v4604 = vmax.f32 %v4385, 0.0
  %v4605 = vmax.f32 %v4388, 0.0
  %v4606 = vmax.f32 %v4426, 0.0
  %v4607 = vmax.f32 %v4429, 0.0
  %v4608 = vmax.f32 %v4467, 0.0
  %v4609 = vmax.f32 %v4470, 0.0
  %v4610 = vmax.f32 %v4508, 0.0
  %v4611 = vmax.f32 %v4511, 0.0
  %v4612 = vmax.f32 %v4549, 0.0
  %v4613 = vmax.f32 %v4552, 0.0
  %v4614 = vmax.f32 %v4590, 0.0
  %v4615 = vmax.f32 %v4593, 0.0
  %v4616 = vpack.c.bf16 %v4597, %v4596
  %v4617 = vpack.c.bf16 %v4599, %v4598
  %v4618 = vpack.c.bf16 %v4601, %v4600
  %v4619 = vpack.c.bf16 %v4603, %v4602
  %v4620 = vpack.c.bf16 %v4605, %v4604
  %v4621 = vpack.c.bf16 %v4607, %v4606
  %v4622 = vpack.c.bf16 %v4609, %v4608
  %v4623 = vpack.c.bf16 %v4611, %v4610
  %v4624 = vpack.c.bf16 %v4613, %v4612
  %v4625 = vpack.c.bf16 %v4615, %v4614
  %v4626 = vld [vmem:[%s10] sm:$0xf]
  %s4627 = scalar_lea.vmem %s10, 4
  %v4628 = vld [vmem:[%s4627] sm:$0xf]
  %v4630 = vsel %vm2036, %v4617, 0
  %v4633 = vsel %vm2036, %v4618, 0
  %v4636 = vsel %vm2036, %v4619, 0
  %v4639 = vsel %vm2036, %v4620, 0
  %v4642 = vsel %vm2036, %v4621, 0
  %v4645 = vsel %vm2036, %v4622, 0
  %v4648 = vsel %vm2036, %v4623, 0
  %v4651 = vsel %vm2036, %v4624, 0
  %v4654 = vsel %vm2073, %v4628, 0
  %4656 = vmatprep.subr.bf16.mxu0 0
  %4657 = vmatpush1.bf16.msra.mxu0 %v4654
  %4658 = vmatprep.subr.bf16.mxu0 0
  %4659 = vmatpush1.bf16.msra.mxu0 0
  %4660 = vmatprep.subr.bf16.mxu0 0
  %4661 = vmatpush1.bf16.msra.mxu0 0
  %4662 = vmatprep.subr.bf16.mxu0 0
  %4663 = vmatpush1.bf16.msra.mxu0 0
  %4664 = vmatprep.subr.bf16.mxu0 0
  %4665 = vmatpush1.bf16.msra.mxu0 0
  %4666 = vmatprep.subr.bf16.mxu0 0
  %4667 = vmatpush1.bf16.msra.mxu0 0
  %4668 = vmatprep.subr.bf16.mxu0 0
  %4669 = vmatpush1.bf16.msra.mxu0 0
  %4670 = vmatprep.subr.bf16.mxu0 0
  %4671 = vmatpush1.bf16.msra.mxu0 0
  %4672 = vmatprep.subr.bf16.mxu0 0
  %4673 = vmatpush1.bf16.msra.mxu0 0
  %4674 = vmatprep.subr.bf16.mxu0 0
  %4675 = vmatpush1.bf16.msra.mxu0 0
  %4676 = vmatprep.subr.bf16.mxu0 0
  %4677 = vmatpush1.bf16.msra.mxu0 0
  %4678 = vmatprep.subr.bf16.mxu0 0
  %4679 = vmatpush1.bf16.msra.mxu0 0
  %4680 = vmatprep.subr.bf16.mxu0 0
  %4681 = vmatpush1.bf16.msra.mxu0 0
  %4682 = vmatprep.subr.bf16.mxu0 0
  %4683 = vmatpush1.bf16.msra.mxu0 0
  %4684 = vmatprep.subr.bf16.mxu0 0
  %4685 = vmatpush1.bf16.msra.mxu0 0
  %4686 = vmatprep.subr.bf16.mxu0 0
  %4687 = vmatpush1.bf16.msra.mxu0 0
  %4688 = vmatprep.mubr.bf16.mxu0 0
  %4689 = vmatmul.mubr.bf16.gmra.mrb[0].mxu0 %v4630
  %v4690 = vpop.f32.mrb[0].mxu0
  %v4691 = vadd.f32 0.0, %v4690
  %v4692 = vpop.f32.mrb[0].mxu0
  %v4693 = vpop.f32.mrb[0].mxu0
  %v4694 = vadd.f32 0.0, %v4693
  %v4695 = vpop.f32.mrb[0].mxu0
  %4696 = vmatprep.mubr.bf16.mxu0 0
  %4697 = vmatmul.mubr.bf16.gmra.mrb[0].mxu0 %v4633
  %v4698 = vpop.f32.mrb[0].mxu0
  %v4699 = vadd.f32 0.0, %v4698
  %v4700 = vpop.f32.mrb[0].mxu0
  %v4701 = vpop.f32.mrb[0].mxu0
  %v4702 = vadd.f32 0.0, %v4701
  %v4703 = vpop.f32.mrb[0].mxu0
  %4704 = vmatprep.mubr.bf16.mxu0 0
  %4705 = vmatmul.mubr.bf16.gmra.mrb[0].mxu0 %v4636
  %v4706 = vpop.f32.mrb[0].mxu0
  %v4707 = vadd.f32 0.0, %v4706
  %v4708 = vpop.f32.mrb[0].mxu0
  %v4709 = vpop.f32.mrb[0].mxu0
  %v4710 = vadd.f32 0.0, %v4709
  %v4711 = vpop.f32.mrb[0].mxu0
  %4712 = vmatprep.mubr.bf16.mxu0 0
  %4713 = vmatmul.mubr.bf16.gmra.mrb[0].mxu0 %v4639
  %v4714 = vpop.f32.mrb[0].mxu0
  %v4715 = vadd.f32 0.0, %v4714
  %v4716 = vpop.f32.mrb[0].mxu0
  %v4717 = vpop.f32.mrb[0].mxu0
  %v4718 = vadd.f32 0.0, %v4717
  %v4719 = vpop.f32.mrb[0].mxu0
  %4720 = vmatprep.mubr.bf16.mxu0 0
  %4721 = vmatmul.mubr.bf16.gmra.mrb[0].mxu0 %v4642
  %v4722 = vpop.f32.mrb[0].mxu0
  %v4723 = vadd.f32 0.0, %v4722
  %v4724 = vpop.f32.mrb[0].mxu0
  %v4725 = vpop.f32.mrb[0].mxu0
  %v4726 = vadd.f32 0.0, %v4725
  %v4727 = vpop.f32.mrb[0].mxu0
  %4728 = vmatprep.mubr.bf16.mxu0 0
  %4729 = vmatmul.mubr.bf16.gmra.mrb[0].mxu0 %v4645
  %v4730 = vpop.f32.mrb[0].mxu0
  %v4731 = vadd.f32 0.0, %v4730
  %v4732 = vpop.f32.mrb[0].mxu0
  %v4733 = vpop.f32.mrb[0].mxu0
  %v4734 = vadd.f32 0.0, %v4733
  %v4735 = vpop.f32.mrb[0].mxu0
  %4736 = vmatprep.mubr.bf16.mxu0 0
  %4737 = vmatmul.mubr.bf16.gmra.mrb[0].mxu0 %v4648
  %v4738 = vpop.f32.mrb[0].mxu0
  %v4739 = vadd.f32 0.0, %v4738
  %v4740 = vpop.f32.mrb[0].mxu0
  %v4741 = vpop.f32.mrb[0].mxu0
  %v4742 = vadd.f32 0.0, %v4741
  %v4743 = vpop.f32.mrb[0].mxu0
  %4744 = vmatprep.mubr.bf16.mxu0 0
  %4745 = vmatmul.mubr.bf16.gmra.mrb[0].mxu0 %v4651
  %v4746 = vpop.f32.mrb[0].mxu0
  %v4747 = vadd.f32 0.0, %v4746
  %v4748 = vpop.f32.mrb[0].mxu0
  %v4749 = vpop.f32.mrb[0].mxu0
  %v4750 = vadd.f32 0.0, %v4749
  %v4751 = vpop.f32.mrb[0].mxu0
  %4752 = vdwg.mxu0
  %v4754 = vsel %vm2036, %v4616, 0
  %v4757 = vsel %vm2073, %v4626, 0
  %4759 = vmatprep.subr.bf16.mxu0 0
  %4760 = vmatpush1.bf16.msra.mxu0 %v4757
  %4761 = vmatprep.subr.bf16.mxu0 0
  %4762 = vmatpush1.bf16.msra.mxu0 0
  %4763 = vmatprep.subr.bf16.mxu0 0
  %4764 = vmatpush1.bf16.msra.mxu0 0
  %4765 = vmatprep.subr.bf16.mxu0 0
  %4766 = vmatpush1.bf16.msra.mxu0 0
  %4767 = vmatprep.subr.bf16.mxu0 0
  %4768 = vmatpush1.bf16.msra.mxu0 0
  %4769 = vmatprep.subr.bf16.mxu0 0
  %4770 = vmatpush1.bf16.msra.mxu0 0
  %4771 = vmatprep.subr.bf16.mxu0 0
  %4772 = vmatpush1.bf16.msra.mxu0 0
  %4773 = vmatprep.subr.bf16.mxu0 0
  %4774 = vmatpush1.bf16.msra.mxu0 0
  %4775 = vmatprep.subr.bf16.mxu0 0
  %4776 = vmatpush1.bf16.msra.mxu0 0
  %4777 = vmatprep.subr.bf16.mxu0 0
  %4778 = vmatpush1.bf16.msra.mxu0 0
  %4779 = vmatprep.subr.bf16.mxu0 0
  %4780 = vmatpush1.bf16.msra.mxu0 0
  %4781 = vmatprep.subr.bf16.mxu0 0
  %4782 = vmatpush1.bf16.msra.mxu0 0
  %4783 = vmatprep.subr.bf16.mxu0 0
  %4784 = vmatpush1.bf16.msra.mxu0 0
  %4785 = vmatprep.subr.bf16.mxu0 0
  %4786 = vmatpush1.bf16.msra.mxu0 0
  %4787 = vmatprep.subr.bf16.mxu0 0
  %4788 = vmatpush1.bf16.msra.mxu0 0
  %4789 = vmatprep.subr.bf16.mxu0 0
  %4790 = vmatpush1.bf16.msra.mxu0 0
  %4791 = vmatprep.mubr.bf16.mxu0 0
  %4792 = vmatmul.mubr.bf16.gmra.mrb[0].mxu0 %v4754
  %v4793 = vpop.f32.mrb[0].mxu0
  %v4794 = vadd.f32 %v4691, %v4793
  %v4795 = vpop.f32.mrb[0].mxu0
  %v4796 = vpop.f32.mrb[0].mxu0
  %v4797 = vadd.f32 %v4694, %v4796
  %v4798 = vpop.f32.mrb[0].mxu0
  %4799 = vmatprep.mubr.bf16.mxu0 0
  %4800 = vmatmul.mubr.bf16.gmra.mrb[0].mxu0 %v4630
  %v4801 = vpop.f32.mrb[0].mxu0
  %v4802 = vadd.f32 %v4699, %v4801
  %v4803 = vpop.f32.mrb[0].mxu0
  %v4804 = vpop.f32.mrb[0].mxu0
  %v4805 = vadd.f32 %v4702, %v4804
  %v4806 = vpop.f32.mrb[0].mxu0
  %4807 = vmatprep.mubr.bf16.mxu0 0
  %4808 = vmatmul.mubr.bf16.gmra.mrb[0].mxu0 %v4633
  %v4809 = vpop.f32.mrb[0].mxu0
  %v4810 = vadd.f32 %v4707, %v4809
  %v4811 = vpop.f32.mrb[0].mxu0
  %v4812 = vpop.f32.mrb[0].mxu0
  %v4813 = vadd.f32 %v4710, %v4812
  %v4814 = vpop.f32.mrb[0].mxu0
  %4815 = vmatprep.mubr.bf16.mxu0 0
  %4816 = vmatmul.mubr.bf16.gmra.mrb[0].mxu0 %v4636
  %v4817 = vpop.f32.mrb[0].mxu0
  %v4818 = vadd.f32 %v4715, %v4817
  %v4819 = vpop.f32.mrb[0].mxu0
  %v4820 = vpop.f32.mrb[0].mxu0
  %v4821 = vadd.f32 %v4718, %v4820
  %v4822 = vpop.f32.mrb[0].mxu0
  %4823 = vmatprep.mubr.bf16.mxu0 0
  %4824 = vmatmul.mubr.bf16.gmra.mrb[0].mxu0 %v4639
  %v4825 = vpop.f32.mrb[0].mxu0
  %v4826 = vadd.f32 %v4723, %v4825
  %v4827 = vpop.f32.mrb[0].mxu0
  %v4828 = vpop.f32.mrb[0].mxu0
  %v4829 = vadd.f32 %v4726, %v4828
  %v4830 = vpop.f32.mrb[0].mxu0
  %4831 = vmatprep.mubr.bf16.mxu0 0
  %4832 = vmatmul.mubr.bf16.gmra.mrb[0].mxu0 %v4642
  %v4833 = vpop.f32.mrb[0].mxu0
  %v4834 = vadd.f32 %v4731, %v4833
  %v4835 = vpop.f32.mrb[0].mxu0
  %v4836 = vpop.f32.mrb[0].mxu0
  %v4837 = vadd.f32 %v4734, %v4836
  %v4838 = vpop.f32.mrb[0].mxu0
  %4839 = vmatprep.mubr.bf16.mxu0 0
  %4840 = vmatmul.mubr.bf16.gmra.mrb[0].mxu0 %v4645
  %v4841 = vpop.f32.mrb[0].mxu0
  %v4842 = vadd.f32 %v4739, %v4841
  %v4843 = vpop.f32.mrb[0].mxu0
  %v4844 = vpop.f32.mrb[0].mxu0
  %v4845 = vadd.f32 %v4742, %v4844
  %v4846 = vpop.f32.mrb[0].mxu0
  %4847 = vmatprep.mubr.bf16.mxu0 0
  %4848 = vmatmul.mubr.bf16.gmra.mrb[0].mxu0 %v4648
  %v4849 = vpop.f32.mrb[0].mxu0
  %v4850 = vadd.f32 %v4747, %v4849
  %v4851 = vpop.f32.mrb[0].mxu0
  %v4852 = vpop.f32.mrb[0].mxu0
  %v4853 = vadd.f32 %v4750, %v4852
  %v4854 = vpop.f32.mrb[0].mxu0
  %4855 = vdwg.mxu0
  %s4856 = scalar_lea.vmem %s10, 8
  %v4857 = vld [vmem:[%s4856] sm:$0xf]
  %v4859 = vsel %vm2036, %v4625, 0
  %v4862 = vsel %vm2073, %v4857, 0
  %4864 = vmatprep.subr.bf16.mxu0 0
  %4865 = vmatpush1.bf16.msra.mxu0 %v4862
  %4866 = vmatprep.subr.bf16.mxu0 0
  %4867 = vmatpush1.bf16.msra.mxu0 0
  %4868 = vmatprep.subr.bf16.mxu0 0
  %4869 = vmatpush1.bf16.msra.mxu0 0
  %4870 = vmatprep.subr.bf16.mxu0 0
  %4871 = vmatpush1.bf16.msra.mxu0 0
  %4872 = vmatprep.subr.bf16.mxu0 0
  %4873 = vmatpush1.bf16.msra.mxu0 0
  %4874 = vmatprep.subr.bf16.mxu0 0
  %4875 = vmatpush1.bf16.msra.mxu0 0
  %4876 = vmatprep.subr.bf16.mxu0 0
  %4877 = vmatpush1.bf16.msra.mxu0 0
  %4878 = vmatprep.subr.bf16.mxu0 0
  %4879 = vmatpush1.bf16.msra.mxu0 0
  %4880 = vmatprep.subr.bf16.mxu0 0
  %4881 = vmatpush1.bf16.msra.mxu0 0
  %4882 = vmatprep.subr.bf16.mxu0 0
  %4883 = vmatpush1.bf16.msra.mxu0 0
  %4884 = vmatprep.subr.bf16.mxu0 0
  %4885 = vmatpush1.bf16.msra.mxu0 0
  %4886 = vmatprep.subr.bf16.mxu0 0
  %4887 = vmatpush1.bf16.msra.mxu0 0
  %4888 = vmatprep.subr.bf16.mxu0 0
  %4889 = vmatpush1.bf16.msra.mxu0 0
  %4890 = vmatprep.subr.bf16.mxu0 0
  %4891 = vmatpush1.bf16.msra.mxu0 0
  %4892 = vmatprep.subr.bf16.mxu0 0
  %4893 = vmatpush1.bf16.msra.mxu0 0
  %4894 = vmatprep.subr.bf16.mxu0 0
  %4895 = vmatpush1.bf16.msra.mxu0 0
  %4896 = vmatprep.mubr.bf16.mxu0 0
  %4897 = vmatmul.mubr.bf16.gmra.mrb[0].mxu0 %v4633
  %v4898 = vpop.f32.mrb[0].mxu0
  %v4899 = vadd.f32 0.0, %v4898
  %v4900 = vpop.f32.mrb[0].mxu0
  %v4901 = vpop.f32.mrb[0].mxu0
  %v4902 = vadd.f32 0.0, %v4901
  %v4903 = vpop.f32.mrb[0].mxu0
  %4904 = vmatprep.mubr.bf16.mxu0 0
  %4905 = vmatmul.mubr.bf16.gmra.mrb[0].mxu0 %v4636
  %v4906 = vpop.f32.mrb[0].mxu0
  %v4907 = vadd.f32 0.0, %v4906
  %v4908 = vpop.f32.mrb[0].mxu0
  %v4909 = vpop.f32.mrb[0].mxu0
  %v4910 = vadd.f32 0.0, %v4909
  %v4911 = vpop.f32.mrb[0].mxu0
  %4912 = vmatprep.mubr.bf16.mxu0 0
  %4913 = vmatmul.mubr.bf16.gmra.mrb[0].mxu0 %v4639
  %v4914 = vpop.f32.mrb[0].mxu0
  %v4915 = vadd.f32 0.0, %v4914
  %v4916 = vpop.f32.mrb[0].mxu0
  %v4917 = vpop.f32.mrb[0].mxu0
  %v4918 = vadd.f32 0.0, %v4917
  %v4919 = vpop.f32.mrb[0].mxu0
  %4920 = vmatprep.mubr.bf16.mxu0 0
  %4921 = vmatmul.mubr.bf16.gmra.mrb[0].mxu0 %v4642
  %v4922 = vpop.f32.mrb[0].mxu0
  %v4923 = vadd.f32 0.0, %v4922
  %v4924 = vpop.f32.mrb[0].mxu0
  %v4925 = vpop.f32.mrb[0].mxu0
  %v4926 = vadd.f32 0.0, %v4925
  %v4927 = vpop.f32.mrb[0].mxu0
  %4928 = vmatprep.mubr.bf16.mxu0 0
  %4929 = vmatmul.mubr.bf16.gmra.mrb[0].mxu0 %v4645
  %v4930 = vpop.f32.mrb[0].mxu0
  %v4931 = vadd.f32 0.0, %v4930
  %v4932 = vpop.f32.mrb[0].mxu0
  %v4933 = vpop.f32.mrb[0].mxu0
  %v4934 = vadd.f32 0.0, %v4933
  %v4935 = vpop.f32.mrb[0].mxu0
  %4936 = vmatprep.mubr.bf16.mxu0 0
  %4937 = vmatmul.mubr.bf16.gmra.mrb[0].mxu0 %v4648
  %v4938 = vpop.f32.mrb[0].mxu0
  %v4939 = vadd.f32 0.0, %v4938
  %v4940 = vpop.f32.mrb[0].mxu0
  %v4941 = vpop.f32.mrb[0].mxu0
  %v4942 = vadd.f32 0.0, %v4941
  %v4943 = vpop.f32.mrb[0].mxu0
  %4944 = vmatprep.mubr.bf16.mxu0 0
  %4945 = vmatmul.mubr.bf16.gmra.mrb[0].mxu0 %v4651
  %v4946 = vpop.f32.mrb[0].mxu0
  %v4947 = vadd.f32 0.0, %v4946
  %v4948 = vpop.f32.mrb[0].mxu0
  %v4949 = vpop.f32.mrb[0].mxu0
  %v4950 = vadd.f32 0.0, %v4949
  %v4951 = vpop.f32.mrb[0].mxu0
  %4952 = vmatprep.mubr.bf16.mxu0 0
  %4953 = vmatmul.mubr.bf16.gmra.mrb[0].mxu0 %v4859
  %v4954 = vpop.f32.mrb[0].mxu0
  %v4955 = vadd.f32 0.0, %v4954
  %v4956 = vpop.f32.mrb[0].mxu0
  %v4957 = vpop.f32.mrb[0].mxu0
  %v4958 = vadd.f32 0.0, %v4957
  %v4959 = vpop.f32.mrb[0].mxu0
  %4960 = vdwg.mxu0
  %v4961 = vadd.f32 %v4794, %v4899
  %v4962 = vadd.f32 %v4797, %v4902
  %v4963 = vadd.f32 %v4802, %v4907
  %v4964 = vadd.f32 %v4805, %v4910
  %v4965 = vadd.f32 %v4810, %v4915
  %v4966 = vadd.f32 %v4813, %v4918
  %v4967 = vadd.f32 %v4818, %v4923
  %v4968 = vadd.f32 %v4821, %v4926
  %v4969 = vadd.f32 %v4826, %v4931
  %v4970 = vadd.f32 %v4829, %v4934
  %v4971 = vadd.f32 %v4834, %v4939
  %v4972 = vadd.f32 %v4837, %v4942
  %v4973 = vadd.f32 %v4842, %v4947
  %v4974 = vadd.f32 %v4845, %v4950
  %v4975 = vadd.f32 %v4850, %v4955
  %v4976 = vadd.f32 %v4853, %v4958
  %v4977 = vld [vmem:[%s11] sm:$0x1]
  %v4979 = vlaneseq
  %v4980 = vshrl.u32 %v4979, 7
  %v4981 = vsub.s32 0, %v4980
  %v4982 = vrot.slane %v4977, %v4981
  %v4984 = vadd.f32 %v4961, %v4982
  %v4985 = vadd.f32 %v4962, %v4982
  %v4986 = vadd.f32 %v4963, %v4982
  %v4987 = vadd.f32 %v4964, %v4982
  %v4988 = vadd.f32 %v4965, %v4982
  %v4989 = vadd.f32 %v4966, %v4982
  %v4990 = vadd.f32 %v4967, %v4982
  %v4991 = vadd.f32 %v4968, %v4982
  %v4992 = vadd.f32 %v4969, %v4982
  %v4993 = vadd.f32 %v4970, %v4982
  %v4994 = vadd.f32 %v4971, %v4982
  %v4995 = vadd.f32 %v4972, %v4982
  %v4996 = vadd.f32 %v4973, %v4982
  %v4997 = vadd.f32 %v4974, %v4982
  %v4998 = vadd.f32 %v4975, %v4982
  %v4999 = vadd.f32 %v4976, %v4982
  %v5000 = vxor.u32 %v4984, 2147483648
  %v5001 = vxor.u32 %v4985, 2147483648
  %v5002 = vxor.u32 %v4986, 2147483648
  %v5003 = vxor.u32 %v4987, 2147483648
  %v5004 = vxor.u32 %v4988, 2147483648
  %v5005 = vxor.u32 %v4989, 2147483648
  %v5006 = vxor.u32 %v4990, 2147483648
  %v5007 = vxor.u32 %v4991, 2147483648
  %v5008 = vxor.u32 %v4992, 2147483648
  %v5009 = vxor.u32 %v4993, 2147483648
  %v5010 = vxor.u32 %v4994, 2147483648
  %v5011 = vxor.u32 %v4995, 2147483648
  %v5012 = vxor.u32 %v4996, 2147483648
  %v5013 = vxor.u32 %v4997, 2147483648
  %v5014 = vxor.u32 %v4998, 2147483648
  %v5015 = vxor.u32 %v4999, 2147483648
  %v5016 = vmul.f32 %v5000, 1.442695
  %v5017 = vpow.pop %v5016
  %v5018 = vmul.f32 %v5001, 1.442695
  %v5019 = vpow.pop %v5018
  %v5020 = vmul.f32 %v5002, 1.442695
  %v5021 = vpow.pop %v5020
  %v5022 = vmul.f32 %v5003, 1.442695
  %v5023 = vpow.pop %v5022
  %v5024 = vmul.f32 %v5004, 1.442695
  %v5025 = vpow.pop %v5024
  %v5026 = vmul.f32 %v5005, 1.442695
  %v5027 = vpow.pop %v5026
  %v5028 = vmul.f32 %v5006, 1.442695
  %v5029 = vpow.pop %v5028
  %v5030 = vmul.f32 %v5007, 1.442695
  %v5031 = vpow.pop %v5030
  %v5032 = vmul.f32 %v5008, 1.442695
  %v5033 = vpow.pop %v5032
  %v5034 = vmul.f32 %v5009, 1.442695
  %v5035 = vpow.pop %v5034
  %v5036 = vmul.f32 %v5010, 1.442695
  %v5037 = vpow.pop %v5036
  %v5038 = vmul.f32 %v5011, 1.442695
  %v5039 = vpow.pop %v5038
  %v5040 = vmul.f32 %v5012, 1.442695
  %v5041 = vpow.pop %v5040
  %v5042 = vmul.f32 %v5013, 1.442695
  %v5043 = vpow.pop %v5042
  %v5044 = vmul.f32 %v5014, 1.442695
  %v5045 = vpow.pop %v5044
  %v5046 = vmul.f32 %v5015, 1.442695
  %v5047 = vpow.pop %v5046
  %v5048 = vadd.f32 %v5017, 1.0
  %v5049 = vadd.f32 %v5019, 1.0
  %v5050 = vadd.f32 %v5021, 1.0
  %v5051 = vadd.f32 %v5023, 1.0
  %v5052 = vadd.f32 %v5025, 1.0
  %v5053 = vadd.f32 %v5027, 1.0
  %v5054 = vadd.f32 %v5029, 1.0
  %v5055 = vadd.f32 %v5031, 1.0
  %v5056 = vadd.f32 %v5033, 1.0
  %v5057 = vadd.f32 %v5035, 1.0
  %v5058 = vadd.f32 %v5037, 1.0
  %v5059 = vadd.f32 %v5039, 1.0
  %v5060 = vadd.f32 %v5041, 1.0
  %v5061 = vadd.f32 %v5043, 1.0
  %v5062 = vadd.f32 %v5045, 1.0
  %v5063 = vadd.f32 %v5047, 1.0
  %v5064 = vrcp.pop %v5048
  %v5065 = vmul.f32 1.0, %v5064
  %v5066 = vrcp.pop %v5049
  %v5067 = vmul.f32 1.0, %v5066
  %v5068 = vrcp.pop %v5050
  %v5069 = vmul.f32 1.0, %v5068
  %v5070 = vrcp.pop %v5051
  %v5071 = vmul.f32 1.0, %v5070
  %v5072 = vrcp.pop %v5052
  %v5073 = vmul.f32 1.0, %v5072
  %v5074 = vrcp.pop %v5053
  %v5075 = vmul.f32 1.0, %v5074
  %v5076 = vrcp.pop %v5054
  %v5077 = vmul.f32 1.0, %v5076
  %v5078 = vrcp.pop %v5055
  %v5079 = vmul.f32 1.0, %v5078
  %v5080 = vrcp.pop %v5056
  %v5081 = vmul.f32 1.0, %v5080
  %v5082 = vrcp.pop %v5057
  %v5083 = vmul.f32 1.0, %v5082
  %v5084 = vrcp.pop %v5058
  %v5085 = vmul.f32 1.0, %v5084
  %v5086 = vrcp.pop %v5059
  %v5087 = vmul.f32 1.0, %v5086
  %v5088 = vrcp.pop %v5060
  %v5089 = vmul.f32 1.0, %v5088
  %v5090 = vrcp.pop %v5061
  %v5091 = vmul.f32 1.0, %v5090
  %v5092 = vrcp.pop %v5062
  %v5093 = vmul.f32 1.0, %v5092
  %v5094 = vrcp.pop %v5063
  %v5095 = vmul.f32 1.0, %v5094
  %5112 = vrot.lane.b32.xlu0 %v5065, 112
  %v5113 = vpop.permute.xlu0 %5112
  %5114 = vrot.lane.b32.xlu0 %v5067, 112
  %v5115 = vpop.permute.xlu0 %5114
  %5116 = vrot.lane.b32.xlu0 %v5069, 112
  %v5117 = vpop.permute.xlu0 %5116
  %5118 = vrot.lane.b32.xlu0 %v5071, 112
  %v5119 = vpop.permute.xlu0 %5118
  %5120 = vrot.lane.b32.xlu0 %v5073, 112
  %v5121 = vpop.permute.xlu0 %5120
  %5122 = vrot.lane.b32.xlu0 %v5075, 112
  %v5123 = vpop.permute.xlu0 %5122
  %5124 = vrot.lane.b32.xlu0 %v5077, 112
  %v5125 = vpop.permute.xlu0 %5124
  %5126 = vrot.lane.b32.xlu0 %v5079, 112
  %v5127 = vpop.permute.xlu0 %5126
  %5128 = vrot.lane.b32.xlu0 %v5081, 112
  %v5129 = vpop.permute.xlu0 %5128
  %5130 = vrot.lane.b32.xlu0 %v5083, 112
  %v5131 = vpop.permute.xlu0 %5130
  %5132 = vrot.lane.b32.xlu0 %v5085, 112
  %v5133 = vpop.permute.xlu0 %5132
  %5134 = vrot.lane.b32.xlu0 %v5087, 112
  %v5135 = vpop.permute.xlu0 %5134
  %5136 = vrot.lane.b32.xlu0 %v5089, 112
  %v5137 = vpop.permute.xlu0 %5136
  %5138 = vrot.lane.b32.xlu0 %v5091, 112
  %v5139 = vpop.permute.xlu0 %5138
  %5140 = vrot.lane.b32.xlu0 %v5093, 112
  %v5141 = vpop.permute.xlu0 %5140
  %5142 = vrot.lane.b32.xlu0 %v5095, 112
  %v5143 = vpop.permute.xlu0 %5142
  %v5160 = vadd.f32 %v4984, %v5113
  %v5161 = vadd.f32 %v4985, %v5115
  %v5162 = vadd.f32 %v4986, %v5117
  %v5163 = vadd.f32 %v4987, %v5119
  %v5164 = vadd.f32 %v4988, %v5121
  %v5165 = vadd.f32 %v4989, %v5123
  %v5166 = vadd.f32 %v4990, %v5125
  %v5167 = vadd.f32 %v4991, %v5127
  %v5168 = vadd.f32 %v4992, %v5129
  %v5169 = vadd.f32 %v4993, %v5131
  %v5170 = vadd.f32 %v4994, %v5133
  %v5171 = vadd.f32 %v4995, %v5135
  %v5172 = vadd.f32 %v4996, %v5137
  %v5173 = vadd.f32 %v4997, %v5139
  %v5174 = vadd.f32 %v4998, %v5141
  %v5175 = vadd.f32 %v4999, %v5143
  %5192 = vrot.lane.b32.xlu0 %v4984, 96
  %v5193 = vpop.permute.xlu0 %5192
  %5194 = vrot.lane.b32.xlu0 %v4985, 96
  %v5195 = vpop.permute.xlu0 %5194
  %5196 = vrot.lane.b32.xlu0 %v4986, 96
  %v5197 = vpop.permute.xlu0 %5196
  %5198 = vrot.lane.b32.xlu0 %v4987, 96
  %v5199 = vpop.permute.xlu0 %5198
  %5200 = vrot.lane.b32.xlu0 %v4988, 96
  %v5201 = vpop.permute.xlu0 %5200
  %5202 = vrot.lane.b32.xlu0 %v4989, 96
  %v5203 = vpop.permute.xlu0 %5202
  %5204 = vrot.lane.b32.xlu0 %v4990, 96
  %v5205 = vpop.permute.xlu0 %5204
  %5206 = vrot.lane.b32.xlu0 %v4991, 96
  %v5207 = vpop.permute.xlu0 %5206
  %5208 = vrot.lane.b32.xlu0 %v4992, 96
  %v5209 = vpop.permute.xlu0 %5208
  %5210 = vrot.lane.b32.xlu0 %v4993, 96
  %v5211 = vpop.permute.xlu0 %5210
  %5212 = vrot.lane.b32.xlu0 %v4994, 96
  %v5213 = vpop.permute.xlu0 %5212
  %5214 = vrot.lane.b32.xlu0 %v4995, 96
  %v5215 = vpop.permute.xlu0 %5214
  %5216 = vrot.lane.b32.xlu0 %v4996, 96
  %v5217 = vpop.permute.xlu0 %5216
  %5218 = vrot.lane.b32.xlu0 %v4997, 96
  %v5219 = vpop.permute.xlu0 %5218
  %5220 = vrot.lane.b32.xlu0 %v4998, 96
  %v5221 = vpop.permute.xlu0 %5220
  %5222 = vrot.lane.b32.xlu0 %v4999, 96
  %v5223 = vpop.permute.xlu0 %5222
  %v5240 = vadd.f32 %v5160, %v5193
  %v5241 = vadd.f32 %v5161, %v5195
  %v5242 = vadd.f32 %v5162, %v5197
  %v5243 = vadd.f32 %v5163, %v5199
  %v5244 = vadd.f32 %v5164, %v5201
  %v5245 = vadd.f32 %v5165, %v5203
  %v5246 = vadd.f32 %v5166, %v5205
  %v5247 = vadd.f32 %v5167, %v5207
  %v5248 = vadd.f32 %v5168, %v5209
  %v5249 = vadd.f32 %v5169, %v5211
  %v5250 = vadd.f32 %v5170, %v5213
  %v5251 = vadd.f32 %v5171, %v5215
  %v5252 = vadd.f32 %v5172, %v5217
  %v5253 = vadd.f32 %v5173, %v5219
  %v5254 = vadd.f32 %v5174, %v5221
  %v5255 = vadd.f32 %v5175, %v5223
  %v5256 = vmax.f32 %v5240, 0.0
  %v5257 = vmax.f32 %v5241, 0.0
  %v5258 = vmax.f32 %v5242, 0.0
  %v5259 = vmax.f32 %v5243, 0.0
  %v5260 = vmax.f32 %v5244, 0.0
  %v5261 = vmax.f32 %v5245, 0.0
  %v5262 = vmax.f32 %v5246, 0.0
  %v5263 = vmax.f32 %v5247, 0.0
  %v5264 = vmax.f32 %v5248, 0.0
  %v5265 = vmax.f32 %v5249, 0.0
  %v5266 = vmax.f32 %v5250, 0.0
  %v5267 = vmax.f32 %v5251, 0.0
  %v5268 = vmax.f32 %v5252, 0.0
  %v5269 = vmax.f32 %v5253, 0.0
  %v5270 = vmax.f32 %v5254, 0.0
  %v5271 = vmax.f32 %v5255, 0.0
  %v5272 = vsel %vm1205, %v5256, 0.0
  %5273 = vadd.xlane.f32.xlu0 %v5272
  %v5274 = vpop.xlane.xlu0 %5273
  %v5275 = vsel %vm1205, %v5257, 0.0
  %5276 = vadd.xlane.f32.xlu0 %v5275
  %v5277 = vpop.xlane.xlu0 %5276
  %v5278 = vsel %vm1205, %v5258, 0.0
  %5279 = vadd.xlane.f32.xlu0 %v5278
  %v5280 = vpop.xlane.xlu0 %5279
  %v5281 = vsel %vm1205, %v5259, 0.0
  %5282 = vadd.xlane.f32.xlu0 %v5281
  %v5283 = vpop.xlane.xlu0 %5282
  %v5284 = vsel %vm1205, %v5260, 0.0
  %5285 = vadd.xlane.f32.xlu0 %v5284
  %v5286 = vpop.xlane.xlu0 %5285
  %v5287 = vsel %vm1205, %v5261, 0.0
  %5288 = vadd.xlane.f32.xlu0 %v5287
  %v5289 = vpop.xlane.xlu0 %5288
  %v5290 = vsel %vm1205, %v5262, 0.0
  %5291 = vadd.xlane.f32.xlu0 %v5290
  %v5292 = vpop.xlane.xlu0 %5291
  %v5293 = vsel %vm1205, %v5263, 0.0
  %5294 = vadd.xlane.f32.xlu0 %v5293
  %v5295 = vpop.xlane.xlu0 %5294
  %v5296 = vsel %vm1205, %v5264, 0.0
  %5297 = vadd.xlane.f32.xlu0 %v5296
  %v5298 = vpop.xlane.xlu0 %5297
  %v5299 = vsel %vm1205, %v5265, 0.0
  %5300 = vadd.xlane.f32.xlu0 %v5299
  %v5301 = vpop.xlane.xlu0 %5300
  %v5302 = vsel %vm1205, %v5266, 0.0
  %5303 = vadd.xlane.f32.xlu0 %v5302
  %v5304 = vpop.xlane.xlu0 %5303
  %v5305 = vsel %vm1205, %v5267, 0.0
  %5306 = vadd.xlane.f32.xlu0 %v5305
  %v5307 = vpop.xlane.xlu0 %5306
  %v5308 = vsel %vm1205, %v5268, 0.0
  %5309 = vadd.xlane.f32.xlu0 %v5308
  %v5310 = vpop.xlane.xlu0 %5309
  %v5311 = vsel %vm1205, %v5269, 0.0
  %5312 = vadd.xlane.f32.xlu0 %v5311
  %v5313 = vpop.xlane.xlu0 %5312
  %v5314 = vsel %vm1205, %v5270, 0.0
  %5315 = vadd.xlane.f32.xlu0 %v5314
  %v5316 = vpop.xlane.xlu0 %5315
  %v5317 = vsel %vm1205, %v5271, 0.0
  %5318 = vadd.xlane.f32.xlu0 %v5317
  %v5319 = vpop.xlane.xlu0 %5318
  %v5320 = vadd.f32 %v5274, %v5280
  %v5321 = vadd.f32 %v5320, %v5286
  %v5322 = vadd.f32 %v5321, %v5292
  %v5323 = vadd.f32 %v5322, %v5298
  %v5324 = vadd.f32 %v5323, %v5304
  %v5325 = vadd.f32 %v5324, %v5310
  %v5326 = vadd.f32 %v5325, %v5316
  %v5327 = vadd.f32 %v5277, %v5283
  %v5328 = vadd.f32 %v5327, %v5289
  %v5329 = vadd.f32 %v5328, %v5295
  %v5330 = vadd.f32 %v5329, %v5301
  %v5331 = vadd.f32 %v5330, %v5307
  %v5332 = vadd.f32 %v5331, %v5313
  %v5333 = vadd.f32 %v5332, %v5319
  %v5334 = vmul.f32 %v5256, %v5256
  %v5335 = vmul.f32 %v5257, %v5257
  %v5336 = vmul.f32 %v5258, %v5258
  %v5337 = vmul.f32 %v5259, %v5259
  %v5338 = vmul.f32 %v5260, %v5260
  %v5339 = vmul.f32 %v5261, %v5261
  %v5340 = vmul.f32 %v5262, %v5262
  %v5341 = vmul.f32 %v5263, %v5263
  %v5342 = vmul.f32 %v5264, %v5264
  %v5343 = vmul.f32 %v5265, %v5265
  %v5344 = vmul.f32 %v5266, %v5266
  %v5345 = vmul.f32 %v5267, %v5267
  %v5346 = vmul.f32 %v5268, %v5268
  %v5347 = vmul.f32 %v5269, %v5269
  %v5348 = vmul.f32 %v5270, %v5270
  %v5349 = vmul.f32 %v5271, %v5271
  %v5350 = vsel %vm1205, %v5334, 0.0
  %5351 = vadd.xlane.f32.xlu0 %v5350
  %v5352 = vpop.xlane.xlu0 %5351
  %v5353 = vsel %vm1205, %v5335, 0.0
  %5354 = vadd.xlane.f32.xlu0 %v5353
  %v5355 = vpop.xlane.xlu0 %5354
  %v5356 = vsel %vm1205, %v5336, 0.0
  %5357 = vadd.xlane.f32.xlu0 %v5356
  %v5358 = vpop.xlane.xlu0 %5357
  %v5359 = vsel %vm1205, %v5337, 0.0
  %5360 = vadd.xlane.f32.xlu0 %v5359
  %v5361 = vpop.xlane.xlu0 %5360
  %v5362 = vsel %vm1205, %v5338, 0.0
  %5363 = vadd.xlane.f32.xlu0 %v5362
  %v5364 = vpop.xlane.xlu0 %5363
  %v5365 = vsel %vm1205, %v5339, 0.0
  %5366 = vadd.xlane.f32.xlu0 %v5365
  %v5367 = vpop.xlane.xlu0 %5366
  %v5368 = vsel %vm1205, %v5340, 0.0
  %5369 = vadd.xlane.f32.xlu0 %v5368
  %v5370 = vpop.xlane.xlu0 %5369
  %v5371 = vsel %vm1205, %v5341, 0.0
  %5372 = vadd.xlane.f32.xlu0 %v5371
  %v5373 = vpop.xlane.xlu0 %5372
  %v5374 = vsel %vm1205, %v5342, 0.0
  %5375 = vadd.xlane.f32.xlu0 %v5374
  %v5376 = vpop.xlane.xlu0 %5375
  %v5377 = vsel %vm1205, %v5343, 0.0
  %5378 = vadd.xlane.f32.xlu0 %v5377
  %v5379 = vpop.xlane.xlu0 %5378
  %v5380 = vsel %vm1205, %v5344, 0.0
  %5381 = vadd.xlane.f32.xlu0 %v5380
  %v5382 = vpop.xlane.xlu0 %5381
  %v5383 = vsel %vm1205, %v5345, 0.0
  %5384 = vadd.xlane.f32.xlu0 %v5383
  %v5385 = vpop.xlane.xlu0 %5384
  %v5386 = vsel %vm1205, %v5346, 0.0
  %5387 = vadd.xlane.f32.xlu0 %v5386
  %v5388 = vpop.xlane.xlu0 %5387
  %v5389 = vsel %vm1205, %v5347, 0.0
  %5390 = vadd.xlane.f32.xlu0 %v5389
  %v5391 = vpop.xlane.xlu0 %5390
  %v5392 = vsel %vm1205, %v5348, 0.0
  %5393 = vadd.xlane.f32.xlu0 %v5392
  %v5394 = vpop.xlane.xlu0 %5393
  %v5395 = vsel %vm1205, %v5349, 0.0
  %5396 = vadd.xlane.f32.xlu0 %v5395
  %v5397 = vpop.xlane.xlu0 %5396
  %v5398 = vadd.f32 %v5352, %v5358
  %v5399 = vadd.f32 %v5398, %v5364
  %v5400 = vadd.f32 %v5399, %v5370
  %v5401 = vadd.f32 %v5400, %v5376
  %v5402 = vadd.f32 %v5401, %v5382
  %v5403 = vadd.f32 %v5402, %v5388
  %v5404 = vadd.f32 %v5403, %v5394
  %v5405 = vadd.f32 %v5355, %v5361
  %v5406 = vadd.f32 %v5405, %v5367
  %v5407 = vadd.f32 %v5406, %v5373
  %v5408 = vadd.f32 %v5407, %v5379
  %v5409 = vadd.f32 %v5408, %v5385
  %v5410 = vadd.f32 %v5409, %v5391
  %v5411 = vadd.f32 %v5410, %v5397
  %v5412 = vmul.f32 %v5326, 0.0078125
  %v5413 = vmul.f32 %v5333, 0.0078125
  %v5414 = vmul.f32 %v5404, 0.0078125
  %v5415 = vmul.f32 %v5411, 0.0078125
  %v5416 = vmul.f32 %v5412, %v5412
  %v5417 = vmul.f32 %v5413, %v5413
  %v5418 = vsub.f32 %v5414, %v5416
  %v5419 = vsub.f32 %v5415, %v5417
  %v5420 = vmax.f32 %v5418, 0.0
  %v5421 = vmax.f32 %v5419, 0.0
  %v5422 = vsub.f32 %v5256, %v5412
  %v5423 = vsub.f32 %v5257, %v5413
  %v5424 = vsub.f32 %v5258, %v5412
  %v5425 = vsub.f32 %v5259, %v5413
  %v5426 = vsub.f32 %v5260, %v5412
  %v5427 = vsub.f32 %v5261, %v5413
  %v5428 = vsub.f32 %v5262, %v5412
  %v5429 = vsub.f32 %v5263, %v5413
  %v5430 = vsub.f32 %v5264, %v5412
  %v5431 = vsub.f32 %v5265, %v5413
  %v5432 = vsub.f32 %v5266, %v5412
  %v5433 = vsub.f32 %v5267, %v5413
  %v5434 = vsub.f32 %v5268, %v5412
  %v5435 = vsub.f32 %v5269, %v5413
  %v5436 = vsub.f32 %v5270, %v5412
  %v5437 = vsub.f32 %v5271, %v5413
  %v5438 = vadd.f32 %v5420, 1e-05
  %v5439 = vadd.f32 %v5421, 1e-05
  %v5440 = vrsqrt.pop %v5438
  %v5441 = vrsqrt.pop %v5439
  %v5442 = vmul.f32 %v5422, %v5440
  %v5443 = vmul.f32 %v5423, %v5441
  %v5444 = vmul.f32 %v5424, %v5440
  %v5445 = vmul.f32 %v5425, %v5441
  %v5446 = vmul.f32 %v5426, %v5440
  %v5447 = vmul.f32 %v5427, %v5441
  %v5448 = vmul.f32 %v5428, %v5440
  %v5449 = vmul.f32 %v5429, %v5441
  %v5450 = vmul.f32 %v5430, %v5440
  %v5451 = vmul.f32 %v5431, %v5441
  %v5452 = vmul.f32 %v5432, %v5440
  %v5453 = vmul.f32 %v5433, %v5441
  %v5454 = vmul.f32 %v5434, %v5440
  %v5455 = vmul.f32 %v5435, %v5441
  %v5456 = vmul.f32 %v5436, %v5440
  %v5457 = vmul.f32 %v5437, %v5441
  %v5458 = vpack.c.bf16 %v5443, %v5442
  %v5459 = vpack.c.bf16 %v5445, %v5444
  %v5460 = vpack.c.bf16 %v5447, %v5446
  %v5461 = vpack.c.bf16 %v5449, %v5448
  %v5462 = vpack.c.bf16 %v5451, %v5450
  %v5463 = vpack.c.bf16 %v5453, %v5452
  %v5464 = vpack.c.bf16 %v5455, %v5454
  %v5465 = vpack.c.bf16 %v5457, %v5456
  %v5466 = vld [vmem:[%s12] sm:$0xf]
  %v5467 = vld [vmem:[%s12 + $0x4] sm:$0xf]
  %s5468 = scalar_lea.vmem %s12, 8
  %v5469 = vld [vmem:[%s5468] sm:$0xf]
  %v5470 = vld [vmem:[%s5468 + $0x4] sm:$0xf]
  %v5473 = vunpack.c.l.b16 %v5469
  %v5474 = vunpack.c.l.b16 %v5470
  %v5475 = vpack.c.b16 %v5474, %v5473
  %v5478 = vsel %vm1205, %v5459, 0
  %v5481 = vsel %vm1205, %v5460, 0
  %v5484 = vsel %vm1205, %v5461, 0
  %v5487 = vsel %vm1205, %v5462, 0
  %v5490 = vsel %vm1205, %v5463, 0
  %v5493 = vsel %vm1205, %v5464, 0
  %5495 = vmatprep.subr.bf16.mxu0 0
  %5496 = vmatpush1.bf16.msra.mxu0 %v5475
  %5497 = vmatprep.subr.bf16.mxu0 0
  %5498 = vmatpush1.bf16.msra.mxu0 0
  %5499 = vmatprep.subr.bf16.mxu0 0
  %5500 = vmatpush1.bf16.msra.mxu0 0
  %5501 = vmatprep.subr.bf16.mxu0 0
  %5502 = vmatpush1.bf16.msra.mxu0 0
  %5503 = vmatprep.subr.bf16.mxu0 0
  %5504 = vmatpush1.bf16.msra.mxu0 0
  %5505 = vmatprep.subr.bf16.mxu0 0
  %5506 = vmatpush1.bf16.msra.mxu0 0
  %5507 = vmatprep.subr.bf16.mxu0 0
  %5508 = vmatpush1.bf16.msra.mxu0 0
  %5509 = vmatprep.subr.bf16.mxu0 0
  %5510 = vmatpush1.bf16.msra.mxu0 0
  %5511 = vmatprep.subr.bf16.mxu0 0
  %5512 = vmatpush1.bf16.msra.mxu0 0
  %5513 = vmatprep.subr.bf16.mxu0 0
  %5514 = vmatpush1.bf16.msra.mxu0 0
  %5515 = vmatprep.subr.bf16.mxu0 0
  %5516 = vmatpush1.bf16.msra.mxu0 0
  %5517 = vmatprep.subr.bf16.mxu0 0
  %5518 = vmatpush1.bf16.msra.mxu0 0
  %5519 = vmatprep.subr.bf16.mxu0 0
  %5520 = vmatpush1.bf16.msra.mxu0 0
  %5521 = vmatprep.subr.bf16.mxu0 0
  %5522 = vmatpush1.bf16.msra.mxu0 0
  %5523 = vmatprep.subr.bf16.mxu0 0
  %5524 = vmatpush1.bf16.msra.mxu0 0
  %5525 = vmatprep.subr.bf16.mxu0 0
  %5526 = vmatpush1.bf16.msra.mxu0 0
  %5527 = vmatprep.mubr.bf16.mxu0 0
  %5528 = vmatmul.mubr.bf16.gmra.mrb[0].mxu0 %v5478
  %v5529 = vpop.f32.mrb[0].mxu0
  %v5530 = vadd.f32 0.0, %v5529
  %v5531 = vpop.f32.mrb[0].mxu0
  %v5532 = vpop.f32.mrb[0].mxu0
  %v5533 = vadd.f32 0.0, %v5532
  %v5534 = vpop.f32.mrb[0].mxu0
  %5535 = vmatprep.mubr.bf16.mxu0 0
  %5536 = vmatmul.mubr.bf16.gmra.mrb[0].mxu0 %v5481
  %v5537 = vpop.f32.mrb[0].mxu0
  %v5538 = vadd.f32 0.0, %v5537
  %v5539 = vpop.f32.mrb[0].mxu0
  %v5540 = vpop.f32.mrb[0].mxu0
  %v5541 = vadd.f32 0.0, %v5540
  %v5542 = vpop.f32.mrb[0].mxu0
  %5543 = vmatprep.mubr.bf16.mxu0 0
  %5544 = vmatmul.mubr.bf16.gmra.mrb[0].mxu0 %v5484
  %v5545 = vpop.f32.mrb[0].mxu0
  %v5546 = vadd.f32 0.0, %v5545
  %v5547 = vpop.f32.mrb[0].mxu0
  %v5548 = vpop.f32.mrb[0].mxu0
  %v5549 = vadd.f32 0.0, %v5548
  %v5550 = vpop.f32.mrb[0].mxu0
  %5551 = vmatprep.mubr.bf16.mxu0 0
  %5552 = vmatmul.mubr.bf16.gmra.mrb[0].mxu0 %v5487
  %v5553 = vpop.f32.mrb[0].mxu0
  %v5554 = vadd.f32 0.0, %v5553
  %v5555 = vpop.f32.mrb[0].mxu0
  %v5556 = vpop.f32.mrb[0].mxu0
  %v5557 = vadd.f32 0.0, %v5556
  %v5558 = vpop.f32.mrb[0].mxu0
  %5559 = vmatprep.mubr.bf16.mxu0 0
  %5560 = vmatmul.mubr.bf16.gmra.mrb[0].mxu0 %v5490
  %v5561 = vpop.f32.mrb[0].mxu0
  %v5562 = vadd.f32 0.0, %v5561
  %v5563 = vpop.f32.mrb[0].mxu0
  %v5564 = vpop.f32.mrb[0].mxu0
  %v5565 = vadd.f32 0.0, %v5564
  %v5566 = vpop.f32.mrb[0].mxu0
  %5567 = vmatprep.mubr.bf16.mxu0 0
  %5568 = vmatmul.mubr.bf16.gmra.mrb[0].mxu0 %v5493
  %v5569 = vpop.f32.mrb[0].mxu0
  %v5570 = vadd.f32 0.0, %v5569
  %v5571 = vpop.f32.mrb[0].mxu0
  %v5572 = vpop.f32.mrb[0].mxu0
  %v5573 = vadd.f32 0.0, %v5572
  %v5574 = vpop.f32.mrb[0].mxu0
  %5575 = vdwg.mxu0
  %v5578 = vunpack.c.l.b16 %v5466
  %v5579 = vunpack.c.l.b16 %v5467
  %v5580 = vpack.c.b16 %v5579, %v5578
  %v5583 = vsel %vm1205, %v5458, 0
  %5585 = vmatprep.subr.bf16.mxu0 0
  %5586 = vmatpush1.bf16.msra.mxu0 %v5580
  %5587 = vmatprep.subr.bf16.mxu0 0
  %5588 = vmatpush1.bf16.msra.mxu0 0
  %5589 = vmatprep.subr.bf16.mxu0 0
  %5590 = vmatpush1.bf16.msra.mxu0 0
  %5591 = vmatprep.subr.bf16.mxu0 0
  %5592 = vmatpush1.bf16.msra.mxu0 0
  %5593 = vmatprep.subr.bf16.mxu0 0
  %5594 = vmatpush1.bf16.msra.mxu0 0
  %5595 = vmatprep.subr.bf16.mxu0 0
  %5596 = vmatpush1.bf16.msra.mxu0 0
  %5597 = vmatprep.subr.bf16.mxu0 0
  %5598 = vmatpush1.bf16.msra.mxu0 0
  %5599 = vmatprep.subr.bf16.mxu0 0
  %5600 = vmatpush1.bf16.msra.mxu0 0
  %5601 = vmatprep.subr.bf16.mxu0 0
  %5602 = vmatpush1.bf16.msra.mxu0 0
  %5603 = vmatprep.subr.bf16.mxu0 0
  %5604 = vmatpush1.bf16.msra.mxu0 0
  %5605 = vmatprep.subr.bf16.mxu0 0
  %5606 = vmatpush1.bf16.msra.mxu0 0
  %5607 = vmatprep.subr.bf16.mxu0 0
  %5608 = vmatpush1.bf16.msra.mxu0 0
  %5609 = vmatprep.subr.bf16.mxu0 0
  %5610 = vmatpush1.bf16.msra.mxu0 0
  %5611 = vmatprep.subr.bf16.mxu0 0
  %5612 = vmatpush1.bf16.msra.mxu0 0
  %5613 = vmatprep.subr.bf16.mxu0 0
  %5614 = vmatpush1.bf16.msra.mxu0 0
  %5615 = vmatprep.subr.bf16.mxu0 0
  %5616 = vmatpush1.bf16.msra.mxu0 0
  %5617 = vmatprep.mubr.bf16.mxu0 0
  %5618 = vmatmul.mubr.bf16.gmra.mrb[0].mxu0 %v5583
  %v5619 = vpop.f32.mrb[0].mxu0
  %v5620 = vadd.f32 %v5530, %v5619
  %v5621 = vpop.f32.mrb[0].mxu0
  %v5622 = vpop.f32.mrb[0].mxu0
  %v5623 = vadd.f32 %v5533, %v5622
  %v5624 = vpop.f32.mrb[0].mxu0
  %5625 = vmatprep.mubr.bf16.mxu0 0
  %5626 = vmatmul.mubr.bf16.gmra.mrb[0].mxu0 %v5478
  %v5627 = vpop.f32.mrb[0].mxu0
  %v5628 = vadd.f32 %v5538, %v5627
  %v5629 = vpop.f32.mrb[0].mxu0
  %v5630 = vpop.f32.mrb[0].mxu0
  %v5631 = vadd.f32 %v5541, %v5630
  %v5632 = vpop.f32.mrb[0].mxu0
  %5633 = vmatprep.mubr.bf16.mxu0 0
  %5634 = vmatmul.mubr.bf16.gmra.mrb[0].mxu0 %v5481
  %v5635 = vpop.f32.mrb[0].mxu0
  %v5636 = vadd.f32 %v5546, %v5635
  %v5637 = vpop.f32.mrb[0].mxu0
  %v5638 = vpop.f32.mrb[0].mxu0
  %v5639 = vadd.f32 %v5549, %v5638
  %v5640 = vpop.f32.mrb[0].mxu0
  %5641 = vmatprep.mubr.bf16.mxu0 0
  %5642 = vmatmul.mubr.bf16.gmra.mrb[0].mxu0 %v5484
  %v5643 = vpop.f32.mrb[0].mxu0
  %v5644 = vadd.f32 %v5554, %v5643
  %v5645 = vpop.f32.mrb[0].mxu0
  %v5646 = vpop.f32.mrb[0].mxu0
  %v5647 = vadd.f32 %v5557, %v5646
  %v5648 = vpop.f32.mrb[0].mxu0
  %5649 = vmatprep.mubr.bf16.mxu0 0
  %5650 = vmatmul.mubr.bf16.gmra.mrb[0].mxu0 %v5487
  %v5651 = vpop.f32.mrb[0].mxu0
  %v5652 = vadd.f32 %v5562, %v5651
  %v5653 = vpop.f32.mrb[0].mxu0
  %v5654 = vpop.f32.mrb[0].mxu0
  %v5655 = vadd.f32 %v5565, %v5654
  %v5656 = vpop.f32.mrb[0].mxu0
  %5657 = vmatprep.mubr.bf16.mxu0 0
  %5658 = vmatmul.mubr.bf16.gmra.mrb[0].mxu0 %v5490
  %v5659 = vpop.f32.mrb[0].mxu0
  %v5660 = vadd.f32 %v5570, %v5659
  %v5661 = vpop.f32.mrb[0].mxu0
  %v5662 = vpop.f32.mrb[0].mxu0
  %v5663 = vadd.f32 %v5573, %v5662
  %v5664 = vpop.f32.mrb[0].mxu0
  %5665 = vdwg.mxu0
  %s5666 = scalar_lea.vmem %s12, 16
  %v5667 = vld [vmem:[%s5666] sm:$0xf]
  %v5668 = vld [vmem:[%s5666 + $0x4] sm:$0xf]
  %v5671 = vunpack.c.l.b16 %v5667
  %v5672 = vunpack.c.l.b16 %v5668
  %v5673 = vpack.c.b16 %v5672, %v5671
  %v5676 = vsel %vm1205, %v5465, 0
  %5678 = vmatprep.subr.bf16.mxu0 0
  %5679 = vmatpush1.bf16.msra.mxu0 %v5673
  %5680 = vmatprep.subr.bf16.mxu0 0
  %5681 = vmatpush1.bf16.msra.mxu0 0
  %5682 = vmatprep.subr.bf16.mxu0 0
  %5683 = vmatpush1.bf16.msra.mxu0 0
  %5684 = vmatprep.subr.bf16.mxu0 0
  %5685 = vmatpush1.bf16.msra.mxu0 0
  %5686 = vmatprep.subr.bf16.mxu0 0
  %5687 = vmatpush1.bf16.msra.mxu0 0
  %5688 = vmatprep.subr.bf16.mxu0 0
  %5689 = vmatpush1.bf16.msra.mxu0 0
  %5690 = vmatprep.subr.bf16.mxu0 0
  %5691 = vmatpush1.bf16.msra.mxu0 0
  %5692 = vmatprep.subr.bf16.mxu0 0
  %5693 = vmatpush1.bf16.msra.mxu0 0
  %5694 = vmatprep.subr.bf16.mxu0 0
  %5695 = vmatpush1.bf16.msra.mxu0 0
  %5696 = vmatprep.subr.bf16.mxu0 0
  %5697 = vmatpush1.bf16.msra.mxu0 0
  %5698 = vmatprep.subr.bf16.mxu0 0
  %5699 = vmatpush1.bf16.msra.mxu0 0
  %5700 = vmatprep.subr.bf16.mxu0 0
  %5701 = vmatpush1.bf16.msra.mxu0 0
  %5702 = vmatprep.subr.bf16.mxu0 0
  %5703 = vmatpush1.bf16.msra.mxu0 0
  %5704 = vmatprep.subr.bf16.mxu0 0
  %5705 = vmatpush1.bf16.msra.mxu0 0
  %5706 = vmatprep.subr.bf16.mxu0 0
  %5707 = vmatpush1.bf16.msra.mxu0 0
  %5708 = vmatprep.subr.bf16.mxu0 0
  %5709 = vmatpush1.bf16.msra.mxu0 0
  %5710 = vmatprep.mubr.bf16.mxu0 0
  %5711 = vmatmul.mubr.bf16.gmra.mrb[0].mxu0 %v5481
  %v5712 = vpop.f32.mrb[0].mxu0
  %v5713 = vadd.f32 0.0, %v5712
  %v5714 = vpop.f32.mrb[0].mxu0
  %v5715 = vpop.f32.mrb[0].mxu0
  %v5716 = vadd.f32 0.0, %v5715
  %v5717 = vpop.f32.mrb[0].mxu0
  %5718 = vmatprep.mubr.bf16.mxu0 0
  %5719 = vmatmul.mubr.bf16.gmra.mrb[0].mxu0 %v5484
  %v5720 = vpop.f32.mrb[0].mxu0
  %v5721 = vadd.f32 0.0, %v5720
  %v5722 = vpop.f32.mrb[0].mxu0
  %v5723 = vpop.f32.mrb[0].mxu0
  %v5724 = vadd.f32 0.0, %v5723
  %v5725 = vpop.f32.mrb[0].mxu0
  %5726 = vmatprep.mubr.bf16.mxu0 0
  %5727 = vmatmul.mubr.bf16.gmra.mrb[0].mxu0 %v5487
  %v5728 = vpop.f32.mrb[0].mxu0
  %v5729 = vadd.f32 0.0, %v5728
  %v5730 = vpop.f32.mrb[0].mxu0
  %v5731 = vpop.f32.mrb[0].mxu0
  %v5732 = vadd.f32 0.0, %v5731
  %v5733 = vpop.f32.mrb[0].mxu0
  %5734 = vmatprep.mubr.bf16.mxu0 0
  %5735 = vmatmul.mubr.bf16.gmra.mrb[0].mxu0 %v5490
  %v5736 = vpop.f32.mrb[0].mxu0
  %v5737 = vadd.f32 0.0, %v5736
  %v5738 = vpop.f32.mrb[0].mxu0
  %v5739 = vpop.f32.mrb[0].mxu0
  %v5740 = vadd.f32 0.0, %v5739
  %v5741 = vpop.f32.mrb[0].mxu0
  %5742 = vmatprep.mubr.bf16.mxu0 0
  %5743 = vmatmul.mubr.bf16.gmra.mrb[0].mxu0 %v5493
  %v5744 = vpop.f32.mrb[0].mxu0
  %v5745 = vadd.f32 0.0, %v5744
  %v5746 = vpop.f32.mrb[0].mxu0
  %v5747 = vpop.f32.mrb[0].mxu0
  %v5748 = vadd.f32 0.0, %v5747
  %v5749 = vpop.f32.mrb[0].mxu0
  %5750 = vmatprep.mubr.bf16.mxu0 0
  %5751 = vmatmul.mubr.bf16.gmra.mrb[0].mxu0 %v5676
  %v5752 = vpop.f32.mrb[0].mxu0
  %v5753 = vadd.f32 0.0, %v5752
  %v5754 = vpop.f32.mrb[0].mxu0
  %v5755 = vpop.f32.mrb[0].mxu0
  %v5756 = vadd.f32 0.0, %v5755
  %v5757 = vpop.f32.mrb[0].mxu0
  %5758 = vdwg.mxu0
  %v5759 = vadd.f32 %v5620, %v5713
  %v5760 = vadd.f32 %v5623, %v5716
  %v5761 = vadd.f32 %v5628, %v5721
  %v5762 = vadd.f32 %v5631, %v5724
  %v5763 = vadd.f32 %v5636, %v5729
  %v5764 = vadd.f32 %v5639, %v5732
  %v5765 = vadd.f32 %v5644, %v5737
  %v5766 = vadd.f32 %v5647, %v5740
  %v5767 = vadd.f32 %v5652, %v5745
  %v5768 = vadd.f32 %v5655, %v5748
  %v5769 = vadd.f32 %v5660, %v5753
  %v5770 = vadd.f32 %v5663, %v5756
  %v5771 = vld [vmem:[%s13] sm:$0x1]
  %v5773 = vlaneseq
  %v5774 = vshrl.u32 %v5773, 7
  %v5775 = vsub.s32 0, %v5774
  %v5776 = vrot.slane %v5771, %v5775
  %v5778 = vadd.f32 %v5759, %v5776
  %v5779 = vadd.f32 %v5760, %v5776
  %v5780 = vadd.f32 %v5761, %v5776
  %v5781 = vadd.f32 %v5762, %v5776
  %v5782 = vadd.f32 %v5763, %v5776
  %v5783 = vadd.f32 %v5764, %v5776
  %v5784 = vadd.f32 %v5765, %v5776
  %v5785 = vadd.f32 %v5766, %v5776
  %v5786 = vadd.f32 %v5767, %v5776
  %v5787 = vadd.f32 %v5768, %v5776
  %v5788 = vadd.f32 %v5769, %v5776
  %v5789 = vadd.f32 %v5770, %v5776
  %v5790 = vxor.u32 %v5778, 2147483648
  %v5791 = vxor.u32 %v5779, 2147483648
  %v5792 = vxor.u32 %v5780, 2147483648
  %v5793 = vxor.u32 %v5781, 2147483648
  %v5794 = vxor.u32 %v5782, 2147483648
  %v5795 = vxor.u32 %v5783, 2147483648
  %v5796 = vxor.u32 %v5784, 2147483648
  %v5797 = vxor.u32 %v5785, 2147483648
  %v5798 = vxor.u32 %v5786, 2147483648
  %v5799 = vxor.u32 %v5787, 2147483648
  %v5800 = vxor.u32 %v5788, 2147483648
  %v5801 = vxor.u32 %v5789, 2147483648
  %v5802 = vmul.f32 %v5790, 1.442695
  %v5803 = vpow.pop %v5802
  %v5804 = vmul.f32 %v5791, 1.442695
  %v5805 = vpow.pop %v5804
  %v5806 = vmul.f32 %v5792, 1.442695
  %v5807 = vpow.pop %v5806
  %v5808 = vmul.f32 %v5793, 1.442695
  %v5809 = vpow.pop %v5808
  %v5810 = vmul.f32 %v5794, 1.442695
  %v5811 = vpow.pop %v5810
  %v5812 = vmul.f32 %v5795, 1.442695
  %v5813 = vpow.pop %v5812
  %v5814 = vmul.f32 %v5796, 1.442695
  %v5815 = vpow.pop %v5814
  %v5816 = vmul.f32 %v5797, 1.442695
  %v5817 = vpow.pop %v5816
  %v5818 = vmul.f32 %v5798, 1.442695
  %v5819 = vpow.pop %v5818
  %v5820 = vmul.f32 %v5799, 1.442695
  %v5821 = vpow.pop %v5820
  %v5822 = vmul.f32 %v5800, 1.442695
  %v5823 = vpow.pop %v5822
  %v5824 = vmul.f32 %v5801, 1.442695
  %v5825 = vpow.pop %v5824
  %v5826 = vadd.f32 %v5803, 1.0
  %v5827 = vadd.f32 %v5805, 1.0
  %v5828 = vadd.f32 %v5807, 1.0
  %v5829 = vadd.f32 %v5809, 1.0
  %v5830 = vadd.f32 %v5811, 1.0
  %v5831 = vadd.f32 %v5813, 1.0
  %v5832 = vadd.f32 %v5815, 1.0
  %v5833 = vadd.f32 %v5817, 1.0
  %v5834 = vadd.f32 %v5819, 1.0
  %v5835 = vadd.f32 %v5821, 1.0
  %v5836 = vadd.f32 %v5823, 1.0
  %v5837 = vadd.f32 %v5825, 1.0
  %v5838 = vrcp.pop %v5826
  %v5839 = vmul.f32 1.0, %v5838
  %v5840 = vrcp.pop %v5827
  %v5841 = vmul.f32 1.0, %v5840
  %v5842 = vrcp.pop %v5828
  %v5843 = vmul.f32 1.0, %v5842
  %v5844 = vrcp.pop %v5829
  %v5845 = vmul.f32 1.0, %v5844
  %v5846 = vrcp.pop %v5830
  %v5847 = vmul.f32 1.0, %v5846
  %v5848 = vrcp.pop %v5831
  %v5849 = vmul.f32 1.0, %v5848
  %v5850 = vrcp.pop %v5832
  %v5851 = vmul.f32 1.0, %v5850
  %v5852 = vrcp.pop %v5833
  %v5853 = vmul.f32 1.0, %v5852
  %v5854 = vrcp.pop %v5834
  %v5855 = vmul.f32 1.0, %v5854
  %v5856 = vrcp.pop %v5835
  %v5857 = vmul.f32 1.0, %v5856
  %v5858 = vrcp.pop %v5836
  %v5859 = vmul.f32 1.0, %v5858
  %v5860 = vrcp.pop %v5837
  %v5861 = vmul.f32 1.0, %v5860
  %5874 = vrot.lane.b32.xlu0 %v5839, 112
  %v5875 = vpop.permute.xlu0 %5874
  %5876 = vrot.lane.b32.xlu0 %v5841, 112
  %v5877 = vpop.permute.xlu0 %5876
  %5878 = vrot.lane.b32.xlu0 %v5843, 112
  %v5879 = vpop.permute.xlu0 %5878
  %5880 = vrot.lane.b32.xlu0 %v5845, 112
  %v5881 = vpop.permute.xlu0 %5880
  %5882 = vrot.lane.b32.xlu0 %v5847, 112
  %v5883 = vpop.permute.xlu0 %5882
  %5884 = vrot.lane.b32.xlu0 %v5849, 112
  %v5885 = vpop.permute.xlu0 %5884
  %5886 = vrot.lane.b32.xlu0 %v5851, 112
  %v5887 = vpop.permute.xlu0 %5886
  %5888 = vrot.lane.b32.xlu0 %v5853, 112
  %v5889 = vpop.permute.xlu0 %5888
  %5890 = vrot.lane.b32.xlu0 %v5855, 112
  %v5891 = vpop.permute.xlu0 %5890
  %5892 = vrot.lane.b32.xlu0 %v5857, 112
  %v5893 = vpop.permute.xlu0 %5892
  %5894 = vrot.lane.b32.xlu0 %v5859, 112
  %v5895 = vpop.permute.xlu0 %5894
  %5896 = vrot.lane.b32.xlu0 %v5861, 112
  %v5897 = vpop.permute.xlu0 %5896
  %v5910 = vadd.f32 %v5778, %v5875
  %v5911 = vadd.f32 %v5779, %v5877
  %v5912 = vadd.f32 %v5780, %v5879
  %v5913 = vadd.f32 %v5781, %v5881
  %v5914 = vadd.f32 %v5782, %v5883
  %v5915 = vadd.f32 %v5783, %v5885
  %v5916 = vadd.f32 %v5784, %v5887
  %v5917 = vadd.f32 %v5785, %v5889
  %v5918 = vadd.f32 %v5786, %v5891
  %v5919 = vadd.f32 %v5787, %v5893
  %v5920 = vadd.f32 %v5788, %v5895
  %v5921 = vadd.f32 %v5789, %v5897
  %5934 = vrot.lane.b32.xlu0 %v5778, 96
  %v5935 = vpop.permute.xlu0 %5934
  %5936 = vrot.lane.b32.xlu0 %v5779, 96
  %v5937 = vpop.permute.xlu0 %5936
  %5938 = vrot.lane.b32.xlu0 %v5780, 96
  %v5939 = vpop.permute.xlu0 %5938
  %5940 = vrot.lane.b32.xlu0 %v5781, 96
  %v5941 = vpop.permute.xlu0 %5940
  %5942 = vrot.lane.b32.xlu0 %v5782, 96
  %v5943 = vpop.permute.xlu0 %5942
  %5944 = vrot.lane.b32.xlu0 %v5783, 96
  %v5945 = vpop.permute.xlu0 %5944
  %5946 = vrot.lane.b32.xlu0 %v5784, 96
  %v5947 = vpop.permute.xlu0 %5946
  %5948 = vrot.lane.b32.xlu0 %v5785, 96
  %v5949 = vpop.permute.xlu0 %5948
  %5950 = vrot.lane.b32.xlu0 %v5786, 96
  %v5951 = vpop.permute.xlu0 %5950
  %5952 = vrot.lane.b32.xlu0 %v5787, 96
  %v5953 = vpop.permute.xlu0 %5952
  %5954 = vrot.lane.b32.xlu0 %v5788, 96
  %v5955 = vpop.permute.xlu0 %5954
  %5956 = vrot.lane.b32.xlu0 %v5789, 96
  %v5957 = vpop.permute.xlu0 %5956
  %v5970 = vadd.f32 %v5910, %v5935
  %v5971 = vadd.f32 %v5911, %v5937
  %v5972 = vadd.f32 %v5912, %v5939
  %v5973 = vadd.f32 %v5913, %v5941
  %v5974 = vadd.f32 %v5914, %v5943
  %v5975 = vadd.f32 %v5915, %v5945
  %v5976 = vadd.f32 %v5916, %v5947
  %v5977 = vadd.f32 %v5917, %v5949
  %v5978 = vadd.f32 %v5918, %v5951
  %v5979 = vadd.f32 %v5919, %v5953
  %v5980 = vadd.f32 %v5920, %v5955
  %v5981 = vadd.f32 %v5921, %v5957
  %v5982 = vmax.f32 %v5970, 0.0
  %v5983 = vmax.f32 %v5971, 0.0
  %v5984 = vmax.f32 %v5972, 0.0
  %v5985 = vmax.f32 %v5973, 0.0
  %v5986 = vmax.f32 %v5974, 0.0
  %v5987 = vmax.f32 %v5975, 0.0
  %v5988 = vmax.f32 %v5976, 0.0
  %v5989 = vmax.f32 %v5977, 0.0
  %v5990 = vmax.f32 %v5978, 0.0
  %v5991 = vmax.f32 %v5979, 0.0
  %v5992 = vmax.f32 %v5980, 0.0
  %v5993 = vmax.f32 %v5981, 0.0
  %v5994 = vpack.c.bf16 %v5983, %v5982
  %v5995 = vpack.c.bf16 %v5985, %v5984
  %v5996 = vpack.c.bf16 %v5987, %v5986
  %v5997 = vpack.c.bf16 %v5989, %v5988
  %v5998 = vpack.c.bf16 %v5991, %v5990
  %v5999 = vpack.c.bf16 %v5993, %v5992
  %v6000 = vld [vmem:[%s14] sm:$0xf]
  %v6001 = vld [vmem:[%s14 + $0x4] sm:$0xf]
  %v6002 = vld [vmem:[%s15] sm:$0x1]
  %v6004 = vlaneseq
  %v6005 = vshrl.u32 %v6004, 7
  %v6006 = vsub.s32 0, %v6005
  %v6007 = vrot.slane %v6002, %v6006
  %v6011 = vunpack.c.l.b16 %v6000
  %v6012 = vunpack.c.l.b16 %v6001
  %v6013 = vpack.c.b16 %v6012, %v6011
  %v6016 = vsel %vm1205, %v5994, 0
  %v6019 = vsel %vm1205, %v5995, 0
  %v6022 = vsel %vm1205, %v5996, 0
  %v6025 = vsel %vm1205, %v5997, 0
  %v6028 = vsel %vm1205, %v5998, 0
  %v6031 = vsel %vm1205, %v5999, 0
  %6033 = vmatprep.subr.bf16.mxu0 0
  %6034 = vmatpush1.bf16.msra.mxu0 %v6013
  %6035 = vmatprep.subr.bf16.mxu0 0
  %6036 = vmatpush1.bf16.msra.mxu0 0
  %6037 = vmatprep.subr.bf16.mxu0 0
  %6038 = vmatpush1.bf16.msra.mxu0 0
  %6039 = vmatprep.subr.bf16.mxu0 0
  %6040 = vmatpush1.bf16.msra.mxu0 0
  %6041 = vmatprep.subr.bf16.mxu0 0
  %6042 = vmatpush1.bf16.msra.mxu0 0
  %6043 = vmatprep.subr.bf16.mxu0 0
  %6044 = vmatpush1.bf16.msra.mxu0 0
  %6045 = vmatprep.subr.bf16.mxu0 0
  %6046 = vmatpush1.bf16.msra.mxu0 0
  %6047 = vmatprep.subr.bf16.mxu0 0
  %6048 = vmatpush1.bf16.msra.mxu0 0
  %6049 = vmatprep.subr.bf16.mxu0 0
  %6050 = vmatpush1.bf16.msra.mxu0 0
  %6051 = vmatprep.subr.bf16.mxu0 0
  %6052 = vmatpush1.bf16.msra.mxu0 0
  %6053 = vmatprep.subr.bf16.mxu0 0
  %6054 = vmatpush1.bf16.msra.mxu0 0
  %6055 = vmatprep.subr.bf16.mxu0 0
  %6056 = vmatpush1.bf16.msra.mxu0 0
  %6057 = vmatprep.subr.bf16.mxu0 0
  %6058 = vmatpush1.bf16.msra.mxu0 0
  %6059 = vmatprep.subr.bf16.mxu0 0
  %6060 = vmatpush1.bf16.msra.mxu0 0
  %6061 = vmatprep.subr.bf16.mxu0 0
  %6062 = vmatpush1.bf16.msra.mxu0 0
  %6063 = vmatprep.subr.bf16.mxu0 0
  %6064 = vmatpush1.bf16.msra.mxu0 0
  %6065 = vmatprep.mubr.bf16.mxu0 0
  %6066 = vmatmul.mubr.bf16.gmra.mrb[0].mxu0 %v6016
  %v6067 = vpop.f32.mrb[0].mxu0
  %v6068 = vadd.f32 %v6007, %v6067
  %v6069 = vpop.f32.mrb[0].mxu0
  %v6070 = vpop.f32.mrb[0].mxu0
  %v6071 = vadd.f32 %v6007, %v6070
  %v6072 = vpop.f32.mrb[0].mxu0
  %6073 = vmatprep.mubr.bf16.mxu0 0
  %6074 = vmatmul.mubr.bf16.gmra.mrb[0].mxu0 %v6019
  %v6075 = vpop.f32.mrb[0].mxu0
  %v6076 = vadd.f32 %v6007, %v6075
  %v6077 = vpop.f32.mrb[0].mxu0
  %v6078 = vpop.f32.mrb[0].mxu0
  %v6079 = vadd.f32 %v6007, %v6078
  %v6080 = vpop.f32.mrb[0].mxu0
  %6081 = vmatprep.mubr.bf16.mxu0 0
  %6082 = vmatmul.mubr.bf16.gmra.mrb[0].mxu0 %v6022
  %v6083 = vpop.f32.mrb[0].mxu0
  %v6084 = vadd.f32 %v6007, %v6083
  %v6085 = vpop.f32.mrb[0].mxu0
  %v6086 = vpop.f32.mrb[0].mxu0
  %v6087 = vadd.f32 %v6007, %v6086
  %v6088 = vpop.f32.mrb[0].mxu0
  %6089 = vmatprep.mubr.bf16.mxu0 0
  %6090 = vmatmul.mubr.bf16.gmra.mrb[0].mxu0 %v6025
  %v6091 = vpop.f32.mrb[0].mxu0
  %v6092 = vadd.f32 %v6007, %v6091
  %v6093 = vpop.f32.mrb[0].mxu0
  %v6094 = vpop.f32.mrb[0].mxu0
  %v6095 = vadd.f32 %v6007, %v6094
  %v6096 = vpop.f32.mrb[0].mxu0
  %6097 = vmatprep.mubr.bf16.mxu0 0
  %6098 = vmatmul.mubr.bf16.gmra.mrb[0].mxu0 %v6028
  %v6099 = vpop.f32.mrb[0].mxu0
  %v6100 = vadd.f32 %v6007, %v6099
  %v6101 = vpop.f32.mrb[0].mxu0
  %v6102 = vpop.f32.mrb[0].mxu0
  %v6103 = vadd.f32 %v6007, %v6102
  %v6104 = vpop.f32.mrb[0].mxu0
  %6105 = vmatprep.mubr.bf16.mxu0 0
  %6106 = vmatmul.mubr.bf16.gmra.mrb[0].mxu0 %v6031
  %v6107 = vpop.f32.mrb[0].mxu0
  %v6108 = vadd.f32 %v6007, %v6107
  %v6109 = vpop.f32.mrb[0].mxu0
  %v6110 = vpop.f32.mrb[0].mxu0
  %v6111 = vadd.f32 %v6007, %v6110
  %v6112 = vpop.f32.mrb[0].mxu0
  %6113 = vdwg.mxu0
  %v6114 = vld [vmem:[%s16] sm:$0xf]
  %v6115 = vld [vmem:[%s16 + $0x4] sm:$0xf]
  %v6116 = vld [vmem:[%s17] sm:$0x1]
  %v6118 = vlaneseq
  %v6119 = vshrl.u32 %v6118, 7
  %v6120 = vsub.s32 0, %v6119
  %v6121 = vrot.slane %v6116, %v6120
  %v6125 = vunpack.c.l.b16 %v6114
  %v6126 = vunpack.c.l.b16 %v6115
  %v6127 = vpack.c.b16 %v6126, %v6125
  %v6130 = vsel %vm1205, 0, 0
  %6132 = vmatprep.subr.bf16.mxu0 0
  %6133 = vmatpush1.bf16.msra.mxu0 %v6127
  %6134 = vmatprep.subr.bf16.mxu0 0
  %6135 = vmatpush1.bf16.msra.mxu0 0
  %6136 = vmatprep.subr.bf16.mxu0 0
  %6137 = vmatpush1.bf16.msra.mxu0 0
  %6138 = vmatprep.subr.bf16.mxu0 0
  %6139 = vmatpush1.bf16.msra.mxu0 0
  %6140 = vmatprep.subr.bf16.mxu0 0
  %6141 = vmatpush1.bf16.msra.mxu0 0
  %6142 = vmatprep.subr.bf16.mxu0 0
  %6143 = vmatpush1.bf16.msra.mxu0 0
  %6144 = vmatprep.subr.bf16.mxu0 0
  %6145 = vmatpush1.bf16.msra.mxu0 0
  %6146 = vmatprep.subr.bf16.mxu0 0
  %6147 = vmatpush1.bf16.msra.mxu0 0
  %6148 = vmatprep.subr.bf16.mxu0 0
  %6149 = vmatpush1.bf16.msra.mxu0 0
  %6150 = vmatprep.subr.bf16.mxu0 0
  %6151 = vmatpush1.bf16.msra.mxu0 0
  %6152 = vmatprep.subr.bf16.mxu0 0
  %6153 = vmatpush1.bf16.msra.mxu0 0
  %6154 = vmatprep.subr.bf16.mxu0 0
  %6155 = vmatpush1.bf16.msra.mxu0 0
  %6156 = vmatprep.subr.bf16.mxu0 0
  %6157 = vmatpush1.bf16.msra.mxu0 0
  %6158 = vmatprep.subr.bf16.mxu0 0
  %6159 = vmatpush1.bf16.msra.mxu0 0
  %6160 = vmatprep.subr.bf16.mxu0 0
  %6161 = vmatpush1.bf16.msra.mxu0 0
  %6162 = vmatprep.subr.bf16.mxu0 0
  %6163 = vmatpush1.bf16.msra.mxu0 0
  %6164 = vmatprep.mubr.bf16.mxu0 0
  %6165 = vmatmul.mubr.bf16.gmra.mrb[0].mxu0 %v6130
  %v6166 = vpop.f32.mrb[0].mxu0
  %v6167 = vadd.f32 %v6121, %v6166
  %v6168 = vpop.f32.mrb[0].mxu0
  %v6169 = vpop.f32.mrb[0].mxu0
  %v6170 = vadd.f32 %v6121, %v6169
  %v6171 = vpop.f32.mrb[0].mxu0
  %6172 = vdwg.mxu0
  %v6173 = vadd.f32 %v6068, %v6167
  %v6174 = vadd.f32 %v6071, %v6170
  %v6175 = vxor.u32 %v6173, 2147483648
  %v6176 = vxor.u32 %v6174, 2147483648
  %v6177 = vmul.f32 %v6175, 1.442695
  %v6178 = vpow.pop %v6177
  %v6179 = vmul.f32 %v6176, 1.442695
  %v6180 = vpow.pop %v6179
  %v6181 = vadd.f32 %v6178, 1.0
  %v6182 = vadd.f32 %v6180, 1.0
  %v6183 = vrcp.pop %v6181
  %v6184 = vmul.f32 1.0, %v6183
  %v6185 = vrcp.pop %v6182
  %v6186 = vmul.f32 1.0, %v6185
  %6189 = vrot.lane.b32.xlu0 %v6167, 96
  %v6190 = vpop.permute.xlu0 %6189
  %6191 = vrot.lane.b32.xlu0 %v6170, 96
  %v6192 = vpop.permute.xlu0 %6191
  %v6195 = vmul.f32 %v6184, %v6190
  %v6196 = vmul.f32 %v6186, %v6192
  %6199 = vrot.lane.b32.xlu0 %v6195, 32
  %v6200 = vpop.permute.xlu0 %6199
  %6201 = vrot.lane.b32.xlu0 %v6196, 32
  %v6202 = vpop.permute.xlu0 %6201
  %v6205 = vadd.f32 %v6068, %v6200
  %v6206 = vadd.f32 %v6071, %v6202
  %v6207 = vtanh.pop %v6205
  %v6208 = vtanh.pop %v6206
  %v6209 = vsub.f32 1.0, %v6184
  %v6210 = vsub.f32 1.0, %v6186
  %6213 = vrot.lane.b32.xlu0 %v6207, 112
  %v6214 = vpop.permute.xlu0 %6213
  %6215 = vrot.lane.b32.xlu0 %v6208, 112
  %v6216 = vpop.permute.xlu0 %6215
  %v6219 = vmul.f32 %v6209, %v6214
  %v6220 = vmul.f32 %v6210, %v6216
  %v6221 = vmul.f32 %v6184, 0.0
  %v6222 = vmul.f32 %v6186, 0.0
  %v6223 = vadd.f32 %v6219, %v6221
  %v6224 = vadd.f32 %v6220, %v6222
  %v6225 = vpack.c.bf16 %v6224, %v6223
  %6227 = vrot.lane.b32.xlu0 %v6225, 112
  %v6228 = vpop.permute.xlu0 %6227
  %v6230 = vsel %vm1205, %v6228, 0
  %6232 = vmatprep.subr.bf16.mxu0 0
  %6233 = vmatpush1.bf16.msra.mxu0 %v6127
  %6234 = vmatprep.subr.bf16.mxu0 0
  %6235 = vmatpush1.bf16.msra.mxu0 0
  %6236 = vmatprep.subr.bf16.mxu0 0
  %6237 = vmatpush1.bf16.msra.mxu0 0
  %6238 = vmatprep.subr.bf16.mxu0 0
  %6239 = vmatpush1.bf16.msra.mxu0 0
  %6240 = vmatprep.subr.bf16.mxu0 0
  %6241 = vmatpush1.bf16.msra.mxu0 0
  %6242 = vmatprep.subr.bf16.mxu0 0
  %6243 = vmatpush1.bf16.msra.mxu0 0
  %6244 = vmatprep.subr.bf16.mxu0 0
  %6245 = vmatpush1.bf16.msra.mxu0 0
  %6246 = vmatprep.subr.bf16.mxu0 0
  %6247 = vmatpush1.bf16.msra.mxu0 0
  %6248 = vmatprep.subr.bf16.mxu0 0
  %6249 = vmatpush1.bf16.msra.mxu0 0
  %6250 = vmatprep.subr.bf16.mxu0 0
  %6251 = vmatpush1.bf16.msra.mxu0 0
  %6252 = vmatprep.subr.bf16.mxu0 0
  %6253 = vmatpush1.bf16.msra.mxu0 0
  %6254 = vmatprep.subr.bf16.mxu0 0
  %6255 = vmatpush1.bf16.msra.mxu0 0
  %6256 = vmatprep.subr.bf16.mxu0 0
  %6257 = vmatpush1.bf16.msra.mxu0 0
  %6258 = vmatprep.subr.bf16.mxu0 0
  %6259 = vmatpush1.bf16.msra.mxu0 0
  %6260 = vmatprep.subr.bf16.mxu0 0
  %6261 = vmatpush1.bf16.msra.mxu0 0
  %6262 = vmatprep.subr.bf16.mxu0 0
  %6263 = vmatpush1.bf16.msra.mxu0 0
  %6264 = vmatprep.mubr.bf16.mxu0 0
  %6265 = vmatmul.mubr.bf16.gmra.mrb[0].mxu0 %v6230
  %v6266 = vpop.f32.mrb[0].mxu0
  %v6267 = vadd.f32 %v6121, %v6266
  %v6268 = vpop.f32.mrb[0].mxu0
  %v6269 = vpop.f32.mrb[0].mxu0
  %v6270 = vadd.f32 %v6121, %v6269
  %v6271 = vpop.f32.mrb[0].mxu0
  %6272 = vdwg.mxu0
  %v6273 = vadd.f32 %v6076, %v6267
  %v6274 = vadd.f32 %v6079, %v6270
  %v6275 = vxor.u32 %v6273, 2147483648
  %v6276 = vxor.u32 %v6274, 2147483648
  %v6277 = vmul.f32 %v6275, 1.442695
  %v6278 = vpow.pop %v6277
  %v6279 = vmul.f32 %v6276, 1.442695
  %v6280 = vpow.pop %v6279
  %v6281 = vadd.f32 %v6278, 1.0
  %v6282 = vadd.f32 %v6280, 1.0
  %v6283 = vrcp.pop %v6281
  %v6284 = vmul.f32 1.0, %v6283
  %v6285 = vrcp.pop %v6282
  %v6286 = vmul.f32 1.0, %v6285
  %6289 = vrot.lane.b32.xlu0 %v6267, 96
  %v6290 = vpop.permute.xlu0 %6289
  %6291 = vrot.lane.b32.xlu0 %v6270, 96
  %v6292 = vpop.permute.xlu0 %6291
  %v6295 = vmul.f32 %v6284, %v6290
  %v6296 = vmul.f32 %v6286, %v6292
  %6299 = vrot.lane.b32.xlu0 %v6295, 32
  %v6300 = vpop.permute.xlu0 %6299
  %6301 = vrot.lane.b32.xlu0 %v6296, 32
  %v6302 = vpop.permute.xlu0 %6301
  %v6305 = vadd.f32 %v6076, %v6300
  %v6306 = vadd.f32 %v6079, %v6302
  %v6307 = vtanh.pop %v6305
  %v6308 = vtanh.pop %v6306
  %v6309 = vsub.f32 1.0, %v6284
  %v6310 = vsub.f32 1.0, %v6286
  %6313 = vrot.lane.b32.xlu0 %v6307, 112
  %v6314 = vpop.permute.xlu0 %6313
  %6315 = vrot.lane.b32.xlu0 %v6308, 112
  %v6316 = vpop.permute.xlu0 %6315
  %v6319 = vmul.f32 %v6309, %v6314
  %v6320 = vmul.f32 %v6310, %v6316
  %v6321 = vmul.f32 %v6284, %v6223
  %v6322 = vmul.f32 %v6286, %v6224
  %v6323 = vadd.f32 %v6319, %v6321
  %v6324 = vadd.f32 %v6320, %v6322
  %v6325 = vpack.c.bf16 %v6324, %v6323
  %6327 = vrot.lane.b32.xlu0 %v6325, 112
  %v6328 = vpop.permute.xlu0 %6327
  %v6330 = vsel %vm1205, %v6328, 0
  %6332 = vmatprep.subr.bf16.mxu0 0
  %6333 = vmatpush1.bf16.msra.mxu0 %v6127
  %6334 = vmatprep.subr.bf16.mxu0 0
  %6335 = vmatpush1.bf16.msra.mxu0 0
  %6336 = vmatprep.subr.bf16.mxu0 0
  %6337 = vmatpush1.bf16.msra.mxu0 0
  %6338 = vmatprep.subr.bf16.mxu0 0
  %6339 = vmatpush1.bf16.msra.mxu0 0
  %6340 = vmatprep.subr.bf16.mxu0 0
  %6341 = vmatpush1.bf16.msra.mxu0 0
  %6342 = vmatprep.subr.bf16.mxu0 0
  %6343 = vmatpush1.bf16.msra.mxu0 0
  %6344 = vmatprep.subr.bf16.mxu0 0
  %6345 = vmatpush1.bf16.msra.mxu0 0
  %6346 = vmatprep.subr.bf16.mxu0 0
  %6347 = vmatpush1.bf16.msra.mxu0 0
  %6348 = vmatprep.subr.bf16.mxu0 0
  %6349 = vmatpush1.bf16.msra.mxu0 0
  %6350 = vmatprep.subr.bf16.mxu0 0
  %6351 = vmatpush1.bf16.msra.mxu0 0
  %6352 = vmatprep.subr.bf16.mxu0 0
  %6353 = vmatpush1.bf16.msra.mxu0 0
  %6354 = vmatprep.subr.bf16.mxu0 0
  %6355 = vmatpush1.bf16.msra.mxu0 0
  %6356 = vmatprep.subr.bf16.mxu0 0
  %6357 = vmatpush1.bf16.msra.mxu0 0
  %6358 = vmatprep.subr.bf16.mxu0 0
  %6359 = vmatpush1.bf16.msra.mxu0 0
  %6360 = vmatprep.subr.bf16.mxu0 0
  %6361 = vmatpush1.bf16.msra.mxu0 0
  %6362 = vmatprep.subr.bf16.mxu0 0
  %6363 = vmatpush1.bf16.msra.mxu0 0
  %6364 = vmatprep.mubr.bf16.mxu0 0
  %6365 = vmatmul.mubr.bf16.gmra.mrb[0].mxu0 %v6330
  %v6366 = vpop.f32.mrb[0].mxu0
  %v6367 = vadd.f32 %v6121, %v6366
  %v6368 = vpop.f32.mrb[0].mxu0
  %v6369 = vpop.f32.mrb[0].mxu0
  %v6370 = vadd.f32 %v6121, %v6369
  %v6371 = vpop.f32.mrb[0].mxu0
  %6372 = vdwg.mxu0
  %v6373 = vadd.f32 %v6084, %v6367
  %v6374 = vadd.f32 %v6087, %v6370
  %v6375 = vxor.u32 %v6373, 2147483648
  %v6376 = vxor.u32 %v6374, 2147483648
  %v6377 = vmul.f32 %v6375, 1.442695
  %v6378 = vpow.pop %v6377
  %v6379 = vmul.f32 %v6376, 1.442695
  %v6380 = vpow.pop %v6379
  %v6381 = vadd.f32 %v6378, 1.0
  %v6382 = vadd.f32 %v6380, 1.0
  %v6383 = vrcp.pop %v6381
  %v6384 = vmul.f32 1.0, %v6383
  %v6385 = vrcp.pop %v6382
  %v6386 = vmul.f32 1.0, %v6385
  %6389 = vrot.lane.b32.xlu0 %v6367, 96
  %v6390 = vpop.permute.xlu0 %6389
  %6391 = vrot.lane.b32.xlu0 %v6370, 96
  %v6392 = vpop.permute.xlu0 %6391
  %v6395 = vmul.f32 %v6384, %v6390
  %v6396 = vmul.f32 %v6386, %v6392
  %6399 = vrot.lane.b32.xlu0 %v6395, 32
  %v6400 = vpop.permute.xlu0 %6399
  %6401 = vrot.lane.b32.xlu0 %v6396, 32
  %v6402 = vpop.permute.xlu0 %6401
  %v6405 = vadd.f32 %v6084, %v6400
  %v6406 = vadd.f32 %v6087, %v6402
  %v6407 = vtanh.pop %v6405
  %v6408 = vtanh.pop %v6406
  %v6409 = vsub.f32 1.0, %v6384
  %v6410 = vsub.f32 1.0, %v6386
  %6413 = vrot.lane.b32.xlu0 %v6407, 112
  %v6414 = vpop.permute.xlu0 %6413
  %6415 = vrot.lane.b32.xlu0 %v6408, 112
  %v6416 = vpop.permute.xlu0 %6415
  %v6419 = vmul.f32 %v6409, %v6414
  %v6420 = vmul.f32 %v6410, %v6416
  %v6421 = vmul.f32 %v6384, %v6323
  %v6422 = vmul.f32 %v6386, %v6324
  %v6423 = vadd.f32 %v6419, %v6421
  %v6424 = vadd.f32 %v6420, %v6422
  %v6425 = vpack.c.bf16 %v6424, %v6423
  %6427 = vrot.lane.b32.xlu0 %v6425, 112
  %v6428 = vpop.permute.xlu0 %6427
  %v6430 = vsel %vm1205, %v6428, 0
  %6432 = vmatprep.subr.bf16.mxu0 0
  %6433 = vmatpush1.bf16.msra.mxu0 %v6127
  %6434 = vmatprep.subr.bf16.mxu0 0
  %6435 = vmatpush1.bf16.msra.mxu0 0
  %6436 = vmatprep.subr.bf16.mxu0 0
  %6437 = vmatpush1.bf16.msra.mxu0 0
  %6438 = vmatprep.subr.bf16.mxu0 0
  %6439 = vmatpush1.bf16.msra.mxu0 0
  %6440 = vmatprep.subr.bf16.mxu0 0
  %6441 = vmatpush1.bf16.msra.mxu0 0
  %6442 = vmatprep.subr.bf16.mxu0 0
  %6443 = vmatpush1.bf16.msra.mxu0 0
  %6444 = vmatprep.subr.bf16.mxu0 0
  %6445 = vmatpush1.bf16.msra.mxu0 0
  %6446 = vmatprep.subr.bf16.mxu0 0
  %6447 = vmatpush1.bf16.msra.mxu0 0
  %6448 = vmatprep.subr.bf16.mxu0 0
  %6449 = vmatpush1.bf16.msra.mxu0 0
  %6450 = vmatprep.subr.bf16.mxu0 0
  %6451 = vmatpush1.bf16.msra.mxu0 0
  %6452 = vmatprep.subr.bf16.mxu0 0
  %6453 = vmatpush1.bf16.msra.mxu0 0
  %6454 = vmatprep.subr.bf16.mxu0 0
  %6455 = vmatpush1.bf16.msra.mxu0 0
  %6456 = vmatprep.subr.bf16.mxu0 0
  %6457 = vmatpush1.bf16.msra.mxu0 0
  %6458 = vmatprep.subr.bf16.mxu0 0
  %6459 = vmatpush1.bf16.msra.mxu0 0
  %6460 = vmatprep.subr.bf16.mxu0 0
  %6461 = vmatpush1.bf16.msra.mxu0 0
  %6462 = vmatprep.subr.bf16.mxu0 0
  %6463 = vmatpush1.bf16.msra.mxu0 0
  %6464 = vmatprep.mubr.bf16.mxu0 0
  %6465 = vmatmul.mubr.bf16.gmra.mrb[0].mxu0 %v6430
  %v6466 = vpop.f32.mrb[0].mxu0
  %v6467 = vadd.f32 %v6121, %v6466
  %v6468 = vpop.f32.mrb[0].mxu0
  %v6469 = vpop.f32.mrb[0].mxu0
  %v6470 = vadd.f32 %v6121, %v6469
  %v6471 = vpop.f32.mrb[0].mxu0
  %6472 = vdwg.mxu0
  %v6473 = vadd.f32 %v6092, %v6467
  %v6474 = vadd.f32 %v6095, %v6470
  %v6475 = vxor.u32 %v6473, 2147483648
  %v6476 = vxor.u32 %v6474, 2147483648
  %v6477 = vmul.f32 %v6475, 1.442695
  %v6478 = vpow.pop %v6477
  %v6479 = vmul.f32 %v6476, 1.442695
  %v6480 = vpow.pop %v6479
  %v6481 = vadd.f32 %v6478, 1.0
  %v6482 = vadd.f32 %v6480, 1.0
  %v6483 = vrcp.pop %v6481
  %v6484 = vmul.f32 1.0, %v6483
  %v6485 = vrcp.pop %v6482
  %v6486 = vmul.f32 1.0, %v6485
  %6489 = vrot.lane.b32.xlu0 %v6467, 96
  %v6490 = vpop.permute.xlu0 %6489
  %6491 = vrot.lane.b32.xlu0 %v6470, 96
  %v6492 = vpop.permute.xlu0 %6491
  %v6495 = vmul.f32 %v6484, %v6490
  %v6496 = vmul.f32 %v6486, %v6492
  %6499 = vrot.lane.b32.xlu0 %v6495, 32
  %v6500 = vpop.permute.xlu0 %6499
  %6501 = vrot.lane.b32.xlu0 %v6496, 32
  %v6502 = vpop.permute.xlu0 %6501
  %v6505 = vadd.f32 %v6092, %v6500
  %v6506 = vadd.f32 %v6095, %v6502
  %v6507 = vtanh.pop %v6505
  %v6508 = vtanh.pop %v6506
  %v6509 = vsub.f32 1.0, %v6484
  %v6510 = vsub.f32 1.0, %v6486
  %6513 = vrot.lane.b32.xlu0 %v6507, 112
  %v6514 = vpop.permute.xlu0 %6513
  %6515 = vrot.lane.b32.xlu0 %v6508, 112
  %v6516 = vpop.permute.xlu0 %6515
  %v6519 = vmul.f32 %v6509, %v6514
  %v6520 = vmul.f32 %v6510, %v6516
  %v6521 = vmul.f32 %v6484, %v6423
  %v6522 = vmul.f32 %v6486, %v6424
  %v6523 = vadd.f32 %v6519, %v6521
  %v6524 = vadd.f32 %v6520, %v6522
  %v6525 = vpack.c.bf16 %v6524, %v6523
  %6527 = vrot.lane.b32.xlu0 %v6525, 112
  %v6528 = vpop.permute.xlu0 %6527
  %v6530 = vsel %vm1205, %v6528, 0
  %6532 = vmatprep.subr.bf16.mxu0 0
  %6533 = vmatpush1.bf16.msra.mxu0 %v6127
  %6534 = vmatprep.subr.bf16.mxu0 0
  %6535 = vmatpush1.bf16.msra.mxu0 0
  %6536 = vmatprep.subr.bf16.mxu0 0
  %6537 = vmatpush1.bf16.msra.mxu0 0
  %6538 = vmatprep.subr.bf16.mxu0 0
  %6539 = vmatpush1.bf16.msra.mxu0 0
  %6540 = vmatprep.subr.bf16.mxu0 0
  %6541 = vmatpush1.bf16.msra.mxu0 0
  %6542 = vmatprep.subr.bf16.mxu0 0
  %6543 = vmatpush1.bf16.msra.mxu0 0
  %6544 = vmatprep.subr.bf16.mxu0 0
  %6545 = vmatpush1.bf16.msra.mxu0 0
  %6546 = vmatprep.subr.bf16.mxu0 0
  %6547 = vmatpush1.bf16.msra.mxu0 0
  %6548 = vmatprep.subr.bf16.mxu0 0
  %6549 = vmatpush1.bf16.msra.mxu0 0
  %6550 = vmatprep.subr.bf16.mxu0 0
  %6551 = vmatpush1.bf16.msra.mxu0 0
  %6552 = vmatprep.subr.bf16.mxu0 0
  %6553 = vmatpush1.bf16.msra.mxu0 0
  %6554 = vmatprep.subr.bf16.mxu0 0
  %6555 = vmatpush1.bf16.msra.mxu0 0
  %6556 = vmatprep.subr.bf16.mxu0 0
  %6557 = vmatpush1.bf16.msra.mxu0 0
  %6558 = vmatprep.subr.bf16.mxu0 0
  %6559 = vmatpush1.bf16.msra.mxu0 0
  %6560 = vmatprep.subr.bf16.mxu0 0
  %6561 = vmatpush1.bf16.msra.mxu0 0
  %6562 = vmatprep.subr.bf16.mxu0 0
  %6563 = vmatpush1.bf16.msra.mxu0 0
  %6564 = vmatprep.mubr.bf16.mxu0 0
  %6565 = vmatmul.mubr.bf16.gmra.mrb[0].mxu0 %v6530
  %v6566 = vpop.f32.mrb[0].mxu0
  %v6567 = vadd.f32 %v6121, %v6566
  %v6568 = vpop.f32.mrb[0].mxu0
  %v6569 = vpop.f32.mrb[0].mxu0
  %v6570 = vadd.f32 %v6121, %v6569
  %v6571 = vpop.f32.mrb[0].mxu0
  %6572 = vdwg.mxu0
  %v6573 = vadd.f32 %v6100, %v6567
  %v6574 = vadd.f32 %v6103, %v6570
  %v6575 = vxor.u32 %v6573, 2147483648
  %v6576 = vxor.u32 %v6574, 2147483648
  %v6577 = vmul.f32 %v6575, 1.442695
  %v6578 = vpow.pop %v6577
  %v6579 = vmul.f32 %v6576, 1.442695
  %v6580 = vpow.pop %v6579
  %v6581 = vadd.f32 %v6578, 1.0
  %v6582 = vadd.f32 %v6580, 1.0
  %v6583 = vrcp.pop %v6581
  %v6584 = vmul.f32 1.0, %v6583
  %v6585 = vrcp.pop %v6582
  %v6586 = vmul.f32 1.0, %v6585
  %6589 = vrot.lane.b32.xlu0 %v6567, 96
  %v6590 = vpop.permute.xlu0 %6589
  %6591 = vrot.lane.b32.xlu0 %v6570, 96
  %v6592 = vpop.permute.xlu0 %6591
  %v6595 = vmul.f32 %v6584, %v6590
  %v6596 = vmul.f32 %v6586, %v6592
  %6599 = vrot.lane.b32.xlu0 %v6595, 32
  %v6600 = vpop.permute.xlu0 %6599
  %6601 = vrot.lane.b32.xlu0 %v6596, 32
  %v6602 = vpop.permute.xlu0 %6601
  %v6605 = vadd.f32 %v6100, %v6600
  %v6606 = vadd.f32 %v6103, %v6602
  %v6607 = vtanh.pop %v6605
  %v6608 = vtanh.pop %v6606
  %v6609 = vsub.f32 1.0, %v6584
  %v6610 = vsub.f32 1.0, %v6586
  %6613 = vrot.lane.b32.xlu0 %v6607, 112
  %v6614 = vpop.permute.xlu0 %6613
  %6615 = vrot.lane.b32.xlu0 %v6608, 112
  %v6616 = vpop.permute.xlu0 %6615
  %v6619 = vmul.f32 %v6609, %v6614
  %v6620 = vmul.f32 %v6610, %v6616
  %v6621 = vmul.f32 %v6584, %v6523
  %v6622 = vmul.f32 %v6586, %v6524
  %v6623 = vadd.f32 %v6619, %v6621
  %v6624 = vadd.f32 %v6620, %v6622
  %v6625 = vpack.c.bf16 %v6624, %v6623
  %6627 = vrot.lane.b32.xlu0 %v6625, 112
  %v6628 = vpop.permute.xlu0 %6627
  %v6630 = vsel %vm1205, %v6628, 0
  %6632 = vmatprep.subr.bf16.mxu0 0
  %6633 = vmatpush1.bf16.msra.mxu0 %v6127
  %6634 = vmatprep.subr.bf16.mxu0 0
  %6635 = vmatpush1.bf16.msra.mxu0 0
  %6636 = vmatprep.subr.bf16.mxu0 0
  %6637 = vmatpush1.bf16.msra.mxu0 0
  %6638 = vmatprep.subr.bf16.mxu0 0
  %6639 = vmatpush1.bf16.msra.mxu0 0
  %6640 = vmatprep.subr.bf16.mxu0 0
  %6641 = vmatpush1.bf16.msra.mxu0 0
  %6642 = vmatprep.subr.bf16.mxu0 0
  %6643 = vmatpush1.bf16.msra.mxu0 0
  %6644 = vmatprep.subr.bf16.mxu0 0
  %6645 = vmatpush1.bf16.msra.mxu0 0
  %6646 = vmatprep.subr.bf16.mxu0 0
  %6647 = vmatpush1.bf16.msra.mxu0 0
  %6648 = vmatprep.subr.bf16.mxu0 0
  %6649 = vmatpush1.bf16.msra.mxu0 0
  %6650 = vmatprep.subr.bf16.mxu0 0
  %6651 = vmatpush1.bf16.msra.mxu0 0
  %6652 = vmatprep.subr.bf16.mxu0 0
  %6653 = vmatpush1.bf16.msra.mxu0 0
  %6654 = vmatprep.subr.bf16.mxu0 0
  %6655 = vmatpush1.bf16.msra.mxu0 0
  %6656 = vmatprep.subr.bf16.mxu0 0
  %6657 = vmatpush1.bf16.msra.mxu0 0
  %6658 = vmatprep.subr.bf16.mxu0 0
  %6659 = vmatpush1.bf16.msra.mxu0 0
  %6660 = vmatprep.subr.bf16.mxu0 0
  %6661 = vmatpush1.bf16.msra.mxu0 0
  %6662 = vmatprep.subr.bf16.mxu0 0
  %6663 = vmatpush1.bf16.msra.mxu0 0
  %6664 = vmatprep.mubr.bf16.mxu0 0
  %6665 = vmatmul.mubr.bf16.gmra.mrb[0].mxu0 %v6630
  %v6666 = vpop.f32.mrb[0].mxu0
  %v6667 = vadd.f32 %v6121, %v6666
  %v6668 = vpop.f32.mrb[0].mxu0
  %v6669 = vpop.f32.mrb[0].mxu0
  %v6670 = vadd.f32 %v6121, %v6669
  %v6671 = vpop.f32.mrb[0].mxu0
  %6672 = vdwg.mxu0
  %v6673 = vadd.f32 %v6108, %v6667
  %v6674 = vadd.f32 %v6111, %v6670
  %v6675 = vxor.u32 %v6673, 2147483648
  %v6676 = vxor.u32 %v6674, 2147483648
  %v6677 = vmul.f32 %v6675, 1.442695
  %v6678 = vpow.pop %v6677
  %v6679 = vmul.f32 %v6676, 1.442695
  %v6680 = vpow.pop %v6679
  %v6681 = vadd.f32 %v6678, 1.0
  %v6682 = vadd.f32 %v6680, 1.0
  %v6683 = vrcp.pop %v6681
  %v6684 = vmul.f32 1.0, %v6683
  %v6685 = vrcp.pop %v6682
  %v6686 = vmul.f32 1.0, %v6685
  %6689 = vrot.lane.b32.xlu0 %v6667, 96
  %v6690 = vpop.permute.xlu0 %6689
  %6691 = vrot.lane.b32.xlu0 %v6670, 96
  %v6692 = vpop.permute.xlu0 %6691
  %v6695 = vmul.f32 %v6684, %v6690
  %v6696 = vmul.f32 %v6686, %v6692
  %6699 = vrot.lane.b32.xlu0 %v6695, 32
  %v6700 = vpop.permute.xlu0 %6699
  %6701 = vrot.lane.b32.xlu0 %v6696, 32
  %v6702 = vpop.permute.xlu0 %6701
  %v6705 = vadd.f32 %v6108, %v6700
  %v6706 = vadd.f32 %v6111, %v6702
  %v6707 = vtanh.pop %v6705
  %v6708 = vtanh.pop %v6706
  %v6709 = vsub.f32 1.0, %v6684
  %v6710 = vsub.f32 1.0, %v6686
  %6713 = vrot.lane.b32.xlu0 %v6707, 112
  %v6714 = vpop.permute.xlu0 %6713
  %6715 = vrot.lane.b32.xlu0 %v6708, 112
  %v6716 = vpop.permute.xlu0 %6715
  %v6719 = vmul.f32 %v6709, %v6714
  %v6720 = vmul.f32 %v6710, %v6716
  %v6721 = vmul.f32 %v6684, %v6623
  %v6722 = vmul.f32 %v6686, %v6624
  %v6723 = vadd.f32 %v6719, %v6721
  %v6724 = vadd.f32 %v6720, %v6722
  %6737 = vrot.lane.b32.xlu0 %v6223, 112
  %v6738 = vpop.permute.xlu0 %6737
  %6739 = vrot.lane.b32.xlu0 %v6224, 112
  %v6740 = vpop.permute.xlu0 %6739
  %6741 = vrot.lane.b32.xlu0 %v6323, 112
  %v6742 = vpop.permute.xlu0 %6741
  %6743 = vrot.lane.b32.xlu0 %v6324, 112
  %v6744 = vpop.permute.xlu0 %6743
  %6745 = vrot.lane.b32.xlu0 %v6423, 112
  %v6746 = vpop.permute.xlu0 %6745
  %6747 = vrot.lane.b32.xlu0 %v6424, 112
  %v6748 = vpop.permute.xlu0 %6747
  %6749 = vrot.lane.b32.xlu0 %v6523, 112
  %v6750 = vpop.permute.xlu0 %6749
  %6751 = vrot.lane.b32.xlu0 %v6524, 112
  %v6752 = vpop.permute.xlu0 %6751
  %6753 = vrot.lane.b32.xlu0 %v6623, 112
  %v6754 = vpop.permute.xlu0 %6753
  %6755 = vrot.lane.b32.xlu0 %v6624, 112
  %v6756 = vpop.permute.xlu0 %6755
  %6757 = vrot.lane.b32.xlu0 %v6723, 112
  %v6758 = vpop.permute.xlu0 %6757
  %6759 = vrot.lane.b32.xlu0 %v6724, 112
  %v6760 = vpop.permute.xlu0 %6759
  %6773 = vst.msk [vmem:[%s18] sm:$0xff] %vm1205, %v6738
  %6774 = vst.msk [vmem:[%s18 + $0x8] sm:$0xff] %vm1205, %v6740
  %6775 = vst.msk [vmem:[%s18 + $0x10] sm:$0xff] %vm1205, %v6742
  %6776 = vst.msk [vmem:[%s18 + $0x18] sm:$0xff] %vm1205, %v6744
  %6777 = vst.msk [vmem:[%s18 + $0x20] sm:$0xff] %vm1205, %v6746
  %6778 = vst.msk [vmem:[%s18 + $0x28] sm:$0xff] %vm1205, %v6748
  %6779 = vst.msk [vmem:[%s18 + $0x30] sm:$0xff] %vm1205, %v6750
  %6780 = vst.msk [vmem:[%s18 + $0x38] sm:$0xff] %vm1205, %v6752
  %6781 = vst.msk [vmem:[%s18 + $0x40] sm:$0xff] %vm1205, %v6754
  %6782 = vst.msk [vmem:[%s18 + $0x48] sm:$0xff] %vm1205, %v6756
  %6783 = vst.msk [vmem:[%s18 + $0x50] sm:$0xff] %vm1205, %v6758
  %6784 = vst.msk [vmem:[%s18 + $0x58] sm:$0xff] %vm1205, %v6760
  %6785 = vst.msk [vmem:[%s19] sm:$0xff] %vm1205, %v6758
  %6786 = vst.msk [vmem:[%s19 + $0x8] sm:$0xff] %vm1205, %v6760
  // Predicated region
  $region74: #{transf_stgcn3_forward.1} parent=0 // pred_check
    _
  $region75: #{transf_stgcn3_forward.1} parent=0 // pred_check_branch
    %6788 = sbr.rel (0) target = $region77
  $region76: #{transf_stgcn3_forward.1} parent=0 // pred_region
    _
  $region77: #{transf_stgcn3_forward.1} parent=0 // pred_fallthru
    _
  // Predicated region
  $region78: #{transf_stgcn3_forward.1} parent=0 // pred_check
    _
  $region79: #{transf_stgcn3_forward.1} parent=0 // pred_check_branch
    %6790 = sbr.rel (0) target = $region81
  $region80: #{transf_stgcn3_forward.1} parent=0 // pred_region
    _
  $region81: #{transf_stgcn3_forward.1} parent=0 // pred_fallthru
    _
  // Predicated region
  $region82: #{transf_stgcn3_forward.1} parent=0 // pred_check
    _
  $region83: #{transf_stgcn3_forward.1} parent=0 // pred_check_branch
    %6792 = sbr.rel (0) target = $region85
  $region84: #{transf_stgcn3_forward.1} parent=0 // pred_region
    _
  $region85: #{transf_stgcn3_forward.1} parent=0 // pred_fallthru
    _
  // Predicated region
  $region86: #{transf_stgcn3_forward.1} parent=0 // pred_check
    _
  $region87: #{transf_stgcn3_forward.1} parent=0 // pred_check_branch
    %6794 = sbr.rel (0) target = $region89
  $region88: #{transf_stgcn3_forward.1} parent=0 // pred_region
    _
  $region89: #{transf_stgcn3_forward.1} parent=0 // pred_fallthru
    _

</llo_original>
